<compile_context>
chip_gen: v7x
topology: tpu7x:2x2x1
jax: 0.10.0
libtpu: 0.0.40
codegen_flags: <defaults>
</compile_context>

<pallas_src>
import jax
import jax.numpy as jnp
from jax import lax
from jax.experimental import pallas as pl
from jax.experimental.pallas import tpu as pltpu

NUM_CLASSES = 10
HIDDEN_CONV = 32
HIDDEN_FC = 128
KSIZE = 3
CIN = 3
H = W = 32                          # CIFAR spatial size implied by hidden_conv*16*16 flatten
POOL_H = POOL_W = 16                # spatial size after 2x2 max-pool
KFLAT = KSIZE * KSIZE * CIN         # 27
LANE_K = POOL_W * KFLAT             # 432 = (px, k) lanes of one im2col row
LANE_BLK = POOL_W * HIDDEN_CONV     # 512 = (px, cout) lanes of one pooled row
FEAT = HIDDEN_CONV * POOL_H * POOL_W  # 8192


# ---------------------------------------------------------------------------
# Fused kernel body (one grid step = one batch tile of TB images).
# ---------------------------------------------------------------------------
def fused_forward_kernel(patches_ref, wblk_ref, bconv_ref, w1_ref, b1_ref,
                         w2_ref, b2_ref, out_ref):
    # patches_ref : [4*16*TB, 432] bf16  rows=(p, py, b), lanes=(px, k)
    # wblk_ref    : [432, 512]     bf16  block-diagonal conv weight (px-block x (px,cout))
    # bconv_ref   : [1, 512]       f32   conv bias tiled over px
    # w1_ref      : [8192, 128]    bf16  fc1 weight, rows permuted to (py, px, c)
    # b1_ref      : [1, 128]       f32
    # w2_ref      : [128, 10]      f32
    # b2_ref      : [1, 10]        f32
    # out_ref     : [TB, 10]       f32
    TB = out_ref.shape[0]
    ROWS = POOL_H * TB                                   # 16*TB rows per pool offset

    # conv3x3 for all 4 pool offsets as ONE bf16 MXU matmul (M = 4*16*TB).
    conv = jnp.dot(patches_ref[...], wblk_ref[...],
                   preferred_element_type=jnp.float32)   # [4*16*TB, 512] f32

    # 2x2 max-pool = elementwise max over the 4 row groups (sublane-aligned slices).
    pooled = jnp.maximum(
        jnp.maximum(conv[0 * ROWS:1 * ROWS, :], conv[1 * ROWS:2 * ROWS, :]),
        jnp.maximum(conv[2 * ROWS:3 * ROWS, :], conv[3 * ROWS:4 * ROWS, :]))
    pooled = jnp.maximum(pooled + bconv_ref[...], 0.0)   # [16*TB, 512], rows=(py, b)
    pooled_bf16 = pooled.astype(jnp.bfloat16)            # single full-slab cast (hoisted)

    # fc1: K=8192 reduction as 16 unrolled K=512 chunk dots (one per pooled row py).
    # The pooled slab lane order (px, cout) already matches the permuted w1 rows,
    # so no relayout is needed.  Accumulation stays f32.
    # TODO(synk): for very large batch tiles switch to lax.fori_loop + VMEM scratch
    # accumulator to bound live ranges (irrelevant at the tile sizes used here).
    h = jnp.zeros((TB, HIDDEN_FC), jnp.float32)
    for py in range(POOL_H):
        lhs = pooled_bf16[py * TB:(py + 1) * TB, :]               # [TB, 512] (TB mult of 8)
        rhs = w1_ref[py * LANE_BLK:(py + 1) * LANE_BLK, :]        # [512, 128] bf16
        h = h + jnp.dot(lhs, rhs, preferred_element_type=jnp.float32)
    h = h + b1_ref[...]                                           # [TB, 128]

    logits = jnp.dot(h, w2_ref[...], preferred_element_type=jnp.float32) + b2_ref[...]
    out_ref[...] = logits.astype(out_ref.dtype)


# ---------------------------------------------------------------------------
# Wrapper: layout plumbing (padding, im2col, weight permutation / block-diag).
# ---------------------------------------------------------------------------
def cifar_smnet_forward(x_nchw, params, *, batch_tile=64):
    conv_w, conv_b, fc1_w, fc1_b, fc2_w, fc2_b = params
    B = x_nchw.shape[0]

    # Pad batch to a multiple of 8 (f32 sublane) and of the batch tile.
    batch_tile = max(8, (batch_tile // 8) * 8)
    BP = -(-B // 8) * 8
    TB = min(batch_tile, BP)
    BP = -(-BP // TB) * TB
    NB = BP // TB

    x = jnp.pad(x_nchw.astype(jnp.float32), ((0, BP - B), (0, 0), (0, 0), (0, 0)))

    # --- im2col patches, all 4 pool offsets stacked in the row dimension ---
    x_nhwc = jnp.transpose(x, (0, 2, 3, 1))                               # [BP,32,32,3]
    x_pad = jnp.pad(x_nhwc, ((0, 0), (1, 1), (1, 1), (0, 0)))             # [BP,34,34,3]
    shifted = jnp.stack(
        [x_pad[:, ky:ky + H, kx:kx + W, :] for ky in range(KSIZE) for kx in range(KSIZE)],
        axis=3).reshape(BP, H, W, KFLAT)                                  # [BP,32,32,27] k=(ky,kx,ci)

    blocks = jnp.stack(
        [shifted[:, dy::2, dx::2, :] for dy in range(2) for dx in range(2)],
        axis=0)                                                           # [4,BP,16,16,27] (p,b,py,px,k)
    blocks = blocks.reshape(4, NB, TB, POOL_H, POOL_W, KFLAT)             # (p,nb,tb,py,px,k)
    blocks = jnp.transpose(blocks, (1, 0, 3, 2, 4, 5))                    # (nb,p,py,tb,px,k)
    patches = blocks.reshape(NB * 4 * POOL_H * TB, LANE_K).astype(jnp.bfloat16)

    # --- conv weight as a block-diagonal (per px) matrix -> lane-dense output ---
    # TODO(synk): a 4-px grouping ([108,128] blocks) would cut the 16x-redundant MXU
    # work/weight; only worth it at large batch, kept simple (bf16) here.
    wc_flat = jnp.transpose(conv_w, (2, 3, 1, 0)).reshape(KFLAT, HIDDEN_CONV).astype(jnp.float32)
    eye = jnp.eye(POOL_W, dtype=jnp.float32)
    wblk = jnp.einsum('pq,kc->pkqc', eye, wc_flat).reshape(LANE_K, LANE_BLK).astype(jnp.bfloat16)
    bconv = jnp.tile(conv_b.astype(jnp.float32), POOL_W).reshape(1, LANE_BLK)  # [1,512]

    # --- fc1 weight permuted to (py, px, c) row order (matches NCHW .view flatten), bf16 ---
    w1p = (fc1_w.reshape(HIDDEN_FC, HIDDEN_CONV, POOL_H, POOL_W)
           .transpose(2, 3, 1, 0)
           .reshape(FEAT, HIDDEN_FC)
           .astype(jnp.bfloat16))                                         # [8192,128]
    b1 = fc1_b.reshape(1, HIDDEN_FC).astype(jnp.float32)
    w2t = fc2_w.T.astype(jnp.float32)                                     # [128,10]
    b2 = fc2_b.reshape(1, NUM_CLASSES).astype(jnp.float32)

    ROWS_P = 4 * POOL_H * TB                                              # patch rows per grid step

    in_specs = [
        pl.BlockSpec((ROWS_P, LANE_K), lambda i: (i, 0)),                 # patches (batch-blocked)
        pl.BlockSpec((LANE_K, LANE_BLK), lambda i: (0, 0)),               # wblk (resident)
        pl.BlockSpec((1, LANE_BLK), lambda i: (0, 0)),                    # bconv
        pl.BlockSpec((FEAT, HIDDEN_FC), lambda i: (0, 0)),                # w1 (resident, bf16)
        pl.BlockSpec((1, HIDDEN_FC), lambda i: (0, 0)),                   # b1
        pl.BlockSpec((HIDDEN_FC, NUM_CLASSES), lambda i: (0, 0)),         # w2
        pl.BlockSpec((1, NUM_CLASSES), lambda i: (0, 0)),                 # b2
    ]
    out_specs = pl.BlockSpec((TB, NUM_CLASSES), lambda i: (i, 0))

    # VMEM budget: double-buffered inputs + kernel live intermediates + headroom.
    vmem_limit = int(2 * (ROWS_P * LANE_K * 2 + FEAT * HIDDEN_FC * 2 + LANE_K * LANE_BLK * 2)
                     + ROWS_P * LANE_BLK * 4                              # conv f32 slab
                     + POOL_H * TB * LANE_BLK * (4 + 2)                   # pooled f32 + bf16
                     + (4 << 20))
    vmem_limit = min(max(vmem_limit, 16 << 20), 48 << 20)

    flops = (2 * (4 * POOL_H * BP) * LANE_K * LANE_BLK
             + 2 * BP * FEAT * HIDDEN_FC
             + 2 * BP * HIDDEN_FC * NUM_CLASSES)
    bytes_accessed = (patches.size * 2 + wblk.size * 2 + w1p.size * 2
                      + bconv.size * 4 + b1.size * 4 + w2t.size * 4 + b2.size * 4
                      + BP * NUM_CLASSES * 4)

    out = pl.pallas_call(
        fused_forward_kernel,
        out_shape=jax.ShapeDtypeStruct((BP, NUM_CLASSES), jnp.float32),
        grid_spec=pltpu.PrefetchScalarGridSpec(
            num_scalar_prefetch=0,
            grid=(NB,),
            in_specs=in_specs,
            out_specs=out_specs),
        compiler_params=pltpu.CompilerParams(
            dimension_semantics=("parallel",),
            vmem_limit_bytes=vmem_limit),
        cost_estimate=pl.CostEstimate(flops=flops, transcendentals=0,
                                      bytes_accessed=bytes_accessed),
    )(patches, wblk, bconv, w1p, b1, w2t, b2)
    return out[:B]


# ---------------------------------------------------------------------------
# Deterministic parameter init (same shapes as the PyTorch module's __init__)
# ---------------------------------------------------------------------------
def init_params(key):
    ks = jax.random.split(key, 6)
    conv_w = jax.random.normal(ks[0], (HIDDEN_CONV, CIN, KSIZE, KSIZE), jnp.float32) * 0.1
    conv_b = jax.random.normal(ks[1], (HIDDEN_CONV,), jnp.float32) * 0.1
    fc1_w = jax.random.normal(ks[2], (HIDDEN_FC, FEAT), jnp.float32) * 0.01
    fc1_b = jax.random.normal(ks[3], (HIDDEN_FC,), jnp.float32) * 0.01
    fc2_w = jax.random.normal(ks[4], (NUM_CLASSES, HIDDEN_FC), jnp.float32) * 0.05
    fc2_b = jax.random.normal(ks[5], (NUM_CLASSES,), jnp.float32) * 0.05
    return (conv_w, conv_b, fc1_w, fc1_b, fc2_w, fc2_b)


# Pure-JAX reference mirroring the PyTorch forward (NCHW) for validation.
def reference_forward(x_nchw, params):
    conv_w, conv_b, fc1_w, fc1_b, fc2_w, fc2_b = params
    y = lax.conv_general_dilated(x_nchw, conv_w, window_strides=(1, 1),
                                 padding=((1, 1), (1, 1)),
                                 dimension_numbers=("NCHW", "OIHW", "NCHW"))
    y = y + conv_b.reshape(1, -1, 1, 1)
    y = jnp.maximum(y, 0.0)
    y = lax.reduce_window(y, -jnp.inf, lax.max, (1, 1, 2, 2), (1, 1, 2, 2), "VALID")
    y = y.reshape(y.shape[0], -1)            # NCHW flatten == torch .view
    y = y @ fc1_w.T + fc1_b
    y = y @ fc2_w.T + fc2_b
    return y


if __name__ == "__main__":
    key = jax.random.PRNGKey(0)
    kx, kp = jax.random.split(key)
    x = jax.random.normal(kx, (2, CIN, H, W), jnp.float32)   # batch=2, CIFAR-shaped NCHW input
    params = init_params(kp)

    fwd = jax.jit(cifar_smnet_forward)
    out = jax.block_until_ready(fwd(x, params))
    ref = jax.block_until_ready(reference_forward(x, params))

    assert out.shape == (2, NUM_CLASSES)
    max_err = float(jnp.max(jnp.abs(out - ref)))
    # conv + fc1 operands are bf16 inside the kernel (native MXU / half the HBM
    # traffic); tolerance sized for bf16 rounding through the K=8192 reduction.
    assert jnp.allclose(out, ref, rtol=2e-2, atol=1e-2), max_err
    print("KERNEL_OK")
</pallas_src>

<mosaic_0001>
module attributes {stable_mosaic.version = 11 : i64} {
  func.func @fused_forward_kernel(%arg0: i32, %arg1: memref<512x432xbf16, #tpu.memory_space<vmem>>, %arg2: memref<432x512xbf16, #tpu.memory_space<vmem>>, %arg3: memref<1x512xf32, #tpu.memory_space<vmem>>, %arg4: memref<8192x128xbf16, #tpu.memory_space<vmem>>, %arg5: memref<1x128xf32, #tpu.memory_space<vmem>>, %arg6: memref<128x10xf32, #tpu.memory_space<vmem>>, %arg7: memref<1x10xf32, #tpu.memory_space<vmem>>, %arg8: memref<8x10xf32, #tpu.memory_space<vmem>>) attributes {dimension_semantics = [#tpu.dimension_semantics<parallel>], iteration_bounds = array<i64: 1>, scalar_prefetch = 0 : i64, scratch_operands = 0 : i64, tpu.core_type = #tpu.core_type<tc>, window_params = [{transform_indices = @transform_0, window_bounds = array<i64: 512, 432>}, {pipeline_mode = #tpu.pipeline_mode<synchronous>, transform_indices = @transform_1, window_bounds = array<i64: 432, 512>}, {pipeline_mode = #tpu.pipeline_mode<synchronous>, transform_indices = @transform_2, window_bounds = array<i64: 1, 512>}, {pipeline_mode = #tpu.pipeline_mode<synchronous>, transform_indices = @transform_3, window_bounds = array<i64: 8192, 128>}, {pipeline_mode = #tpu.pipeline_mode<synchronous>, transform_indices = @transform_4, window_bounds = array<i64: 1, 128>}, {pipeline_mode = #tpu.pipeline_mode<synchronous>, transform_indices = @transform_5, window_bounds = array<i64: 128, 10>}, {pipeline_mode = #tpu.pipeline_mode<synchronous>, transform_indices = @transform_6, window_bounds = array<i64: 1, 10>}, {transform_indices = @transform_7, window_bounds = array<i64: 8, 10>}]} {
    %c0 = arith.constant 0 : index
    %c0_0 = arith.constant 0 : index
    %0 = vector.load %arg1[%c0, %c0_0] : memref<512x432xbf16, #tpu.memory_space<vmem>>, vector<512x432xbf16>
    %c0_1 = arith.constant 0 : index
    %c0_2 = arith.constant 0 : index
    %1 = vector.load %arg2[%c0_1, %c0_2] : memref<432x512xbf16, #tpu.memory_space<vmem>>, vector<432x512xbf16>
    %cst = arith.constant dense<0.000000e+00> : vector<512x512xf32>
    %2 = tpu.matmul %0, %1, %cst {dimension_numbers = #tpu.dot_dimension_numbers<[1], [0], [0], [1], [0, 0, 1, 1], [], []>} : vector<512x432xbf16>, vector<432x512xbf16>, vector<512x512xf32> -> vector<512x512xf32>
    %3 = vector.extract_strided_slice %2 {offsets = [0, 0], sizes = [128, 512], strides = [1, 1]} : vector<512x512xf32> to vector<128x512xf32>
    %4 = vector.extract_strided_slice %2 {offsets = [128, 0], sizes = [128, 512], strides = [1, 1]} : vector<512x512xf32> to vector<128x512xf32>
    %5 = arith.maximumf %3, %4 : vector<128x512xf32>
    %6 = vector.extract_strided_slice %2 {offsets = [256, 0], sizes = [128, 512], strides = [1, 1]} : vector<512x512xf32> to vector<128x512xf32>
    %7 = vector.extract_strided_slice %2 {offsets = [384, 0], sizes = [128, 512], strides = [1, 1]} : vector<512x512xf32> to vector<128x512xf32>
    %8 = arith.maximumf %6, %7 : vector<128x512xf32>
    %9 = arith.maximumf %5, %8 : vector<128x512xf32>
    %c0_3 = arith.constant 0 : index
    %c0_4 = arith.constant 0 : index
    %10 = vector.load %arg3[%c0_3, %c0_4] : memref<1x512xf32, #tpu.memory_space<vmem>>, vector<1x512xf32>
    %11 = vector.broadcast %10 : vector<1x512xf32> to vector<128x512xf32>
    %12 = arith.addf %9, %11 : vector<128x512xf32>
    %cst_5 = arith.constant 0.000000e+00 : f32
    %13 = vector.broadcast %cst_5 : f32 to vector<128x512xf32>
    %14 = arith.maximumf %12, %13 : vector<128x512xf32>
    %15 = arith.truncf %14 : vector<128x512xf32> to vector<128x512xbf16>
    %cst_6 = arith.constant 0.000000e+00 : f32
    %16 = vector.broadcast %cst_6 : f32 to vector<8x128xf32>
    %17 = vector.extract_strided_slice %15 {offsets = [0, 0], sizes = [8, 512], strides = [1, 1]} : vector<128x512xbf16> to vector<8x512xbf16>
    %c0_7 = arith.constant 0 : index
    %c0_8 = arith.constant 0 : index
    %18 = vector.load %arg4[%c0_7, %c0_8] : memref<8192x128xbf16, #tpu.memory_space<vmem>>, vector<512x128xbf16>
    %cst_9 = arith.constant dense<0.000000e+00> : vector<8x128xf32>
    %19 = tpu.matmul %17, %18, %cst_9 {dimension_numbers = #tpu.dot_dimension_numbers<[1], [0], [0], [1], [0, 0, 1, 1], [], []>} : vector<8x512xbf16>, vector<512x128xbf16>, vector<8x128xf32> -> vector<8x128xf32>
    %20 = arith.addf %16, %19 : vector<8x128xf32>
    %21 = vector.extract_strided_slice %15 {offsets = [8, 0], sizes = [8, 512], strides = [1, 1]} : vector<128x512xbf16> to vector<8x512xbf16>
    %c512 = arith.constant 512 : index
    %c0_10 = arith.constant 0 : index
    %22 = vector.load %arg4[%c512, %c0_10] : memref<8192x128xbf16, #tpu.memory_space<vmem>>, vector<512x128xbf16>
    %cst_11 = arith.constant dense<0.000000e+00> : vector<8x128xf32>
    %23 = tpu.matmul %21, %22, %cst_11 {dimension_numbers = #tpu.dot_dimension_numbers<[1], [0], [0], [1], [0, 0, 1, 1], [], []>} : vector<8x512xbf16>, vector<512x128xbf16>, vector<8x128xf32> -> vector<8x128xf32>
    %24 = arith.addf %20, %23 : vector<8x128xf32>
    %25 = vector.extract_strided_slice %15 {offsets = [16, 0], sizes = [8, 512], strides = [1, 1]} : vector<128x512xbf16> to vector<8x512xbf16>
    %c1024 = arith.constant 1024 : index
    %c0_12 = arith.constant 0 : index
    %26 = vector.load %arg4[%c1024, %c0_12] : memref<8192x128xbf16, #tpu.memory_space<vmem>>, vector<512x128xbf16>
    %cst_13 = arith.constant dense<0.000000e+00> : vector<8x128xf32>
    %27 = tpu.matmul %25, %26, %cst_13 {dimension_numbers = #tpu.dot_dimension_numbers<[1], [0], [0], [1], [0, 0, 1, 1], [], []>} : vector<8x512xbf16>, vector<512x128xbf16>, vector<8x128xf32> -> vector<8x128xf32>
    %28 = arith.addf %24, %27 : vector<8x128xf32>
    %29 = vector.extract_strided_slice %15 {offsets = [24, 0], sizes = [8, 512], strides = [1, 1]} : vector<128x512xbf16> to vector<8x512xbf16>
    %c1536 = arith.constant 1536 : index
    %c0_14 = arith.constant 0 : index
    %30 = vector.load %arg4[%c1536, %c0_14] : memref<8192x128xbf16, #tpu.memory_space<vmem>>, vector<512x128xbf16>
    %cst_15 = arith.constant dense<0.000000e+00> : vector<8x128xf32>
    %31 = tpu.matmul %29, %30, %cst_15 {dimension_numbers = #tpu.dot_dimension_numbers<[1], [0], [0], [1], [0, 0, 1, 1], [], []>} : vector<8x512xbf16>, vector<512x128xbf16>, vector<8x128xf32> -> vector<8x128xf32>
    %32 = arith.addf %28, %31 : vector<8x128xf32>
    %33 = vector.extract_strided_slice %15 {offsets = [32, 0], sizes = [8, 512], strides = [1, 1]} : vector<128x512xbf16> to vector<8x512xbf16>
    %c2048 = arith.constant 2048 : index
    %c0_16 = arith.constant 0 : index
    %34 = vector.load %arg4[%c2048, %c0_16] : memref<8192x128xbf16, #tpu.memory_space<vmem>>, vector<512x128xbf16>
    %cst_17 = arith.constant dense<0.000000e+00> : vector<8x128xf32>
    %35 = tpu.matmul %33, %34, %cst_17 {dimension_numbers = #tpu.dot_dimension_numbers<[1], [0], [0], [1], [0, 0, 1, 1], [], []>} : vector<8x512xbf16>, vector<512x128xbf16>, vector<8x128xf32> -> vector<8x128xf32>
    %36 = arith.addf %32, %35 : vector<8x128xf32>
    %37 = vector.extract_strided_slice %15 {offsets = [40, 0], sizes = [8, 512], strides = [1, 1]} : vector<128x512xbf16> to vector<8x512xbf16>
    %c2560 = arith.constant 2560 : index
    %c0_18 = arith.constant 0 : index
    %38 = vector.load %arg4[%c2560, %c0_18] : memref<8192x128xbf16, #tpu.memory_space<vmem>>, vector<512x128xbf16>
    %cst_19 = arith.constant dense<0.000000e+00> : vector<8x128xf32>
    %39 = tpu.matmul %37, %38, %cst_19 {dimension_numbers = #tpu.dot_dimension_numbers<[1], [0], [0], [1], [0, 0, 1, 1], [], []>} : vector<8x512xbf16>, vector<512x128xbf16>, vector<8x128xf32> -> vector<8x128xf32>
    %40 = arith.addf %36, %39 : vector<8x128xf32>
    %41 = vector.extract_strided_slice %15 {offsets = [48, 0], sizes = [8, 512], strides = [1, 1]} : vector<128x512xbf16> to vector<8x512xbf16>
    %c3072 = arith.constant 3072 : index
    %c0_20 = arith.constant 0 : index
    %42 = vector.load %arg4[%c3072, %c0_20] : memref<8192x128xbf16, #tpu.memory_space<vmem>>, vector<512x128xbf16>
    %cst_21 = arith.constant dense<0.000000e+00> : vector<8x128xf32>
    %43 = tpu.matmul %41, %42, %cst_21 {dimension_numbers = #tpu.dot_dimension_numbers<[1], [0], [0], [1], [0, 0, 1, 1], [], []>} : vector<8x512xbf16>, vector<512x128xbf16>, vector<8x128xf32> -> vector<8x128xf32>
    %44 = arith.addf %40, %43 : vector<8x128xf32>
    %45 = vector.extract_strided_slice %15 {offsets = [56, 0], sizes = [8, 512], strides = [1, 1]} : vector<128x512xbf16> to vector<8x512xbf16>
    %c3584 = arith.constant 3584 : index
    %c0_22 = arith.constant 0 : index
    %46 = vector.load %arg4[%c3584, %c0_22] : memref<8192x128xbf16, #tpu.memory_space<vmem>>, vector<512x128xbf16>
    %cst_23 = arith.constant dense<0.000000e+00> : vector<8x128xf32>
    %47 = tpu.matmul %45, %46, %cst_23 {dimension_numbers = #tpu.dot_dimension_numbers<[1], [0], [0], [1], [0, 0, 1, 1], [], []>} : vector<8x512xbf16>, vector<512x128xbf16>, vector<8x128xf32> -> vector<8x128xf32>
    %48 = arith.addf %44, %47 : vector<8x128xf32>
    %49 = vector.extract_strided_slice %15 {offsets = [64, 0], sizes = [8, 512], strides = [1, 1]} : vector<128x512xbf16> to vector<8x512xbf16>
    %c4096 = arith.constant 4096 : index
    %c0_24 = arith.constant 0 : index
    %50 = vector.load %arg4[%c4096, %c0_24] : memref<8192x128xbf16, #tpu.memory_space<vmem>>, vector<512x128xbf16>
    %cst_25 = arith.constant dense<0.000000e+00> : vector<8x128xf32>
    %51 = tpu.matmul %49, %50, %cst_25 {dimension_numbers = #tpu.dot_dimension_numbers<[1], [0], [0], [1], [0, 0, 1, 1], [], []>} : vector<8x512xbf16>, vector<512x128xbf16>, vector<8x128xf32> -> vector<8x128xf32>
    %52 = arith.addf %48, %51 : vector<8x128xf32>
    %53 = vector.extract_strided_slice %15 {offsets = [72, 0], sizes = [8, 512], strides = [1, 1]} : vector<128x512xbf16> to vector<8x512xbf16>
    %c4608 = arith.constant 4608 : index
    %c0_26 = arith.constant 0 : index
    %54 = vector.load %arg4[%c4608, %c0_26] : memref<8192x128xbf16, #tpu.memory_space<vmem>>, vector<512x128xbf16>
    %cst_27 = arith.constant dense<0.000000e+00> : vector<8x128xf32>
    %55 = tpu.matmul %53, %54, %cst_27 {dimension_numbers = #tpu.dot_dimension_numbers<[1], [0], [0], [1], [0, 0, 1, 1], [], []>} : vector<8x512xbf16>, vector<512x128xbf16>, vector<8x128xf32> -> vector<8x128xf32>
    %56 = arith.addf %52, %55 : vector<8x128xf32>
    %57 = vector.extract_strided_slice %15 {offsets = [80, 0], sizes = [8, 512], strides = [1, 1]} : vector<128x512xbf16> to vector<8x512xbf16>
    %c5120 = arith.constant 5120 : index
    %c0_28 = arith.constant 0 : index
    %58 = vector.load %arg4[%c5120, %c0_28] : memref<8192x128xbf16, #tpu.memory_space<vmem>>, vector<512x128xbf16>
    %cst_29 = arith.constant dense<0.000000e+00> : vector<8x128xf32>
    %59 = tpu.matmul %57, %58, %cst_29 {dimension_numbers = #tpu.dot_dimension_numbers<[1], [0], [0], [1], [0, 0, 1, 1], [], []>} : vector<8x512xbf16>, vector<512x128xbf16>, vector<8x128xf32> -> vector<8x128xf32>
    %60 = arith.addf %56, %59 : vector<8x128xf32>
    %61 = vector.extract_strided_slice %15 {offsets = [88, 0], sizes = [8, 512], strides = [1, 1]} : vector<128x512xbf16> to vector<8x512xbf16>
    %c5632 = arith.constant 5632 : index
    %c0_30 = arith.constant 0 : index
    %62 = vector.load %arg4[%c5632, %c0_30] : memref<8192x128xbf16, #tpu.memory_space<vmem>>, vector<512x128xbf16>
    %cst_31 = arith.constant dense<0.000000e+00> : vector<8x128xf32>
    %63 = tpu.matmul %61, %62, %cst_31 {dimension_numbers = #tpu.dot_dimension_numbers<[1], [0], [0], [1], [0, 0, 1, 1], [], []>} : vector<8x512xbf16>, vector<512x128xbf16>, vector<8x128xf32> -> vector<8x128xf32>
    %64 = arith.addf %60, %63 : vector<8x128xf32>
    %65 = vector.extract_strided_slice %15 {offsets = [96, 0], sizes = [8, 512], strides = [1, 1]} : vector<128x512xbf16> to vector<8x512xbf16>
    %c6144 = arith.constant 6144 : index
    %c0_32 = arith.constant 0 : index
    %66 = vector.load %arg4[%c6144, %c0_32] : memref<8192x128xbf16, #tpu.memory_space<vmem>>, vector<512x128xbf16>
    %cst_33 = arith.constant dense<0.000000e+00> : vector<8x128xf32>
    %67 = tpu.matmul %65, %66, %cst_33 {dimension_numbers = #tpu.dot_dimension_numbers<[1], [0], [0], [1], [0, 0, 1, 1], [], []>} : vector<8x512xbf16>, vector<512x128xbf16>, vector<8x128xf32> -> vector<8x128xf32>
    %68 = arith.addf %64, %67 : vector<8x128xf32>
    %69 = vector.extract_strided_slice %15 {offsets = [104, 0], sizes = [8, 512], strides = [1, 1]} : vector<128x512xbf16> to vector<8x512xbf16>
    %c6656 = arith.constant 6656 : index
    %c0_34 = arith.constant 0 : index
    %70 = vector.load %arg4[%c6656, %c0_34] : memref<8192x128xbf16, #tpu.memory_space<vmem>>, vector<512x128xbf16>
    %cst_35 = arith.constant dense<0.000000e+00> : vector<8x128xf32>
    %71 = tpu.matmul %69, %70, %cst_35 {dimension_numbers = #tpu.dot_dimension_numbers<[1], [0], [0], [1], [0, 0, 1, 1], [], []>} : vector<8x512xbf16>, vector<512x128xbf16>, vector<8x128xf32> -> vector<8x128xf32>
    %72 = arith.addf %68, %71 : vector<8x128xf32>
    %73 = vector.extract_strided_slice %15 {offsets = [112, 0], sizes = [8, 512], strides = [1, 1]} : vector<128x512xbf16> to vector<8x512xbf16>
    %c7168 = arith.constant 7168 : index
    %c0_36 = arith.constant 0 : index
    %74 = vector.load %arg4[%c7168, %c0_36] : memref<8192x128xbf16, #tpu.memory_space<vmem>>, vector<512x128xbf16>
    %cst_37 = arith.constant dense<0.000000e+00> : vector<8x128xf32>
    %75 = tpu.matmul %73, %74, %cst_37 {dimension_numbers = #tpu.dot_dimension_numbers<[1], [0], [0], [1], [0, 0, 1, 1], [], []>} : vector<8x512xbf16>, vector<512x128xbf16>, vector<8x128xf32> -> vector<8x128xf32>
    %76 = arith.addf %72, %75 : vector<8x128xf32>
    %77 = vector.extract_strided_slice %15 {offsets = [120, 0], sizes = [8, 512], strides = [1, 1]} : vector<128x512xbf16> to vector<8x512xbf16>
    %c7680 = arith.constant 7680 : index
    %c0_38 = arith.constant 0 : index
    %78 = vector.load %arg4[%c7680, %c0_38] : memref<8192x128xbf16, #tpu.memory_space<vmem>>, vector<512x128xbf16>
    %cst_39 = arith.constant dense<0.000000e+00> : vector<8x128xf32>
    %79 = tpu.matmul %77, %78, %cst_39 {dimension_numbers = #tpu.dot_dimension_numbers<[1], [0], [0], [1], [0, 0, 1, 1], [], []>} : vector<8x512xbf16>, vector<512x128xbf16>, vector<8x128xf32> -> vector<8x128xf32>
    %80 = arith.addf %76, %79 : vector<8x128xf32>
    %c0_40 = arith.constant 0 : index
    %c0_41 = arith.constant 0 : index
    %81 = vector.load %arg5[%c0_40, %c0_41] : memref<1x128xf32, #tpu.memory_space<vmem>>, vector<1x128xf32>
    %82 = vector.broadcast %81 : vector<1x128xf32> to vector<8x128xf32>
    %83 = arith.addf %80, %82 : vector<8x128xf32>
    %c0_42 = arith.constant 0 : index
    %c0_43 = arith.constant 0 : index
    %84 = vector.load %arg6[%c0_42, %c0_43] : memref<128x10xf32, #tpu.memory_space<vmem>>, vector<128x10xf32>
    %cst_44 = arith.constant dense<0.000000e+00> : vector<8x10xf32>
    %85 = tpu.matmul %83, %84, %cst_44 {dimension_numbers = #tpu.dot_dimension_numbers<[1], [0], [0], [1], [0, 0, 1, 1], [], []>} : vector<8x128xf32>, vector<128x10xf32>, vector<8x10xf32> -> vector<8x10xf32>
    %c0_45 = arith.constant 0 : index
    %c0_46 = arith.constant 0 : index
    %86 = vector.load %arg7[%c0_45, %c0_46] : memref<1x10xf32, #tpu.memory_space<vmem>>, vector<1x10xf32>
    %87 = vector.broadcast %86 : vector<1x10xf32> to vector<8x10xf32>
    %88 = arith.addf %85, %87 : vector<8x10xf32>
    %c0_47 = arith.constant 0 : index
    %c0_48 = arith.constant 0 : index
    %89 = vector.load %arg8[%c0_47, %c0_48] : memref<8x10xf32, #tpu.memory_space<vmem>>, vector<8x10xf32>
    tpu.vector_store %arg8[%c0_47, %c0_48], %88 {strides = array<i32>} : memref<8x10xf32, #tpu.memory_space<vmem>>, vector<8x10xf32>,
    return
  }
  func.func @transform_0(%arg0: i32) -> (i32, i32) {
    %c0_i32 = arith.constant 0 : i32
    %c0_i32_0 = arith.constant 0 : i32
    return %arg0, %c0_i32 : i32, i32
  }
  func.func @transform_1(%arg0: i32) -> (i32, i32) {
    %c0_i32 = arith.constant 0 : i32
    %c0_i32_0 = arith.constant 0 : i32
    %c0_i32_1 = arith.constant 0 : i32
    return %c0_i32, %c0_i32_0 : i32, i32
  }
  func.func @transform_2(%arg0: i32) -> (i32, i32) {
    %c0_i32 = arith.constant 0 : i32
    %c0_i32_0 = arith.constant 0 : i32
    %c0_i32_1 = arith.constant 0 : i32
    return %c0_i32, %c0_i32_0 : i32, i32
  }
  func.func @transform_3(%arg0: i32) -> (i32, i32) {
    %c0_i32 = arith.constant 0 : i32
    %c0_i32_0 = arith.constant 0 : i32
    %c0_i32_1 = arith.constant 0 : i32
    return %c0_i32, %c0_i32_0 : i32, i32
  }
  func.func @transform_4(%arg0: i32) -> (i32, i32) {
    %c0_i32 = arith.constant 0 : i32
    %c0_i32_0 = arith.constant 0 : i32
    %c0_i32_1 = arith.constant 0 : i32
    return %c0_i32, %c0_i32_0 : i32, i32
  }
  func.func @transform_5(%arg0: i32) -> (i32, i32) {
    %c0_i32 = arith.constant 0 : i32
    %c0_i32_0 = arith.constant 0 : i32
    %c0_i32_1 = arith.constant 0 : i32
    return %c0_i32, %c0_i32_0 : i32, i32
  }
  func.func @transform_6(%arg0: i32) -> (i32, i32) {
    %c0_i32 = arith.constant 0 : i32
    %c0_i32_0 = arith.constant 0 : i32
    %c0_i32_1 = arith.constant 0 : i32
    return %c0_i32, %c0_i32_0 : i32, i32
  }
  func.func @transform_7(%arg0: i32) -> (i32, i32) {
    %c0_i32 = arith.constant 0 : i32
    %c0_i32_0 = arith.constant 0 : i32
    return %arg0, %c0_i32 : i32, i32
  }
}

</mosaic_0001>

<llo_original>
// kernel: tile.8
$region0: #{tile.8}
  #allocation0 [shape = 's32[1]{0}', space=sflag, size = 0x4, scoped, tag = 'scoped memory for tile.8']
  %s0 = inlined_call_operand.vmem [shape: f32[32], index: 0, kind: input, shape index: {}]
  %s1 = inlined_call_operand.vmem [shape: f32[16,32], index: 1, kind: output, shape index: {}]
  // Predicated region
  $region2: #{tile.8} parent=0 // pred_check
    _
  $region3: #{tile.8} parent=0 // pred_check_branch
    %3 = sbr.rel (0) target = $region5
  $region4: #{tile.8} parent=0 // pred_region
    _
  $region5: #{tile.8} parent=0 // pred_fallthru
    _
  %v4 = vld [vmem:[%s0] ss:$0 sm:$0xff]
  %5 = vst [vmem:[%s1] sm:$0xff] %v4
  %s6 = scalar_lea.vmem %s1, 8
  %7 = vst [vmem:[%s6] sm:$0xff] %v4

// kernel: tile.9
$region0: #{tile.9}
  %s0 = inlined_call_operand.vmem [shape: f32[16,32], index: 0, kind: input, shape index: {}]
  %s1 = inlined_call_operand.vmem [shape: f32[1,512], index: 1, kind: output, shape index: {}]
  $region1: #{tile.9} parent=0
    #allocation0 [shape = 'u8[16384]{0}', space=vmem, size = 0x4000, scoped, tag = 'scoped mem for output reshape']
    %v2 = vld [vmem:[%s0] ss:$4 sm:$0xf]
    %vm3 = vcmask 261120
    %4 = vst.msk [vmem:[#allocation0] ss:$8 sm:$0xf] %vm3, %v2
    %s5 = scalar_lea.vmem %s0, 3
    %v6 = vld [vmem:[%s5] ss:$4 sm:$0xf]
    %7 = vrot.lane.b32.xlu0 %v6, 96
    %v8 = vpop.permute.xlu0 %7
    %vm9 = vcmask 1048320
    %10 = vst.msk [vmem:[#allocation0] ss:$8 sm:$0xf] %vm9, %v8
    %s11 = scalar_lea.vmem %s0, 2
    %v12 = vld [vmem:[%s11] ss:$4 sm:$0xf]
    %13 = vrot.lane.b32.xlu0 %v12, 64
    %v14 = vpop.permute.xlu0 %13
    %vm15 = vcmask 785920
    %16 = vst.msk [vmem:[#allocation0] ss:$8 sm:$0xf] %vm15, %v14
    %s17 = scalar_lea.vmem %s0, 1
    %v18 = vld [vmem:[%s17] ss:$4 sm:$0xf]
    %19 = vrot.lane.b32.xlu0 %v18, 32
    %v20 = vpop.permute.xlu0 %19
    %vm21 = vcmask 523520
    %22 = vst.msk [vmem:[#allocation0] ss:$8 sm:$0xf] %vm21, %v20
    %s24 = sshllo.u32 0, 1
    %v26 = vld [vmem:[#allocation0] sm:%s24]
    %s27 = sshllo.u32 0, 1
    %28 = vst [vmem:[%s1] sm:%s27] %v26
    %s29 = scalar_lea.vmem [#allocation0], 8
    %v30 = vld [vmem:[%s29] sm:%s24]
    %s31 = sshllo.u32 0, 1
    %s32 = scalar_lea.vmem %s1, 1
    %33 = vst [vmem:[%s32] sm:%s31] %v30
    %s34 = scalar_lea.vmem [#allocation0], 16
    %v35 = vld [vmem:[%s34] sm:%s24]
    %s36 = sshllo.u32 0, 1
    %s37 = smul.addr 1, 2
    %s38 = scalar_lea.vmem %s1, %s37
    %39 = vst [vmem:[%s38] sm:%s36] %v35
    %s40 = scalar_lea.vmem [#allocation0], 24
    %v41 = vld [vmem:[%s40] sm:%s24]
    %s42 = sshllo.u32 0, 1
    %s43 = smul.addr 1, 3
    %s44 = scalar_lea.vmem %s1, %s43
    %45 = vst [vmem:[%s44] sm:%s42] %v41

// kernel: cifar_smnet_forward.1
$region0: #{cifar_smnet_forward.1}
  #allocation0 [shape = 'u32[]', space=smem, size = 0x4, offset = 0x4, fixed_abs, tag = 'smem constant byte address 0x4 - core index']
  #allocation1 [shape = 'u32[144,128]{1,0:T(1,128)}', space=vmem, size = 0x12000, scoped, tag = 'internal scratch']
  %s0 = inlined_call_operand.vmem [shape: bf16[512,432], index: 0, kind: input, shape index: {}]
  %s1 = inlined_call_operand.vmem [shape: bf16[432,512], index: 1, kind: input, shape index: {}]
  %s2 = inlined_call_operand.vmem [shape: f32[1,512], index: 2, kind: input, shape index: {}]
  %s3 = inlined_call_operand.vmem [shape: bf16[8192,128], index: 3, kind: input, shape index: {}]
  %s4 = inlined_call_operand.vmem [shape: f32[1,128], index: 4, kind: input, shape index: {}]
  %s5 = inlined_call_operand.vmem [shape: f32[128,10], index: 5, kind: input, shape index: {}]
  %s6 = inlined_call_operand.vmem [shape: f32[1,10], index: 6, kind: input, shape index: {}]
  %s7 = inlined_call_operand.vmem [shape: f32[8,10], index: 7, kind: output, shape index: {}]
  %s8 = sld [smem:[#allocation0]]
  $region38: #{cifar_smnet_forward.1} parent=0
    _
  %s10 = ssub.s32 1, %s8
  %s11 = scalar_select 0, %s10, %s8
  // Predicated region
  $region2: #{cifar_smnet_forward.1} parent=0 // pred_check
    _
  $region3: #{cifar_smnet_forward.1} parent=0 // pred_check_branch
    %13 = sbr.rel (0) target = $region5
  $region4: #{cifar_smnet_forward.1} parent=0 // pred_region
    _
  $region5: #{cifar_smnet_forward.1} parent=0 // pred_fallthru
    _
  // Predicated region
  $region6: #{cifar_smnet_forward.1} parent=0 // pred_check
    _
  $region7: #{cifar_smnet_forward.1} parent=0 // pred_check_branch
    %15 = sbr.rel (0) target = $region9
  $region8: #{cifar_smnet_forward.1} parent=0 // pred_region
    _
  $region9: #{cifar_smnet_forward.1} parent=0 // pred_fallthru
    _
  // Predicated region
  $region10: #{cifar_smnet_forward.1} parent=0 // pred_check
    _
  $region11: #{cifar_smnet_forward.1} parent=0 // pred_check_branch
    %17 = sbr.rel (0) target = $region13
  $region12: #{cifar_smnet_forward.1} parent=0 // pred_region
    _
  $region13: #{cifar_smnet_forward.1} parent=0 // pred_fallthru
    _
  // Predicated region
  $region14: #{cifar_smnet_forward.1} parent=0 // pred_check
    _
  $region15: #{cifar_smnet_forward.1} parent=0 // pred_check_branch
    %19 = sbr.rel (0) target = $region17
  $region16: #{cifar_smnet_forward.1} parent=0 // pred_region
    _
  $region17: #{cifar_smnet_forward.1} parent=0 // pred_fallthru
    _
  // Predicated region
  $region18: #{cifar_smnet_forward.1} parent=0 // pred_check
    _
  $region19: #{cifar_smnet_forward.1} parent=0 // pred_check_branch
    %21 = sbr.rel (0) target = $region21
  $region20: #{cifar_smnet_forward.1} parent=0 // pred_region
    _
  $region21: #{cifar_smnet_forward.1} parent=0 // pred_fallthru
    _
  // Predicated region
  $region22: #{cifar_smnet_forward.1} parent=0 // pred_check
    _
  $region23: #{cifar_smnet_forward.1} parent=0 // pred_check_branch
    %23 = sbr.rel (0) target = $region25
  $region24: #{cifar_smnet_forward.1} parent=0 // pred_region
    _
  $region25: #{cifar_smnet_forward.1} parent=0 // pred_fallthru
    _
  // Predicated region
  $region26: #{cifar_smnet_forward.1} parent=0 // pred_check
    _
  $region27: #{cifar_smnet_forward.1} parent=0 // pred_check_branch
    %25 = sbr.rel (0) target = $region29
  $region28: #{cifar_smnet_forward.1} parent=0 // pred_region
    _
  $region29: #{cifar_smnet_forward.1} parent=0 // pred_fallthru
    _
  %v27 = vld [vmem:[%s0] sm:$0xff]
  %v28 = vld [vmem:[%s0 + $0x8] sm:$0xff]
  %v29 = vld [vmem:[%s0 + $0x10] sm:$0xff]
  %v30 = vld [vmem:[%s0 + $0x18] sm:$0xff]
  %v31 = vld [vmem:[%s0 + $0x20] sm:$0xff]
  %v32 = vld [vmem:[%s0 + $0x28] sm:$0xff]
  %v33 = vld [vmem:[%s0 + $0x30] sm:$0xff]
  %v34 = vld [vmem:[%s0 + $0x38] sm:$0xff]
  %v35 = vld [vmem:[%s0 + $0x40] sm:$0xff]
  %v36 = vld [vmem:[%s0 + $0x48] sm:$0xff]
  %v37 = vld [vmem:[%s0 + $0x50] sm:$0xff]
  %v38 = vld [vmem:[%s0 + $0x58] sm:$0xff]
  %v39 = vld [vmem:[%s0 + $0x60] sm:$0xff]
  %v40 = vld [vmem:[%s0 + $0x68] sm:$0xff]
  %v41 = vld [vmem:[%s0 + $0x70] sm:$0xff]
  %v42 = vld [vmem:[%s0 + $0x78] sm:$0xff]
  %v43 = vld [vmem:[%s0 + $0x80] sm:$0xff]
  %v44 = vld [vmem:[%s0 + $0x88] sm:$0xff]
  %v45 = vld [vmem:[%s0 + $0x90] sm:$0xff]
  %v46 = vld [vmem:[%s0 + $0x98] sm:$0xff]
  %v47 = vld [vmem:[%s0 + $0xa0] sm:$0xff]
  %v48 = vld [vmem:[%s0 + $0xa8] sm:$0xff]
  %v49 = vld [vmem:[%s0 + $0xb0] sm:$0xff]
  %v50 = vld [vmem:[%s0 + $0xb8] sm:$0xff]
  %v51 = vld [vmem:[%s0 + $0xc0] sm:$0xff]
  %v52 = vld [vmem:[%s0 + $0xc8] sm:$0xff]
  %v53 = vld [vmem:[%s0 + $0xd0] sm:$0xff]
  %v54 = vld [vmem:[%s0 + $0xd8] sm:$0xff]
  %v55 = vld [vmem:[%s0 + $0xe0] sm:$0xff]
  %v56 = vld [vmem:[%s0 + $0xe8] sm:$0xff]
  %v57 = vld [vmem:[%s0 + $0xf0] sm:$0xff]
  %v58 = vld [vmem:[%s0 + $0xf8] sm:$0xff]
  %v59 = vld [vmem:[%s0 + $0x100] sm:$0xff]
  %v60 = vld [vmem:[%s0 + $0x108] sm:$0xff]
  %v61 = vld [vmem:[%s0 + $0x110] sm:$0xff]
  %v62 = vld [vmem:[%s0 + $0x118] sm:$0xff]
  %v63 = vld [vmem:[%s0 + $0x120] sm:$0xff]
  %v64 = vld [vmem:[%s0 + $0x128] sm:$0xff]
  %v65 = vld [vmem:[%s0 + $0x130] sm:$0xff]
  %v66 = vld [vmem:[%s0 + $0x138] sm:$0xff]
  %v67 = vld [vmem:[%s0 + $0x140] sm:$0xff]
  %v68 = vld [vmem:[%s0 + $0x148] sm:$0xff]
  %v69 = vld [vmem:[%s0 + $0x150] sm:$0xff]
  %v70 = vld [vmem:[%s0 + $0x158] sm:$0xff]
  %v71 = vld [vmem:[%s0 + $0x160] sm:$0xff]
  %v72 = vld [vmem:[%s0 + $0x168] sm:$0xff]
  %v73 = vld [vmem:[%s0 + $0x170] sm:$0xff]
  %v74 = vld [vmem:[%s0 + $0x178] sm:$0xff]
  %v75 = vld [vmem:[%s0 + $0x180] sm:$0xff]
  %v76 = vld [vmem:[%s0 + $0x188] sm:$0xff]
  %v77 = vld [vmem:[%s0 + $0x190] sm:$0xff]
  %v78 = vld [vmem:[%s0 + $0x198] sm:$0xff]
  %v79 = vld [vmem:[%s0 + $0x1a0] sm:$0xff]
  %v80 = vld [vmem:[%s0 + $0x1a8] sm:$0xff]
  %v81 = vld [vmem:[%s0 + $0x1b0] sm:$0xff]
  %v82 = vld [vmem:[%s0 + $0x1b8] sm:$0xff]
  %v83 = vld [vmem:[%s0 + $0x1c0] sm:$0xff]
  %v84 = vld [vmem:[%s0 + $0x1c8] sm:$0xff]
  %v85 = vld [vmem:[%s0 + $0x1d0] sm:$0xff]
  %v86 = vld [vmem:[%s0 + $0x1d8] sm:$0xff]
  %v87 = vld [vmem:[%s0 + $0x1e0] sm:$0xff]
  %v88 = vld [vmem:[%s0 + $0x1e8] sm:$0xff]
  %v89 = vld [vmem:[%s0 + $0x1f0] sm:$0xff]
  %v90 = vld [vmem:[%s0 + $0x1f8] sm:$0xff]
  %v91 = vld [vmem:[%s0 + $0x200] sm:$0xff]
  %v92 = vld [vmem:[%s0 + $0x208] sm:$0xff]
  %v93 = vld [vmem:[%s0 + $0x210] sm:$0xff]
  %v94 = vld [vmem:[%s0 + $0x218] sm:$0xff]
  %v95 = vld [vmem:[%s0 + $0x220] sm:$0xff]
  %v96 = vld [vmem:[%s0 + $0x228] sm:$0xff]
  %v97 = vld [vmem:[%s0 + $0x230] sm:$0xff]
  %v98 = vld [vmem:[%s0 + $0x238] sm:$0xff]
  %v99 = vld [vmem:[%s0 + $0x240] sm:$0xff]
  %v100 = vld [vmem:[%s0 + $0x248] sm:$0xff]
  %v101 = vld [vmem:[%s0 + $0x250] sm:$0xff]
  %v102 = vld [vmem:[%s0 + $0x258] sm:$0xff]
  %v103 = vld [vmem:[%s0 + $0x260] sm:$0xff]
  %v104 = vld [vmem:[%s0 + $0x268] sm:$0xff]
  %v105 = vld [vmem:[%s0 + $0x270] sm:$0xff]
  %v106 = vld [vmem:[%s0 + $0x278] sm:$0xff]
  %v107 = vld [vmem:[%s0 + $0x280] sm:$0xff]
  %v108 = vld [vmem:[%s0 + $0x288] sm:$0xff]
  %v109 = vld [vmem:[%s0 + $0x290] sm:$0xff]
  %v110 = vld [vmem:[%s0 + $0x298] sm:$0xff]
  %v111 = vld [vmem:[%s0 + $0x2a0] sm:$0xff]
  %v112 = vld [vmem:[%s0 + $0x2a8] sm:$0xff]
  %v113 = vld [vmem:[%s0 + $0x2b0] sm:$0xff]
  %v114 = vld [vmem:[%s0 + $0x2b8] sm:$0xff]
  %v115 = vld [vmem:[%s0 + $0x2c0] sm:$0xff]
  %v116 = vld [vmem:[%s0 + $0x2c8] sm:$0xff]
  %v117 = vld [vmem:[%s0 + $0x2d0] sm:$0xff]
  %v118 = vld [vmem:[%s0 + $0x2d8] sm:$0xff]
  %v119 = vld [vmem:[%s0 + $0x2e0] sm:$0xff]
  %v120 = vld [vmem:[%s0 + $0x2e8] sm:$0xff]
  %v121 = vld [vmem:[%s0 + $0x2f0] sm:$0xff]
  %v122 = vld [vmem:[%s0 + $0x2f8] sm:$0xff]
  %v123 = vld [vmem:[%s0 + $0x300] sm:$0xff]
  %v124 = vld [vmem:[%s0 + $0x308] sm:$0xff]
  %v125 = vld [vmem:[%s0 + $0x310] sm:$0xff]
  %v126 = vld [vmem:[%s0 + $0x318] sm:$0xff]
  %v127 = vld [vmem:[%s0 + $0x320] sm:$0xff]
  %v128 = vld [vmem:[%s0 + $0x328] sm:$0xff]
  %v129 = vld [vmem:[%s0 + $0x330] sm:$0xff]
  %v130 = vld [vmem:[%s0 + $0x338] sm:$0xff]
  %v131 = vld [vmem:[%s0 + $0x340] sm:$0xff]
  %v132 = vld [vmem:[%s0 + $0x348] sm:$0xff]
  %v133 = vld [vmem:[%s0 + $0x350] sm:$0xff]
  %v134 = vld [vmem:[%s0 + $0x358] sm:$0xff]
  %v135 = vld [vmem:[%s0 + $0x360] sm:$0xff]
  %v136 = vld [vmem:[%s0 + $0x368] sm:$0xff]
  %v137 = vld [vmem:[%s0 + $0x370] sm:$0xff]
  %v138 = vld [vmem:[%s0 + $0x378] sm:$0xff]
  %v139 = vld [vmem:[%s0 + $0x380] sm:$0xff]
  %v140 = vld [vmem:[%s0 + $0x388] sm:$0xff]
  %v141 = vld [vmem:[%s0 + $0x390] sm:$0xff]
  %v142 = vld [vmem:[%s0 + $0x398] sm:$0xff]
  %v143 = vld [vmem:[%s0 + $0x3a0] sm:$0xff]
  %v144 = vld [vmem:[%s0 + $0x3a8] sm:$0xff]
  %v145 = vld [vmem:[%s0 + $0x3b0] sm:$0xff]
  %v146 = vld [vmem:[%s0 + $0x3b8] sm:$0xff]
  %v147 = vld [vmem:[%s0 + $0x3c0] sm:$0xff]
  %v148 = vld [vmem:[%s0 + $0x3c8] sm:$0xff]
  %v149 = vld [vmem:[%s0 + $0x3d0] sm:$0xff]
  %v150 = vld [vmem:[%s0 + $0x3d8] sm:$0xff]
  %v151 = vld [vmem:[%s0 + $0x3e0] sm:$0xff]
  %v152 = vld [vmem:[%s0 + $0x3e8] sm:$0xff]
  %v153 = vld [vmem:[%s0 + $0x3f0] sm:$0xff]
  %v154 = vld [vmem:[%s0 + $0x3f8] sm:$0xff]
  %v155 = vld [vmem:[%s1] sm:$0xff]
  %v156 = vld [vmem:[%s1 + $0x8] sm:$0xff]
  %v157 = vld [vmem:[%s1 + $0x10] sm:$0xff]
  %v158 = vld [vmem:[%s1 + $0x18] sm:$0xff]
  %v159 = vld [vmem:[%s1 + $0x20] sm:$0xff]
  %v160 = vld [vmem:[%s1 + $0x28] sm:$0xff]
  %v161 = vld [vmem:[%s1 + $0x30] sm:$0xff]
  %v162 = vld [vmem:[%s1 + $0x38] sm:$0xff]
  %v163 = vld [vmem:[%s1 + $0x40] sm:$0xff]
  %v164 = vld [vmem:[%s1 + $0x48] sm:$0xff]
  %v165 = vld [vmem:[%s1 + $0x50] sm:$0xff]
  %v166 = vld [vmem:[%s1 + $0x58] sm:$0xff]
  %v167 = vld [vmem:[%s1 + $0x60] sm:$0xff]
  %v168 = vld [vmem:[%s1 + $0x68] sm:$0xff]
  %v169 = vld [vmem:[%s1 + $0x70] sm:$0xff]
  %v170 = vld [vmem:[%s1 + $0x78] sm:$0xff]
  %v171 = vld [vmem:[%s1 + $0x80] sm:$0xff]
  %v172 = vld [vmem:[%s1 + $0x88] sm:$0xff]
  %v173 = vld [vmem:[%s1 + $0x90] sm:$0xff]
  %v174 = vld [vmem:[%s1 + $0x98] sm:$0xff]
  %v175 = vld [vmem:[%s1 + $0xa0] sm:$0xff]
  %v176 = vld [vmem:[%s1 + $0xa8] sm:$0xff]
  %v177 = vld [vmem:[%s1 + $0xb0] sm:$0xff]
  %v178 = vld [vmem:[%s1 + $0xb8] sm:$0xff]
  %v179 = vld [vmem:[%s1 + $0xc0] sm:$0xff]
  %v180 = vld [vmem:[%s1 + $0xc8] sm:$0xff]
  %v181 = vld [vmem:[%s1 + $0xd0] sm:$0xff]
  %v182 = vld [vmem:[%s1 + $0xd8] sm:$0xff]
  %v183 = vld [vmem:[%s1 + $0xe0] sm:$0xff]
  %v184 = vld [vmem:[%s1 + $0xe8] sm:$0xff]
  %v185 = vld [vmem:[%s1 + $0xf0] sm:$0xff]
  %v186 = vld [vmem:[%s1 + $0xf8] sm:$0xff]
  %v187 = vld [vmem:[%s1 + $0x100] sm:$0xff]
  %v188 = vld [vmem:[%s1 + $0x108] sm:$0xff]
  %v189 = vld [vmem:[%s1 + $0x110] sm:$0xff]
  %v190 = vld [vmem:[%s1 + $0x118] sm:$0xff]
  %v191 = vld [vmem:[%s1 + $0x120] sm:$0xff]
  %v192 = vld [vmem:[%s1 + $0x128] sm:$0xff]
  %v193 = vld [vmem:[%s1 + $0x130] sm:$0xff]
  %v194 = vld [vmem:[%s1 + $0x138] sm:$0xff]
  %v195 = vld [vmem:[%s1 + $0x140] sm:$0xff]
  %v196 = vld [vmem:[%s1 + $0x148] sm:$0xff]
  %v197 = vld [vmem:[%s1 + $0x150] sm:$0xff]
  %v198 = vld [vmem:[%s1 + $0x158] sm:$0xff]
  %v199 = vld [vmem:[%s1 + $0x160] sm:$0xff]
  %v200 = vld [vmem:[%s1 + $0x168] sm:$0xff]
  %v201 = vld [vmem:[%s1 + $0x170] sm:$0xff]
  %v202 = vld [vmem:[%s1 + $0x178] sm:$0xff]
  %v203 = vld [vmem:[%s1 + $0x180] sm:$0xff]
  %v204 = vld [vmem:[%s1 + $0x188] sm:$0xff]
  %v205 = vld [vmem:[%s1 + $0x190] sm:$0xff]
  %v206 = vld [vmem:[%s1 + $0x198] sm:$0xff]
  %v207 = vld [vmem:[%s1 + $0x1a0] sm:$0xff]
  %v208 = vld [vmem:[%s1 + $0x1a8] sm:$0xff]
  %v209 = vld [vmem:[%s1 + $0x1b0] sm:$0xff]
  %v210 = vld [vmem:[%s1 + $0x1b8] sm:$0xff]
  %v211 = vld [vmem:[%s1 + $0x1c0] sm:$0xff]
  %v212 = vld [vmem:[%s1 + $0x1c8] sm:$0xff]
  %v213 = vld [vmem:[%s1 + $0x1d0] sm:$0xff]
  %v214 = vld [vmem:[%s1 + $0x1d8] sm:$0xff]
  %v215 = vld [vmem:[%s1 + $0x1e0] sm:$0xff]
  %v216 = vld [vmem:[%s1 + $0x1e8] sm:$0xff]
  %v217 = vld [vmem:[%s1 + $0x1f0] sm:$0xff]
  %v218 = vld [vmem:[%s1 + $0x1f8] sm:$0xff]
  %v219 = vld [vmem:[%s1 + $0x200] sm:$0xff]
  %v220 = vld [vmem:[%s1 + $0x208] sm:$0xff]
  %v221 = vld [vmem:[%s1 + $0x210] sm:$0xff]
  %v222 = vld [vmem:[%s1 + $0x218] sm:$0xff]
  %v223 = vld [vmem:[%s1 + $0x220] sm:$0xff]
  %v224 = vld [vmem:[%s1 + $0x228] sm:$0xff]
  %v225 = vld [vmem:[%s1 + $0x230] sm:$0xff]
  %v226 = vld [vmem:[%s1 + $0x238] sm:$0xff]
  %v227 = vld [vmem:[%s1 + $0x240] sm:$0xff]
  %v228 = vld [vmem:[%s1 + $0x248] sm:$0xff]
  %v229 = vld [vmem:[%s1 + $0x250] sm:$0xff]
  %v230 = vld [vmem:[%s1 + $0x258] sm:$0xff]
  %v231 = vld [vmem:[%s1 + $0x260] sm:$0xff]
  %v232 = vld [vmem:[%s1 + $0x268] sm:$0xff]
  %v233 = vld [vmem:[%s1 + $0x270] sm:$0xff]
  %v234 = vld [vmem:[%s1 + $0x278] sm:$0xff]
  %v235 = vld [vmem:[%s1 + $0x280] sm:$0xff]
  %v236 = vld [vmem:[%s1 + $0x288] sm:$0xff]
  %v237 = vld [vmem:[%s1 + $0x290] sm:$0xff]
  %v238 = vld [vmem:[%s1 + $0x298] sm:$0xff]
  %v239 = vld [vmem:[%s1 + $0x2a0] sm:$0xff]
  %v240 = vld [vmem:[%s1 + $0x2a8] sm:$0xff]
  %v241 = vld [vmem:[%s1 + $0x2b0] sm:$0xff]
  %v242 = vld [vmem:[%s1 + $0x2b8] sm:$0xff]
  %v243 = vld [vmem:[%s1 + $0x2c0] sm:$0xff]
  %v244 = vld [vmem:[%s1 + $0x2c8] sm:$0xff]
  %v245 = vld [vmem:[%s1 + $0x2d0] sm:$0xff]
  %v246 = vld [vmem:[%s1 + $0x2d8] sm:$0xff]
  %v247 = vld [vmem:[%s1 + $0x2e0] sm:$0xff]
  %v248 = vld [vmem:[%s1 + $0x2e8] sm:$0xff]
  %v249 = vld [vmem:[%s1 + $0x2f0] sm:$0xff]
  %v250 = vld [vmem:[%s1 + $0x2f8] sm:$0xff]
  %v251 = vld [vmem:[%s1 + $0x300] sm:$0xff]
  %v252 = vld [vmem:[%s1 + $0x308] sm:$0xff]
  %v253 = vld [vmem:[%s1 + $0x310] sm:$0xff]
  %v254 = vld [vmem:[%s1 + $0x318] sm:$0xff]
  %v255 = vld [vmem:[%s1 + $0x320] sm:$0xff]
  %v256 = vld [vmem:[%s1 + $0x328] sm:$0xff]
  %v257 = vld [vmem:[%s1 + $0x330] sm:$0xff]
  %v258 = vld [vmem:[%s1 + $0x338] sm:$0xff]
  %v259 = vld [vmem:[%s1 + $0x340] sm:$0xff]
  %v260 = vld [vmem:[%s1 + $0x348] sm:$0xff]
  %v261 = vld [vmem:[%s1 + $0x350] sm:$0xff]
  %v262 = vld [vmem:[%s1 + $0x358] sm:$0xff]
  %v391 = vunpack.c.l.b16 %v27
  %v392 = vunpack.c.h.b16 %v27
  %v393 = vunpack.c.l.b16 %v28
  %v394 = vunpack.c.h.b16 %v28
  %v395 = vunpack.c.l.b16 %v29
  %v396 = vunpack.c.h.b16 %v29
  %v397 = vunpack.c.l.b16 %v30
  %v398 = vunpack.c.h.b16 %v30
  %v399 = vunpack.c.l.b16 %v31
  %v400 = vunpack.c.h.b16 %v31
  %v401 = vunpack.c.l.b16 %v32
  %v402 = vunpack.c.h.b16 %v32
  %v403 = vunpack.c.l.b16 %v33
  %v404 = vunpack.c.h.b16 %v33
  %v405 = vunpack.c.l.b16 %v34
  %v406 = vunpack.c.h.b16 %v34
  %v407 = vunpack.c.l.b16 %v35
  %v408 = vunpack.c.h.b16 %v35
  %v409 = vunpack.c.l.b16 %v36
  %v410 = vunpack.c.h.b16 %v36
  %v411 = vunpack.c.l.b16 %v37
  %v412 = vunpack.c.h.b16 %v37
  %v413 = vunpack.c.l.b16 %v38
  %v414 = vunpack.c.h.b16 %v38
  %v415 = vunpack.c.l.b16 %v39
  %v416 = vunpack.c.h.b16 %v39
  %v417 = vunpack.c.l.b16 %v40
  %v418 = vunpack.c.h.b16 %v40
  %v419 = vunpack.c.l.b16 %v41
  %v420 = vunpack.c.h.b16 %v41
  %v421 = vunpack.c.l.b16 %v42
  %v422 = vunpack.c.h.b16 %v42
  %v423 = vunpack.c.l.b16 %v43
  %v424 = vunpack.c.h.b16 %v43
  %v425 = vunpack.c.l.b16 %v44
  %v426 = vunpack.c.h.b16 %v44
  %v427 = vunpack.c.l.b16 %v45
  %v428 = vunpack.c.h.b16 %v45
  %v429 = vunpack.c.l.b16 %v46
  %v430 = vunpack.c.h.b16 %v46
  %v431 = vunpack.c.l.b16 %v47
  %v432 = vunpack.c.h.b16 %v47
  %v433 = vunpack.c.l.b16 %v48
  %v434 = vunpack.c.h.b16 %v48
  %v435 = vunpack.c.l.b16 %v49
  %v436 = vunpack.c.h.b16 %v49
  %v437 = vunpack.c.l.b16 %v50
  %v438 = vunpack.c.h.b16 %v50
  %v439 = vunpack.c.l.b16 %v51
  %v440 = vunpack.c.h.b16 %v51
  %v441 = vunpack.c.l.b16 %v52
  %v442 = vunpack.c.h.b16 %v52
  %v443 = vunpack.c.l.b16 %v53
  %v444 = vunpack.c.h.b16 %v53
  %v445 = vunpack.c.l.b16 %v54
  %v446 = vunpack.c.h.b16 %v54
  %v447 = vunpack.c.l.b16 %v55
  %v448 = vunpack.c.h.b16 %v55
  %v449 = vunpack.c.l.b16 %v56
  %v450 = vunpack.c.h.b16 %v56
  %v451 = vunpack.c.l.b16 %v57
  %v452 = vunpack.c.h.b16 %v57
  %v453 = vunpack.c.l.b16 %v58
  %v454 = vunpack.c.h.b16 %v58
  %v455 = vunpack.c.l.b16 %v59
  %v456 = vunpack.c.h.b16 %v59
  %v457 = vunpack.c.l.b16 %v60
  %v458 = vunpack.c.h.b16 %v60
  %v459 = vunpack.c.l.b16 %v61
  %v460 = vunpack.c.h.b16 %v61
  %v461 = vunpack.c.l.b16 %v62
  %v462 = vunpack.c.h.b16 %v62
  %v463 = vunpack.c.l.b16 %v63
  %v464 = vunpack.c.h.b16 %v63
  %v465 = vunpack.c.l.b16 %v64
  %v466 = vunpack.c.h.b16 %v64
  %v467 = vunpack.c.l.b16 %v65
  %v468 = vunpack.c.h.b16 %v65
  %v469 = vunpack.c.l.b16 %v66
  %v470 = vunpack.c.h.b16 %v66
  %v471 = vunpack.c.l.b16 %v67
  %v472 = vunpack.c.h.b16 %v67
  %v473 = vunpack.c.l.b16 %v68
  %v474 = vunpack.c.h.b16 %v68
  %v475 = vunpack.c.l.b16 %v69
  %v476 = vunpack.c.h.b16 %v69
  %v477 = vunpack.c.l.b16 %v70
  %v478 = vunpack.c.h.b16 %v70
  %v479 = vunpack.c.l.b16 %v71
  %v480 = vunpack.c.h.b16 %v71
  %v481 = vunpack.c.l.b16 %v72
  %v482 = vunpack.c.h.b16 %v72
  %v483 = vunpack.c.l.b16 %v73
  %v484 = vunpack.c.h.b16 %v73
  %v485 = vunpack.c.l.b16 %v74
  %v486 = vunpack.c.h.b16 %v74
  %v487 = vunpack.c.l.b16 %v75
  %v488 = vunpack.c.h.b16 %v75
  %v489 = vunpack.c.l.b16 %v76
  %v490 = vunpack.c.h.b16 %v76
  %v491 = vunpack.c.l.b16 %v77
  %v492 = vunpack.c.h.b16 %v77
  %v493 = vunpack.c.l.b16 %v78
  %v494 = vunpack.c.h.b16 %v78
  %v495 = vunpack.c.l.b16 %v79
  %v496 = vunpack.c.h.b16 %v79
  %v497 = vunpack.c.l.b16 %v80
  %v498 = vunpack.c.h.b16 %v80
  %v499 = vunpack.c.l.b16 %v81
  %v500 = vunpack.c.h.b16 %v81
  %v501 = vunpack.c.l.b16 %v82
  %v502 = vunpack.c.h.b16 %v82
  %v503 = vunpack.c.l.b16 %v83
  %v504 = vunpack.c.h.b16 %v83
  %v505 = vunpack.c.l.b16 %v84
  %v506 = vunpack.c.h.b16 %v84
  %v507 = vunpack.c.l.b16 %v85
  %v508 = vunpack.c.h.b16 %v85
  %v509 = vunpack.c.l.b16 %v86
  %v510 = vunpack.c.h.b16 %v86
  %v511 = vunpack.c.l.b16 %v87
  %v512 = vunpack.c.h.b16 %v87
  %v513 = vunpack.c.l.b16 %v88
  %v514 = vunpack.c.h.b16 %v88
  %v515 = vunpack.c.l.b16 %v89
  %v516 = vunpack.c.h.b16 %v89
  %v517 = vunpack.c.l.b16 %v90
  %v518 = vunpack.c.h.b16 %v90
  %v519 = vunpack.c.l.b16 %v91
  %v520 = vunpack.c.h.b16 %v91
  %v521 = vunpack.c.l.b16 %v92
  %v522 = vunpack.c.h.b16 %v92
  %v523 = vunpack.c.l.b16 %v93
  %v524 = vunpack.c.h.b16 %v93
  %v525 = vunpack.c.l.b16 %v94
  %v526 = vunpack.c.h.b16 %v94
  %v527 = vunpack.c.l.b16 %v95
  %v528 = vunpack.c.h.b16 %v95
  %v529 = vunpack.c.l.b16 %v96
  %v530 = vunpack.c.h.b16 %v96
  %v531 = vunpack.c.l.b16 %v97
  %v532 = vunpack.c.h.b16 %v97
  %v533 = vunpack.c.l.b16 %v98
  %v534 = vunpack.c.h.b16 %v98
  %v535 = vunpack.c.l.b16 %v99
  %v536 = vunpack.c.h.b16 %v99
  %v537 = vunpack.c.l.b16 %v100
  %v538 = vunpack.c.h.b16 %v100
  %v539 = vunpack.c.l.b16 %v101
  %v540 = vunpack.c.h.b16 %v101
  %v541 = vunpack.c.l.b16 %v102
  %v542 = vunpack.c.h.b16 %v102
  %v543 = vunpack.c.l.b16 %v103
  %v544 = vunpack.c.h.b16 %v103
  %v545 = vunpack.c.l.b16 %v104
  %v546 = vunpack.c.h.b16 %v104
  %v547 = vunpack.c.l.b16 %v105
  %v548 = vunpack.c.h.b16 %v105
  %v549 = vunpack.c.l.b16 %v106
  %v550 = vunpack.c.h.b16 %v106
  %v551 = vunpack.c.l.b16 %v107
  %v552 = vunpack.c.h.b16 %v107
  %v553 = vunpack.c.l.b16 %v108
  %v554 = vunpack.c.h.b16 %v108
  %v555 = vunpack.c.l.b16 %v109
  %v556 = vunpack.c.h.b16 %v109
  %v557 = vunpack.c.l.b16 %v110
  %v558 = vunpack.c.h.b16 %v110
  %v559 = vunpack.c.l.b16 %v111
  %v560 = vunpack.c.h.b16 %v111
  %v561 = vunpack.c.l.b16 %v112
  %v562 = vunpack.c.h.b16 %v112
  %v563 = vunpack.c.l.b16 %v113
  %v564 = vunpack.c.h.b16 %v113
  %v565 = vunpack.c.l.b16 %v114
  %v566 = vunpack.c.h.b16 %v114
  %v567 = vunpack.c.l.b16 %v115
  %v568 = vunpack.c.h.b16 %v115
  %v569 = vunpack.c.l.b16 %v116
  %v570 = vunpack.c.h.b16 %v116
  %v571 = vunpack.c.l.b16 %v117
  %v572 = vunpack.c.h.b16 %v117
  %v573 = vunpack.c.l.b16 %v118
  %v574 = vunpack.c.h.b16 %v118
  %v575 = vunpack.c.l.b16 %v119
  %v576 = vunpack.c.h.b16 %v119
  %v577 = vunpack.c.l.b16 %v120
  %v578 = vunpack.c.h.b16 %v120
  %v579 = vunpack.c.l.b16 %v121
  %v580 = vunpack.c.h.b16 %v121
  %v581 = vunpack.c.l.b16 %v122
  %v582 = vunpack.c.h.b16 %v122
  %v583 = vunpack.c.l.b16 %v123
  %v584 = vunpack.c.h.b16 %v123
  %v585 = vunpack.c.l.b16 %v124
  %v586 = vunpack.c.h.b16 %v124
  %v587 = vunpack.c.l.b16 %v125
  %v588 = vunpack.c.h.b16 %v125
  %v589 = vunpack.c.l.b16 %v126
  %v590 = vunpack.c.h.b16 %v126
  %v591 = vunpack.c.l.b16 %v127
  %v592 = vunpack.c.h.b16 %v127
  %v593 = vunpack.c.l.b16 %v128
  %v594 = vunpack.c.h.b16 %v128
  %v595 = vunpack.c.l.b16 %v129
  %v596 = vunpack.c.h.b16 %v129
  %v597 = vunpack.c.l.b16 %v130
  %v598 = vunpack.c.h.b16 %v130
  %v599 = vunpack.c.l.b16 %v131
  %v600 = vunpack.c.h.b16 %v131
  %v601 = vunpack.c.l.b16 %v132
  %v602 = vunpack.c.h.b16 %v132
  %v603 = vunpack.c.l.b16 %v133
  %v604 = vunpack.c.h.b16 %v133
  %v605 = vunpack.c.l.b16 %v134
  %v606 = vunpack.c.h.b16 %v134
  %v607 = vunpack.c.l.b16 %v135
  %v608 = vunpack.c.h.b16 %v135
  %v609 = vunpack.c.l.b16 %v136
  %v610 = vunpack.c.h.b16 %v136
  %v611 = vunpack.c.l.b16 %v137
  %v612 = vunpack.c.h.b16 %v137
  %v613 = vunpack.c.l.b16 %v138
  %v614 = vunpack.c.h.b16 %v138
  %v615 = vunpack.c.l.b16 %v139
  %v616 = vunpack.c.h.b16 %v139
  %v617 = vunpack.c.l.b16 %v140
  %v618 = vunpack.c.h.b16 %v140
  %v619 = vunpack.c.l.b16 %v141
  %v620 = vunpack.c.h.b16 %v141
  %v621 = vunpack.c.l.b16 %v142
  %v622 = vunpack.c.h.b16 %v142
  %v623 = vunpack.c.l.b16 %v143
  %v624 = vunpack.c.h.b16 %v143
  %v625 = vunpack.c.l.b16 %v144
  %v626 = vunpack.c.h.b16 %v144
  %v627 = vunpack.c.l.b16 %v145
  %v628 = vunpack.c.h.b16 %v145
  %v629 = vunpack.c.l.b16 %v146
  %v630 = vunpack.c.h.b16 %v146
  %v631 = vunpack.c.l.b16 %v147
  %v632 = vunpack.c.h.b16 %v147
  %v633 = vunpack.c.l.b16 %v148
  %v634 = vunpack.c.h.b16 %v148
  %v635 = vunpack.c.l.b16 %v149
  %v636 = vunpack.c.h.b16 %v149
  %v637 = vunpack.c.l.b16 %v150
  %v638 = vunpack.c.h.b16 %v150
  %v639 = vunpack.c.l.b16 %v151
  %v640 = vunpack.c.h.b16 %v151
  %v641 = vunpack.c.l.b16 %v152
  %v642 = vunpack.c.h.b16 %v152
  %v643 = vunpack.c.l.b16 %v153
  %v644 = vunpack.c.h.b16 %v153
  %v645 = vunpack.c.l.b16 %v154
  %v646 = vunpack.c.h.b16 %v154
  %v647 = vpack.c.b16 %v395, %v391
  %v648 = vpack.c.b16 %v396, %v392
  %v649 = vpack.c.b16 %v397, %v393
  %v650 = vpack.c.b16 %v398, %v394
  %v651 = vpack.c.b16 %v403, %v399
  %v652 = vpack.c.b16 %v404, %v400
  %v653 = vpack.c.b16 %v405, %v401
  %v654 = vpack.c.b16 %v406, %v402
  %v655 = vpack.c.b16 %v411, %v407
  %v656 = vpack.c.b16 %v412, %v408
  %v657 = vpack.c.b16 %v413, %v409
  %v658 = vpack.c.b16 %v414, %v410
  %v659 = vpack.c.b16 %v419, %v415
  %v660 = vpack.c.b16 %v420, %v416
  %v661 = vpack.c.b16 %v421, %v417
  %v662 = vpack.c.b16 %v422, %v418
  %v663 = vpack.c.b16 %v427, %v423
  %v664 = vpack.c.b16 %v428, %v424
  %v665 = vpack.c.b16 %v429, %v425
  %v666 = vpack.c.b16 %v430, %v426
  %v667 = vpack.c.b16 %v435, %v431
  %v668 = vpack.c.b16 %v436, %v432
  %v669 = vpack.c.b16 %v437, %v433
  %v670 = vpack.c.b16 %v438, %v434
  %v671 = vpack.c.b16 %v443, %v439
  %v672 = vpack.c.b16 %v444, %v440
  %v673 = vpack.c.b16 %v445, %v441
  %v674 = vpack.c.b16 %v446, %v442
  %v675 = vpack.c.b16 %v451, %v447
  %v676 = vpack.c.b16 %v452, %v448
  %v677 = vpack.c.b16 %v453, %v449
  %v678 = vpack.c.b16 %v454, %v450
  %v679 = vpack.c.b16 %v459, %v455
  %v680 = vpack.c.b16 %v460, %v456
  %v681 = vpack.c.b16 %v461, %v457
  %v682 = vpack.c.b16 %v462, %v458
  %v683 = vpack.c.b16 %v467, %v463
  %v684 = vpack.c.b16 %v468, %v464
  %v685 = vpack.c.b16 %v469, %v465
  %v686 = vpack.c.b16 %v470, %v466
  %v687 = vpack.c.b16 %v475, %v471
  %v688 = vpack.c.b16 %v476, %v472
  %v689 = vpack.c.b16 %v477, %v473
  %v690 = vpack.c.b16 %v478, %v474
  %v691 = vpack.c.b16 %v483, %v479
  %v692 = vpack.c.b16 %v484, %v480
  %v693 = vpack.c.b16 %v485, %v481
  %v694 = vpack.c.b16 %v486, %v482
  %v695 = vpack.c.b16 %v491, %v487
  %v696 = vpack.c.b16 %v492, %v488
  %v697 = vpack.c.b16 %v493, %v489
  %v698 = vpack.c.b16 %v494, %v490
  %v699 = vpack.c.b16 %v499, %v495
  %v700 = vpack.c.b16 %v500, %v496
  %v701 = vpack.c.b16 %v501, %v497
  %v702 = vpack.c.b16 %v502, %v498
  %v703 = vpack.c.b16 %v507, %v503
  %v704 = vpack.c.b16 %v508, %v504
  %v705 = vpack.c.b16 %v509, %v505
  %v706 = vpack.c.b16 %v510, %v506
  %v707 = vpack.c.b16 %v515, %v511
  %v708 = vpack.c.b16 %v516, %v512
  %v709 = vpack.c.b16 %v517, %v513
  %v710 = vpack.c.b16 %v518, %v514
  %v711 = vpack.c.b16 %v523, %v519
  %v712 = vpack.c.b16 %v524, %v520
  %v713 = vpack.c.b16 %v525, %v521
  %v714 = vpack.c.b16 %v526, %v522
  %v715 = vpack.c.b16 %v531, %v527
  %v716 = vpack.c.b16 %v532, %v528
  %v717 = vpack.c.b16 %v533, %v529
  %v718 = vpack.c.b16 %v534, %v530
  %v719 = vpack.c.b16 %v539, %v535
  %v720 = vpack.c.b16 %v540, %v536
  %v721 = vpack.c.b16 %v541, %v537
  %v722 = vpack.c.b16 %v542, %v538
  %v723 = vpack.c.b16 %v547, %v543
  %v724 = vpack.c.b16 %v548, %v544
  %v725 = vpack.c.b16 %v549, %v545
  %v726 = vpack.c.b16 %v550, %v546
  %v727 = vpack.c.b16 %v555, %v551
  %v728 = vpack.c.b16 %v556, %v552
  %v729 = vpack.c.b16 %v557, %v553
  %v730 = vpack.c.b16 %v558, %v554
  %v731 = vpack.c.b16 %v563, %v559
  %v732 = vpack.c.b16 %v564, %v560
  %v733 = vpack.c.b16 %v565, %v561
  %v734 = vpack.c.b16 %v566, %v562
  %v735 = vpack.c.b16 %v571, %v567
  %v736 = vpack.c.b16 %v572, %v568
  %v737 = vpack.c.b16 %v573, %v569
  %v738 = vpack.c.b16 %v574, %v570
  %v739 = vpack.c.b16 %v579, %v575
  %v740 = vpack.c.b16 %v580, %v576
  %v741 = vpack.c.b16 %v581, %v577
  %v742 = vpack.c.b16 %v582, %v578
  %v743 = vpack.c.b16 %v587, %v583
  %v744 = vpack.c.b16 %v588, %v584
  %v745 = vpack.c.b16 %v589, %v585
  %v746 = vpack.c.b16 %v590, %v586
  %v747 = vpack.c.b16 %v595, %v591
  %v748 = vpack.c.b16 %v596, %v592
  %v749 = vpack.c.b16 %v597, %v593
  %v750 = vpack.c.b16 %v598, %v594
  %v751 = vpack.c.b16 %v603, %v599
  %v752 = vpack.c.b16 %v604, %v600
  %v753 = vpack.c.b16 %v605, %v601
  %v754 = vpack.c.b16 %v606, %v602
  %v755 = vpack.c.b16 %v611, %v607
  %v756 = vpack.c.b16 %v612, %v608
  %v757 = vpack.c.b16 %v613, %v609
  %v758 = vpack.c.b16 %v614, %v610
  %v759 = vpack.c.b16 %v619, %v615
  %v760 = vpack.c.b16 %v620, %v616
  %v761 = vpack.c.b16 %v621, %v617
  %v762 = vpack.c.b16 %v622, %v618
  %v763 = vpack.c.b16 %v627, %v623
  %v764 = vpack.c.b16 %v628, %v624
  %v765 = vpack.c.b16 %v629, %v625
  %v766 = vpack.c.b16 %v630, %v626
  %v767 = vpack.c.b16 %v635, %v631
  %v768 = vpack.c.b16 %v636, %v632
  %v769 = vpack.c.b16 %v637, %v633
  %v770 = vpack.c.b16 %v638, %v634
  %v771 = vpack.c.b16 %v643, %v639
  %v772 = vpack.c.b16 %v644, %v640
  %v773 = vpack.c.b16 %v645, %v641
  %v774 = vpack.c.b16 %v646, %v642
  %v979 = vunpack.c.l.b16 %v155
  %v980 = vunpack.c.h.b16 %v155
  %v981 = vunpack.c.l.b16 %v156
  %v982 = vunpack.c.h.b16 %v156
  %v983 = vunpack.c.l.b16 %v157
  %v984 = vunpack.c.h.b16 %v157
  %v985 = vunpack.c.l.b16 %v158
  %v986 = vunpack.c.h.b16 %v158
  %v987 = vunpack.c.l.b16 %v159
  %v988 = vunpack.c.h.b16 %v159
  %v989 = vunpack.c.l.b16 %v160
  %v990 = vunpack.c.h.b16 %v160
  %v991 = vunpack.c.l.b16 %v161
  %v992 = vunpack.c.h.b16 %v161
  %v993 = vunpack.c.l.b16 %v162
  %v994 = vunpack.c.h.b16 %v162
  %v995 = vunpack.c.l.b16 %v163
  %v996 = vunpack.c.h.b16 %v163
  %v997 = vunpack.c.l.b16 %v164
  %v998 = vunpack.c.h.b16 %v164
  %v999 = vunpack.c.l.b16 %v165
  %v1000 = vunpack.c.h.b16 %v165
  %v1001 = vunpack.c.l.b16 %v166
  %v1002 = vunpack.c.h.b16 %v166
  %v1003 = vunpack.c.l.b16 %v167
  %v1004 = vunpack.c.h.b16 %v167
  %v1005 = vunpack.c.l.b16 %v168
  %v1006 = vunpack.c.h.b16 %v168
  %v1007 = vunpack.c.l.b16 %v169
  %v1008 = vunpack.c.h.b16 %v169
  %v1009 = vunpack.c.l.b16 %v170
  %v1010 = vunpack.c.h.b16 %v170
  %v1011 = vunpack.c.l.b16 %v171
  %v1012 = vunpack.c.h.b16 %v171
  %v1013 = vunpack.c.l.b16 %v172
  %v1014 = vunpack.c.h.b16 %v172
  %v1015 = vunpack.c.l.b16 %v173
  %v1016 = vunpack.c.h.b16 %v173
  %v1017 = vunpack.c.l.b16 %v174
  %v1018 = vunpack.c.h.b16 %v174
  %v1019 = vunpack.c.l.b16 %v175
  %v1020 = vunpack.c.h.b16 %v175
  %v1021 = vunpack.c.l.b16 %v176
  %v1022 = vunpack.c.h.b16 %v176
  %v1023 = vunpack.c.l.b16 %v177
  %v1024 = vunpack.c.h.b16 %v177
  %v1025 = vunpack.c.l.b16 %v178
  %v1026 = vunpack.c.h.b16 %v178
  %v1027 = vunpack.c.l.b16 %v179
  %v1028 = vunpack.c.h.b16 %v179
  %v1029 = vunpack.c.l.b16 %v180
  %v1030 = vunpack.c.h.b16 %v180
  %v1031 = vunpack.c.l.b16 %v181
  %v1032 = vunpack.c.h.b16 %v181
  %v1033 = vunpack.c.l.b16 %v182
  %v1034 = vunpack.c.h.b16 %v182
  %v1035 = vunpack.c.l.b16 %v183
  %v1036 = vunpack.c.h.b16 %v183
  %v1037 = vunpack.c.l.b16 %v184
  %v1038 = vunpack.c.h.b16 %v184
  %v1039 = vunpack.c.l.b16 %v185
  %v1040 = vunpack.c.h.b16 %v185
  %v1041 = vunpack.c.l.b16 %v186
  %v1042 = vunpack.c.h.b16 %v186
  %v1043 = vunpack.c.l.b16 %v187
  %v1044 = vunpack.c.h.b16 %v187
  %v1045 = vunpack.c.l.b16 %v188
  %v1046 = vunpack.c.h.b16 %v188
  %v1047 = vunpack.c.l.b16 %v189
  %v1048 = vunpack.c.h.b16 %v189
  %v1049 = vunpack.c.l.b16 %v190
  %v1050 = vunpack.c.h.b16 %v190
  %v1051 = vunpack.c.l.b16 %v191
  %v1052 = vunpack.c.h.b16 %v191
  %v1053 = vunpack.c.l.b16 %v192
  %v1054 = vunpack.c.h.b16 %v192
  %v1055 = vunpack.c.l.b16 %v193
  %v1056 = vunpack.c.h.b16 %v193
  %v1057 = vunpack.c.l.b16 %v194
  %v1058 = vunpack.c.h.b16 %v194
  %v1059 = vunpack.c.l.b16 %v195
  %v1060 = vunpack.c.h.b16 %v195
  %v1061 = vunpack.c.l.b16 %v196
  %v1062 = vunpack.c.h.b16 %v196
  %v1063 = vunpack.c.l.b16 %v197
  %v1064 = vunpack.c.h.b16 %v197
  %v1065 = vunpack.c.l.b16 %v198
  %v1066 = vunpack.c.h.b16 %v198
  %v1067 = vunpack.c.l.b16 %v199
  %v1068 = vunpack.c.h.b16 %v199
  %v1069 = vunpack.c.l.b16 %v200
  %v1070 = vunpack.c.h.b16 %v200
  %v1071 = vunpack.c.l.b16 %v201
  %v1072 = vunpack.c.h.b16 %v201
  %v1073 = vunpack.c.l.b16 %v202
  %v1074 = vunpack.c.h.b16 %v202
  %v1075 = vunpack.c.l.b16 %v203
  %v1076 = vunpack.c.h.b16 %v203
  %v1077 = vunpack.c.l.b16 %v204
  %v1078 = vunpack.c.h.b16 %v204
  %v1079 = vunpack.c.l.b16 %v205
  %v1080 = vunpack.c.h.b16 %v205
  %v1081 = vunpack.c.l.b16 %v206
  %v1082 = vunpack.c.h.b16 %v206
  %v1083 = vunpack.c.l.b16 %v207
  %v1084 = vunpack.c.h.b16 %v207
  %v1085 = vunpack.c.l.b16 %v208
  %v1086 = vunpack.c.h.b16 %v208
  %v1087 = vunpack.c.l.b16 %v209
  %v1088 = vunpack.c.h.b16 %v209
  %v1089 = vunpack.c.l.b16 %v210
  %v1090 = vunpack.c.h.b16 %v210
  %v1091 = vunpack.c.l.b16 %v211
  %v1092 = vunpack.c.h.b16 %v211
  %v1093 = vunpack.c.l.b16 %v212
  %v1094 = vunpack.c.h.b16 %v212
  %v1095 = vunpack.c.l.b16 %v213
  %v1096 = vunpack.c.h.b16 %v213
  %v1097 = vunpack.c.l.b16 %v214
  %v1098 = vunpack.c.h.b16 %v214
  %v1099 = vunpack.c.l.b16 %v215
  %v1100 = vunpack.c.h.b16 %v215
  %v1101 = vunpack.c.l.b16 %v216
  %v1102 = vunpack.c.h.b16 %v216
  %v1103 = vunpack.c.l.b16 %v217
  %v1104 = vunpack.c.h.b16 %v217
  %v1105 = vunpack.c.l.b16 %v218
  %v1106 = vunpack.c.h.b16 %v218
  %v1107 = vunpack.c.l.b16 %v219
  %v1108 = vunpack.c.h.b16 %v219
  %v1109 = vunpack.c.l.b16 %v220
  %v1110 = vunpack.c.h.b16 %v220
  %v1111 = vunpack.c.l.b16 %v221
  %v1112 = vunpack.c.h.b16 %v221
  %v1113 = vunpack.c.l.b16 %v222
  %v1114 = vunpack.c.h.b16 %v222
  %v1115 = vunpack.c.l.b16 %v223
  %v1116 = vunpack.c.h.b16 %v223
  %v1117 = vunpack.c.l.b16 %v224
  %v1118 = vunpack.c.h.b16 %v224
  %v1119 = vunpack.c.l.b16 %v225
  %v1120 = vunpack.c.h.b16 %v225
  %v1121 = vunpack.c.l.b16 %v226
  %v1122 = vunpack.c.h.b16 %v226
  %v1123 = vunpack.c.l.b16 %v227
  %v1124 = vunpack.c.h.b16 %v227
  %v1125 = vunpack.c.l.b16 %v228
  %v1126 = vunpack.c.h.b16 %v228
  %v1127 = vunpack.c.l.b16 %v229
  %v1128 = vunpack.c.h.b16 %v229
  %v1129 = vunpack.c.l.b16 %v230
  %v1130 = vunpack.c.h.b16 %v230
  %v1131 = vunpack.c.l.b16 %v231
  %v1132 = vunpack.c.h.b16 %v231
  %v1133 = vunpack.c.l.b16 %v232
  %v1134 = vunpack.c.h.b16 %v232
  %v1135 = vunpack.c.l.b16 %v233
  %v1136 = vunpack.c.h.b16 %v233
  %v1137 = vunpack.c.l.b16 %v234
  %v1138 = vunpack.c.h.b16 %v234
  %v1139 = vunpack.c.l.b16 %v235
  %v1140 = vunpack.c.h.b16 %v235
  %v1141 = vunpack.c.l.b16 %v236
  %v1142 = vunpack.c.h.b16 %v236
  %v1143 = vunpack.c.l.b16 %v237
  %v1144 = vunpack.c.h.b16 %v237
  %v1145 = vunpack.c.l.b16 %v238
  %v1146 = vunpack.c.h.b16 %v238
  %v1147 = vunpack.c.l.b16 %v239
  %v1148 = vunpack.c.h.b16 %v239
  %v1149 = vunpack.c.l.b16 %v240
  %v1150 = vunpack.c.h.b16 %v240
  %v1151 = vunpack.c.l.b16 %v241
  %v1152 = vunpack.c.h.b16 %v241
  %v1153 = vunpack.c.l.b16 %v242
  %v1154 = vunpack.c.h.b16 %v242
  %v1155 = vunpack.c.l.b16 %v243
  %v1156 = vunpack.c.h.b16 %v243
  %v1157 = vunpack.c.l.b16 %v244
  %v1158 = vunpack.c.h.b16 %v244
  %v1159 = vunpack.c.l.b16 %v245
  %v1160 = vunpack.c.h.b16 %v245
  %v1161 = vunpack.c.l.b16 %v246
  %v1162 = vunpack.c.h.b16 %v246
  %v1163 = vunpack.c.l.b16 %v247
  %v1164 = vunpack.c.h.b16 %v247
  %v1165 = vunpack.c.l.b16 %v248
  %v1166 = vunpack.c.h.b16 %v248
  %v1167 = vunpack.c.l.b16 %v249
  %v1168 = vunpack.c.h.b16 %v249
  %v1169 = vunpack.c.l.b16 %v250
  %v1170 = vunpack.c.h.b16 %v250
  %v1171 = vunpack.c.l.b16 %v251
  %v1172 = vunpack.c.h.b16 %v251
  %v1173 = vunpack.c.l.b16 %v252
  %v1174 = vunpack.c.h.b16 %v252
  %v1175 = vunpack.c.l.b16 %v253
  %v1176 = vunpack.c.h.b16 %v253
  %v1177 = vunpack.c.l.b16 %v254
  %v1178 = vunpack.c.h.b16 %v254
  %v1179 = vunpack.c.l.b16 %v255
  %v1180 = vunpack.c.h.b16 %v255
  %v1181 = vunpack.c.l.b16 %v256
  %v1182 = vunpack.c.h.b16 %v256
  %v1183 = vunpack.c.l.b16 %v257
  %v1184 = vunpack.c.h.b16 %v257
  %v1185 = vunpack.c.l.b16 %v258
  %v1186 = vunpack.c.h.b16 %v258
  %v1187 = vunpack.c.l.b16 %v259
  %v1188 = vunpack.c.h.b16 %v259
  %v1189 = vunpack.c.l.b16 %v260
  %v1190 = vunpack.c.h.b16 %v260
  %v1191 = vunpack.c.l.b16 %v261
  %v1192 = vunpack.c.h.b16 %v261
  %v1193 = vunpack.c.l.b16 %v262
  %v1194 = vunpack.c.h.b16 %v262
  %v1195 = vpack.c.b16 %v983, %v979
  %v1196 = vpack.c.b16 %v984, %v980
  %v1197 = vpack.c.b16 %v985, %v981
  %v1198 = vpack.c.b16 %v986, %v982
  %v1199 = vpack.c.b16 %v991, %v987
  %v1200 = vpack.c.b16 %v992, %v988
  %v1201 = vpack.c.b16 %v993, %v989
  %v1202 = vpack.c.b16 %v994, %v990
  %v1203 = vpack.c.b16 %v999, %v995
  %v1204 = vpack.c.b16 %v1000, %v996
  %v1205 = vpack.c.b16 %v1001, %v997
  %v1206 = vpack.c.b16 %v1002, %v998
  %v1207 = vpack.c.b16 %v1007, %v1003
  %v1208 = vpack.c.b16 %v1008, %v1004
  %v1209 = vpack.c.b16 %v1009, %v1005
  %v1210 = vpack.c.b16 %v1010, %v1006
  %v1211 = vpack.c.b16 %v1015, %v1011
  %v1212 = vpack.c.b16 %v1016, %v1012
  %v1213 = vpack.c.b16 %v1017, %v1013
  %v1214 = vpack.c.b16 %v1018, %v1014
  %v1215 = vpack.c.b16 %v1023, %v1019
  %v1216 = vpack.c.b16 %v1024, %v1020
  %v1217 = vpack.c.b16 %v1025, %v1021
  %v1218 = vpack.c.b16 %v1026, %v1022
  %v1219 = vpack.c.b16 %v1031, %v1027
  %v1220 = vpack.c.b16 %v1032, %v1028
  %v1221 = vpack.c.b16 %v1033, %v1029
  %v1222 = vpack.c.b16 %v1034, %v1030
  %v1223 = vpack.c.b16 %v1039, %v1035
  %v1224 = vpack.c.b16 %v1040, %v1036
  %v1225 = vpack.c.b16 %v1041, %v1037
  %v1226 = vpack.c.b16 %v1042, %v1038
  %v1227 = vpack.c.b16 %v1047, %v1043
  %v1228 = vpack.c.b16 %v1048, %v1044
  %v1229 = vpack.c.b16 %v1049, %v1045
  %v1230 = vpack.c.b16 %v1050, %v1046
  %v1231 = vpack.c.b16 %v1055, %v1051
  %v1232 = vpack.c.b16 %v1056, %v1052
  %v1233 = vpack.c.b16 %v1057, %v1053
  %v1234 = vpack.c.b16 %v1058, %v1054
  %v1235 = vpack.c.b16 %v1063, %v1059
  %v1236 = vpack.c.b16 %v1064, %v1060
  %v1237 = vpack.c.b16 %v1065, %v1061
  %v1238 = vpack.c.b16 %v1066, %v1062
  %v1239 = vpack.c.b16 %v1071, %v1067
  %v1240 = vpack.c.b16 %v1072, %v1068
  %v1241 = vpack.c.b16 %v1073, %v1069
  %v1242 = vpack.c.b16 %v1074, %v1070
  %v1243 = vpack.c.b16 %v1079, %v1075
  %v1244 = vpack.c.b16 %v1080, %v1076
  %v1245 = vpack.c.b16 %v1081, %v1077
  %v1246 = vpack.c.b16 %v1082, %v1078
  %v1247 = vpack.c.b16 %v1087, %v1083
  %v1248 = vpack.c.b16 %v1088, %v1084
  %v1249 = vpack.c.b16 %v1089, %v1085
  %v1250 = vpack.c.b16 %v1090, %v1086
  %v1251 = vpack.c.b16 %v1095, %v1091
  %v1252 = vpack.c.b16 %v1096, %v1092
  %v1253 = vpack.c.b16 %v1097, %v1093
  %v1254 = vpack.c.b16 %v1098, %v1094
  %v1255 = vpack.c.b16 %v1103, %v1099
  %v1256 = vpack.c.b16 %v1104, %v1100
  %v1257 = vpack.c.b16 %v1105, %v1101
  %v1258 = vpack.c.b16 %v1106, %v1102
  %v1259 = vpack.c.b16 %v1111, %v1107
  %v1260 = vpack.c.b16 %v1112, %v1108
  %v1261 = vpack.c.b16 %v1113, %v1109
  %v1262 = vpack.c.b16 %v1114, %v1110
  %v1263 = vpack.c.b16 %v1119, %v1115
  %v1264 = vpack.c.b16 %v1120, %v1116
  %v1265 = vpack.c.b16 %v1121, %v1117
  %v1266 = vpack.c.b16 %v1122, %v1118
  %v1267 = vpack.c.b16 %v1127, %v1123
  %v1268 = vpack.c.b16 %v1128, %v1124
  %v1269 = vpack.c.b16 %v1129, %v1125
  %v1270 = vpack.c.b16 %v1130, %v1126
  %v1271 = vpack.c.b16 %v1135, %v1131
  %v1272 = vpack.c.b16 %v1136, %v1132
  %v1273 = vpack.c.b16 %v1137, %v1133
  %v1274 = vpack.c.b16 %v1138, %v1134
  %v1275 = vpack.c.b16 %v1143, %v1139
  %v1276 = vpack.c.b16 %v1144, %v1140
  %v1277 = vpack.c.b16 %v1145, %v1141
  %v1278 = vpack.c.b16 %v1146, %v1142
  %v1279 = vpack.c.b16 %v1151, %v1147
  %v1280 = vpack.c.b16 %v1152, %v1148
  %v1281 = vpack.c.b16 %v1153, %v1149
  %v1282 = vpack.c.b16 %v1154, %v1150
  %v1283 = vpack.c.b16 %v1159, %v1155
  %v1284 = vpack.c.b16 %v1160, %v1156
  %v1285 = vpack.c.b16 %v1161, %v1157
  %v1286 = vpack.c.b16 %v1162, %v1158
  %v1287 = vpack.c.b16 %v1167, %v1163
  %v1288 = vpack.c.b16 %v1168, %v1164
  %v1289 = vpack.c.b16 %v1169, %v1165
  %v1290 = vpack.c.b16 %v1170, %v1166
  %v1291 = vpack.c.b16 %v1175, %v1171
  %v1292 = vpack.c.b16 %v1176, %v1172
  %v1293 = vpack.c.b16 %v1177, %v1173
  %v1294 = vpack.c.b16 %v1178, %v1174
  %v1295 = vpack.c.b16 %v1183, %v1179
  %v1296 = vpack.c.b16 %v1184, %v1180
  %v1297 = vpack.c.b16 %v1185, %v1181
  %v1298 = vpack.c.b16 %v1186, %v1182
  %v1299 = vpack.c.b16 %v1191, %v1187
  %v1300 = vpack.c.b16 %v1192, %v1188
  %v1301 = vpack.c.b16 %v1193, %v1189
  %v1302 = vpack.c.b16 %v1194, %v1190
  %vm1411 = vcmask 392192
  %v1413 = vsel %vm1411, %v650, 0
  %v1416 = vsel %vm1411, %v654, 0
  %v1419 = vsel %vm1411, %v658, 0
  %v1422 = vsel %vm1411, %v662, 0
  %v1425 = vsel %vm1411, %v666, 0
  %v1428 = vsel %vm1411, %v670, 0
  %v1431 = vsel %vm1411, %v674, 0
  %v1434 = vsel %vm1411, %v678, 0
  %v1437 = vsel %vm1411, %v682, 0
  %v1440 = vsel %vm1411, %v686, 0
  %v1443 = vsel %vm1411, %v690, 0
  %v1446 = vsel %vm1411, %v694, 0
  %v1449 = vsel %vm1411, %v698, 0
  %v1452 = vsel %vm1411, %v702, 0
  %v1455 = vsel %vm1411, %v706, 0
  %v1458 = vsel %vm1411, %v710, 0
  %v1461 = vsel %vm1411, %v714, 0
  %v1464 = vsel %vm1411, %v718, 0
  %v1467 = vsel %vm1411, %v722, 0
  %v1470 = vsel %vm1411, %v726, 0
  %v1473 = vsel %vm1411, %v730, 0
  %v1476 = vsel %vm1411, %v734, 0
  %v1479 = vsel %vm1411, %v738, 0
  %v1482 = vsel %vm1411, %v742, 0
  %v1485 = vsel %vm1411, %v746, 0
  %v1488 = vsel %vm1411, %v750, 0
  %v1491 = vsel %vm1411, %v754, 0
  %v1494 = vsel %vm1411, %v758, 0
  %v1497 = vsel %vm1411, %v762, 0
  %v1500 = vsel %vm1411, %v766, 0
  %v1503 = vsel %vm1411, %v770, 0
  %v1506 = vsel %vm1411, %v774, 0
  %1508 = vmatprep.subr.bf16.mxu0 %v1196
  %1509 = vmatpush1.bf16.msra.mxu0 %v1195
  %1510 = vmatprep.subr.bf16.mxu0 %v1200
  %1511 = vmatpush1.bf16.msra.mxu0 %v1199
  %1512 = vmatprep.subr.bf16.mxu0 %v1204
  %1513 = vmatpush1.bf16.msra.mxu0 %v1203
  %1514 = vmatprep.subr.bf16.mxu0 %v1208
  %1515 = vmatpush1.bf16.msra.mxu0 %v1207
  %1516 = vmatprep.subr.bf16.mxu0 %v1212
  %1517 = vmatpush1.bf16.msra.mxu0 %v1211
  %1518 = vmatprep.subr.bf16.mxu0 %v1216
  %1519 = vmatpush1.bf16.msra.mxu0 %v1215
  %1520 = vmatprep.subr.bf16.mxu0 %v1220
  %1521 = vmatpush1.bf16.msra.mxu0 %v1219
  %1522 = vmatprep.subr.bf16.mxu0 %v1224
  %1523 = vmatpush1.bf16.msra.mxu0 %v1223
  %1524 = vmatprep.subr.bf16.mxu0 %v1228
  %1525 = vmatpush1.bf16.msra.mxu0 %v1227
  %1526 = vmatprep.subr.bf16.mxu0 %v1232
  %1527 = vmatpush1.bf16.msra.mxu0 %v1231
  %1528 = vmatprep.subr.bf16.mxu0 %v1236
  %1529 = vmatpush1.bf16.msra.mxu0 %v1235
  %1530 = vmatprep.subr.bf16.mxu0 %v1240
  %1531 = vmatpush1.bf16.msra.mxu0 %v1239
  %1532 = vmatprep.subr.bf16.mxu0 %v1244
  %1533 = vmatpush1.bf16.msra.mxu0 %v1243
  %1534 = vmatprep.subr.bf16.mxu0 %v1248
  %1535 = vmatpush1.bf16.msra.mxu0 %v1247
  %1536 = vmatprep.subr.bf16.mxu0 %v1252
  %1537 = vmatpush1.bf16.msra.mxu0 %v1251
  %1538 = vmatprep.subr.bf16.mxu0 %v1256
  %1539 = vmatpush1.bf16.msra.mxu0 %v1255
  %1540 = vmatprep.mubr.bf16.mxu0 %v648
  %1541 = vmatmul.mubr.bf16.gmra.mrb[0].mxu0 %v647
  %v1542 = vpop.f32.mrb[0].mxu0
  %v1543 = vadd.f32 0.0, %v1542
  %v1544 = vpop.f32.mrb[0].mxu0
  %v1545 = vadd.f32 0.0, %v1544
  %v1546 = vpop.f32.mrb[0].mxu0
  %v1547 = vadd.f32 0.0, %v1546
  %v1548 = vpop.f32.mrb[0].mxu0
  %v1549 = vadd.f32 0.0, %v1548
  %1550 = vmatprep.mubr.bf16.mxu0 %v652
  %1551 = vmatmul.mubr.bf16.gmra.mrb[0].mxu0 %v651
  %v1552 = vpop.f32.mrb[0].mxu0
  %v1553 = vadd.f32 0.0, %v1552
  %v1554 = vpop.f32.mrb[0].mxu0
  %v1555 = vadd.f32 0.0, %v1554
  %v1556 = vpop.f32.mrb[0].mxu0
  %v1557 = vadd.f32 0.0, %v1556
  %v1558 = vpop.f32.mrb[0].mxu0
  %v1559 = vadd.f32 0.0, %v1558
  %1560 = vmatprep.mubr.bf16.mxu0 %v656
  %1561 = vmatmul.mubr.bf16.gmra.mrb[0].mxu0 %v655
  %v1562 = vpop.f32.mrb[0].mxu0
  %v1563 = vadd.f32 0.0, %v1562
  %v1564 = vpop.f32.mrb[0].mxu0
  %v1565 = vadd.f32 0.0, %v1564
  %v1566 = vpop.f32.mrb[0].mxu0
  %v1567 = vadd.f32 0.0, %v1566
  %v1568 = vpop.f32.mrb[0].mxu0
  %v1569 = vadd.f32 0.0, %v1568
  %1570 = vmatprep.mubr.bf16.mxu0 %v660
  %1571 = vmatmul.mubr.bf16.gmra.mrb[0].mxu0 %v659
  %v1572 = vpop.f32.mrb[0].mxu0
  %v1573 = vadd.f32 0.0, %v1572
  %v1574 = vpop.f32.mrb[0].mxu0
  %v1575 = vadd.f32 0.0, %v1574
  %v1576 = vpop.f32.mrb[0].mxu0
  %v1577 = vadd.f32 0.0, %v1576
  %v1578 = vpop.f32.mrb[0].mxu0
  %v1579 = vadd.f32 0.0, %v1578
  %1580 = vmatprep.mubr.bf16.mxu0 %v664
  %1581 = vmatmul.mubr.bf16.gmra.mrb[0].mxu0 %v663
  %v1582 = vpop.f32.mrb[0].mxu0
  %v1583 = vadd.f32 0.0, %v1582
  %v1584 = vpop.f32.mrb[0].mxu0
  %v1585 = vadd.f32 0.0, %v1584
  %v1586 = vpop.f32.mrb[0].mxu0
  %v1587 = vadd.f32 0.0, %v1586
  %v1588 = vpop.f32.mrb[0].mxu0
  %v1589 = vadd.f32 0.0, %v1588
  %1590 = vmatprep.mubr.bf16.mxu0 %v668
  %1591 = vmatmul.mubr.bf16.gmra.mrb[0].mxu0 %v667
  %v1592 = vpop.f32.mrb[0].mxu0
  %v1593 = vadd.f32 0.0, %v1592
  %v1594 = vpop.f32.mrb[0].mxu0
  %v1595 = vadd.f32 0.0, %v1594
  %v1596 = vpop.f32.mrb[0].mxu0
  %v1597 = vadd.f32 0.0, %v1596
  %v1598 = vpop.f32.mrb[0].mxu0
  %v1599 = vadd.f32 0.0, %v1598
  %1600 = vmatprep.mubr.bf16.mxu0 %v672
  %1601 = vmatmul.mubr.bf16.gmra.mrb[0].mxu0 %v671
  %v1602 = vpop.f32.mrb[0].mxu0
  %v1603 = vadd.f32 0.0, %v1602
  %v1604 = vpop.f32.mrb[0].mxu0
  %v1605 = vadd.f32 0.0, %v1604
  %v1606 = vpop.f32.mrb[0].mxu0
  %v1607 = vadd.f32 0.0, %v1606
  %v1608 = vpop.f32.mrb[0].mxu0
  %v1609 = vadd.f32 0.0, %v1608
  %1610 = vmatprep.mubr.bf16.mxu0 %v676
  %1611 = vmatmul.mubr.bf16.gmra.mrb[0].mxu0 %v675
  %v1612 = vpop.f32.mrb[0].mxu0
  %v1613 = vadd.f32 0.0, %v1612
  %v1614 = vpop.f32.mrb[0].mxu0
  %v1615 = vadd.f32 0.0, %v1614
  %v1616 = vpop.f32.mrb[0].mxu0
  %v1617 = vadd.f32 0.0, %v1616
  %v1618 = vpop.f32.mrb[0].mxu0
  %v1619 = vadd.f32 0.0, %v1618
  %1620 = vmatprep.mubr.bf16.mxu0 %v680
  %1621 = vmatmul.mubr.bf16.gmra.mrb[0].mxu0 %v679
  %v1622 = vpop.f32.mrb[0].mxu0
  %v1623 = vadd.f32 0.0, %v1622
  %v1624 = vpop.f32.mrb[0].mxu0
  %v1625 = vadd.f32 0.0, %v1624
  %v1626 = vpop.f32.mrb[0].mxu0
  %v1627 = vadd.f32 0.0, %v1626
  %v1628 = vpop.f32.mrb[0].mxu0
  %v1629 = vadd.f32 0.0, %v1628
  %1630 = vmatprep.mubr.bf16.mxu0 %v684
  %1631 = vmatmul.mubr.bf16.gmra.mrb[0].mxu0 %v683
  %v1632 = vpop.f32.mrb[0].mxu0
  %v1633 = vadd.f32 0.0, %v1632
  %v1634 = vpop.f32.mrb[0].mxu0
  %v1635 = vadd.f32 0.0, %v1634
  %v1636 = vpop.f32.mrb[0].mxu0
  %v1637 = vadd.f32 0.0, %v1636
  %v1638 = vpop.f32.mrb[0].mxu0
  %v1639 = vadd.f32 0.0, %v1638
  %1640 = vmatprep.mubr.bf16.mxu0 %v688
  %1641 = vmatmul.mubr.bf16.gmra.mrb[0].mxu0 %v687
  %v1642 = vpop.f32.mrb[0].mxu0
  %v1643 = vadd.f32 0.0, %v1642
  %v1644 = vpop.f32.mrb[0].mxu0
  %v1645 = vadd.f32 0.0, %v1644
  %v1646 = vpop.f32.mrb[0].mxu0
  %v1647 = vadd.f32 0.0, %v1646
  %v1648 = vpop.f32.mrb[0].mxu0
  %v1649 = vadd.f32 0.0, %v1648
  %1650 = vmatprep.mubr.bf16.mxu0 %v692
  %1651 = vmatmul.mubr.bf16.gmra.mrb[0].mxu0 %v691
  %v1652 = vpop.f32.mrb[0].mxu0
  %v1653 = vadd.f32 0.0, %v1652
  %v1654 = vpop.f32.mrb[0].mxu0
  %v1655 = vadd.f32 0.0, %v1654
  %v1656 = vpop.f32.mrb[0].mxu0
  %v1657 = vadd.f32 0.0, %v1656
  %v1658 = vpop.f32.mrb[0].mxu0
  %v1659 = vadd.f32 0.0, %v1658
  %1660 = vmatprep.mubr.bf16.mxu0 %v696
  %1661 = vmatmul.mubr.bf16.gmra.mrb[0].mxu0 %v695
  %v1662 = vpop.f32.mrb[0].mxu0
  %v1663 = vadd.f32 0.0, %v1662
  %v1664 = vpop.f32.mrb[0].mxu0
  %v1665 = vadd.f32 0.0, %v1664
  %v1666 = vpop.f32.mrb[0].mxu0
  %v1667 = vadd.f32 0.0, %v1666
  %v1668 = vpop.f32.mrb[0].mxu0
  %v1669 = vadd.f32 0.0, %v1668
  %1670 = vmatprep.mubr.bf16.mxu0 %v700
  %1671 = vmatmul.mubr.bf16.gmra.mrb[0].mxu0 %v699
  %v1672 = vpop.f32.mrb[0].mxu0
  %v1673 = vadd.f32 0.0, %v1672
  %v1674 = vpop.f32.mrb[0].mxu0
  %v1675 = vadd.f32 0.0, %v1674
  %v1676 = vpop.f32.mrb[0].mxu0
  %v1677 = vadd.f32 0.0, %v1676
  %v1678 = vpop.f32.mrb[0].mxu0
  %v1679 = vadd.f32 0.0, %v1678
  %1680 = vmatprep.mubr.bf16.mxu0 %v704
  %1681 = vmatmul.mubr.bf16.gmra.mrb[0].mxu0 %v703
  %v1682 = vpop.f32.mrb[0].mxu0
  %v1683 = vadd.f32 0.0, %v1682
  %v1684 = vpop.f32.mrb[0].mxu0
  %v1685 = vadd.f32 0.0, %v1684
  %v1686 = vpop.f32.mrb[0].mxu0
  %v1687 = vadd.f32 0.0, %v1686
  %v1688 = vpop.f32.mrb[0].mxu0
  %v1689 = vadd.f32 0.0, %v1688
  %1690 = vmatprep.mubr.bf16.mxu0 %v708
  %1691 = vmatmul.mubr.bf16.gmra.mrb[0].mxu0 %v707
  %v1692 = vpop.f32.mrb[0].mxu0
  %v1693 = vadd.f32 0.0, %v1692
  %v1694 = vpop.f32.mrb[0].mxu0
  %v1695 = vadd.f32 0.0, %v1694
  %v1696 = vpop.f32.mrb[0].mxu0
  %v1697 = vadd.f32 0.0, %v1696
  %v1698 = vpop.f32.mrb[0].mxu0
  %v1699 = vadd.f32 0.0, %v1698
  %1700 = vmatprep.mubr.bf16.mxu0 %v712
  %1701 = vmatmul.mubr.bf16.gmra.mrb[0].mxu0 %v711
  %v1702 = vpop.f32.mrb[0].mxu0
  %v1703 = vadd.f32 0.0, %v1702
  %v1704 = vpop.f32.mrb[0].mxu0
  %v1705 = vadd.f32 0.0, %v1704
  %v1706 = vpop.f32.mrb[0].mxu0
  %v1707 = vadd.f32 0.0, %v1706
  %v1708 = vpop.f32.mrb[0].mxu0
  %v1709 = vadd.f32 0.0, %v1708
  %1710 = vmatprep.mubr.bf16.mxu0 %v716
  %1711 = vmatmul.mubr.bf16.gmra.mrb[0].mxu0 %v715
  %v1712 = vpop.f32.mrb[0].mxu0
  %v1713 = vadd.f32 0.0, %v1712
  %v1714 = vpop.f32.mrb[0].mxu0
  %v1715 = vadd.f32 0.0, %v1714
  %v1716 = vpop.f32.mrb[0].mxu0
  %v1717 = vadd.f32 0.0, %v1716
  %v1718 = vpop.f32.mrb[0].mxu0
  %v1719 = vadd.f32 0.0, %v1718
  %1720 = vmatprep.mubr.bf16.mxu0 %v720
  %1721 = vmatmul.mubr.bf16.gmra.mrb[0].mxu0 %v719
  %v1722 = vpop.f32.mrb[0].mxu0
  %v1723 = vadd.f32 0.0, %v1722
  %v1724 = vpop.f32.mrb[0].mxu0
  %v1725 = vadd.f32 0.0, %v1724
  %v1726 = vpop.f32.mrb[0].mxu0
  %v1727 = vadd.f32 0.0, %v1726
  %v1728 = vpop.f32.mrb[0].mxu0
  %v1729 = vadd.f32 0.0, %v1728
  %1730 = vmatprep.mubr.bf16.mxu0 %v724
  %1731 = vmatmul.mubr.bf16.gmra.mrb[0].mxu0 %v723
  %v1732 = vpop.f32.mrb[0].mxu0
  %v1733 = vadd.f32 0.0, %v1732
  %v1734 = vpop.f32.mrb[0].mxu0
  %v1735 = vadd.f32 0.0, %v1734
  %v1736 = vpop.f32.mrb[0].mxu0
  %v1737 = vadd.f32 0.0, %v1736
  %v1738 = vpop.f32.mrb[0].mxu0
  %v1739 = vadd.f32 0.0, %v1738
  %1740 = vmatprep.mubr.bf16.mxu0 %v728
  %1741 = vmatmul.mubr.bf16.gmra.mrb[0].mxu0 %v727
  %v1742 = vpop.f32.mrb[0].mxu0
  %v1743 = vadd.f32 0.0, %v1742
  %v1744 = vpop.f32.mrb[0].mxu0
  %v1745 = vadd.f32 0.0, %v1744
  %v1746 = vpop.f32.mrb[0].mxu0
  %v1747 = vadd.f32 0.0, %v1746
  %v1748 = vpop.f32.mrb[0].mxu0
  %v1749 = vadd.f32 0.0, %v1748
  %1750 = vmatprep.mubr.bf16.mxu0 %v732
  %1751 = vmatmul.mubr.bf16.gmra.mrb[0].mxu0 %v731
  %v1752 = vpop.f32.mrb[0].mxu0
  %v1753 = vadd.f32 0.0, %v1752
  %v1754 = vpop.f32.mrb[0].mxu0
  %v1755 = vadd.f32 0.0, %v1754
  %v1756 = vpop.f32.mrb[0].mxu0
  %v1757 = vadd.f32 0.0, %v1756
  %v1758 = vpop.f32.mrb[0].mxu0
  %v1759 = vadd.f32 0.0, %v1758
  %1760 = vmatprep.mubr.bf16.mxu0 %v736
  %1761 = vmatmul.mubr.bf16.gmra.mrb[0].mxu0 %v735
  %v1762 = vpop.f32.mrb[0].mxu0
  %v1763 = vadd.f32 0.0, %v1762
  %v1764 = vpop.f32.mrb[0].mxu0
  %v1765 = vadd.f32 0.0, %v1764
  %v1766 = vpop.f32.mrb[0].mxu0
  %v1767 = vadd.f32 0.0, %v1766
  %v1768 = vpop.f32.mrb[0].mxu0
  %v1769 = vadd.f32 0.0, %v1768
  %1770 = vmatprep.mubr.bf16.mxu0 %v740
  %1771 = vmatmul.mubr.bf16.gmra.mrb[0].mxu0 %v739
  %v1772 = vpop.f32.mrb[0].mxu0
  %v1773 = vadd.f32 0.0, %v1772
  %v1774 = vpop.f32.mrb[0].mxu0
  %v1775 = vadd.f32 0.0, %v1774
  %v1776 = vpop.f32.mrb[0].mxu0
  %v1777 = vadd.f32 0.0, %v1776
  %v1778 = vpop.f32.mrb[0].mxu0
  %v1779 = vadd.f32 0.0, %v1778
  %1780 = vmatprep.mubr.bf16.mxu0 %v744
  %1781 = vmatmul.mubr.bf16.gmra.mrb[0].mxu0 %v743
  %v1782 = vpop.f32.mrb[0].mxu0
  %v1783 = vadd.f32 0.0, %v1782
  %v1784 = vpop.f32.mrb[0].mxu0
  %v1785 = vadd.f32 0.0, %v1784
  %v1786 = vpop.f32.mrb[0].mxu0
  %v1787 = vadd.f32 0.0, %v1786
  %v1788 = vpop.f32.mrb[0].mxu0
  %v1789 = vadd.f32 0.0, %v1788
  %1790 = vmatprep.mubr.bf16.mxu0 %v748
  %1791 = vmatmul.mubr.bf16.gmra.mrb[0].mxu0 %v747
  %v1792 = vpop.f32.mrb[0].mxu0
  %v1793 = vadd.f32 0.0, %v1792
  %v1794 = vpop.f32.mrb[0].mxu0
  %v1795 = vadd.f32 0.0, %v1794
  %v1796 = vpop.f32.mrb[0].mxu0
  %v1797 = vadd.f32 0.0, %v1796
  %v1798 = vpop.f32.mrb[0].mxu0
  %v1799 = vadd.f32 0.0, %v1798
  %1800 = vmatprep.mubr.bf16.mxu0 %v752
  %1801 = vmatmul.mubr.bf16.gmra.mrb[0].mxu0 %v751
  %v1802 = vpop.f32.mrb[0].mxu0
  %v1803 = vadd.f32 0.0, %v1802
  %v1804 = vpop.f32.mrb[0].mxu0
  %v1805 = vadd.f32 0.0, %v1804
  %v1806 = vpop.f32.mrb[0].mxu0
  %v1807 = vadd.f32 0.0, %v1806
  %v1808 = vpop.f32.mrb[0].mxu0
  %v1809 = vadd.f32 0.0, %v1808
  %1810 = vmatprep.mubr.bf16.mxu0 %v756
  %1811 = vmatmul.mubr.bf16.gmra.mrb[0].mxu0 %v755
  %v1812 = vpop.f32.mrb[0].mxu0
  %v1813 = vadd.f32 0.0, %v1812
  %v1814 = vpop.f32.mrb[0].mxu0
  %v1815 = vadd.f32 0.0, %v1814
  %v1816 = vpop.f32.mrb[0].mxu0
  %v1817 = vadd.f32 0.0, %v1816
  %v1818 = vpop.f32.mrb[0].mxu0
  %v1819 = vadd.f32 0.0, %v1818
  %1820 = vmatprep.mubr.bf16.mxu0 %v760
  %1821 = vmatmul.mubr.bf16.gmra.mrb[0].mxu0 %v759
  %v1822 = vpop.f32.mrb[0].mxu0
  %v1823 = vadd.f32 0.0, %v1822
  %v1824 = vpop.f32.mrb[0].mxu0
  %v1825 = vadd.f32 0.0, %v1824
  %v1826 = vpop.f32.mrb[0].mxu0
  %v1827 = vadd.f32 0.0, %v1826
  %v1828 = vpop.f32.mrb[0].mxu0
  %v1829 = vadd.f32 0.0, %v1828
  %1830 = vmatprep.mubr.bf16.mxu0 %v764
  %1831 = vmatmul.mubr.bf16.gmra.mrb[0].mxu0 %v763
  %v1832 = vpop.f32.mrb[0].mxu0
  %v1833 = vadd.f32 0.0, %v1832
  %v1834 = vpop.f32.mrb[0].mxu0
  %v1835 = vadd.f32 0.0, %v1834
  %v1836 = vpop.f32.mrb[0].mxu0
  %v1837 = vadd.f32 0.0, %v1836
  %v1838 = vpop.f32.mrb[0].mxu0
  %v1839 = vadd.f32 0.0, %v1838
  %1840 = vmatprep.mubr.bf16.mxu0 %v768
  %1841 = vmatmul.mubr.bf16.gmra.mrb[0].mxu0 %v767
  %v1842 = vpop.f32.mrb[0].mxu0
  %v1843 = vadd.f32 0.0, %v1842
  %v1844 = vpop.f32.mrb[0].mxu0
  %v1845 = vadd.f32 0.0, %v1844
  %v1846 = vpop.f32.mrb[0].mxu0
  %v1847 = vadd.f32 0.0, %v1846
  %v1848 = vpop.f32.mrb[0].mxu0
  %v1849 = vadd.f32 0.0, %v1848
  %1850 = vmatprep.mubr.bf16.mxu0 %v772
  %1851 = vmatmul.mubr.bf16.gmra.mrb[0].mxu0 %v771
  %v1852 = vpop.f32.mrb[0].mxu0
  %v1853 = vadd.f32 0.0, %v1852
  %v1854 = vpop.f32.mrb[0].mxu0
  %v1855 = vadd.f32 0.0, %v1854
  %v1856 = vpop.f32.mrb[0].mxu0
  %v1857 = vadd.f32 0.0, %v1856
  %v1858 = vpop.f32.mrb[0].mxu0
  %v1859 = vadd.f32 0.0, %v1858
  %1860 = vdwg.mxu0
  %1861 = vmatprep.subr.bf16.mxu0 %v1260
  %1862 = vmatpush1.bf16.msra.mxu0 %v1259
  %1863 = vmatprep.subr.bf16.mxu0 %v1264
  %1864 = vmatpush1.bf16.msra.mxu0 %v1263
  %1865 = vmatprep.subr.bf16.mxu0 %v1268
  %1866 = vmatpush1.bf16.msra.mxu0 %v1267
  %1867 = vmatprep.subr.bf16.mxu0 %v1272
  %1868 = vmatpush1.bf16.msra.mxu0 %v1271
  %1869 = vmatprep.subr.bf16.mxu0 %v1276
  %1870 = vmatpush1.bf16.msra.mxu0 %v1275
  %1871 = vmatprep.subr.bf16.mxu0 %v1280
  %1872 = vmatpush1.bf16.msra.mxu0 %v1279
  %1873 = vmatprep.subr.bf16.mxu0 %v1284
  %1874 = vmatpush1.bf16.msra.mxu0 %v1283
  %1875 = vmatprep.subr.bf16.mxu0 %v1288
  %1876 = vmatpush1.bf16.msra.mxu0 %v1287
  %1877 = vmatprep.subr.bf16.mxu0 %v1292
  %1878 = vmatpush1.bf16.msra.mxu0 %v1291
  %1879 = vmatprep.subr.bf16.mxu0 %v1296
  %1880 = vmatpush1.bf16.msra.mxu0 %v1295
  %1881 = vmatprep.subr.bf16.mxu0 %v1300
  %1882 = vmatpush1.bf16.msra.mxu0 %v1299
  %1883 = vmatprep.subr.bf16.mxu0 0
  %1884 = vmatpush1.bf16.msra.mxu0 0
  %1885 = vmatprep.subr.bf16.mxu0 0
  %1886 = vmatpush1.bf16.msra.mxu0 0
  %1887 = vmatprep.subr.bf16.mxu0 0
  %1888 = vmatpush1.bf16.msra.mxu0 0
  %1889 = vmatprep.subr.bf16.mxu0 0
  %1890 = vmatpush1.bf16.msra.mxu0 0
  %1891 = vmatprep.subr.bf16.mxu0 0
  %1892 = vmatpush1.bf16.msra.mxu0 0
  %1893 = vmatprep.mubr.bf16.mxu0 %v1413
  %1894 = vmatmul.mubr.bf16.gmra.mrb[0].mxu0 %v649
  %v1895 = vpop.f32.mrb[0].mxu0
  %v1896 = vadd.f32 %v1543, %v1895
  %v1897 = vpop.f32.mrb[0].mxu0
  %v1898 = vadd.f32 %v1545, %v1897
  %v1899 = vpop.f32.mrb[0].mxu0
  %v1900 = vadd.f32 %v1547, %v1899
  %v1901 = vpop.f32.mrb[0].mxu0
  %v1902 = vadd.f32 %v1549, %v1901
  %1903 = vmatprep.mubr.bf16.mxu0 %v1416
  %1904 = vmatmul.mubr.bf16.gmra.mrb[0].mxu0 %v653
  %v1905 = vpop.f32.mrb[0].mxu0
  %v1906 = vadd.f32 %v1553, %v1905
  %v1907 = vpop.f32.mrb[0].mxu0
  %v1908 = vadd.f32 %v1555, %v1907
  %v1909 = vpop.f32.mrb[0].mxu0
  %v1910 = vadd.f32 %v1557, %v1909
  %v1911 = vpop.f32.mrb[0].mxu0
  %v1912 = vadd.f32 %v1559, %v1911
  %1913 = vmatprep.mubr.bf16.mxu0 %v1419
  %1914 = vmatmul.mubr.bf16.gmra.mrb[0].mxu0 %v657
  %v1915 = vpop.f32.mrb[0].mxu0
  %v1916 = vadd.f32 %v1563, %v1915
  %v1917 = vpop.f32.mrb[0].mxu0
  %v1918 = vadd.f32 %v1565, %v1917
  %v1919 = vpop.f32.mrb[0].mxu0
  %v1920 = vadd.f32 %v1567, %v1919
  %v1921 = vpop.f32.mrb[0].mxu0
  %v1922 = vadd.f32 %v1569, %v1921
  %1923 = vmatprep.mubr.bf16.mxu0 %v1422
  %1924 = vmatmul.mubr.bf16.gmra.mrb[0].mxu0 %v661
  %v1925 = vpop.f32.mrb[0].mxu0
  %v1926 = vadd.f32 %v1573, %v1925
  %v1927 = vpop.f32.mrb[0].mxu0
  %v1928 = vadd.f32 %v1575, %v1927
  %v1929 = vpop.f32.mrb[0].mxu0
  %v1930 = vadd.f32 %v1577, %v1929
  %v1931 = vpop.f32.mrb[0].mxu0
  %v1932 = vadd.f32 %v1579, %v1931
  %1933 = vmatprep.mubr.bf16.mxu0 %v1425
  %1934 = vmatmul.mubr.bf16.gmra.mrb[0].mxu0 %v665
  %v1935 = vpop.f32.mrb[0].mxu0
  %v1936 = vadd.f32 %v1583, %v1935
  %v1937 = vpop.f32.mrb[0].mxu0
  %v1938 = vadd.f32 %v1585, %v1937
  %v1939 = vpop.f32.mrb[0].mxu0
  %v1940 = vadd.f32 %v1587, %v1939
  %v1941 = vpop.f32.mrb[0].mxu0
  %v1942 = vadd.f32 %v1589, %v1941
  %1943 = vmatprep.mubr.bf16.mxu0 %v1428
  %1944 = vmatmul.mubr.bf16.gmra.mrb[0].mxu0 %v669
  %v1945 = vpop.f32.mrb[0].mxu0
  %v1946 = vadd.f32 %v1593, %v1945
  %v1947 = vpop.f32.mrb[0].mxu0
  %v1948 = vadd.f32 %v1595, %v1947
  %v1949 = vpop.f32.mrb[0].mxu0
  %v1950 = vadd.f32 %v1597, %v1949
  %v1951 = vpop.f32.mrb[0].mxu0
  %v1952 = vadd.f32 %v1599, %v1951
  %1953 = vmatprep.mubr.bf16.mxu0 %v1431
  %1954 = vmatmul.mubr.bf16.gmra.mrb[0].mxu0 %v673
  %v1955 = vpop.f32.mrb[0].mxu0
  %v1956 = vadd.f32 %v1603, %v1955
  %v1957 = vpop.f32.mrb[0].mxu0
  %v1958 = vadd.f32 %v1605, %v1957
  %v1959 = vpop.f32.mrb[0].mxu0
  %v1960 = vadd.f32 %v1607, %v1959
  %v1961 = vpop.f32.mrb[0].mxu0
  %v1962 = vadd.f32 %v1609, %v1961
  %1963 = vmatprep.mubr.bf16.mxu0 %v1434
  %1964 = vmatmul.mubr.bf16.gmra.mrb[0].mxu0 %v677
  %v1965 = vpop.f32.mrb[0].mxu0
  %v1966 = vadd.f32 %v1613, %v1965
  %v1967 = vpop.f32.mrb[0].mxu0
  %v1968 = vadd.f32 %v1615, %v1967
  %v1969 = vpop.f32.mrb[0].mxu0
  %v1970 = vadd.f32 %v1617, %v1969
  %v1971 = vpop.f32.mrb[0].mxu0
  %v1972 = vadd.f32 %v1619, %v1971
  %1973 = vmatprep.mubr.bf16.mxu0 %v1437
  %1974 = vmatmul.mubr.bf16.gmra.mrb[0].mxu0 %v681
  %v1975 = vpop.f32.mrb[0].mxu0
  %v1976 = vadd.f32 %v1623, %v1975
  %v1977 = vpop.f32.mrb[0].mxu0
  %v1978 = vadd.f32 %v1625, %v1977
  %v1979 = vpop.f32.mrb[0].mxu0
  %v1980 = vadd.f32 %v1627, %v1979
  %v1981 = vpop.f32.mrb[0].mxu0
  %v1982 = vadd.f32 %v1629, %v1981
  %1983 = vmatprep.mubr.bf16.mxu0 %v1440
  %1984 = vmatmul.mubr.bf16.gmra.mrb[0].mxu0 %v685
  %v1985 = vpop.f32.mrb[0].mxu0
  %v1986 = vadd.f32 %v1633, %v1985
  %v1987 = vpop.f32.mrb[0].mxu0
  %v1988 = vadd.f32 %v1635, %v1987
  %v1989 = vpop.f32.mrb[0].mxu0
  %v1990 = vadd.f32 %v1637, %v1989
  %v1991 = vpop.f32.mrb[0].mxu0
  %v1992 = vadd.f32 %v1639, %v1991
  %1993 = vmatprep.mubr.bf16.mxu0 %v1443
  %1994 = vmatmul.mubr.bf16.gmra.mrb[0].mxu0 %v689
  %v1995 = vpop.f32.mrb[0].mxu0
  %v1996 = vadd.f32 %v1643, %v1995
  %v1997 = vpop.f32.mrb[0].mxu0
  %v1998 = vadd.f32 %v1645, %v1997
  %v1999 = vpop.f32.mrb[0].mxu0
  %v2000 = vadd.f32 %v1647, %v1999
  %v2001 = vpop.f32.mrb[0].mxu0
  %v2002 = vadd.f32 %v1649, %v2001
  %2003 = vmatprep.mubr.bf16.mxu0 %v1446
  %2004 = vmatmul.mubr.bf16.gmra.mrb[0].mxu0 %v693
  %v2005 = vpop.f32.mrb[0].mxu0
  %v2006 = vadd.f32 %v1653, %v2005
  %v2007 = vpop.f32.mrb[0].mxu0
  %v2008 = vadd.f32 %v1655, %v2007
  %v2009 = vpop.f32.mrb[0].mxu0
  %v2010 = vadd.f32 %v1657, %v2009
  %v2011 = vpop.f32.mrb[0].mxu0
  %v2012 = vadd.f32 %v1659, %v2011
  %2013 = vmatprep.mubr.bf16.mxu0 %v1449
  %2014 = vmatmul.mubr.bf16.gmra.mrb[0].mxu0 %v697
  %v2015 = vpop.f32.mrb[0].mxu0
  %v2016 = vadd.f32 %v1663, %v2015
  %v2017 = vpop.f32.mrb[0].mxu0
  %v2018 = vadd.f32 %v1665, %v2017
  %v2019 = vpop.f32.mrb[0].mxu0
  %v2020 = vadd.f32 %v1667, %v2019
  %v2021 = vpop.f32.mrb[0].mxu0
  %v2022 = vadd.f32 %v1669, %v2021
  %2023 = vmatprep.mubr.bf16.mxu0 %v1452
  %2024 = vmatmul.mubr.bf16.gmra.mrb[0].mxu0 %v701
  %v2025 = vpop.f32.mrb[0].mxu0
  %v2026 = vadd.f32 %v1673, %v2025
  %v2027 = vpop.f32.mrb[0].mxu0
  %v2028 = vadd.f32 %v1675, %v2027
  %v2029 = vpop.f32.mrb[0].mxu0
  %v2030 = vadd.f32 %v1677, %v2029
  %v2031 = vpop.f32.mrb[0].mxu0
  %v2032 = vadd.f32 %v1679, %v2031
  %2033 = vmatprep.mubr.bf16.mxu0 %v1455
  %2034 = vmatmul.mubr.bf16.gmra.mrb[0].mxu0 %v705
  %v2035 = vpop.f32.mrb[0].mxu0
  %v2036 = vadd.f32 %v1683, %v2035
  %v2037 = vpop.f32.mrb[0].mxu0
  %v2038 = vadd.f32 %v1685, %v2037
  %v2039 = vpop.f32.mrb[0].mxu0
  %v2040 = vadd.f32 %v1687, %v2039
  %v2041 = vpop.f32.mrb[0].mxu0
  %v2042 = vadd.f32 %v1689, %v2041
  %2043 = vmatprep.mubr.bf16.mxu0 %v1458
  %2044 = vmatmul.mubr.bf16.gmra.mrb[0].mxu0 %v709
  %v2045 = vpop.f32.mrb[0].mxu0
  %v2046 = vadd.f32 %v1693, %v2045
  %v2047 = vpop.f32.mrb[0].mxu0
  %v2048 = vadd.f32 %v1695, %v2047
  %v2049 = vpop.f32.mrb[0].mxu0
  %v2050 = vadd.f32 %v1697, %v2049
  %v2051 = vpop.f32.mrb[0].mxu0
  %v2052 = vadd.f32 %v1699, %v2051
  %2053 = vmatprep.mubr.bf16.mxu0 %v1461
  %2054 = vmatmul.mubr.bf16.gmra.mrb[0].mxu0 %v713
  %v2055 = vpop.f32.mrb[0].mxu0
  %v2056 = vadd.f32 %v1703, %v2055
  %v2057 = vpop.f32.mrb[0].mxu0
  %v2058 = vadd.f32 %v1705, %v2057
  %v2059 = vpop.f32.mrb[0].mxu0
  %v2060 = vadd.f32 %v1707, %v2059
  %v2061 = vpop.f32.mrb[0].mxu0
  %v2062 = vadd.f32 %v1709, %v2061
  %2063 = vmatprep.mubr.bf16.mxu0 %v1464
  %2064 = vmatmul.mubr.bf16.gmra.mrb[0].mxu0 %v717
  %v2065 = vpop.f32.mrb[0].mxu0
  %v2066 = vadd.f32 %v1713, %v2065
  %v2067 = vpop.f32.mrb[0].mxu0
  %v2068 = vadd.f32 %v1715, %v2067
  %v2069 = vpop.f32.mrb[0].mxu0
  %v2070 = vadd.f32 %v1717, %v2069
  %v2071 = vpop.f32.mrb[0].mxu0
  %v2072 = vadd.f32 %v1719, %v2071
  %2073 = vmatprep.mubr.bf16.mxu0 %v1467
  %2074 = vmatmul.mubr.bf16.gmra.mrb[0].mxu0 %v721
  %v2075 = vpop.f32.mrb[0].mxu0
  %v2076 = vadd.f32 %v1723, %v2075
  %v2077 = vpop.f32.mrb[0].mxu0
  %v2078 = vadd.f32 %v1725, %v2077
  %v2079 = vpop.f32.mrb[0].mxu0
  %v2080 = vadd.f32 %v1727, %v2079
  %v2081 = vpop.f32.mrb[0].mxu0
  %v2082 = vadd.f32 %v1729, %v2081
  %2083 = vmatprep.mubr.bf16.mxu0 %v1470
  %2084 = vmatmul.mubr.bf16.gmra.mrb[0].mxu0 %v725
  %v2085 = vpop.f32.mrb[0].mxu0
  %v2086 = vadd.f32 %v1733, %v2085
  %v2087 = vpop.f32.mrb[0].mxu0
  %v2088 = vadd.f32 %v1735, %v2087
  %v2089 = vpop.f32.mrb[0].mxu0
  %v2090 = vadd.f32 %v1737, %v2089
  %v2091 = vpop.f32.mrb[0].mxu0
  %v2092 = vadd.f32 %v1739, %v2091
  %2093 = vmatprep.mubr.bf16.mxu0 %v1473
  %2094 = vmatmul.mubr.bf16.gmra.mrb[0].mxu0 %v729
  %v2095 = vpop.f32.mrb[0].mxu0
  %v2096 = vadd.f32 %v1743, %v2095
  %v2097 = vpop.f32.mrb[0].mxu0
  %v2098 = vadd.f32 %v1745, %v2097
  %v2099 = vpop.f32.mrb[0].mxu0
  %v2100 = vadd.f32 %v1747, %v2099
  %v2101 = vpop.f32.mrb[0].mxu0
  %v2102 = vadd.f32 %v1749, %v2101
  %2103 = vmatprep.mubr.bf16.mxu0 %v1476
  %2104 = vmatmul.mubr.bf16.gmra.mrb[0].mxu0 %v733
  %v2105 = vpop.f32.mrb[0].mxu0
  %v2106 = vadd.f32 %v1753, %v2105
  %v2107 = vpop.f32.mrb[0].mxu0
  %v2108 = vadd.f32 %v1755, %v2107
  %v2109 = vpop.f32.mrb[0].mxu0
  %v2110 = vadd.f32 %v1757, %v2109
  %v2111 = vpop.f32.mrb[0].mxu0
  %v2112 = vadd.f32 %v1759, %v2111
  %2113 = vmatprep.mubr.bf16.mxu0 %v1479
  %2114 = vmatmul.mubr.bf16.gmra.mrb[0].mxu0 %v737
  %v2115 = vpop.f32.mrb[0].mxu0
  %v2116 = vadd.f32 %v1763, %v2115
  %v2117 = vpop.f32.mrb[0].mxu0
  %v2118 = vadd.f32 %v1765, %v2117
  %v2119 = vpop.f32.mrb[0].mxu0
  %v2120 = vadd.f32 %v1767, %v2119
  %v2121 = vpop.f32.mrb[0].mxu0
  %v2122 = vadd.f32 %v1769, %v2121
  %2123 = vmatprep.mubr.bf16.mxu0 %v1482
  %2124 = vmatmul.mubr.bf16.gmra.mrb[0].mxu0 %v741
  %v2125 = vpop.f32.mrb[0].mxu0
  %v2126 = vadd.f32 %v1773, %v2125
  %v2127 = vpop.f32.mrb[0].mxu0
  %v2128 = vadd.f32 %v1775, %v2127
  %v2129 = vpop.f32.mrb[0].mxu0
  %v2130 = vadd.f32 %v1777, %v2129
  %v2131 = vpop.f32.mrb[0].mxu0
  %v2132 = vadd.f32 %v1779, %v2131
  %2133 = vmatprep.mubr.bf16.mxu0 %v1485
  %2134 = vmatmul.mubr.bf16.gmra.mrb[0].mxu0 %v745
  %v2135 = vpop.f32.mrb[0].mxu0
  %v2136 = vadd.f32 %v1783, %v2135
  %v2137 = vpop.f32.mrb[0].mxu0
  %v2138 = vadd.f32 %v1785, %v2137
  %v2139 = vpop.f32.mrb[0].mxu0
  %v2140 = vadd.f32 %v1787, %v2139
  %v2141 = vpop.f32.mrb[0].mxu0
  %v2142 = vadd.f32 %v1789, %v2141
  %2143 = vmatprep.mubr.bf16.mxu0 %v1488
  %2144 = vmatmul.mubr.bf16.gmra.mrb[0].mxu0 %v749
  %v2145 = vpop.f32.mrb[0].mxu0
  %v2146 = vadd.f32 %v1793, %v2145
  %v2147 = vpop.f32.mrb[0].mxu0
  %v2148 = vadd.f32 %v1795, %v2147
  %v2149 = vpop.f32.mrb[0].mxu0
  %v2150 = vadd.f32 %v1797, %v2149
  %v2151 = vpop.f32.mrb[0].mxu0
  %v2152 = vadd.f32 %v1799, %v2151
  %2153 = vmatprep.mubr.bf16.mxu0 %v1491
  %2154 = vmatmul.mubr.bf16.gmra.mrb[0].mxu0 %v753
  %v2155 = vpop.f32.mrb[0].mxu0
  %v2156 = vadd.f32 %v1803, %v2155
  %v2157 = vpop.f32.mrb[0].mxu0
  %v2158 = vadd.f32 %v1805, %v2157
  %v2159 = vpop.f32.mrb[0].mxu0
  %v2160 = vadd.f32 %v1807, %v2159
  %v2161 = vpop.f32.mrb[0].mxu0
  %v2162 = vadd.f32 %v1809, %v2161
  %2163 = vmatprep.mubr.bf16.mxu0 %v1494
  %2164 = vmatmul.mubr.bf16.gmra.mrb[0].mxu0 %v757
  %v2165 = vpop.f32.mrb[0].mxu0
  %v2166 = vadd.f32 %v1813, %v2165
  %v2167 = vpop.f32.mrb[0].mxu0
  %v2168 = vadd.f32 %v1815, %v2167
  %v2169 = vpop.f32.mrb[0].mxu0
  %v2170 = vadd.f32 %v1817, %v2169
  %v2171 = vpop.f32.mrb[0].mxu0
  %v2172 = vadd.f32 %v1819, %v2171
  %2173 = vmatprep.mubr.bf16.mxu0 %v1497
  %2174 = vmatmul.mubr.bf16.gmra.mrb[0].mxu0 %v761
  %v2175 = vpop.f32.mrb[0].mxu0
  %v2176 = vadd.f32 %v1823, %v2175
  %v2177 = vpop.f32.mrb[0].mxu0
  %v2178 = vadd.f32 %v1825, %v2177
  %v2179 = vpop.f32.mrb[0].mxu0
  %v2180 = vadd.f32 %v1827, %v2179
  %v2181 = vpop.f32.mrb[0].mxu0
  %v2182 = vadd.f32 %v1829, %v2181
  %2183 = vmatprep.mubr.bf16.mxu0 %v1500
  %2184 = vmatmul.mubr.bf16.gmra.mrb[0].mxu0 %v765
  %v2185 = vpop.f32.mrb[0].mxu0
  %v2186 = vadd.f32 %v1833, %v2185
  %v2187 = vpop.f32.mrb[0].mxu0
  %v2188 = vadd.f32 %v1835, %v2187
  %v2189 = vpop.f32.mrb[0].mxu0
  %v2190 = vadd.f32 %v1837, %v2189
  %v2191 = vpop.f32.mrb[0].mxu0
  %v2192 = vadd.f32 %v1839, %v2191
  %2193 = vmatprep.mubr.bf16.mxu0 %v1503
  %2194 = vmatmul.mubr.bf16.gmra.mrb[0].mxu0 %v769
  %v2195 = vpop.f32.mrb[0].mxu0
  %v2196 = vadd.f32 %v1843, %v2195
  %v2197 = vpop.f32.mrb[0].mxu0
  %v2198 = vadd.f32 %v1845, %v2197
  %v2199 = vpop.f32.mrb[0].mxu0
  %v2200 = vadd.f32 %v1847, %v2199
  %v2201 = vpop.f32.mrb[0].mxu0
  %v2202 = vadd.f32 %v1849, %v2201
  %2203 = vmatprep.mubr.bf16.mxu0 %v1506
  %2204 = vmatmul.mubr.bf16.gmra.mrb[0].mxu0 %v773
  %v2205 = vpop.f32.mrb[0].mxu0
  %v2206 = vadd.f32 %v1853, %v2205
  %v2207 = vpop.f32.mrb[0].mxu0
  %v2208 = vadd.f32 %v1855, %v2207
  %v2209 = vpop.f32.mrb[0].mxu0
  %v2210 = vadd.f32 %v1857, %v2209
  %v2211 = vpop.f32.mrb[0].mxu0
  %v2212 = vadd.f32 %v1859, %v2211
  %2213 = vdwg.mxu0
  %2214 = vmatprep.subr.bf16.mxu0 %v1198
  %2215 = vmatpush1.bf16.msra.mxu0 %v1197
  %2216 = vmatprep.subr.bf16.mxu0 %v1202
  %2217 = vmatpush1.bf16.msra.mxu0 %v1201
  %2218 = vmatprep.subr.bf16.mxu0 %v1206
  %2219 = vmatpush1.bf16.msra.mxu0 %v1205
  %2220 = vmatprep.subr.bf16.mxu0 %v1210
  %2221 = vmatpush1.bf16.msra.mxu0 %v1209
  %2222 = vmatprep.subr.bf16.mxu0 %v1214
  %2223 = vmatpush1.bf16.msra.mxu0 %v1213
  %2224 = vmatprep.subr.bf16.mxu0 %v1218
  %2225 = vmatpush1.bf16.msra.mxu0 %v1217
  %2226 = vmatprep.subr.bf16.mxu0 %v1222
  %2227 = vmatpush1.bf16.msra.mxu0 %v1221
  %2228 = vmatprep.subr.bf16.mxu0 %v1226
  %2229 = vmatpush1.bf16.msra.mxu0 %v1225
  %2230 = vmatprep.subr.bf16.mxu0 %v1230
  %2231 = vmatpush1.bf16.msra.mxu0 %v1229
  %2232 = vmatprep.subr.bf16.mxu0 %v1234
  %2233 = vmatpush1.bf16.msra.mxu0 %v1233
  %2234 = vmatprep.subr.bf16.mxu0 %v1238
  %2235 = vmatpush1.bf16.msra.mxu0 %v1237
  %2236 = vmatprep.subr.bf16.mxu0 %v1242
  %2237 = vmatpush1.bf16.msra.mxu0 %v1241
  %2238 = vmatprep.subr.bf16.mxu0 %v1246
  %2239 = vmatpush1.bf16.msra.mxu0 %v1245
  %2240 = vmatprep.subr.bf16.mxu0 %v1250
  %2241 = vmatpush1.bf16.msra.mxu0 %v1249
  %2242 = vmatprep.subr.bf16.mxu0 %v1254
  %2243 = vmatpush1.bf16.msra.mxu0 %v1253
  %2244 = vmatprep.subr.bf16.mxu0 %v1258
  %2245 = vmatpush1.bf16.msra.mxu0 %v1257
  %2246 = vmatprep.mubr.bf16.mxu0 %v648
  %2247 = vmatmul.mubr.bf16.gmra.mrb[0].mxu0 %v647
  %v2248 = vpop.f32.mrb[0].mxu0
  %v2249 = vadd.f32 0.0, %v2248
  %v2250 = vpop.f32.mrb[0].mxu0
  %v2251 = vadd.f32 0.0, %v2250
  %v2252 = vpop.f32.mrb[0].mxu0
  %v2253 = vadd.f32 0.0, %v2252
  %v2254 = vpop.f32.mrb[0].mxu0
  %v2255 = vadd.f32 0.0, %v2254
  %2256 = vmatprep.mubr.bf16.mxu0 %v652
  %2257 = vmatmul.mubr.bf16.gmra.mrb[0].mxu0 %v651
  %v2258 = vpop.f32.mrb[0].mxu0
  %v2259 = vadd.f32 0.0, %v2258
  %v2260 = vpop.f32.mrb[0].mxu0
  %v2261 = vadd.f32 0.0, %v2260
  %v2262 = vpop.f32.mrb[0].mxu0
  %v2263 = vadd.f32 0.0, %v2262
  %v2264 = vpop.f32.mrb[0].mxu0
  %v2265 = vadd.f32 0.0, %v2264
  %2266 = vmatprep.mubr.bf16.mxu0 %v656
  %2267 = vmatmul.mubr.bf16.gmra.mrb[0].mxu0 %v655
  %v2268 = vpop.f32.mrb[0].mxu0
  %v2269 = vadd.f32 0.0, %v2268
  %v2270 = vpop.f32.mrb[0].mxu0
  %v2271 = vadd.f32 0.0, %v2270
  %v2272 = vpop.f32.mrb[0].mxu0
  %v2273 = vadd.f32 0.0, %v2272
  %v2274 = vpop.f32.mrb[0].mxu0
  %v2275 = vadd.f32 0.0, %v2274
  %2276 = vmatprep.mubr.bf16.mxu0 %v660
  %2277 = vmatmul.mubr.bf16.gmra.mrb[0].mxu0 %v659
  %v2278 = vpop.f32.mrb[0].mxu0
  %v2279 = vadd.f32 0.0, %v2278
  %v2280 = vpop.f32.mrb[0].mxu0
  %v2281 = vadd.f32 0.0, %v2280
  %v2282 = vpop.f32.mrb[0].mxu0
  %v2283 = vadd.f32 0.0, %v2282
  %v2284 = vpop.f32.mrb[0].mxu0
  %v2285 = vadd.f32 0.0, %v2284
  %2286 = vmatprep.mubr.bf16.mxu0 %v664
  %2287 = vmatmul.mubr.bf16.gmra.mrb[0].mxu0 %v663
  %v2288 = vpop.f32.mrb[0].mxu0
  %v2289 = vadd.f32 0.0, %v2288
  %v2290 = vpop.f32.mrb[0].mxu0
  %v2291 = vadd.f32 0.0, %v2290
  %v2292 = vpop.f32.mrb[0].mxu0
  %v2293 = vadd.f32 0.0, %v2292
  %v2294 = vpop.f32.mrb[0].mxu0
  %v2295 = vadd.f32 0.0, %v2294
  %2296 = vmatprep.mubr.bf16.mxu0 %v668
  %2297 = vmatmul.mubr.bf16.gmra.mrb[0].mxu0 %v667
  %v2298 = vpop.f32.mrb[0].mxu0
  %v2299 = vadd.f32 0.0, %v2298
  %v2300 = vpop.f32.mrb[0].mxu0
  %v2301 = vadd.f32 0.0, %v2300
  %v2302 = vpop.f32.mrb[0].mxu0
  %v2303 = vadd.f32 0.0, %v2302
  %v2304 = vpop.f32.mrb[0].mxu0
  %v2305 = vadd.f32 0.0, %v2304
  %2306 = vmatprep.mubr.bf16.mxu0 %v672
  %2307 = vmatmul.mubr.bf16.gmra.mrb[0].mxu0 %v671
  %v2308 = vpop.f32.mrb[0].mxu0
  %v2309 = vadd.f32 0.0, %v2308
  %v2310 = vpop.f32.mrb[0].mxu0
  %v2311 = vadd.f32 0.0, %v2310
  %v2312 = vpop.f32.mrb[0].mxu0
  %v2313 = vadd.f32 0.0, %v2312
  %v2314 = vpop.f32.mrb[0].mxu0
  %v2315 = vadd.f32 0.0, %v2314
  %2316 = vmatprep.mubr.bf16.mxu0 %v676
  %2317 = vmatmul.mubr.bf16.gmra.mrb[0].mxu0 %v675
  %v2318 = vpop.f32.mrb[0].mxu0
  %v2319 = vadd.f32 0.0, %v2318
  %v2320 = vpop.f32.mrb[0].mxu0
  %v2321 = vadd.f32 0.0, %v2320
  %v2322 = vpop.f32.mrb[0].mxu0
  %v2323 = vadd.f32 0.0, %v2322
  %v2324 = vpop.f32.mrb[0].mxu0
  %v2325 = vadd.f32 0.0, %v2324
  %2326 = vmatprep.mubr.bf16.mxu0 %v680
  %2327 = vmatmul.mubr.bf16.gmra.mrb[0].mxu0 %v679
  %v2328 = vpop.f32.mrb[0].mxu0
  %v2329 = vadd.f32 0.0, %v2328
  %v2330 = vpop.f32.mrb[0].mxu0
  %v2331 = vadd.f32 0.0, %v2330
  %v2332 = vpop.f32.mrb[0].mxu0
  %v2333 = vadd.f32 0.0, %v2332
  %v2334 = vpop.f32.mrb[0].mxu0
  %v2335 = vadd.f32 0.0, %v2334
  %2336 = vmatprep.mubr.bf16.mxu0 %v684
  %2337 = vmatmul.mubr.bf16.gmra.mrb[0].mxu0 %v683
  %v2338 = vpop.f32.mrb[0].mxu0
  %v2339 = vadd.f32 0.0, %v2338
  %v2340 = vpop.f32.mrb[0].mxu0
  %v2341 = vadd.f32 0.0, %v2340
  %v2342 = vpop.f32.mrb[0].mxu0
  %v2343 = vadd.f32 0.0, %v2342
  %v2344 = vpop.f32.mrb[0].mxu0
  %v2345 = vadd.f32 0.0, %v2344
  %2346 = vmatprep.mubr.bf16.mxu0 %v688
  %2347 = vmatmul.mubr.bf16.gmra.mrb[0].mxu0 %v687
  %v2348 = vpop.f32.mrb[0].mxu0
  %v2349 = vadd.f32 0.0, %v2348
  %v2350 = vpop.f32.mrb[0].mxu0
  %v2351 = vadd.f32 0.0, %v2350
  %v2352 = vpop.f32.mrb[0].mxu0
  %v2353 = vadd.f32 0.0, %v2352
  %v2354 = vpop.f32.mrb[0].mxu0
  %v2355 = vadd.f32 0.0, %v2354
  %2356 = vmatprep.mubr.bf16.mxu0 %v692
  %2357 = vmatmul.mubr.bf16.gmra.mrb[0].mxu0 %v691
  %v2358 = vpop.f32.mrb[0].mxu0
  %v2359 = vadd.f32 0.0, %v2358
  %v2360 = vpop.f32.mrb[0].mxu0
  %v2361 = vadd.f32 0.0, %v2360
  %v2362 = vpop.f32.mrb[0].mxu0
  %v2363 = vadd.f32 0.0, %v2362
  %v2364 = vpop.f32.mrb[0].mxu0
  %v2365 = vadd.f32 0.0, %v2364
  %2366 = vmatprep.mubr.bf16.mxu0 %v696
  %2367 = vmatmul.mubr.bf16.gmra.mrb[0].mxu0 %v695
  %v2368 = vpop.f32.mrb[0].mxu0
  %v2369 = vadd.f32 0.0, %v2368
  %v2370 = vpop.f32.mrb[0].mxu0
  %v2371 = vadd.f32 0.0, %v2370
  %v2372 = vpop.f32.mrb[0].mxu0
  %v2373 = vadd.f32 0.0, %v2372
  %v2374 = vpop.f32.mrb[0].mxu0
  %v2375 = vadd.f32 0.0, %v2374
  %2376 = vmatprep.mubr.bf16.mxu0 %v700
  %2377 = vmatmul.mubr.bf16.gmra.mrb[0].mxu0 %v699
  %v2378 = vpop.f32.mrb[0].mxu0
  %v2379 = vadd.f32 0.0, %v2378
  %v2380 = vpop.f32.mrb[0].mxu0
  %v2381 = vadd.f32 0.0, %v2380
  %v2382 = vpop.f32.mrb[0].mxu0
  %v2383 = vadd.f32 0.0, %v2382
  %v2384 = vpop.f32.mrb[0].mxu0
  %v2385 = vadd.f32 0.0, %v2384
  %2386 = vmatprep.mubr.bf16.mxu0 %v704
  %2387 = vmatmul.mubr.bf16.gmra.mrb[0].mxu0 %v703
  %v2388 = vpop.f32.mrb[0].mxu0
  %v2389 = vadd.f32 0.0, %v2388
  %v2390 = vpop.f32.mrb[0].mxu0
  %v2391 = vadd.f32 0.0, %v2390
  %v2392 = vpop.f32.mrb[0].mxu0
  %v2393 = vadd.f32 0.0, %v2392
  %v2394 = vpop.f32.mrb[0].mxu0
  %v2395 = vadd.f32 0.0, %v2394
  %2396 = vmatprep.mubr.bf16.mxu0 %v708
  %2397 = vmatmul.mubr.bf16.gmra.mrb[0].mxu0 %v707
  %v2398 = vpop.f32.mrb[0].mxu0
  %v2399 = vadd.f32 0.0, %v2398
  %v2400 = vpop.f32.mrb[0].mxu0
  %v2401 = vadd.f32 0.0, %v2400
  %v2402 = vpop.f32.mrb[0].mxu0
  %v2403 = vadd.f32 0.0, %v2402
  %v2404 = vpop.f32.mrb[0].mxu0
  %v2405 = vadd.f32 0.0, %v2404
  %2406 = vmatprep.mubr.bf16.mxu0 %v712
  %2407 = vmatmul.mubr.bf16.gmra.mrb[0].mxu0 %v711
  %v2408 = vpop.f32.mrb[0].mxu0
  %v2409 = vadd.f32 0.0, %v2408
  %v2410 = vpop.f32.mrb[0].mxu0
  %v2411 = vadd.f32 0.0, %v2410
  %v2412 = vpop.f32.mrb[0].mxu0
  %v2413 = vadd.f32 0.0, %v2412
  %v2414 = vpop.f32.mrb[0].mxu0
  %v2415 = vadd.f32 0.0, %v2414
  %2416 = vmatprep.mubr.bf16.mxu0 %v716
  %2417 = vmatmul.mubr.bf16.gmra.mrb[0].mxu0 %v715
  %v2418 = vpop.f32.mrb[0].mxu0
  %v2419 = vadd.f32 0.0, %v2418
  %v2420 = vpop.f32.mrb[0].mxu0
  %v2421 = vadd.f32 0.0, %v2420
  %v2422 = vpop.f32.mrb[0].mxu0
  %v2423 = vadd.f32 0.0, %v2422
  %v2424 = vpop.f32.mrb[0].mxu0
  %v2425 = vadd.f32 0.0, %v2424
  %2426 = vmatprep.mubr.bf16.mxu0 %v720
  %2427 = vmatmul.mubr.bf16.gmra.mrb[0].mxu0 %v719
  %v2428 = vpop.f32.mrb[0].mxu0
  %v2429 = vadd.f32 0.0, %v2428
  %v2430 = vpop.f32.mrb[0].mxu0
  %v2431 = vadd.f32 0.0, %v2430
  %v2432 = vpop.f32.mrb[0].mxu0
  %v2433 = vadd.f32 0.0, %v2432
  %v2434 = vpop.f32.mrb[0].mxu0
  %v2435 = vadd.f32 0.0, %v2434
  %2436 = vmatprep.mubr.bf16.mxu0 %v724
  %2437 = vmatmul.mubr.bf16.gmra.mrb[0].mxu0 %v723
  %v2438 = vpop.f32.mrb[0].mxu0
  %v2439 = vadd.f32 0.0, %v2438
  %v2440 = vpop.f32.mrb[0].mxu0
  %v2441 = vadd.f32 0.0, %v2440
  %v2442 = vpop.f32.mrb[0].mxu0
  %v2443 = vadd.f32 0.0, %v2442
  %v2444 = vpop.f32.mrb[0].mxu0
  %v2445 = vadd.f32 0.0, %v2444
  %2446 = vmatprep.mubr.bf16.mxu0 %v728
  %2447 = vmatmul.mubr.bf16.gmra.mrb[0].mxu0 %v727
  %v2448 = vpop.f32.mrb[0].mxu0
  %v2449 = vadd.f32 0.0, %v2448
  %v2450 = vpop.f32.mrb[0].mxu0
  %v2451 = vadd.f32 0.0, %v2450
  %v2452 = vpop.f32.mrb[0].mxu0
  %v2453 = vadd.f32 0.0, %v2452
  %v2454 = vpop.f32.mrb[0].mxu0
  %v2455 = vadd.f32 0.0, %v2454
  %2456 = vmatprep.mubr.bf16.mxu0 %v732
  %2457 = vmatmul.mubr.bf16.gmra.mrb[0].mxu0 %v731
  %v2458 = vpop.f32.mrb[0].mxu0
  %v2459 = vadd.f32 0.0, %v2458
  %v2460 = vpop.f32.mrb[0].mxu0
  %v2461 = vadd.f32 0.0, %v2460
  %v2462 = vpop.f32.mrb[0].mxu0
  %v2463 = vadd.f32 0.0, %v2462
  %v2464 = vpop.f32.mrb[0].mxu0
  %v2465 = vadd.f32 0.0, %v2464
  %2466 = vmatprep.mubr.bf16.mxu0 %v736
  %2467 = vmatmul.mubr.bf16.gmra.mrb[0].mxu0 %v735
  %v2468 = vpop.f32.mrb[0].mxu0
  %v2469 = vadd.f32 0.0, %v2468
  %v2470 = vpop.f32.mrb[0].mxu0
  %v2471 = vadd.f32 0.0, %v2470
  %v2472 = vpop.f32.mrb[0].mxu0
  %v2473 = vadd.f32 0.0, %v2472
  %v2474 = vpop.f32.mrb[0].mxu0
  %v2475 = vadd.f32 0.0, %v2474
  %2476 = vmatprep.mubr.bf16.mxu0 %v740
  %2477 = vmatmul.mubr.bf16.gmra.mrb[0].mxu0 %v739
  %v2478 = vpop.f32.mrb[0].mxu0
  %v2479 = vadd.f32 0.0, %v2478
  %v2480 = vpop.f32.mrb[0].mxu0
  %v2481 = vadd.f32 0.0, %v2480
  %v2482 = vpop.f32.mrb[0].mxu0
  %v2483 = vadd.f32 0.0, %v2482
  %v2484 = vpop.f32.mrb[0].mxu0
  %v2485 = vadd.f32 0.0, %v2484
  %2486 = vmatprep.mubr.bf16.mxu0 %v744
  %2487 = vmatmul.mubr.bf16.gmra.mrb[0].mxu0 %v743
  %v2488 = vpop.f32.mrb[0].mxu0
  %v2489 = vadd.f32 0.0, %v2488
  %v2490 = vpop.f32.mrb[0].mxu0
  %v2491 = vadd.f32 0.0, %v2490
  %v2492 = vpop.f32.mrb[0].mxu0
  %v2493 = vadd.f32 0.0, %v2492
  %v2494 = vpop.f32.mrb[0].mxu0
  %v2495 = vadd.f32 0.0, %v2494
  %2496 = vmatprep.mubr.bf16.mxu0 %v748
  %2497 = vmatmul.mubr.bf16.gmra.mrb[0].mxu0 %v747
  %v2498 = vpop.f32.mrb[0].mxu0
  %v2499 = vadd.f32 0.0, %v2498
  %v2500 = vpop.f32.mrb[0].mxu0
  %v2501 = vadd.f32 0.0, %v2500
  %v2502 = vpop.f32.mrb[0].mxu0
  %v2503 = vadd.f32 0.0, %v2502
  %v2504 = vpop.f32.mrb[0].mxu0
  %v2505 = vadd.f32 0.0, %v2504
  %2506 = vmatprep.mubr.bf16.mxu0 %v752
  %2507 = vmatmul.mubr.bf16.gmra.mrb[0].mxu0 %v751
  %v2508 = vpop.f32.mrb[0].mxu0
  %v2509 = vadd.f32 0.0, %v2508
  %v2510 = vpop.f32.mrb[0].mxu0
  %v2511 = vadd.f32 0.0, %v2510
  %v2512 = vpop.f32.mrb[0].mxu0
  %v2513 = vadd.f32 0.0, %v2512
  %v2514 = vpop.f32.mrb[0].mxu0
  %v2515 = vadd.f32 0.0, %v2514
  %2516 = vmatprep.mubr.bf16.mxu0 %v756
  %2517 = vmatmul.mubr.bf16.gmra.mrb[0].mxu0 %v755
  %v2518 = vpop.f32.mrb[0].mxu0
  %v2519 = vadd.f32 0.0, %v2518
  %v2520 = vpop.f32.mrb[0].mxu0
  %v2521 = vadd.f32 0.0, %v2520
  %v2522 = vpop.f32.mrb[0].mxu0
  %v2523 = vadd.f32 0.0, %v2522
  %v2524 = vpop.f32.mrb[0].mxu0
  %v2525 = vadd.f32 0.0, %v2524
  %2526 = vmatprep.mubr.bf16.mxu0 %v760
  %2527 = vmatmul.mubr.bf16.gmra.mrb[0].mxu0 %v759
  %v2528 = vpop.f32.mrb[0].mxu0
  %v2529 = vadd.f32 0.0, %v2528
  %v2530 = vpop.f32.mrb[0].mxu0
  %v2531 = vadd.f32 0.0, %v2530
  %v2532 = vpop.f32.mrb[0].mxu0
  %v2533 = vadd.f32 0.0, %v2532
  %v2534 = vpop.f32.mrb[0].mxu0
  %v2535 = vadd.f32 0.0, %v2534
  %2536 = vmatprep.mubr.bf16.mxu0 %v764
  %2537 = vmatmul.mubr.bf16.gmra.mrb[0].mxu0 %v763
  %v2538 = vpop.f32.mrb[0].mxu0
  %v2539 = vadd.f32 0.0, %v2538
  %v2540 = vpop.f32.mrb[0].mxu0
  %v2541 = vadd.f32 0.0, %v2540
  %v2542 = vpop.f32.mrb[0].mxu0
  %v2543 = vadd.f32 0.0, %v2542
  %v2544 = vpop.f32.mrb[0].mxu0
  %v2545 = vadd.f32 0.0, %v2544
  %2546 = vmatprep.mubr.bf16.mxu0 %v768
  %2547 = vmatmul.mubr.bf16.gmra.mrb[0].mxu0 %v767
  %v2548 = vpop.f32.mrb[0].mxu0
  %v2549 = vadd.f32 0.0, %v2548
  %v2550 = vpop.f32.mrb[0].mxu0
  %v2551 = vadd.f32 0.0, %v2550
  %v2552 = vpop.f32.mrb[0].mxu0
  %v2553 = vadd.f32 0.0, %v2552
  %v2554 = vpop.f32.mrb[0].mxu0
  %v2555 = vadd.f32 0.0, %v2554
  %2556 = vmatprep.mubr.bf16.mxu0 %v772
  %2557 = vmatmul.mubr.bf16.gmra.mrb[0].mxu0 %v771
  %v2558 = vpop.f32.mrb[0].mxu0
  %v2559 = vadd.f32 0.0, %v2558
  %v2560 = vpop.f32.mrb[0].mxu0
  %v2561 = vadd.f32 0.0, %v2560
  %v2562 = vpop.f32.mrb[0].mxu0
  %v2563 = vadd.f32 0.0, %v2562
  %v2564 = vpop.f32.mrb[0].mxu0
  %v2565 = vadd.f32 0.0, %v2564
  %2566 = vdwg.mxu0
  %2567 = vmatprep.subr.bf16.mxu0 %v1262
  %2568 = vmatpush1.bf16.msra.mxu0 %v1261
  %2569 = vmatprep.subr.bf16.mxu0 %v1266
  %2570 = vmatpush1.bf16.msra.mxu0 %v1265
  %2571 = vmatprep.subr.bf16.mxu0 %v1270
  %2572 = vmatpush1.bf16.msra.mxu0 %v1269
  %2573 = vmatprep.subr.bf16.mxu0 %v1274
  %2574 = vmatpush1.bf16.msra.mxu0 %v1273
  %2575 = vmatprep.subr.bf16.mxu0 %v1278
  %2576 = vmatpush1.bf16.msra.mxu0 %v1277
  %2577 = vmatprep.subr.bf16.mxu0 %v1282
  %2578 = vmatpush1.bf16.msra.mxu0 %v1281
  %2579 = vmatprep.subr.bf16.mxu0 %v1286
  %2580 = vmatpush1.bf16.msra.mxu0 %v1285
  %2581 = vmatprep.subr.bf16.mxu0 %v1290
  %2582 = vmatpush1.bf16.msra.mxu0 %v1289
  %2583 = vmatprep.subr.bf16.mxu0 %v1294
  %2584 = vmatpush1.bf16.msra.mxu0 %v1293
  %2585 = vmatprep.subr.bf16.mxu0 %v1298
  %2586 = vmatpush1.bf16.msra.mxu0 %v1297
  %2587 = vmatprep.subr.bf16.mxu0 %v1302
  %2588 = vmatpush1.bf16.msra.mxu0 %v1301
  %2589 = vmatprep.subr.bf16.mxu0 0
  %2590 = vmatpush1.bf16.msra.mxu0 0
  %2591 = vmatprep.subr.bf16.mxu0 0
  %2592 = vmatpush1.bf16.msra.mxu0 0
  %2593 = vmatprep.subr.bf16.mxu0 0
  %2594 = vmatpush1.bf16.msra.mxu0 0
  %2595 = vmatprep.subr.bf16.mxu0 0
  %2596 = vmatpush1.bf16.msra.mxu0 0
  %2597 = vmatprep.subr.bf16.mxu0 0
  %2598 = vmatpush1.bf16.msra.mxu0 0
  %2599 = vmatprep.mubr.bf16.mxu0 %v1413
  %2600 = vmatmul.mubr.bf16.gmra.mrb[0].mxu0 %v649
  %v2601 = vpop.f32.mrb[0].mxu0
  %v2602 = vadd.f32 %v2249, %v2601
  %v2603 = vpop.f32.mrb[0].mxu0
  %v2604 = vadd.f32 %v2251, %v2603
  %v2605 = vpop.f32.mrb[0].mxu0
  %v2606 = vadd.f32 %v2253, %v2605
  %v2607 = vpop.f32.mrb[0].mxu0
  %v2608 = vadd.f32 %v2255, %v2607
  %2609 = vmatprep.mubr.bf16.mxu0 %v1416
  %2610 = vmatmul.mubr.bf16.gmra.mrb[0].mxu0 %v653
  %v2611 = vpop.f32.mrb[0].mxu0
  %v2612 = vadd.f32 %v2259, %v2611
  %v2613 = vpop.f32.mrb[0].mxu0
  %v2614 = vadd.f32 %v2261, %v2613
  %v2615 = vpop.f32.mrb[0].mxu0
  %v2616 = vadd.f32 %v2263, %v2615
  %v2617 = vpop.f32.mrb[0].mxu0
  %v2618 = vadd.f32 %v2265, %v2617
  %2619 = vmatprep.mubr.bf16.mxu0 %v1419
  %2620 = vmatmul.mubr.bf16.gmra.mrb[0].mxu0 %v657
  %v2621 = vpop.f32.mrb[0].mxu0
  %v2622 = vadd.f32 %v2269, %v2621
  %v2623 = vpop.f32.mrb[0].mxu0
  %v2624 = vadd.f32 %v2271, %v2623
  %v2625 = vpop.f32.mrb[0].mxu0
  %v2626 = vadd.f32 %v2273, %v2625
  %v2627 = vpop.f32.mrb[0].mxu0
  %v2628 = vadd.f32 %v2275, %v2627
  %2629 = vmatprep.mubr.bf16.mxu0 %v1422
  %2630 = vmatmul.mubr.bf16.gmra.mrb[0].mxu0 %v661
  %v2631 = vpop.f32.mrb[0].mxu0
  %v2632 = vadd.f32 %v2279, %v2631
  %v2633 = vpop.f32.mrb[0].mxu0
  %v2634 = vadd.f32 %v2281, %v2633
  %v2635 = vpop.f32.mrb[0].mxu0
  %v2636 = vadd.f32 %v2283, %v2635
  %v2637 = vpop.f32.mrb[0].mxu0
  %v2638 = vadd.f32 %v2285, %v2637
  %2639 = vmatprep.mubr.bf16.mxu0 %v1425
  %2640 = vmatmul.mubr.bf16.gmra.mrb[0].mxu0 %v665
  %v2641 = vpop.f32.mrb[0].mxu0
  %v2642 = vadd.f32 %v2289, %v2641
  %v2643 = vpop.f32.mrb[0].mxu0
  %v2644 = vadd.f32 %v2291, %v2643
  %v2645 = vpop.f32.mrb[0].mxu0
  %v2646 = vadd.f32 %v2293, %v2645
  %v2647 = vpop.f32.mrb[0].mxu0
  %v2648 = vadd.f32 %v2295, %v2647
  %2649 = vmatprep.mubr.bf16.mxu0 %v1428
  %2650 = vmatmul.mubr.bf16.gmra.mrb[0].mxu0 %v669
  %v2651 = vpop.f32.mrb[0].mxu0
  %v2652 = vadd.f32 %v2299, %v2651
  %v2653 = vpop.f32.mrb[0].mxu0
  %v2654 = vadd.f32 %v2301, %v2653
  %v2655 = vpop.f32.mrb[0].mxu0
  %v2656 = vadd.f32 %v2303, %v2655
  %v2657 = vpop.f32.mrb[0].mxu0
  %v2658 = vadd.f32 %v2305, %v2657
  %2659 = vmatprep.mubr.bf16.mxu0 %v1431
  %2660 = vmatmul.mubr.bf16.gmra.mrb[0].mxu0 %v673
  %v2661 = vpop.f32.mrb[0].mxu0
  %v2662 = vadd.f32 %v2309, %v2661
  %v2663 = vpop.f32.mrb[0].mxu0
  %v2664 = vadd.f32 %v2311, %v2663
  %v2665 = vpop.f32.mrb[0].mxu0
  %v2666 = vadd.f32 %v2313, %v2665
  %v2667 = vpop.f32.mrb[0].mxu0
  %v2668 = vadd.f32 %v2315, %v2667
  %2669 = vmatprep.mubr.bf16.mxu0 %v1434
  %2670 = vmatmul.mubr.bf16.gmra.mrb[0].mxu0 %v677
  %v2671 = vpop.f32.mrb[0].mxu0
  %v2672 = vadd.f32 %v2319, %v2671
  %v2673 = vpop.f32.mrb[0].mxu0
  %v2674 = vadd.f32 %v2321, %v2673
  %v2675 = vpop.f32.mrb[0].mxu0
  %v2676 = vadd.f32 %v2323, %v2675
  %v2677 = vpop.f32.mrb[0].mxu0
  %v2678 = vadd.f32 %v2325, %v2677
  %2679 = vmatprep.mubr.bf16.mxu0 %v1437
  %2680 = vmatmul.mubr.bf16.gmra.mrb[0].mxu0 %v681
  %v2681 = vpop.f32.mrb[0].mxu0
  %v2682 = vadd.f32 %v2329, %v2681
  %v2683 = vpop.f32.mrb[0].mxu0
  %v2684 = vadd.f32 %v2331, %v2683
  %v2685 = vpop.f32.mrb[0].mxu0
  %v2686 = vadd.f32 %v2333, %v2685
  %v2687 = vpop.f32.mrb[0].mxu0
  %v2688 = vadd.f32 %v2335, %v2687
  %2689 = vmatprep.mubr.bf16.mxu0 %v1440
  %2690 = vmatmul.mubr.bf16.gmra.mrb[0].mxu0 %v685
  %v2691 = vpop.f32.mrb[0].mxu0
  %v2692 = vadd.f32 %v2339, %v2691
  %v2693 = vpop.f32.mrb[0].mxu0
  %v2694 = vadd.f32 %v2341, %v2693
  %v2695 = vpop.f32.mrb[0].mxu0
  %v2696 = vadd.f32 %v2343, %v2695
  %v2697 = vpop.f32.mrb[0].mxu0
  %v2698 = vadd.f32 %v2345, %v2697
  %2699 = vmatprep.mubr.bf16.mxu0 %v1443
  %2700 = vmatmul.mubr.bf16.gmra.mrb[0].mxu0 %v689
  %v2701 = vpop.f32.mrb[0].mxu0
  %v2702 = vadd.f32 %v2349, %v2701
  %v2703 = vpop.f32.mrb[0].mxu0
  %v2704 = vadd.f32 %v2351, %v2703
  %v2705 = vpop.f32.mrb[0].mxu0
  %v2706 = vadd.f32 %v2353, %v2705
  %v2707 = vpop.f32.mrb[0].mxu0
  %v2708 = vadd.f32 %v2355, %v2707
  %2709 = vmatprep.mubr.bf16.mxu0 %v1446
  %2710 = vmatmul.mubr.bf16.gmra.mrb[0].mxu0 %v693
  %v2711 = vpop.f32.mrb[0].mxu0
  %v2712 = vadd.f32 %v2359, %v2711
  %v2713 = vpop.f32.mrb[0].mxu0
  %v2714 = vadd.f32 %v2361, %v2713
  %v2715 = vpop.f32.mrb[0].mxu0
  %v2716 = vadd.f32 %v2363, %v2715
  %v2717 = vpop.f32.mrb[0].mxu0
  %v2718 = vadd.f32 %v2365, %v2717
  %2719 = vmatprep.mubr.bf16.mxu0 %v1449
  %2720 = vmatmul.mubr.bf16.gmra.mrb[0].mxu0 %v697
  %v2721 = vpop.f32.mrb[0].mxu0
  %v2722 = vadd.f32 %v2369, %v2721
  %v2723 = vpop.f32.mrb[0].mxu0
  %v2724 = vadd.f32 %v2371, %v2723
  %v2725 = vpop.f32.mrb[0].mxu0
  %v2726 = vadd.f32 %v2373, %v2725
  %v2727 = vpop.f32.mrb[0].mxu0
  %v2728 = vadd.f32 %v2375, %v2727
  %2729 = vmatprep.mubr.bf16.mxu0 %v1452
  %2730 = vmatmul.mubr.bf16.gmra.mrb[0].mxu0 %v701
  %v2731 = vpop.f32.mrb[0].mxu0
  %v2732 = vadd.f32 %v2379, %v2731
  %v2733 = vpop.f32.mrb[0].mxu0
  %v2734 = vadd.f32 %v2381, %v2733
  %v2735 = vpop.f32.mrb[0].mxu0
  %v2736 = vadd.f32 %v2383, %v2735
  %v2737 = vpop.f32.mrb[0].mxu0
  %v2738 = vadd.f32 %v2385, %v2737
  %2739 = vmatprep.mubr.bf16.mxu0 %v1455
  %2740 = vmatmul.mubr.bf16.gmra.mrb[0].mxu0 %v705
  %v2741 = vpop.f32.mrb[0].mxu0
  %v2742 = vadd.f32 %v2389, %v2741
  %v2743 = vpop.f32.mrb[0].mxu0
  %v2744 = vadd.f32 %v2391, %v2743
  %v2745 = vpop.f32.mrb[0].mxu0
  %v2746 = vadd.f32 %v2393, %v2745
  %v2747 = vpop.f32.mrb[0].mxu0
  %v2748 = vadd.f32 %v2395, %v2747
  %2749 = vmatprep.mubr.bf16.mxu0 %v1458
  %2750 = vmatmul.mubr.bf16.gmra.mrb[0].mxu0 %v709
  %v2751 = vpop.f32.mrb[0].mxu0
  %v2752 = vadd.f32 %v2399, %v2751
  %v2753 = vpop.f32.mrb[0].mxu0
  %v2754 = vadd.f32 %v2401, %v2753
  %v2755 = vpop.f32.mrb[0].mxu0
  %v2756 = vadd.f32 %v2403, %v2755
  %v2757 = vpop.f32.mrb[0].mxu0
  %v2758 = vadd.f32 %v2405, %v2757
  %2759 = vmatprep.mubr.bf16.mxu0 %v1461
  %2760 = vmatmul.mubr.bf16.gmra.mrb[0].mxu0 %v713
  %v2761 = vpop.f32.mrb[0].mxu0
  %v2762 = vadd.f32 %v2409, %v2761
  %v2763 = vpop.f32.mrb[0].mxu0
  %v2764 = vadd.f32 %v2411, %v2763
  %v2765 = vpop.f32.mrb[0].mxu0
  %v2766 = vadd.f32 %v2413, %v2765
  %v2767 = vpop.f32.mrb[0].mxu0
  %v2768 = vadd.f32 %v2415, %v2767
  %2769 = vmatprep.mubr.bf16.mxu0 %v1464
  %2770 = vmatmul.mubr.bf16.gmra.mrb[0].mxu0 %v717
  %v2771 = vpop.f32.mrb[0].mxu0
  %v2772 = vadd.f32 %v2419, %v2771
  %v2773 = vpop.f32.mrb[0].mxu0
  %v2774 = vadd.f32 %v2421, %v2773
  %v2775 = vpop.f32.mrb[0].mxu0
  %v2776 = vadd.f32 %v2423, %v2775
  %v2777 = vpop.f32.mrb[0].mxu0
  %v2778 = vadd.f32 %v2425, %v2777
  %2779 = vmatprep.mubr.bf16.mxu0 %v1467
  %2780 = vmatmul.mubr.bf16.gmra.mrb[0].mxu0 %v721
  %v2781 = vpop.f32.mrb[0].mxu0
  %v2782 = vadd.f32 %v2429, %v2781
  %v2783 = vpop.f32.mrb[0].mxu0
  %v2784 = vadd.f32 %v2431, %v2783
  %v2785 = vpop.f32.mrb[0].mxu0
  %v2786 = vadd.f32 %v2433, %v2785
  %v2787 = vpop.f32.mrb[0].mxu0
  %v2788 = vadd.f32 %v2435, %v2787
  %2789 = vmatprep.mubr.bf16.mxu0 %v1470
  %2790 = vmatmul.mubr.bf16.gmra.mrb[0].mxu0 %v725
  %v2791 = vpop.f32.mrb[0].mxu0
  %v2792 = vadd.f32 %v2439, %v2791
  %v2793 = vpop.f32.mrb[0].mxu0
  %v2794 = vadd.f32 %v2441, %v2793
  %v2795 = vpop.f32.mrb[0].mxu0
  %v2796 = vadd.f32 %v2443, %v2795
  %v2797 = vpop.f32.mrb[0].mxu0
  %v2798 = vadd.f32 %v2445, %v2797
  %2799 = vmatprep.mubr.bf16.mxu0 %v1473
  %2800 = vmatmul.mubr.bf16.gmra.mrb[0].mxu0 %v729
  %v2801 = vpop.f32.mrb[0].mxu0
  %v2802 = vadd.f32 %v2449, %v2801
  %v2803 = vpop.f32.mrb[0].mxu0
  %v2804 = vadd.f32 %v2451, %v2803
  %v2805 = vpop.f32.mrb[0].mxu0
  %v2806 = vadd.f32 %v2453, %v2805
  %v2807 = vpop.f32.mrb[0].mxu0
  %v2808 = vadd.f32 %v2455, %v2807
  %2809 = vmatprep.mubr.bf16.mxu0 %v1476
  %2810 = vmatmul.mubr.bf16.gmra.mrb[0].mxu0 %v733
  %v2811 = vpop.f32.mrb[0].mxu0
  %v2812 = vadd.f32 %v2459, %v2811
  %v2813 = vpop.f32.mrb[0].mxu0
  %v2814 = vadd.f32 %v2461, %v2813
  %v2815 = vpop.f32.mrb[0].mxu0
  %v2816 = vadd.f32 %v2463, %v2815
  %v2817 = vpop.f32.mrb[0].mxu0
  %v2818 = vadd.f32 %v2465, %v2817
  %2819 = vmatprep.mubr.bf16.mxu0 %v1479
  %2820 = vmatmul.mubr.bf16.gmra.mrb[0].mxu0 %v737
  %v2821 = vpop.f32.mrb[0].mxu0
  %v2822 = vadd.f32 %v2469, %v2821
  %v2823 = vpop.f32.mrb[0].mxu0
  %v2824 = vadd.f32 %v2471, %v2823
  %v2825 = vpop.f32.mrb[0].mxu0
  %v2826 = vadd.f32 %v2473, %v2825
  %v2827 = vpop.f32.mrb[0].mxu0
  %v2828 = vadd.f32 %v2475, %v2827
  %2829 = vmatprep.mubr.bf16.mxu0 %v1482
  %2830 = vmatmul.mubr.bf16.gmra.mrb[0].mxu0 %v741
  %v2831 = vpop.f32.mrb[0].mxu0
  %v2832 = vadd.f32 %v2479, %v2831
  %v2833 = vpop.f32.mrb[0].mxu0
  %v2834 = vadd.f32 %v2481, %v2833
  %v2835 = vpop.f32.mrb[0].mxu0
  %v2836 = vadd.f32 %v2483, %v2835
  %v2837 = vpop.f32.mrb[0].mxu0
  %v2838 = vadd.f32 %v2485, %v2837
  %2839 = vmatprep.mubr.bf16.mxu0 %v1485
  %2840 = vmatmul.mubr.bf16.gmra.mrb[0].mxu0 %v745
  %v2841 = vpop.f32.mrb[0].mxu0
  %v2842 = vadd.f32 %v2489, %v2841
  %v2843 = vpop.f32.mrb[0].mxu0
  %v2844 = vadd.f32 %v2491, %v2843
  %v2845 = vpop.f32.mrb[0].mxu0
  %v2846 = vadd.f32 %v2493, %v2845
  %v2847 = vpop.f32.mrb[0].mxu0
  %v2848 = vadd.f32 %v2495, %v2847
  %2849 = vmatprep.mubr.bf16.mxu0 %v1488
  %2850 = vmatmul.mubr.bf16.gmra.mrb[0].mxu0 %v749
  %v2851 = vpop.f32.mrb[0].mxu0
  %v2852 = vadd.f32 %v2499, %v2851
  %v2853 = vpop.f32.mrb[0].mxu0
  %v2854 = vadd.f32 %v2501, %v2853
  %v2855 = vpop.f32.mrb[0].mxu0
  %v2856 = vadd.f32 %v2503, %v2855
  %v2857 = vpop.f32.mrb[0].mxu0
  %v2858 = vadd.f32 %v2505, %v2857
  %2859 = vmatprep.mubr.bf16.mxu0 %v1491
  %2860 = vmatmul.mubr.bf16.gmra.mrb[0].mxu0 %v753
  %v2861 = vpop.f32.mrb[0].mxu0
  %v2862 = vadd.f32 %v2509, %v2861
  %v2863 = vpop.f32.mrb[0].mxu0
  %v2864 = vadd.f32 %v2511, %v2863
  %v2865 = vpop.f32.mrb[0].mxu0
  %v2866 = vadd.f32 %v2513, %v2865
  %v2867 = vpop.f32.mrb[0].mxu0
  %v2868 = vadd.f32 %v2515, %v2867
  %2869 = vmatprep.mubr.bf16.mxu0 %v1494
  %2870 = vmatmul.mubr.bf16.gmra.mrb[0].mxu0 %v757
  %v2871 = vpop.f32.mrb[0].mxu0
  %v2872 = vadd.f32 %v2519, %v2871
  %v2873 = vpop.f32.mrb[0].mxu0
  %v2874 = vadd.f32 %v2521, %v2873
  %v2875 = vpop.f32.mrb[0].mxu0
  %v2876 = vadd.f32 %v2523, %v2875
  %v2877 = vpop.f32.mrb[0].mxu0
  %v2878 = vadd.f32 %v2525, %v2877
  %2879 = vmatprep.mubr.bf16.mxu0 %v1497
  %2880 = vmatmul.mubr.bf16.gmra.mrb[0].mxu0 %v761
  %v2881 = vpop.f32.mrb[0].mxu0
  %v2882 = vadd.f32 %v2529, %v2881
  %v2883 = vpop.f32.mrb[0].mxu0
  %v2884 = vadd.f32 %v2531, %v2883
  %v2885 = vpop.f32.mrb[0].mxu0
  %v2886 = vadd.f32 %v2533, %v2885
  %v2887 = vpop.f32.mrb[0].mxu0
  %v2888 = vadd.f32 %v2535, %v2887
  %2889 = vmatprep.mubr.bf16.mxu0 %v1500
  %2890 = vmatmul.mubr.bf16.gmra.mrb[0].mxu0 %v765
  %v2891 = vpop.f32.mrb[0].mxu0
  %v2892 = vadd.f32 %v2539, %v2891
  %v2893 = vpop.f32.mrb[0].mxu0
  %v2894 = vadd.f32 %v2541, %v2893
  %v2895 = vpop.f32.mrb[0].mxu0
  %v2896 = vadd.f32 %v2543, %v2895
  %v2897 = vpop.f32.mrb[0].mxu0
  %v2898 = vadd.f32 %v2545, %v2897
  %2899 = vmatprep.mubr.bf16.mxu0 %v1503
  %2900 = vmatmul.mubr.bf16.gmra.mrb[0].mxu0 %v769
  %v2901 = vpop.f32.mrb[0].mxu0
  %v2902 = vadd.f32 %v2549, %v2901
  %v2903 = vpop.f32.mrb[0].mxu0
  %v2904 = vadd.f32 %v2551, %v2903
  %v2905 = vpop.f32.mrb[0].mxu0
  %v2906 = vadd.f32 %v2553, %v2905
  %v2907 = vpop.f32.mrb[0].mxu0
  %v2908 = vadd.f32 %v2555, %v2907
  %2909 = vmatprep.mubr.bf16.mxu0 %v1506
  %2910 = vmatmul.mubr.bf16.gmra.mrb[0].mxu0 %v773
  %v2911 = vpop.f32.mrb[0].mxu0
  %v2912 = vadd.f32 %v2559, %v2911
  %v2913 = vpop.f32.mrb[0].mxu0
  %v2914 = vadd.f32 %v2561, %v2913
  %v2915 = vpop.f32.mrb[0].mxu0
  %v2916 = vadd.f32 %v2563, %v2915
  %v2917 = vpop.f32.mrb[0].mxu0
  %v2918 = vadd.f32 %v2565, %v2917
  %2919 = vdwg.mxu0
  %v2920 = vmax.f32 %v1896, %v1976
  %v2921 = vmax.f32 %v1898, %v1978
  %v2922 = vmax.f32 %v2602, %v2682
  %v2923 = vmax.f32 %v2604, %v2684
  %v2924 = vmax.f32 %v1900, %v1980
  %v2925 = vmax.f32 %v1902, %v1982
  %v2926 = vmax.f32 %v2606, %v2686
  %v2927 = vmax.f32 %v2608, %v2688
  %v2928 = vmax.f32 %v1906, %v1986
  %v2929 = vmax.f32 %v1908, %v1988
  %v2930 = vmax.f32 %v2612, %v2692
  %v2931 = vmax.f32 %v2614, %v2694
  %v2932 = vmax.f32 %v1910, %v1990
  %v2933 = vmax.f32 %v1912, %v1992
  %v2934 = vmax.f32 %v2616, %v2696
  %v2935 = vmax.f32 %v2618, %v2698
  %v2936 = vmax.f32 %v1916, %v1996
  %v2937 = vmax.f32 %v1918, %v1998
  %v2938 = vmax.f32 %v2622, %v2702
  %v2939 = vmax.f32 %v2624, %v2704
  %v2940 = vmax.f32 %v1920, %v2000
  %v2941 = vmax.f32 %v1922, %v2002
  %v2942 = vmax.f32 %v2626, %v2706
  %v2943 = vmax.f32 %v2628, %v2708
  %v2944 = vmax.f32 %v1926, %v2006
  %v2945 = vmax.f32 %v1928, %v2008
  %v2946 = vmax.f32 %v2632, %v2712
  %v2947 = vmax.f32 %v2634, %v2714
  %v2948 = vmax.f32 %v1930, %v2010
  %v2949 = vmax.f32 %v1932, %v2012
  %v2950 = vmax.f32 %v2636, %v2716
  %v2951 = vmax.f32 %v2638, %v2718
  %v2952 = vmax.f32 %v1936, %v2016
  %v2953 = vmax.f32 %v1938, %v2018
  %v2954 = vmax.f32 %v2642, %v2722
  %v2955 = vmax.f32 %v2644, %v2724
  %v2956 = vmax.f32 %v1940, %v2020
  %v2957 = vmax.f32 %v1942, %v2022
  %v2958 = vmax.f32 %v2646, %v2726
  %v2959 = vmax.f32 %v2648, %v2728
  %v2960 = vmax.f32 %v1946, %v2026
  %v2961 = vmax.f32 %v1948, %v2028
  %v2962 = vmax.f32 %v2652, %v2732
  %v2963 = vmax.f32 %v2654, %v2734
  %v2964 = vmax.f32 %v1950, %v2030
  %v2965 = vmax.f32 %v1952, %v2032
  %v2966 = vmax.f32 %v2656, %v2736
  %v2967 = vmax.f32 %v2658, %v2738
  %v2968 = vmax.f32 %v1956, %v2036
  %v2969 = vmax.f32 %v1958, %v2038
  %v2970 = vmax.f32 %v2662, %v2742
  %v2971 = vmax.f32 %v2664, %v2744
  %v2972 = vmax.f32 %v1960, %v2040
  %v2973 = vmax.f32 %v1962, %v2042
  %v2974 = vmax.f32 %v2666, %v2746
  %v2975 = vmax.f32 %v2668, %v2748
  %v2976 = vmax.f32 %v1966, %v2046
  %v2977 = vmax.f32 %v1968, %v2048
  %v2978 = vmax.f32 %v2672, %v2752
  %v2979 = vmax.f32 %v2674, %v2754
  %v2980 = vmax.f32 %v1970, %v2050
  %v2981 = vmax.f32 %v1972, %v2052
  %v2982 = vmax.f32 %v2676, %v2756
  %v2983 = vmax.f32 %v2678, %v2758
  %v2984 = vmax.f32 %v2056, %v2136
  %v2985 = vmax.f32 %v2058, %v2138
  %v2986 = vmax.f32 %v2762, %v2842
  %v2987 = vmax.f32 %v2764, %v2844
  %v2988 = vmax.f32 %v2060, %v2140
  %v2989 = vmax.f32 %v2062, %v2142
  %v2990 = vmax.f32 %v2766, %v2846
  %v2991 = vmax.f32 %v2768, %v2848
  %v2992 = vmax.f32 %v2066, %v2146
  %v2993 = vmax.f32 %v2068, %v2148
  %v2994 = vmax.f32 %v2772, %v2852
  %v2995 = vmax.f32 %v2774, %v2854
  %v2996 = vmax.f32 %v2070, %v2150
  %v2997 = vmax.f32 %v2072, %v2152
  %v2998 = vmax.f32 %v2776, %v2856
  %v2999 = vmax.f32 %v2778, %v2858
  %v3000 = vmax.f32 %v2076, %v2156
  %v3001 = vmax.f32 %v2078, %v2158
  %v3002 = vmax.f32 %v2782, %v2862
  %v3003 = vmax.f32 %v2784, %v2864
  %v3004 = vmax.f32 %v2080, %v2160
  %v3005 = vmax.f32 %v2082, %v2162
  %v3006 = vmax.f32 %v2786, %v2866
  %v3007 = vmax.f32 %v2788, %v2868
  %v3008 = vmax.f32 %v2086, %v2166
  %v3009 = vmax.f32 %v2088, %v2168
  %v3010 = vmax.f32 %v2792, %v2872
  %v3011 = vmax.f32 %v2794, %v2874
  %v3012 = vmax.f32 %v2090, %v2170
  %v3013 = vmax.f32 %v2092, %v2172
  %v3014 = vmax.f32 %v2796, %v2876
  %v3015 = vmax.f32 %v2798, %v2878
  %v3016 = vmax.f32 %v2096, %v2176
  %v3017 = vmax.f32 %v2098, %v2178
  %v3018 = vmax.f32 %v2802, %v2882
  %v3019 = vmax.f32 %v2804, %v2884
  %v3020 = vmax.f32 %v2100, %v2180
  %v3021 = vmax.f32 %v2102, %v2182
  %v3022 = vmax.f32 %v2806, %v2886
  %v3023 = vmax.f32 %v2808, %v2888
  %v3024 = vmax.f32 %v2106, %v2186
  %v3025 = vmax.f32 %v2108, %v2188
  %v3026 = vmax.f32 %v2812, %v2892
  %v3027 = vmax.f32 %v2814, %v2894
  %v3028 = vmax.f32 %v2110, %v2190
  %v3029 = vmax.f32 %v2112, %v2192
  %v3030 = vmax.f32 %v2816, %v2896
  %v3031 = vmax.f32 %v2818, %v2898
  %v3032 = vmax.f32 %v2116, %v2196
  %v3033 = vmax.f32 %v2118, %v2198
  %v3034 = vmax.f32 %v2822, %v2902
  %v3035 = vmax.f32 %v2824, %v2904
  %v3036 = vmax.f32 %v2120, %v2200
  %v3037 = vmax.f32 %v2122, %v2202
  %v3038 = vmax.f32 %v2826, %v2906
  %v3039 = vmax.f32 %v2828, %v2908
  %v3040 = vmax.f32 %v2126, %v2206
  %v3041 = vmax.f32 %v2128, %v2208
  %v3042 = vmax.f32 %v2832, %v2912
  %v3043 = vmax.f32 %v2834, %v2914
  %v3044 = vmax.f32 %v2130, %v2210
  %v3045 = vmax.f32 %v2132, %v2212
  %v3046 = vmax.f32 %v2836, %v2916
  %v3047 = vmax.f32 %v2838, %v2918
  %v3048 = vmax.f32 %v2920, %v2984
  %v3049 = vmax.f32 %v2921, %v2985
  %v3050 = vmax.f32 %v2922, %v2986
  %v3051 = vmax.f32 %v2923, %v2987
  %v3052 = vmax.f32 %v2924, %v2988
  %v3053 = vmax.f32 %v2925, %v2989
  %v3054 = vmax.f32 %v2926, %v2990
  %v3055 = vmax.f32 %v2927, %v2991
  %v3056 = vmax.f32 %v2928, %v2992
  %v3057 = vmax.f32 %v2929, %v2993
  %v3058 = vmax.f32 %v2930, %v2994
  %v3059 = vmax.f32 %v2931, %v2995
  %v3060 = vmax.f32 %v2932, %v2996
  %v3061 = vmax.f32 %v2933, %v2997
  %v3062 = vmax.f32 %v2934, %v2998
  %v3063 = vmax.f32 %v2935, %v2999
  %v3064 = vmax.f32 %v2936, %v3000
  %v3065 = vmax.f32 %v2937, %v3001
  %v3066 = vmax.f32 %v2938, %v3002
  %v3067 = vmax.f32 %v2939, %v3003
  %v3068 = vmax.f32 %v2940, %v3004
  %v3069 = vmax.f32 %v2941, %v3005
  %v3070 = vmax.f32 %v2942, %v3006
  %v3071 = vmax.f32 %v2943, %v3007
  %v3072 = vmax.f32 %v2944, %v3008
  %v3073 = vmax.f32 %v2945, %v3009
  %v3074 = vmax.f32 %v2946, %v3010
  %v3075 = vmax.f32 %v2947, %v3011
  %v3076 = vmax.f32 %v2948, %v3012
  %v3077 = vmax.f32 %v2949, %v3013
  %v3078 = vmax.f32 %v2950, %v3014
  %v3079 = vmax.f32 %v2951, %v3015
  %v3080 = vmax.f32 %v2952, %v3016
  %v3081 = vmax.f32 %v2953, %v3017
  %v3082 = vmax.f32 %v2954, %v3018
  %v3083 = vmax.f32 %v2955, %v3019
  %v3084 = vmax.f32 %v2956, %v3020
  %v3085 = vmax.f32 %v2957, %v3021
  %v3086 = vmax.f32 %v2958, %v3022
  %v3087 = vmax.f32 %v2959, %v3023
  %v3088 = vmax.f32 %v2960, %v3024
  %v3089 = vmax.f32 %v2961, %v3025
  %v3090 = vmax.f32 %v2962, %v3026
  %v3091 = vmax.f32 %v2963, %v3027
  %v3092 = vmax.f32 %v2964, %v3028
  %v3093 = vmax.f32 %v2965, %v3029
  %v3094 = vmax.f32 %v2966, %v3030
  %v3095 = vmax.f32 %v2967, %v3031
  %v3096 = vmax.f32 %v2968, %v3032
  %v3097 = vmax.f32 %v2969, %v3033
  %v3098 = vmax.f32 %v2970, %v3034
  %v3099 = vmax.f32 %v2971, %v3035
  %v3100 = vmax.f32 %v2972, %v3036
  %v3101 = vmax.f32 %v2973, %v3037
  %v3102 = vmax.f32 %v2974, %v3038
  %v3103 = vmax.f32 %v2975, %v3039
  %v3104 = vmax.f32 %v2976, %v3040
  %v3105 = vmax.f32 %v2977, %v3041
  %v3106 = vmax.f32 %v2978, %v3042
  %v3107 = vmax.f32 %v2979, %v3043
  %v3108 = vmax.f32 %v2980, %v3044
  %v3109 = vmax.f32 %v2981, %v3045
  %v3110 = vmax.f32 %v2982, %v3046
  %v3111 = vmax.f32 %v2983, %v3047
  %v3112 = vld [vmem:[%s2] sm:$0xf]
  %v3114 = vlaneseq
  %v3115 = vshrl.u32 %v3114, 7
  %v3116 = vsub.s32 0, %v3115
  %v3117 = vrot.slane %v3112, %v3116
  %v3118 = vlaneseq
  %v3119 = vshrl.u32 %v3118, 7
  %v3120 = vsub.s32 1, %v3119
  %v3121 = vrot.slane %v3112, %v3120
  %v3122 = vlaneseq
  %v3123 = vshrl.u32 %v3122, 7
  %v3124 = vsub.s32 2, %v3123
  %v3125 = vrot.slane %v3112, %v3124
  %v3126 = vlaneseq
  %v3127 = vshrl.u32 %v3126, 7
  %v3128 = vsub.s32 3, %v3127
  %v3129 = vrot.slane %v3112, %v3128
  %v3134 = vadd.f32 %v3048, %v3117
  %v3135 = vadd.f32 %v3049, %v3121
  %v3136 = vadd.f32 %v3050, %v3125
  %v3137 = vadd.f32 %v3051, %v3129
  %v3138 = vadd.f32 %v3052, %v3117
  %v3139 = vadd.f32 %v3053, %v3121
  %v3140 = vadd.f32 %v3054, %v3125
  %v3141 = vadd.f32 %v3055, %v3129
  %v3142 = vadd.f32 %v3056, %v3117
  %v3143 = vadd.f32 %v3057, %v3121
  %v3144 = vadd.f32 %v3058, %v3125
  %v3145 = vadd.f32 %v3059, %v3129
  %v3146 = vadd.f32 %v3060, %v3117
  %v3147 = vadd.f32 %v3061, %v3121
  %v3148 = vadd.f32 %v3062, %v3125
  %v3149 = vadd.f32 %v3063, %v3129
  %v3150 = vadd.f32 %v3064, %v3117
  %v3151 = vadd.f32 %v3065, %v3121
  %v3152 = vadd.f32 %v3066, %v3125
  %v3153 = vadd.f32 %v3067, %v3129
  %v3154 = vadd.f32 %v3068, %v3117
  %v3155 = vadd.f32 %v3069, %v3121
  %v3156 = vadd.f32 %v3070, %v3125
  %v3157 = vadd.f32 %v3071, %v3129
  %v3158 = vadd.f32 %v3072, %v3117
  %v3159 = vadd.f32 %v3073, %v3121
  %v3160 = vadd.f32 %v3074, %v3125
  %v3161 = vadd.f32 %v3075, %v3129
  %v3162 = vadd.f32 %v3076, %v3117
  %v3163 = vadd.f32 %v3077, %v3121
  %v3164 = vadd.f32 %v3078, %v3125
  %v3165 = vadd.f32 %v3079, %v3129
  %v3166 = vadd.f32 %v3080, %v3117
  %v3167 = vadd.f32 %v3081, %v3121
  %v3168 = vadd.f32 %v3082, %v3125
  %v3169 = vadd.f32 %v3083, %v3129
  %v3170 = vadd.f32 %v3084, %v3117
  %v3171 = vadd.f32 %v3085, %v3121
  %v3172 = vadd.f32 %v3086, %v3125
  %v3173 = vadd.f32 %v3087, %v3129
  %v3174 = vadd.f32 %v3088, %v3117
  %v3175 = vadd.f32 %v3089, %v3121
  %v3176 = vadd.f32 %v3090, %v3125
  %v3177 = vadd.f32 %v3091, %v3129
  %v3178 = vadd.f32 %v3092, %v3117
  %v3179 = vadd.f32 %v3093, %v3121
  %v3180 = vadd.f32 %v3094, %v3125
  %v3181 = vadd.f32 %v3095, %v3129
  %v3182 = vadd.f32 %v3096, %v3117
  %v3183 = vadd.f32 %v3097, %v3121
  %v3184 = vadd.f32 %v3098, %v3125
  %v3185 = vadd.f32 %v3099, %v3129
  %v3186 = vadd.f32 %v3100, %v3117
  %v3187 = vadd.f32 %v3101, %v3121
  %v3188 = vadd.f32 %v3102, %v3125
  %v3189 = vadd.f32 %v3103, %v3129
  %v3190 = vadd.f32 %v3104, %v3117
  %v3191 = vadd.f32 %v3105, %v3121
  %v3192 = vadd.f32 %v3106, %v3125
  %v3193 = vadd.f32 %v3107, %v3129
  %v3194 = vadd.f32 %v3108, %v3117
  %v3195 = vadd.f32 %v3109, %v3121
  %v3196 = vadd.f32 %v3110, %v3125
  %v3197 = vadd.f32 %v3111, %v3129
  %v3198 = vmax.f32 %v3134, 0.0
  %v3199 = vmax.f32 %v3135, 0.0
  %v3200 = vmax.f32 %v3136, 0.0
  %v3201 = vmax.f32 %v3137, 0.0
  %v3202 = vmax.f32 %v3138, 0.0
  %v3203 = vmax.f32 %v3139, 0.0
  %v3204 = vmax.f32 %v3140, 0.0
  %v3205 = vmax.f32 %v3141, 0.0
  %v3206 = vmax.f32 %v3142, 0.0
  %v3207 = vmax.f32 %v3143, 0.0
  %v3208 = vmax.f32 %v3144, 0.0
  %v3209 = vmax.f32 %v3145, 0.0
  %v3210 = vmax.f32 %v3146, 0.0
  %v3211 = vmax.f32 %v3147, 0.0
  %v3212 = vmax.f32 %v3148, 0.0
  %v3213 = vmax.f32 %v3149, 0.0
  %v3214 = vmax.f32 %v3150, 0.0
  %v3215 = vmax.f32 %v3151, 0.0
  %v3216 = vmax.f32 %v3152, 0.0
  %v3217 = vmax.f32 %v3153, 0.0
  %v3218 = vmax.f32 %v3154, 0.0
  %v3219 = vmax.f32 %v3155, 0.0
  %v3220 = vmax.f32 %v3156, 0.0
  %v3221 = vmax.f32 %v3157, 0.0
  %v3222 = vmax.f32 %v3158, 0.0
  %v3223 = vmax.f32 %v3159, 0.0
  %v3224 = vmax.f32 %v3160, 0.0
  %v3225 = vmax.f32 %v3161, 0.0
  %v3226 = vmax.f32 %v3162, 0.0
  %v3227 = vmax.f32 %v3163, 0.0
  %v3228 = vmax.f32 %v3164, 0.0
  %v3229 = vmax.f32 %v3165, 0.0
  %v3230 = vmax.f32 %v3166, 0.0
  %v3231 = vmax.f32 %v3167, 0.0
  %v3232 = vmax.f32 %v3168, 0.0
  %v3233 = vmax.f32 %v3169, 0.0
  %v3234 = vmax.f32 %v3170, 0.0
  %v3235 = vmax.f32 %v3171, 0.0
  %v3236 = vmax.f32 %v3172, 0.0
  %v3237 = vmax.f32 %v3173, 0.0
  %v3238 = vmax.f32 %v3174, 0.0
  %v3239 = vmax.f32 %v3175, 0.0
  %v3240 = vmax.f32 %v3176, 0.0
  %v3241 = vmax.f32 %v3177, 0.0
  %v3242 = vmax.f32 %v3178, 0.0
  %v3243 = vmax.f32 %v3179, 0.0
  %v3244 = vmax.f32 %v3180, 0.0
  %v3245 = vmax.f32 %v3181, 0.0
  %v3246 = vmax.f32 %v3182, 0.0
  %v3247 = vmax.f32 %v3183, 0.0
  %v3248 = vmax.f32 %v3184, 0.0
  %v3249 = vmax.f32 %v3185, 0.0
  %v3250 = vmax.f32 %v3186, 0.0
  %v3251 = vmax.f32 %v3187, 0.0
  %v3252 = vmax.f32 %v3188, 0.0
  %v3253 = vmax.f32 %v3189, 0.0
  %v3254 = vmax.f32 %v3190, 0.0
  %v3255 = vmax.f32 %v3191, 0.0
  %v3256 = vmax.f32 %v3192, 0.0
  %v3257 = vmax.f32 %v3193, 0.0
  %v3258 = vmax.f32 %v3194, 0.0
  %v3259 = vmax.f32 %v3195, 0.0
  %v3260 = vmax.f32 %v3196, 0.0
  %v3261 = vmax.f32 %v3197, 0.0
  %v3262 = vpack.c.bf16 %v3202, %v3198
  %v3263 = vpack.c.bf16 %v3203, %v3199
  %v3264 = vpack.c.bf16 %v3204, %v3200
  %v3265 = vpack.c.bf16 %v3205, %v3201
  %v3266 = vpack.c.bf16 %v3210, %v3206
  %v3267 = vpack.c.bf16 %v3211, %v3207
  %v3268 = vpack.c.bf16 %v3212, %v3208
  %v3269 = vpack.c.bf16 %v3213, %v3209
  %v3270 = vpack.c.bf16 %v3218, %v3214
  %v3271 = vpack.c.bf16 %v3219, %v3215
  %v3272 = vpack.c.bf16 %v3220, %v3216
  %v3273 = vpack.c.bf16 %v3221, %v3217
  %v3274 = vpack.c.bf16 %v3226, %v3222
  %v3275 = vpack.c.bf16 %v3227, %v3223
  %v3276 = vpack.c.bf16 %v3228, %v3224
  %v3277 = vpack.c.bf16 %v3229, %v3225
  %v3278 = vpack.c.bf16 %v3234, %v3230
  %v3279 = vpack.c.bf16 %v3235, %v3231
  %v3280 = vpack.c.bf16 %v3236, %v3232
  %v3281 = vpack.c.bf16 %v3237, %v3233
  %v3282 = vpack.c.bf16 %v3242, %v3238
  %v3283 = vpack.c.bf16 %v3243, %v3239
  %v3284 = vpack.c.bf16 %v3244, %v3240
  %v3285 = vpack.c.bf16 %v3245, %v3241
  %v3286 = vpack.c.bf16 %v3250, %v3246
  %v3287 = vpack.c.bf16 %v3251, %v3247
  %v3288 = vpack.c.bf16 %v3252, %v3248
  %v3289 = vpack.c.bf16 %v3253, %v3249
  %v3290 = vpack.c.bf16 %v3258, %v3254
  %v3291 = vpack.c.bf16 %v3259, %v3255
  %v3292 = vpack.c.bf16 %v3260, %v3256
  %v3293 = vpack.c.bf16 %v3261, %v3257
  %v3294 = vld [vmem:[%s3] sm:$0xf]
  %v3295 = vld [vmem:[%s3 + $0x4] sm:$0xf]
  %v3296 = vld [vmem:[%s3 + $0x8] sm:$0xf]
  %v3297 = vld [vmem:[%s3 + $0xc] sm:$0xf]
  %v3298 = vld [vmem:[%s3 + $0x10] sm:$0xf]
  %v3299 = vld [vmem:[%s3 + $0x14] sm:$0xf]
  %v3300 = vld [vmem:[%s3 + $0x18] sm:$0xf]
  %v3301 = vld [vmem:[%s3 + $0x1c] sm:$0xf]
  %v3302 = vld [vmem:[%s3 + $0x20] sm:$0xf]
  %v3303 = vld [vmem:[%s3 + $0x24] sm:$0xf]
  %v3304 = vld [vmem:[%s3 + $0x28] sm:$0xf]
  %v3305 = vld [vmem:[%s3 + $0x2c] sm:$0xf]
  %v3306 = vld [vmem:[%s3 + $0x30] sm:$0xf]
  %v3307 = vld [vmem:[%s3 + $0x34] sm:$0xf]
  %v3308 = vld [vmem:[%s3 + $0x38] sm:$0xf]
  %v3309 = vld [vmem:[%s3 + $0x3c] sm:$0xf]
  %v3310 = vld [vmem:[%s3 + $0x40] sm:$0xf]
  %v3311 = vld [vmem:[%s3 + $0x44] sm:$0xf]
  %v3312 = vld [vmem:[%s3 + $0x48] sm:$0xf]
  %v3313 = vld [vmem:[%s3 + $0x4c] sm:$0xf]
  %v3314 = vld [vmem:[%s3 + $0x50] sm:$0xf]
  %v3315 = vld [vmem:[%s3 + $0x54] sm:$0xf]
  %v3316 = vld [vmem:[%s3 + $0x58] sm:$0xf]
  %v3317 = vld [vmem:[%s3 + $0x5c] sm:$0xf]
  %v3318 = vld [vmem:[%s3 + $0x60] sm:$0xf]
  %v3319 = vld [vmem:[%s3 + $0x64] sm:$0xf]
  %v3320 = vld [vmem:[%s3 + $0x68] sm:$0xf]
  %v3321 = vld [vmem:[%s3 + $0x6c] sm:$0xf]
  %v3322 = vld [vmem:[%s3 + $0x70] sm:$0xf]
  %v3323 = vld [vmem:[%s3 + $0x74] sm:$0xf]
  %v3324 = vld [vmem:[%s3 + $0x78] sm:$0xf]
  %v3325 = vld [vmem:[%s3 + $0x7c] sm:$0xf]
  %v3326 = vld [vmem:[%s3 + $0x80] sm:$0xf]
  %v3327 = vld [vmem:[%s3 + $0x84] sm:$0xf]
  %v3328 = vld [vmem:[%s3 + $0x88] sm:$0xf]
  %v3329 = vld [vmem:[%s3 + $0x8c] sm:$0xf]
  %v3330 = vld [vmem:[%s3 + $0x90] sm:$0xf]
  %v3331 = vld [vmem:[%s3 + $0x94] sm:$0xf]
  %v3332 = vld [vmem:[%s3 + $0x98] sm:$0xf]
  %v3333 = vld [vmem:[%s3 + $0x9c] sm:$0xf]
  %v3334 = vld [vmem:[%s3 + $0xa0] sm:$0xf]
  %v3335 = vld [vmem:[%s3 + $0xa4] sm:$0xf]
  %v3336 = vld [vmem:[%s3 + $0xa8] sm:$0xf]
  %v3337 = vld [vmem:[%s3 + $0xac] sm:$0xf]
  %v3338 = vld [vmem:[%s3 + $0xb0] sm:$0xf]
  %v3339 = vld [vmem:[%s3 + $0xb4] sm:$0xf]
  %v3340 = vld [vmem:[%s3 + $0xb8] sm:$0xf]
  %v3341 = vld [vmem:[%s3 + $0xbc] sm:$0xf]
  %v3342 = vld [vmem:[%s3 + $0xc0] sm:$0xf]
  %v3343 = vld [vmem:[%s3 + $0xc4] sm:$0xf]
  %v3344 = vld [vmem:[%s3 + $0xc8] sm:$0xf]
  %v3345 = vld [vmem:[%s3 + $0xcc] sm:$0xf]
  %v3346 = vld [vmem:[%s3 + $0xd0] sm:$0xf]
  %v3347 = vld [vmem:[%s3 + $0xd4] sm:$0xf]
  %v3348 = vld [vmem:[%s3 + $0xd8] sm:$0xf]
  %v3349 = vld [vmem:[%s3 + $0xdc] sm:$0xf]
  %v3350 = vld [vmem:[%s3 + $0xe0] sm:$0xf]
  %v3351 = vld [vmem:[%s3 + $0xe4] sm:$0xf]
  %v3352 = vld [vmem:[%s3 + $0xe8] sm:$0xf]
  %v3353 = vld [vmem:[%s3 + $0xec] sm:$0xf]
  %v3354 = vld [vmem:[%s3 + $0xf0] sm:$0xf]
  %v3355 = vld [vmem:[%s3 + $0xf4] sm:$0xf]
  %v3356 = vld [vmem:[%s3 + $0xf8] sm:$0xf]
  %v3357 = vld [vmem:[%s3 + $0xfc] sm:$0xf]
  %v3358 = vld [vmem:[%s3 + $0x100] sm:$0xf]
  %v3359 = vld [vmem:[%s3 + $0x104] sm:$0xf]
  %v3360 = vld [vmem:[%s3 + $0x108] sm:$0xf]
  %v3361 = vld [vmem:[%s3 + $0x10c] sm:$0xf]
  %v3362 = vld [vmem:[%s3 + $0x110] sm:$0xf]
  %v3363 = vld [vmem:[%s3 + $0x114] sm:$0xf]
  %v3364 = vld [vmem:[%s3 + $0x118] sm:$0xf]
  %v3365 = vld [vmem:[%s3 + $0x11c] sm:$0xf]
  %v3366 = vld [vmem:[%s3 + $0x120] sm:$0xf]
  %v3367 = vld [vmem:[%s3 + $0x124] sm:$0xf]
  %v3368 = vld [vmem:[%s3 + $0x128] sm:$0xf]
  %v3369 = vld [vmem:[%s3 + $0x12c] sm:$0xf]
  %v3370 = vld [vmem:[%s3 + $0x130] sm:$0xf]
  %v3371 = vld [vmem:[%s3 + $0x134] sm:$0xf]
  %v3372 = vld [vmem:[%s3 + $0x138] sm:$0xf]
  %v3373 = vld [vmem:[%s3 + $0x13c] sm:$0xf]
  %v3374 = vld [vmem:[%s3 + $0x140] sm:$0xf]
  %v3375 = vld [vmem:[%s3 + $0x144] sm:$0xf]
  %v3376 = vld [vmem:[%s3 + $0x148] sm:$0xf]
  %v3377 = vld [vmem:[%s3 + $0x14c] sm:$0xf]
  %v3378 = vld [vmem:[%s3 + $0x150] sm:$0xf]
  %v3379 = vld [vmem:[%s3 + $0x154] sm:$0xf]
  %v3380 = vld [vmem:[%s3 + $0x158] sm:$0xf]
  %v3381 = vld [vmem:[%s3 + $0x15c] sm:$0xf]
  %v3382 = vld [vmem:[%s3 + $0x160] sm:$0xf]
  %v3383 = vld [vmem:[%s3 + $0x164] sm:$0xf]
  %v3384 = vld [vmem:[%s3 + $0x168] sm:$0xf]
  %v3385 = vld [vmem:[%s3 + $0x16c] sm:$0xf]
  %v3386 = vld [vmem:[%s3 + $0x170] sm:$0xf]
  %v3387 = vld [vmem:[%s3 + $0x174] sm:$0xf]
  %v3388 = vld [vmem:[%s3 + $0x178] sm:$0xf]
  %v3389 = vld [vmem:[%s3 + $0x17c] sm:$0xf]
  %v3390 = vld [vmem:[%s3 + $0x180] sm:$0xf]
  %v3391 = vld [vmem:[%s3 + $0x184] sm:$0xf]
  %v3392 = vld [vmem:[%s3 + $0x188] sm:$0xf]
  %v3393 = vld [vmem:[%s3 + $0x18c] sm:$0xf]
  %v3394 = vld [vmem:[%s3 + $0x190] sm:$0xf]
  %v3395 = vld [vmem:[%s3 + $0x194] sm:$0xf]
  %v3396 = vld [vmem:[%s3 + $0x198] sm:$0xf]
  %v3397 = vld [vmem:[%s3 + $0x19c] sm:$0xf]
  %v3398 = vld [vmem:[%s3 + $0x1a0] sm:$0xf]
  %v3399 = vld [vmem:[%s3 + $0x1a4] sm:$0xf]
  %v3400 = vld [vmem:[%s3 + $0x1a8] sm:$0xf]
  %v3401 = vld [vmem:[%s3 + $0x1ac] sm:$0xf]
  %v3402 = vld [vmem:[%s3 + $0x1b0] sm:$0xf]
  %v3403 = vld [vmem:[%s3 + $0x1b4] sm:$0xf]
  %v3404 = vld [vmem:[%s3 + $0x1b8] sm:$0xf]
  %v3405 = vld [vmem:[%s3 + $0x1bc] sm:$0xf]
  %v3406 = vld [vmem:[%s3 + $0x1c0] sm:$0xf]
  %v3407 = vld [vmem:[%s3 + $0x1c4] sm:$0xf]
  %v3408 = vld [vmem:[%s3 + $0x1c8] sm:$0xf]
  %v3409 = vld [vmem:[%s3 + $0x1cc] sm:$0xf]
  %v3410 = vld [vmem:[%s3 + $0x1d0] sm:$0xf]
  %v3411 = vld [vmem:[%s3 + $0x1d4] sm:$0xf]
  %v3412 = vld [vmem:[%s3 + $0x1d8] sm:$0xf]
  %v3413 = vld [vmem:[%s3 + $0x1dc] sm:$0xf]
  %v3414 = vld [vmem:[%s3 + $0x1e0] sm:$0xf]
  %v3415 = vld [vmem:[%s3 + $0x1e4] sm:$0xf]
  %v3416 = vld [vmem:[%s3 + $0x1e8] sm:$0xf]
  %v3417 = vld [vmem:[%s3 + $0x1ec] sm:$0xf]
  %v3418 = vld [vmem:[%s3 + $0x1f0] sm:$0xf]
  %v3419 = vld [vmem:[%s3 + $0x1f4] sm:$0xf]
  %v3420 = vld [vmem:[%s3 + $0x1f8] sm:$0xf]
  %v3421 = vld [vmem:[%s3 + $0x1fc] sm:$0xf]
  %v3426 = vrot.slane %v3262, 4
  %v3427 = vrot.slane %v3263, 4
  %v3428 = vrot.slane %v3264, 4
  %v3429 = vrot.slane %v3265, 4
  %v3498 = vunpack.c.l.b16 %v3358
  %v3499 = vunpack.c.l.b16 %v3359
  %v3500 = vunpack.c.l.b16 %v3360
  %v3501 = vunpack.c.l.b16 %v3361
  %v3502 = vunpack.c.l.b16 %v3362
  %v3503 = vunpack.c.l.b16 %v3363
  %v3504 = vunpack.c.l.b16 %v3364
  %v3505 = vunpack.c.l.b16 %v3365
  %v3506 = vunpack.c.l.b16 %v3366
  %v3507 = vunpack.c.l.b16 %v3367
  %v3508 = vunpack.c.l.b16 %v3368
  %v3509 = vunpack.c.l.b16 %v3369
  %v3510 = vunpack.c.l.b16 %v3370
  %v3511 = vunpack.c.l.b16 %v3371
  %v3512 = vunpack.c.l.b16 %v3372
  %v3513 = vunpack.c.l.b16 %v3373
  %v3514 = vunpack.c.l.b16 %v3374
  %v3515 = vunpack.c.l.b16 %v3375
  %v3516 = vunpack.c.l.b16 %v3376
  %v3517 = vunpack.c.l.b16 %v3377
  %v3518 = vunpack.c.l.b16 %v3378
  %v3519 = vunpack.c.l.b16 %v3379
  %v3520 = vunpack.c.l.b16 %v3380
  %v3521 = vunpack.c.l.b16 %v3381
  %v3522 = vunpack.c.l.b16 %v3382
  %v3523 = vunpack.c.l.b16 %v3383
  %v3524 = vunpack.c.l.b16 %v3384
  %v3525 = vunpack.c.l.b16 %v3385
  %v3526 = vunpack.c.l.b16 %v3386
  %v3527 = vunpack.c.l.b16 %v3387
  %v3528 = vunpack.c.l.b16 %v3388
  %v3529 = vunpack.c.l.b16 %v3389
  %v3530 = vunpack.c.l.b16 %v3390
  %v3531 = vunpack.c.l.b16 %v3391
  %v3532 = vunpack.c.l.b16 %v3392
  %v3533 = vunpack.c.l.b16 %v3393
  %v3534 = vunpack.c.l.b16 %v3394
  %v3535 = vunpack.c.l.b16 %v3395
  %v3536 = vunpack.c.l.b16 %v3396
  %v3537 = vunpack.c.l.b16 %v3397
  %v3538 = vunpack.c.l.b16 %v3398
  %v3539 = vunpack.c.l.b16 %v3399
  %v3540 = vunpack.c.l.b16 %v3400
  %v3541 = vunpack.c.l.b16 %v3401
  %v3542 = vunpack.c.l.b16 %v3402
  %v3543 = vunpack.c.l.b16 %v3403
  %v3544 = vunpack.c.l.b16 %v3404
  %v3545 = vunpack.c.l.b16 %v3405
  %v3546 = vunpack.c.l.b16 %v3406
  %v3547 = vunpack.c.l.b16 %v3407
  %v3548 = vunpack.c.l.b16 %v3408
  %v3549 = vunpack.c.l.b16 %v3409
  %v3550 = vunpack.c.l.b16 %v3410
  %v3551 = vunpack.c.l.b16 %v3411
  %v3552 = vunpack.c.l.b16 %v3412
  %v3553 = vunpack.c.l.b16 %v3413
  %v3554 = vunpack.c.l.b16 %v3414
  %v3555 = vunpack.c.l.b16 %v3415
  %v3556 = vunpack.c.l.b16 %v3416
  %v3557 = vunpack.c.l.b16 %v3417
  %v3558 = vunpack.c.l.b16 %v3418
  %v3559 = vunpack.c.l.b16 %v3419
  %v3560 = vunpack.c.l.b16 %v3420
  %v3561 = vunpack.c.l.b16 %v3421
  %v3562 = vpack.c.b16 %v3499, %v3498
  %v3563 = vpack.c.b16 %v3501, %v3500
  %v3564 = vpack.c.b16 %v3503, %v3502
  %v3565 = vpack.c.b16 %v3505, %v3504
  %v3566 = vpack.c.b16 %v3507, %v3506
  %v3567 = vpack.c.b16 %v3509, %v3508
  %v3568 = vpack.c.b16 %v3511, %v3510
  %v3569 = vpack.c.b16 %v3513, %v3512
  %v3570 = vpack.c.b16 %v3515, %v3514
  %v3571 = vpack.c.b16 %v3517, %v3516
  %v3572 = vpack.c.b16 %v3519, %v3518
  %v3573 = vpack.c.b16 %v3521, %v3520
  %v3574 = vpack.c.b16 %v3523, %v3522
  %v3575 = vpack.c.b16 %v3525, %v3524
  %v3576 = vpack.c.b16 %v3527, %v3526
  %v3577 = vpack.c.b16 %v3529, %v3528
  %v3578 = vpack.c.b16 %v3531, %v3530
  %v3579 = vpack.c.b16 %v3533, %v3532
  %v3580 = vpack.c.b16 %v3535, %v3534
  %v3581 = vpack.c.b16 %v3537, %v3536
  %v3582 = vpack.c.b16 %v3539, %v3538
  %v3583 = vpack.c.b16 %v3541, %v3540
  %v3584 = vpack.c.b16 %v3543, %v3542
  %v3585 = vpack.c.b16 %v3545, %v3544
  %v3586 = vpack.c.b16 %v3547, %v3546
  %v3587 = vpack.c.b16 %v3549, %v3548
  %v3588 = vpack.c.b16 %v3551, %v3550
  %v3589 = vpack.c.b16 %v3553, %v3552
  %v3590 = vpack.c.b16 %v3555, %v3554
  %v3591 = vpack.c.b16 %v3557, %v3556
  %v3592 = vpack.c.b16 %v3559, %v3558
  %v3593 = vpack.c.b16 %v3561, %v3560
  %3626 = vmatprep.subr.bf16.mxu0 0
  %3627 = vmatpush1.bf16.msra.mxu0 %v3562
  %3628 = vmatprep.subr.bf16.mxu0 0
  %3629 = vmatpush1.bf16.msra.mxu0 %v3563
  %3630 = vmatprep.subr.bf16.mxu0 0
  %3631 = vmatpush1.bf16.msra.mxu0 %v3564
  %3632 = vmatprep.subr.bf16.mxu0 0
  %3633 = vmatpush1.bf16.msra.mxu0 %v3565
  %3634 = vmatprep.subr.bf16.mxu0 0
  %3635 = vmatpush1.bf16.msra.mxu0 %v3566
  %3636 = vmatprep.subr.bf16.mxu0 0
  %3637 = vmatpush1.bf16.msra.mxu0 %v3567
  %3638 = vmatprep.subr.bf16.mxu0 0
  %3639 = vmatpush1.bf16.msra.mxu0 %v3568
  %3640 = vmatprep.subr.bf16.mxu0 0
  %3641 = vmatpush1.bf16.msra.mxu0 %v3569
  %3642 = vmatprep.subr.bf16.mxu0 0
  %3643 = vmatpush1.bf16.msra.mxu0 %v3570
  %3644 = vmatprep.subr.bf16.mxu0 0
  %3645 = vmatpush1.bf16.msra.mxu0 %v3571
  %3646 = vmatprep.subr.bf16.mxu0 0
  %3647 = vmatpush1.bf16.msra.mxu0 %v3572
  %3648 = vmatprep.subr.bf16.mxu0 0
  %3649 = vmatpush1.bf16.msra.mxu0 %v3573
  %3650 = vmatprep.subr.bf16.mxu0 0
  %3651 = vmatpush1.bf16.msra.mxu0 %v3574
  %3652 = vmatprep.subr.bf16.mxu0 0
  %3653 = vmatpush1.bf16.msra.mxu0 %v3575
  %3654 = vmatprep.subr.bf16.mxu0 0
  %3655 = vmatpush1.bf16.msra.mxu0 %v3576
  %3656 = vmatprep.subr.bf16.mxu0 0
  %3657 = vmatpush1.bf16.msra.mxu0 %v3577
  %3658 = vmatprep.mubr.bf16.mxu0 %v3427
  %3659 = vmatmul.mubr.bf16.gmra.mrb[0].mxu0 %v3426
  %v3660 = vpop.f32.mrb[0].mxu0
  %v3661 = vadd.f32 0.0, %v3660
  %v3662 = vpop.f32.mrb[0].mxu0
  %v3663 = vpop.f32.mrb[0].mxu0
  %v3664 = vpop.f32.mrb[0].mxu0
  %3665 = vdwg.mxu0
  %3666 = vmatprep.subr.bf16.mxu0 0
  %3667 = vmatpush1.bf16.msra.mxu0 %v3578
  %3668 = vmatprep.subr.bf16.mxu0 0
  %3669 = vmatpush1.bf16.msra.mxu0 %v3579
  %3670 = vmatprep.subr.bf16.mxu0 0
  %3671 = vmatpush1.bf16.msra.mxu0 %v3580
  %3672 = vmatprep.subr.bf16.mxu0 0
  %3673 = vmatpush1.bf16.msra.mxu0 %v3581
  %3674 = vmatprep.subr.bf16.mxu0 0
  %3675 = vmatpush1.bf16.msra.mxu0 %v3582
  %3676 = vmatprep.subr.bf16.mxu0 0
  %3677 = vmatpush1.bf16.msra.mxu0 %v3583
  %3678 = vmatprep.subr.bf16.mxu0 0
  %3679 = vmatpush1.bf16.msra.mxu0 %v3584
  %3680 = vmatprep.subr.bf16.mxu0 0
  %3681 = vmatpush1.bf16.msra.mxu0 %v3585
  %3682 = vmatprep.subr.bf16.mxu0 0
  %3683 = vmatpush1.bf16.msra.mxu0 %v3586
  %3684 = vmatprep.subr.bf16.mxu0 0
  %3685 = vmatpush1.bf16.msra.mxu0 %v3587
  %3686 = vmatprep.subr.bf16.mxu0 0
  %3687 = vmatpush1.bf16.msra.mxu0 %v3588
  %3688 = vmatprep.subr.bf16.mxu0 0
  %3689 = vmatpush1.bf16.msra.mxu0 %v3589
  %3690 = vmatprep.subr.bf16.mxu0 0
  %3691 = vmatpush1.bf16.msra.mxu0 %v3590
  %3692 = vmatprep.subr.bf16.mxu0 0
  %3693 = vmatpush1.bf16.msra.mxu0 %v3591
  %3694 = vmatprep.subr.bf16.mxu0 0
  %3695 = vmatpush1.bf16.msra.mxu0 %v3592
  %3696 = vmatprep.subr.bf16.mxu0 0
  %3697 = vmatpush1.bf16.msra.mxu0 %v3593
  %3698 = vmatprep.mubr.bf16.mxu0 %v3429
  %3699 = vmatmul.mubr.bf16.gmra.mrb[0].mxu0 %v3428
  %v3700 = vpop.f32.mrb[0].mxu0
  %v3701 = vadd.f32 %v3661, %v3700
  %v3702 = vpop.f32.mrb[0].mxu0
  %v3703 = vpop.f32.mrb[0].mxu0
  %v3704 = vpop.f32.mrb[0].mxu0
  %3705 = vdwg.mxu0
  %v3770 = vunpack.c.l.b16 %v3294
  %v3771 = vunpack.c.l.b16 %v3295
  %v3772 = vunpack.c.l.b16 %v3296
  %v3773 = vunpack.c.l.b16 %v3297
  %v3774 = vunpack.c.l.b16 %v3298
  %v3775 = vunpack.c.l.b16 %v3299
  %v3776 = vunpack.c.l.b16 %v3300
  %v3777 = vunpack.c.l.b16 %v3301
  %v3778 = vunpack.c.l.b16 %v3302
  %v3779 = vunpack.c.l.b16 %v3303
  %v3780 = vunpack.c.l.b16 %v3304
  %v3781 = vunpack.c.l.b16 %v3305
  %v3782 = vunpack.c.l.b16 %v3306
  %v3783 = vunpack.c.l.b16 %v3307
  %v3784 = vunpack.c.l.b16 %v3308
  %v3785 = vunpack.c.l.b16 %v3309
  %v3786 = vunpack.c.l.b16 %v3310
  %v3787 = vunpack.c.l.b16 %v3311
  %v3788 = vunpack.c.l.b16 %v3312
  %v3789 = vunpack.c.l.b16 %v3313
  %v3790 = vunpack.c.l.b16 %v3314
  %v3791 = vunpack.c.l.b16 %v3315
  %v3792 = vunpack.c.l.b16 %v3316
  %v3793 = vunpack.c.l.b16 %v3317
  %v3794 = vunpack.c.l.b16 %v3318
  %v3795 = vunpack.c.l.b16 %v3319
  %v3796 = vunpack.c.l.b16 %v3320
  %v3797 = vunpack.c.l.b16 %v3321
  %v3798 = vunpack.c.l.b16 %v3322
  %v3799 = vunpack.c.l.b16 %v3323
  %v3800 = vunpack.c.l.b16 %v3324
  %v3801 = vunpack.c.l.b16 %v3325
  %v3802 = vunpack.c.l.b16 %v3326
  %v3803 = vunpack.c.l.b16 %v3327
  %v3804 = vunpack.c.l.b16 %v3328
  %v3805 = vunpack.c.l.b16 %v3329
  %v3806 = vunpack.c.l.b16 %v3330
  %v3807 = vunpack.c.l.b16 %v3331
  %v3808 = vunpack.c.l.b16 %v3332
  %v3809 = vunpack.c.l.b16 %v3333
  %v3810 = vunpack.c.l.b16 %v3334
  %v3811 = vunpack.c.l.b16 %v3335
  %v3812 = vunpack.c.l.b16 %v3336
  %v3813 = vunpack.c.l.b16 %v3337
  %v3814 = vunpack.c.l.b16 %v3338
  %v3815 = vunpack.c.l.b16 %v3339
  %v3816 = vunpack.c.l.b16 %v3340
  %v3817 = vunpack.c.l.b16 %v3341
  %v3818 = vunpack.c.l.b16 %v3342
  %v3819 = vunpack.c.l.b16 %v3343
  %v3820 = vunpack.c.l.b16 %v3344
  %v3821 = vunpack.c.l.b16 %v3345
  %v3822 = vunpack.c.l.b16 %v3346
  %v3823 = vunpack.c.l.b16 %v3347
  %v3824 = vunpack.c.l.b16 %v3348
  %v3825 = vunpack.c.l.b16 %v3349
  %v3826 = vunpack.c.l.b16 %v3350
  %v3827 = vunpack.c.l.b16 %v3351
  %v3828 = vunpack.c.l.b16 %v3352
  %v3829 = vunpack.c.l.b16 %v3353
  %v3830 = vunpack.c.l.b16 %v3354
  %v3831 = vunpack.c.l.b16 %v3355
  %v3832 = vunpack.c.l.b16 %v3356
  %v3833 = vunpack.c.l.b16 %v3357
  %v3834 = vpack.c.b16 %v3771, %v3770
  %v3835 = vpack.c.b16 %v3773, %v3772
  %v3836 = vpack.c.b16 %v3775, %v3774
  %v3837 = vpack.c.b16 %v3777, %v3776
  %v3838 = vpack.c.b16 %v3779, %v3778
  %v3839 = vpack.c.b16 %v3781, %v3780
  %v3840 = vpack.c.b16 %v3783, %v3782
  %v3841 = vpack.c.b16 %v3785, %v3784
  %v3842 = vpack.c.b16 %v3787, %v3786
  %v3843 = vpack.c.b16 %v3789, %v3788
  %v3844 = vpack.c.b16 %v3791, %v3790
  %v3845 = vpack.c.b16 %v3793, %v3792
  %v3846 = vpack.c.b16 %v3795, %v3794
  %v3847 = vpack.c.b16 %v3797, %v3796
  %v3848 = vpack.c.b16 %v3799, %v3798
  %v3849 = vpack.c.b16 %v3801, %v3800
  %v3850 = vpack.c.b16 %v3803, %v3802
  %v3851 = vpack.c.b16 %v3805, %v3804
  %v3852 = vpack.c.b16 %v3807, %v3806
  %v3853 = vpack.c.b16 %v3809, %v3808
  %v3854 = vpack.c.b16 %v3811, %v3810
  %v3855 = vpack.c.b16 %v3813, %v3812
  %v3856 = vpack.c.b16 %v3815, %v3814
  %v3857 = vpack.c.b16 %v3817, %v3816
  %v3858 = vpack.c.b16 %v3819, %v3818
  %v3859 = vpack.c.b16 %v3821, %v3820
  %v3860 = vpack.c.b16 %v3823, %v3822
  %v3861 = vpack.c.b16 %v3825, %v3824
  %v3862 = vpack.c.b16 %v3827, %v3826
  %v3863 = vpack.c.b16 %v3829, %v3828
  %v3864 = vpack.c.b16 %v3831, %v3830
  %v3865 = vpack.c.b16 %v3833, %v3832
  %3898 = vmatprep.subr.bf16.mxu0 0
  %3899 = vmatpush1.bf16.msra.mxu0 %v3834
  %3900 = vmatprep.subr.bf16.mxu0 0
  %3901 = vmatpush1.bf16.msra.mxu0 %v3835
  %3902 = vmatprep.subr.bf16.mxu0 0
  %3903 = vmatpush1.bf16.msra.mxu0 %v3836
  %3904 = vmatprep.subr.bf16.mxu0 0
  %3905 = vmatpush1.bf16.msra.mxu0 %v3837
  %3906 = vmatprep.subr.bf16.mxu0 0
  %3907 = vmatpush1.bf16.msra.mxu0 %v3838
  %3908 = vmatprep.subr.bf16.mxu0 0
  %3909 = vmatpush1.bf16.msra.mxu0 %v3839
  %3910 = vmatprep.subr.bf16.mxu0 0
  %3911 = vmatpush1.bf16.msra.mxu0 %v3840
  %3912 = vmatprep.subr.bf16.mxu0 0
  %3913 = vmatpush1.bf16.msra.mxu0 %v3841
  %3914 = vmatprep.subr.bf16.mxu0 0
  %3915 = vmatpush1.bf16.msra.mxu0 %v3842
  %3916 = vmatprep.subr.bf16.mxu0 0
  %3917 = vmatpush1.bf16.msra.mxu0 %v3843
  %3918 = vmatprep.subr.bf16.mxu0 0
  %3919 = vmatpush1.bf16.msra.mxu0 %v3844
  %3920 = vmatprep.subr.bf16.mxu0 0
  %3921 = vmatpush1.bf16.msra.mxu0 %v3845
  %3922 = vmatprep.subr.bf16.mxu0 0
  %3923 = vmatpush1.bf16.msra.mxu0 %v3846
  %3924 = vmatprep.subr.bf16.mxu0 0
  %3925 = vmatpush1.bf16.msra.mxu0 %v3847
  %3926 = vmatprep.subr.bf16.mxu0 0
  %3927 = vmatpush1.bf16.msra.mxu0 %v3848
  %3928 = vmatprep.subr.bf16.mxu0 0
  %3929 = vmatpush1.bf16.msra.mxu0 %v3849
  %3930 = vmatprep.mubr.bf16.mxu0 %v3263
  %3931 = vmatmul.mubr.bf16.gmra.mrb[0].mxu0 %v3262
  %v3932 = vpop.f32.mrb[0].mxu0
  %v3933 = vadd.f32 %v3701, %v3932
  %v3934 = vpop.f32.mrb[0].mxu0
  %v3935 = vpop.f32.mrb[0].mxu0
  %v3936 = vpop.f32.mrb[0].mxu0
  %3937 = vdwg.mxu0
  %3938 = vmatprep.subr.bf16.mxu0 0
  %3939 = vmatpush1.bf16.msra.mxu0 %v3850
  %3940 = vmatprep.subr.bf16.mxu0 0
  %3941 = vmatpush1.bf16.msra.mxu0 %v3851
  %3942 = vmatprep.subr.bf16.mxu0 0
  %3943 = vmatpush1.bf16.msra.mxu0 %v3852
  %3944 = vmatprep.subr.bf16.mxu0 0
  %3945 = vmatpush1.bf16.msra.mxu0 %v3853
  %3946 = vmatprep.subr.bf16.mxu0 0
  %3947 = vmatpush1.bf16.msra.mxu0 %v3854
  %3948 = vmatprep.subr.bf16.mxu0 0
  %3949 = vmatpush1.bf16.msra.mxu0 %v3855
  %3950 = vmatprep.subr.bf16.mxu0 0
  %3951 = vmatpush1.bf16.msra.mxu0 %v3856
  %3952 = vmatprep.subr.bf16.mxu0 0
  %3953 = vmatpush1.bf16.msra.mxu0 %v3857
  %3954 = vmatprep.subr.bf16.mxu0 0
  %3955 = vmatpush1.bf16.msra.mxu0 %v3858
  %3956 = vmatprep.subr.bf16.mxu0 0
  %3957 = vmatpush1.bf16.msra.mxu0 %v3859
  %3958 = vmatprep.subr.bf16.mxu0 0
  %3959 = vmatpush1.bf16.msra.mxu0 %v3860
  %3960 = vmatprep.subr.bf16.mxu0 0
  %3961 = vmatpush1.bf16.msra.mxu0 %v3861
  %3962 = vmatprep.subr.bf16.mxu0 0
  %3963 = vmatpush1.bf16.msra.mxu0 %v3862
  %3964 = vmatprep.subr.bf16.mxu0 0
  %3965 = vmatpush1.bf16.msra.mxu0 %v3863
  %3966 = vmatprep.subr.bf16.mxu0 0
  %3967 = vmatpush1.bf16.msra.mxu0 %v3864
  %3968 = vmatprep.subr.bf16.mxu0 0
  %3969 = vmatpush1.bf16.msra.mxu0 %v3865
  %3970 = vmatprep.mubr.bf16.mxu0 %v3265
  %3971 = vmatmul.mubr.bf16.gmra.mrb[0].mxu0 %v3264
  %v3972 = vpop.f32.mrb[0].mxu0
  %v3973 = vadd.f32 %v3933, %v3972
  %v3974 = vpop.f32.mrb[0].mxu0
  %v3975 = vpop.f32.mrb[0].mxu0
  %v3976 = vpop.f32.mrb[0].mxu0
  %3977 = vdwg.mxu0
  %v3978 = vld [vmem:[%s3 + $0x200] sm:$0xf]
  %v3979 = vld [vmem:[%s3 + $0x204] sm:$0xf]
  %v3980 = vld [vmem:[%s3 + $0x208] sm:$0xf]
  %v3981 = vld [vmem:[%s3 + $0x20c] sm:$0xf]
  %v3982 = vld [vmem:[%s3 + $0x210] sm:$0xf]
  %v3983 = vld [vmem:[%s3 + $0x214] sm:$0xf]
  %v3984 = vld [vmem:[%s3 + $0x218] sm:$0xf]
  %v3985 = vld [vmem:[%s3 + $0x21c] sm:$0xf]
  %v3986 = vld [vmem:[%s3 + $0x220] sm:$0xf]
  %v3987 = vld [vmem:[%s3 + $0x224] sm:$0xf]
  %v3988 = vld [vmem:[%s3 + $0x228] sm:$0xf]
  %v3989 = vld [vmem:[%s3 + $0x22c] sm:$0xf]
  %v3990 = vld [vmem:[%s3 + $0x230] sm:$0xf]
  %v3991 = vld [vmem:[%s3 + $0x234] sm:$0xf]
  %v3992 = vld [vmem:[%s3 + $0x238] sm:$0xf]
  %v3993 = vld [vmem:[%s3 + $0x23c] sm:$0xf]
  %v3994 = vld [vmem:[%s3 + $0x240] sm:$0xf]
  %v3995 = vld [vmem:[%s3 + $0x244] sm:$0xf]
  %v3996 = vld [vmem:[%s3 + $0x248] sm:$0xf]
  %v3997 = vld [vmem:[%s3 + $0x24c] sm:$0xf]
  %v3998 = vld [vmem:[%s3 + $0x250] sm:$0xf]
  %v3999 = vld [vmem:[%s3 + $0x254] sm:$0xf]
  %v4000 = vld [vmem:[%s3 + $0x258] sm:$0xf]
  %v4001 = vld [vmem:[%s3 + $0x25c] sm:$0xf]
  %v4002 = vld [vmem:[%s3 + $0x260] sm:$0xf]
  %v4003 = vld [vmem:[%s3 + $0x264] sm:$0xf]
  %v4004 = vld [vmem:[%s3 + $0x268] sm:$0xf]
  %v4005 = vld [vmem:[%s3 + $0x26c] sm:$0xf]
  %v4006 = vld [vmem:[%s3 + $0x270] sm:$0xf]
  %v4007 = vld [vmem:[%s3 + $0x274] sm:$0xf]
  %v4008 = vld [vmem:[%s3 + $0x278] sm:$0xf]
  %v4009 = vld [vmem:[%s3 + $0x27c] sm:$0xf]
  %v4010 = vld [vmem:[%s3 + $0x280] sm:$0xf]
  %v4011 = vld [vmem:[%s3 + $0x284] sm:$0xf]
  %v4012 = vld [vmem:[%s3 + $0x288] sm:$0xf]
  %v4013 = vld [vmem:[%s3 + $0x28c] sm:$0xf]
  %v4014 = vld [vmem:[%s3 + $0x290] sm:$0xf]
  %v4015 = vld [vmem:[%s3 + $0x294] sm:$0xf]
  %v4016 = vld [vmem:[%s3 + $0x298] sm:$0xf]
  %v4017 = vld [vmem:[%s3 + $0x29c] sm:$0xf]
  %v4018 = vld [vmem:[%s3 + $0x2a0] sm:$0xf]
  %v4019 = vld [vmem:[%s3 + $0x2a4] sm:$0xf]
  %v4020 = vld [vmem:[%s3 + $0x2a8] sm:$0xf]
  %v4021 = vld [vmem:[%s3 + $0x2ac] sm:$0xf]
  %v4022 = vld [vmem:[%s3 + $0x2b0] sm:$0xf]
  %v4023 = vld [vmem:[%s3 + $0x2b4] sm:$0xf]
  %v4024 = vld [vmem:[%s3 + $0x2b8] sm:$0xf]
  %v4025 = vld [vmem:[%s3 + $0x2bc] sm:$0xf]
  %v4026 = vld [vmem:[%s3 + $0x2c0] sm:$0xf]
  %v4027 = vld [vmem:[%s3 + $0x2c4] sm:$0xf]
  %v4028 = vld [vmem:[%s3 + $0x2c8] sm:$0xf]
  %v4029 = vld [vmem:[%s3 + $0x2cc] sm:$0xf]
  %v4030 = vld [vmem:[%s3 + $0x2d0] sm:$0xf]
  %v4031 = vld [vmem:[%s3 + $0x2d4] sm:$0xf]
  %v4032 = vld [vmem:[%s3 + $0x2d8] sm:$0xf]
  %v4033 = vld [vmem:[%s3 + $0x2dc] sm:$0xf]
  %v4034 = vld [vmem:[%s3 + $0x2e0] sm:$0xf]
  %v4035 = vld [vmem:[%s3 + $0x2e4] sm:$0xf]
  %v4036 = vld [vmem:[%s3 + $0x2e8] sm:$0xf]
  %v4037 = vld [vmem:[%s3 + $0x2ec] sm:$0xf]
  %v4038 = vld [vmem:[%s3 + $0x2f0] sm:$0xf]
  %v4039 = vld [vmem:[%s3 + $0x2f4] sm:$0xf]
  %v4040 = vld [vmem:[%s3 + $0x2f8] sm:$0xf]
  %v4041 = vld [vmem:[%s3 + $0x2fc] sm:$0xf]
  %v4106 = vunpack.c.l.b16 %v3978
  %v4107 = vunpack.c.l.b16 %v3979
  %v4108 = vunpack.c.l.b16 %v3980
  %v4109 = vunpack.c.l.b16 %v3981
  %v4110 = vunpack.c.l.b16 %v3982
  %v4111 = vunpack.c.l.b16 %v3983
  %v4112 = vunpack.c.l.b16 %v3984
  %v4113 = vunpack.c.l.b16 %v3985
  %v4114 = vunpack.c.l.b16 %v3986
  %v4115 = vunpack.c.l.b16 %v3987
  %v4116 = vunpack.c.l.b16 %v3988
  %v4117 = vunpack.c.l.b16 %v3989
  %v4118 = vunpack.c.l.b16 %v3990
  %v4119 = vunpack.c.l.b16 %v3991
  %v4120 = vunpack.c.l.b16 %v3992
  %v4121 = vunpack.c.l.b16 %v3993
  %v4122 = vunpack.c.l.b16 %v3994
  %v4123 = vunpack.c.l.b16 %v3995
  %v4124 = vunpack.c.l.b16 %v3996
  %v4125 = vunpack.c.l.b16 %v3997
  %v4126 = vunpack.c.l.b16 %v3998
  %v4127 = vunpack.c.l.b16 %v3999
  %v4128 = vunpack.c.l.b16 %v4000
  %v4129 = vunpack.c.l.b16 %v4001
  %v4130 = vunpack.c.l.b16 %v4002
  %v4131 = vunpack.c.l.b16 %v4003
  %v4132 = vunpack.c.l.b16 %v4004
  %v4133 = vunpack.c.l.b16 %v4005
  %v4134 = vunpack.c.l.b16 %v4006
  %v4135 = vunpack.c.l.b16 %v4007
  %v4136 = vunpack.c.l.b16 %v4008
  %v4137 = vunpack.c.l.b16 %v4009
  %v4138 = vunpack.c.l.b16 %v4010
  %v4139 = vunpack.c.l.b16 %v4011
  %v4140 = vunpack.c.l.b16 %v4012
  %v4141 = vunpack.c.l.b16 %v4013
  %v4142 = vunpack.c.l.b16 %v4014
  %v4143 = vunpack.c.l.b16 %v4015
  %v4144 = vunpack.c.l.b16 %v4016
  %v4145 = vunpack.c.l.b16 %v4017
  %v4146 = vunpack.c.l.b16 %v4018
  %v4147 = vunpack.c.l.b16 %v4019
  %v4148 = vunpack.c.l.b16 %v4020
  %v4149 = vunpack.c.l.b16 %v4021
  %v4150 = vunpack.c.l.b16 %v4022
  %v4151 = vunpack.c.l.b16 %v4023
  %v4152 = vunpack.c.l.b16 %v4024
  %v4153 = vunpack.c.l.b16 %v4025
  %v4154 = vunpack.c.l.b16 %v4026
  %v4155 = vunpack.c.l.b16 %v4027
  %v4156 = vunpack.c.l.b16 %v4028
  %v4157 = vunpack.c.l.b16 %v4029
  %v4158 = vunpack.c.l.b16 %v4030
  %v4159 = vunpack.c.l.b16 %v4031
  %v4160 = vunpack.c.l.b16 %v4032
  %v4161 = vunpack.c.l.b16 %v4033
  %v4162 = vunpack.c.l.b16 %v4034
  %v4163 = vunpack.c.l.b16 %v4035
  %v4164 = vunpack.c.l.b16 %v4036
  %v4165 = vunpack.c.l.b16 %v4037
  %v4166 = vunpack.c.l.b16 %v4038
  %v4167 = vunpack.c.l.b16 %v4039
  %v4168 = vunpack.c.l.b16 %v4040
  %v4169 = vunpack.c.l.b16 %v4041
  %v4170 = vpack.c.b16 %v4107, %v4106
  %v4171 = vpack.c.b16 %v4109, %v4108
  %v4172 = vpack.c.b16 %v4111, %v4110
  %v4173 = vpack.c.b16 %v4113, %v4112
  %v4174 = vpack.c.b16 %v4115, %v4114
  %v4175 = vpack.c.b16 %v4117, %v4116
  %v4176 = vpack.c.b16 %v4119, %v4118
  %v4177 = vpack.c.b16 %v4121, %v4120
  %v4178 = vpack.c.b16 %v4123, %v4122
  %v4179 = vpack.c.b16 %v4125, %v4124
  %v4180 = vpack.c.b16 %v4127, %v4126
  %v4181 = vpack.c.b16 %v4129, %v4128
  %v4182 = vpack.c.b16 %v4131, %v4130
  %v4183 = vpack.c.b16 %v4133, %v4132
  %v4184 = vpack.c.b16 %v4135, %v4134
  %v4185 = vpack.c.b16 %v4137, %v4136
  %v4186 = vpack.c.b16 %v4139, %v4138
  %v4187 = vpack.c.b16 %v4141, %v4140
  %v4188 = vpack.c.b16 %v4143, %v4142
  %v4189 = vpack.c.b16 %v4145, %v4144
  %v4190 = vpack.c.b16 %v4147, %v4146
  %v4191 = vpack.c.b16 %v4149, %v4148
  %v4192 = vpack.c.b16 %v4151, %v4150
  %v4193 = vpack.c.b16 %v4153, %v4152
  %v4194 = vpack.c.b16 %v4155, %v4154
  %v4195 = vpack.c.b16 %v4157, %v4156
  %v4196 = vpack.c.b16 %v4159, %v4158
  %v4197 = vpack.c.b16 %v4161, %v4160
  %v4198 = vpack.c.b16 %v4163, %v4162
  %v4199 = vpack.c.b16 %v4165, %v4164
  %v4200 = vpack.c.b16 %v4167, %v4166
  %v4201 = vpack.c.b16 %v4169, %v4168
  %4234 = vmatprep.subr.bf16.mxu0 0
  %4235 = vmatpush1.bf16.msra.mxu0 %v4170
  %4236 = vmatprep.subr.bf16.mxu0 0
  %4237 = vmatpush1.bf16.msra.mxu0 %v4171
  %4238 = vmatprep.subr.bf16.mxu0 0
  %4239 = vmatpush1.bf16.msra.mxu0 %v4172
  %4240 = vmatprep.subr.bf16.mxu0 0
  %4241 = vmatpush1.bf16.msra.mxu0 %v4173
  %4242 = vmatprep.subr.bf16.mxu0 0
  %4243 = vmatpush1.bf16.msra.mxu0 %v4174
  %4244 = vmatprep.subr.bf16.mxu0 0
  %4245 = vmatpush1.bf16.msra.mxu0 %v4175
  %4246 = vmatprep.subr.bf16.mxu0 0
  %4247 = vmatpush1.bf16.msra.mxu0 %v4176
  %4248 = vmatprep.subr.bf16.mxu0 0
  %4249 = vmatpush1.bf16.msra.mxu0 %v4177
  %4250 = vmatprep.subr.bf16.mxu0 0
  %4251 = vmatpush1.bf16.msra.mxu0 %v4178
  %4252 = vmatprep.subr.bf16.mxu0 0
  %4253 = vmatpush1.bf16.msra.mxu0 %v4179
  %4254 = vmatprep.subr.bf16.mxu0 0
  %4255 = vmatpush1.bf16.msra.mxu0 %v4180
  %4256 = vmatprep.subr.bf16.mxu0 0
  %4257 = vmatpush1.bf16.msra.mxu0 %v4181
  %4258 = vmatprep.subr.bf16.mxu0 0
  %4259 = vmatpush1.bf16.msra.mxu0 %v4182
  %4260 = vmatprep.subr.bf16.mxu0 0
  %4261 = vmatpush1.bf16.msra.mxu0 %v4183
  %4262 = vmatprep.subr.bf16.mxu0 0
  %4263 = vmatpush1.bf16.msra.mxu0 %v4184
  %4264 = vmatprep.subr.bf16.mxu0 0
  %4265 = vmatpush1.bf16.msra.mxu0 %v4185
  %4266 = vmatprep.mubr.bf16.mxu0 %v3267
  %4267 = vmatmul.mubr.bf16.gmra.mrb[0].mxu0 %v3266
  %v4268 = vpop.f32.mrb[0].mxu0
  %v4269 = vadd.f32 0.0, %v4268
  %v4270 = vpop.f32.mrb[0].mxu0
  %v4271 = vpop.f32.mrb[0].mxu0
  %v4272 = vpop.f32.mrb[0].mxu0
  %4273 = vdwg.mxu0
  %4274 = vmatprep.subr.bf16.mxu0 0
  %4275 = vmatpush1.bf16.msra.mxu0 %v4186
  %4276 = vmatprep.subr.bf16.mxu0 0
  %4277 = vmatpush1.bf16.msra.mxu0 %v4187
  %4278 = vmatprep.subr.bf16.mxu0 0
  %4279 = vmatpush1.bf16.msra.mxu0 %v4188
  %4280 = vmatprep.subr.bf16.mxu0 0
  %4281 = vmatpush1.bf16.msra.mxu0 %v4189
  %4282 = vmatprep.subr.bf16.mxu0 0
  %4283 = vmatpush1.bf16.msra.mxu0 %v4190
  %4284 = vmatprep.subr.bf16.mxu0 0
  %4285 = vmatpush1.bf16.msra.mxu0 %v4191
  %4286 = vmatprep.subr.bf16.mxu0 0
  %4287 = vmatpush1.bf16.msra.mxu0 %v4192
  %4288 = vmatprep.subr.bf16.mxu0 0
  %4289 = vmatpush1.bf16.msra.mxu0 %v4193
  %4290 = vmatprep.subr.bf16.mxu0 0
  %4291 = vmatpush1.bf16.msra.mxu0 %v4194
  %4292 = vmatprep.subr.bf16.mxu0 0
  %4293 = vmatpush1.bf16.msra.mxu0 %v4195
  %4294 = vmatprep.subr.bf16.mxu0 0
  %4295 = vmatpush1.bf16.msra.mxu0 %v4196
  %4296 = vmatprep.subr.bf16.mxu0 0
  %4297 = vmatpush1.bf16.msra.mxu0 %v4197
  %4298 = vmatprep.subr.bf16.mxu0 0
  %4299 = vmatpush1.bf16.msra.mxu0 %v4198
  %4300 = vmatprep.subr.bf16.mxu0 0
  %4301 = vmatpush1.bf16.msra.mxu0 %v4199
  %4302 = vmatprep.subr.bf16.mxu0 0
  %4303 = vmatpush1.bf16.msra.mxu0 %v4200
  %4304 = vmatprep.subr.bf16.mxu0 0
  %4305 = vmatpush1.bf16.msra.mxu0 %v4201
  %4306 = vmatprep.mubr.bf16.mxu0 %v3269
  %4307 = vmatmul.mubr.bf16.gmra.mrb[0].mxu0 %v3268
  %v4308 = vpop.f32.mrb[0].mxu0
  %v4309 = vadd.f32 %v4269, %v4308
  %v4310 = vpop.f32.mrb[0].mxu0
  %v4311 = vpop.f32.mrb[0].mxu0
  %v4312 = vpop.f32.mrb[0].mxu0
  %4313 = vdwg.mxu0
  %v4314 = vadd.f32 %v3973, %v4309
  %v4315 = vld [vmem:[%s3 + $0x300] sm:$0xf]
  %v4316 = vld [vmem:[%s3 + $0x304] sm:$0xf]
  %v4317 = vld [vmem:[%s3 + $0x308] sm:$0xf]
  %v4318 = vld [vmem:[%s3 + $0x30c] sm:$0xf]
  %v4319 = vld [vmem:[%s3 + $0x310] sm:$0xf]
  %v4320 = vld [vmem:[%s3 + $0x314] sm:$0xf]
  %v4321 = vld [vmem:[%s3 + $0x318] sm:$0xf]
  %v4322 = vld [vmem:[%s3 + $0x31c] sm:$0xf]
  %v4323 = vld [vmem:[%s3 + $0x320] sm:$0xf]
  %v4324 = vld [vmem:[%s3 + $0x324] sm:$0xf]
  %v4325 = vld [vmem:[%s3 + $0x328] sm:$0xf]
  %v4326 = vld [vmem:[%s3 + $0x32c] sm:$0xf]
  %v4327 = vld [vmem:[%s3 + $0x330] sm:$0xf]
  %v4328 = vld [vmem:[%s3 + $0x334] sm:$0xf]
  %v4329 = vld [vmem:[%s3 + $0x338] sm:$0xf]
  %v4330 = vld [vmem:[%s3 + $0x33c] sm:$0xf]
  %v4331 = vld [vmem:[%s3 + $0x340] sm:$0xf]
  %v4332 = vld [vmem:[%s3 + $0x344] sm:$0xf]
  %v4333 = vld [vmem:[%s3 + $0x348] sm:$0xf]
  %v4334 = vld [vmem:[%s3 + $0x34c] sm:$0xf]
  %v4335 = vld [vmem:[%s3 + $0x350] sm:$0xf]
  %v4336 = vld [vmem:[%s3 + $0x354] sm:$0xf]
  %v4337 = vld [vmem:[%s3 + $0x358] sm:$0xf]
  %v4338 = vld [vmem:[%s3 + $0x35c] sm:$0xf]
  %v4339 = vld [vmem:[%s3 + $0x360] sm:$0xf]
  %v4340 = vld [vmem:[%s3 + $0x364] sm:$0xf]
  %v4341 = vld [vmem:[%s3 + $0x368] sm:$0xf]
  %v4342 = vld [vmem:[%s3 + $0x36c] sm:$0xf]
  %v4343 = vld [vmem:[%s3 + $0x370] sm:$0xf]
  %v4344 = vld [vmem:[%s3 + $0x374] sm:$0xf]
  %v4345 = vld [vmem:[%s3 + $0x378] sm:$0xf]
  %v4346 = vld [vmem:[%s3 + $0x37c] sm:$0xf]
  %v4347 = vld [vmem:[%s3 + $0x380] sm:$0xf]
  %v4348 = vld [vmem:[%s3 + $0x384] sm:$0xf]
  %v4349 = vld [vmem:[%s3 + $0x388] sm:$0xf]
  %v4350 = vld [vmem:[%s3 + $0x38c] sm:$0xf]
  %v4351 = vld [vmem:[%s3 + $0x390] sm:$0xf]
  %v4352 = vld [vmem:[%s3 + $0x394] sm:$0xf]
  %v4353 = vld [vmem:[%s3 + $0x398] sm:$0xf]
  %v4354 = vld [vmem:[%s3 + $0x39c] sm:$0xf]
  %v4355 = vld [vmem:[%s3 + $0x3a0] sm:$0xf]
  %v4356 = vld [vmem:[%s3 + $0x3a4] sm:$0xf]
  %v4357 = vld [vmem:[%s3 + $0x3a8] sm:$0xf]
  %v4358 = vld [vmem:[%s3 + $0x3ac] sm:$0xf]
  %v4359 = vld [vmem:[%s3 + $0x3b0] sm:$0xf]
  %v4360 = vld [vmem:[%s3 + $0x3b4] sm:$0xf]
  %v4361 = vld [vmem:[%s3 + $0x3b8] sm:$0xf]
  %v4362 = vld [vmem:[%s3 + $0x3bc] sm:$0xf]
  %v4363 = vld [vmem:[%s3 + $0x3c0] sm:$0xf]
  %v4364 = vld [vmem:[%s3 + $0x3c4] sm:$0xf]
  %v4365 = vld [vmem:[%s3 + $0x3c8] sm:$0xf]
  %v4366 = vld [vmem:[%s3 + $0x3cc] sm:$0xf]
  %v4367 = vld [vmem:[%s3 + $0x3d0] sm:$0xf]
  %v4368 = vld [vmem:[%s3 + $0x3d4] sm:$0xf]
  %v4369 = vld [vmem:[%s3 + $0x3d8] sm:$0xf]
  %v4370 = vld [vmem:[%s3 + $0x3dc] sm:$0xf]
  %v4371 = vld [vmem:[%s3 + $0x3e0] sm:$0xf]
  %v4372 = vld [vmem:[%s3 + $0x3e4] sm:$0xf]
  %v4373 = vld [vmem:[%s3 + $0x3e8] sm:$0xf]
  %v4374 = vld [vmem:[%s3 + $0x3ec] sm:$0xf]
  %v4375 = vld [vmem:[%s3 + $0x3f0] sm:$0xf]
  %v4376 = vld [vmem:[%s3 + $0x3f4] sm:$0xf]
  %v4377 = vld [vmem:[%s3 + $0x3f8] sm:$0xf]
  %v4378 = vld [vmem:[%s3 + $0x3fc] sm:$0xf]
  %v4383 = vrot.slane %v3266, 4
  %v4384 = vrot.slane %v3267, 4
  %v4385 = vrot.slane %v3268, 4
  %v4386 = vrot.slane %v3269, 4
  %v4455 = vunpack.c.l.b16 %v4315
  %v4456 = vunpack.c.l.b16 %v4316
  %v4457 = vunpack.c.l.b16 %v4317
  %v4458 = vunpack.c.l.b16 %v4318
  %v4459 = vunpack.c.l.b16 %v4319
  %v4460 = vunpack.c.l.b16 %v4320
  %v4461 = vunpack.c.l.b16 %v4321
  %v4462 = vunpack.c.l.b16 %v4322
  %v4463 = vunpack.c.l.b16 %v4323
  %v4464 = vunpack.c.l.b16 %v4324
  %v4465 = vunpack.c.l.b16 %v4325
  %v4466 = vunpack.c.l.b16 %v4326
  %v4467 = vunpack.c.l.b16 %v4327
  %v4468 = vunpack.c.l.b16 %v4328
  %v4469 = vunpack.c.l.b16 %v4329
  %v4470 = vunpack.c.l.b16 %v4330
  %v4471 = vunpack.c.l.b16 %v4331
  %v4472 = vunpack.c.l.b16 %v4332
  %v4473 = vunpack.c.l.b16 %v4333
  %v4474 = vunpack.c.l.b16 %v4334
  %v4475 = vunpack.c.l.b16 %v4335
  %v4476 = vunpack.c.l.b16 %v4336
  %v4477 = vunpack.c.l.b16 %v4337
  %v4478 = vunpack.c.l.b16 %v4338
  %v4479 = vunpack.c.l.b16 %v4339
  %v4480 = vunpack.c.l.b16 %v4340
  %v4481 = vunpack.c.l.b16 %v4341
  %v4482 = vunpack.c.l.b16 %v4342
  %v4483 = vunpack.c.l.b16 %v4343
  %v4484 = vunpack.c.l.b16 %v4344
  %v4485 = vunpack.c.l.b16 %v4345
  %v4486 = vunpack.c.l.b16 %v4346
  %v4487 = vunpack.c.l.b16 %v4347
  %v4488 = vunpack.c.l.b16 %v4348
  %v4489 = vunpack.c.l.b16 %v4349
  %v4490 = vunpack.c.l.b16 %v4350
  %v4491 = vunpack.c.l.b16 %v4351
  %v4492 = vunpack.c.l.b16 %v4352
  %v4493 = vunpack.c.l.b16 %v4353
  %v4494 = vunpack.c.l.b16 %v4354
  %v4495 = vunpack.c.l.b16 %v4355
  %v4496 = vunpack.c.l.b16 %v4356
  %v4497 = vunpack.c.l.b16 %v4357
  %v4498 = vunpack.c.l.b16 %v4358
  %v4499 = vunpack.c.l.b16 %v4359
  %v4500 = vunpack.c.l.b16 %v4360
  %v4501 = vunpack.c.l.b16 %v4361
  %v4502 = vunpack.c.l.b16 %v4362
  %v4503 = vunpack.c.l.b16 %v4363
  %v4504 = vunpack.c.l.b16 %v4364
  %v4505 = vunpack.c.l.b16 %v4365
  %v4506 = vunpack.c.l.b16 %v4366
  %v4507 = vunpack.c.l.b16 %v4367
  %v4508 = vunpack.c.l.b16 %v4368
  %v4509 = vunpack.c.l.b16 %v4369
  %v4510 = vunpack.c.l.b16 %v4370
  %v4511 = vunpack.c.l.b16 %v4371
  %v4512 = vunpack.c.l.b16 %v4372
  %v4513 = vunpack.c.l.b16 %v4373
  %v4514 = vunpack.c.l.b16 %v4374
  %v4515 = vunpack.c.l.b16 %v4375
  %v4516 = vunpack.c.l.b16 %v4376
  %v4517 = vunpack.c.l.b16 %v4377
  %v4518 = vunpack.c.l.b16 %v4378
  %v4519 = vpack.c.b16 %v4456, %v4455
  %v4520 = vpack.c.b16 %v4458, %v4457
  %v4521 = vpack.c.b16 %v4460, %v4459
  %v4522 = vpack.c.b16 %v4462, %v4461
  %v4523 = vpack.c.b16 %v4464, %v4463
  %v4524 = vpack.c.b16 %v4466, %v4465
  %v4525 = vpack.c.b16 %v4468, %v4467
  %v4526 = vpack.c.b16 %v4470, %v4469
  %v4527 = vpack.c.b16 %v4472, %v4471
  %v4528 = vpack.c.b16 %v4474, %v4473
  %v4529 = vpack.c.b16 %v4476, %v4475
  %v4530 = vpack.c.b16 %v4478, %v4477
  %v4531 = vpack.c.b16 %v4480, %v4479
  %v4532 = vpack.c.b16 %v4482, %v4481
  %v4533 = vpack.c.b16 %v4484, %v4483
  %v4534 = vpack.c.b16 %v4486, %v4485
  %v4535 = vpack.c.b16 %v4488, %v4487
  %v4536 = vpack.c.b16 %v4490, %v4489
  %v4537 = vpack.c.b16 %v4492, %v4491
  %v4538 = vpack.c.b16 %v4494, %v4493
  %v4539 = vpack.c.b16 %v4496, %v4495
  %v4540 = vpack.c.b16 %v4498, %v4497
  %v4541 = vpack.c.b16 %v4500, %v4499
  %v4542 = vpack.c.b16 %v4502, %v4501
  %v4543 = vpack.c.b16 %v4504, %v4503
  %v4544 = vpack.c.b16 %v4506, %v4505
  %v4545 = vpack.c.b16 %v4508, %v4507
  %v4546 = vpack.c.b16 %v4510, %v4509
  %v4547 = vpack.c.b16 %v4512, %v4511
  %v4548 = vpack.c.b16 %v4514, %v4513
  %v4549 = vpack.c.b16 %v4516, %v4515
  %v4550 = vpack.c.b16 %v4518, %v4517
  %4583 = vmatprep.subr.bf16.mxu0 0
  %4584 = vmatpush1.bf16.msra.mxu0 %v4519
  %4585 = vmatprep.subr.bf16.mxu0 0
  %4586 = vmatpush1.bf16.msra.mxu0 %v4520
  %4587 = vmatprep.subr.bf16.mxu0 0
  %4588 = vmatpush1.bf16.msra.mxu0 %v4521
  %4589 = vmatprep.subr.bf16.mxu0 0
  %4590 = vmatpush1.bf16.msra.mxu0 %v4522
  %4591 = vmatprep.subr.bf16.mxu0 0
  %4592 = vmatpush1.bf16.msra.mxu0 %v4523
  %4593 = vmatprep.subr.bf16.mxu0 0
  %4594 = vmatpush1.bf16.msra.mxu0 %v4524
  %4595 = vmatprep.subr.bf16.mxu0 0
  %4596 = vmatpush1.bf16.msra.mxu0 %v4525
  %4597 = vmatprep.subr.bf16.mxu0 0
  %4598 = vmatpush1.bf16.msra.mxu0 %v4526
  %4599 = vmatprep.subr.bf16.mxu0 0
  %4600 = vmatpush1.bf16.msra.mxu0 %v4527
  %4601 = vmatprep.subr.bf16.mxu0 0
  %4602 = vmatpush1.bf16.msra.mxu0 %v4528
  %4603 = vmatprep.subr.bf16.mxu0 0
  %4604 = vmatpush1.bf16.msra.mxu0 %v4529
  %4605 = vmatprep.subr.bf16.mxu0 0
  %4606 = vmatpush1.bf16.msra.mxu0 %v4530
  %4607 = vmatprep.subr.bf16.mxu0 0
  %4608 = vmatpush1.bf16.msra.mxu0 %v4531
  %4609 = vmatprep.subr.bf16.mxu0 0
  %4610 = vmatpush1.bf16.msra.mxu0 %v4532
  %4611 = vmatprep.subr.bf16.mxu0 0
  %4612 = vmatpush1.bf16.msra.mxu0 %v4533
  %4613 = vmatprep.subr.bf16.mxu0 0
  %4614 = vmatpush1.bf16.msra.mxu0 %v4534
  %4615 = vmatprep.mubr.bf16.mxu0 %v4384
  %4616 = vmatmul.mubr.bf16.gmra.mrb[0].mxu0 %v4383
  %v4617 = vpop.f32.mrb[0].mxu0
  %v4618 = vadd.f32 0.0, %v4617
  %v4619 = vpop.f32.mrb[0].mxu0
  %v4620 = vpop.f32.mrb[0].mxu0
  %v4621 = vpop.f32.mrb[0].mxu0
  %4622 = vdwg.mxu0
  %4623 = vmatprep.subr.bf16.mxu0 0
  %4624 = vmatpush1.bf16.msra.mxu0 %v4535
  %4625 = vmatprep.subr.bf16.mxu0 0
  %4626 = vmatpush1.bf16.msra.mxu0 %v4536
  %4627 = vmatprep.subr.bf16.mxu0 0
  %4628 = vmatpush1.bf16.msra.mxu0 %v4537
  %4629 = vmatprep.subr.bf16.mxu0 0
  %4630 = vmatpush1.bf16.msra.mxu0 %v4538
  %4631 = vmatprep.subr.bf16.mxu0 0
  %4632 = vmatpush1.bf16.msra.mxu0 %v4539
  %4633 = vmatprep.subr.bf16.mxu0 0
  %4634 = vmatpush1.bf16.msra.mxu0 %v4540
  %4635 = vmatprep.subr.bf16.mxu0 0
  %4636 = vmatpush1.bf16.msra.mxu0 %v4541
  %4637 = vmatprep.subr.bf16.mxu0 0
  %4638 = vmatpush1.bf16.msra.mxu0 %v4542
  %4639 = vmatprep.subr.bf16.mxu0 0
  %4640 = vmatpush1.bf16.msra.mxu0 %v4543
  %4641 = vmatprep.subr.bf16.mxu0 0
  %4642 = vmatpush1.bf16.msra.mxu0 %v4544
  %4643 = vmatprep.subr.bf16.mxu0 0
  %4644 = vmatpush1.bf16.msra.mxu0 %v4545
  %4645 = vmatprep.subr.bf16.mxu0 0
  %4646 = vmatpush1.bf16.msra.mxu0 %v4546
  %4647 = vmatprep.subr.bf16.mxu0 0
  %4648 = vmatpush1.bf16.msra.mxu0 %v4547
  %4649 = vmatprep.subr.bf16.mxu0 0
  %4650 = vmatpush1.bf16.msra.mxu0 %v4548
  %4651 = vmatprep.subr.bf16.mxu0 0
  %4652 = vmatpush1.bf16.msra.mxu0 %v4549
  %4653 = vmatprep.subr.bf16.mxu0 0
  %4654 = vmatpush1.bf16.msra.mxu0 %v4550
  %4655 = vmatprep.mubr.bf16.mxu0 %v4386
  %4656 = vmatmul.mubr.bf16.gmra.mrb[0].mxu0 %v4385
  %v4657 = vpop.f32.mrb[0].mxu0
  %v4658 = vadd.f32 %v4618, %v4657
  %v4659 = vpop.f32.mrb[0].mxu0
  %v4660 = vpop.f32.mrb[0].mxu0
  %v4661 = vpop.f32.mrb[0].mxu0
  %4662 = vdwg.mxu0
  %v4663 = vadd.f32 %v4314, %v4658
  %v4664 = vld [vmem:[%s3 + $0x400] sm:$0xf]
  %v4665 = vld [vmem:[%s3 + $0x404] sm:$0xf]
  %v4666 = vld [vmem:[%s3 + $0x408] sm:$0xf]
  %v4667 = vld [vmem:[%s3 + $0x40c] sm:$0xf]
  %v4668 = vld [vmem:[%s3 + $0x410] sm:$0xf]
  %v4669 = vld [vmem:[%s3 + $0x414] sm:$0xf]
  %v4670 = vld [vmem:[%s3 + $0x418] sm:$0xf]
  %v4671 = vld [vmem:[%s3 + $0x41c] sm:$0xf]
  %v4672 = vld [vmem:[%s3 + $0x420] sm:$0xf]
  %v4673 = vld [vmem:[%s3 + $0x424] sm:$0xf]
  %v4674 = vld [vmem:[%s3 + $0x428] sm:$0xf]
  %v4675 = vld [vmem:[%s3 + $0x42c] sm:$0xf]
  %v4676 = vld [vmem:[%s3 + $0x430] sm:$0xf]
  %v4677 = vld [vmem:[%s3 + $0x434] sm:$0xf]
  %v4678 = vld [vmem:[%s3 + $0x438] sm:$0xf]
  %v4679 = vld [vmem:[%s3 + $0x43c] sm:$0xf]
  %v4680 = vld [vmem:[%s3 + $0x440] sm:$0xf]
  %v4681 = vld [vmem:[%s3 + $0x444] sm:$0xf]
  %v4682 = vld [vmem:[%s3 + $0x448] sm:$0xf]
  %v4683 = vld [vmem:[%s3 + $0x44c] sm:$0xf]
  %v4684 = vld [vmem:[%s3 + $0x450] sm:$0xf]
  %v4685 = vld [vmem:[%s3 + $0x454] sm:$0xf]
  %v4686 = vld [vmem:[%s3 + $0x458] sm:$0xf]
  %v4687 = vld [vmem:[%s3 + $0x45c] sm:$0xf]
  %v4688 = vld [vmem:[%s3 + $0x460] sm:$0xf]
  %v4689 = vld [vmem:[%s3 + $0x464] sm:$0xf]
  %v4690 = vld [vmem:[%s3 + $0x468] sm:$0xf]
  %v4691 = vld [vmem:[%s3 + $0x46c] sm:$0xf]
  %v4692 = vld [vmem:[%s3 + $0x470] sm:$0xf]
  %v4693 = vld [vmem:[%s3 + $0x474] sm:$0xf]
  %v4694 = vld [vmem:[%s3 + $0x478] sm:$0xf]
  %v4695 = vld [vmem:[%s3 + $0x47c] sm:$0xf]
  %v4696 = vld [vmem:[%s3 + $0x480] sm:$0xf]
  %v4697 = vld [vmem:[%s3 + $0x484] sm:$0xf]
  %v4698 = vld [vmem:[%s3 + $0x488] sm:$0xf]
  %v4699 = vld [vmem:[%s3 + $0x48c] sm:$0xf]
  %v4700 = vld [vmem:[%s3 + $0x490] sm:$0xf]
  %v4701 = vld [vmem:[%s3 + $0x494] sm:$0xf]
  %v4702 = vld [vmem:[%s3 + $0x498] sm:$0xf]
  %v4703 = vld [vmem:[%s3 + $0x49c] sm:$0xf]
  %v4704 = vld [vmem:[%s3 + $0x4a0] sm:$0xf]
  %v4705 = vld [vmem:[%s3 + $0x4a4] sm:$0xf]
  %v4706 = vld [vmem:[%s3 + $0x4a8] sm:$0xf]
  %v4707 = vld [vmem:[%s3 + $0x4ac] sm:$0xf]
  %v4708 = vld [vmem:[%s3 + $0x4b0] sm:$0xf]
  %v4709 = vld [vmem:[%s3 + $0x4b4] sm:$0xf]
  %v4710 = vld [vmem:[%s3 + $0x4b8] sm:$0xf]
  %v4711 = vld [vmem:[%s3 + $0x4bc] sm:$0xf]
  %v4712 = vld [vmem:[%s3 + $0x4c0] sm:$0xf]
  %v4713 = vld [vmem:[%s3 + $0x4c4] sm:$0xf]
  %v4714 = vld [vmem:[%s3 + $0x4c8] sm:$0xf]
  %v4715 = vld [vmem:[%s3 + $0x4cc] sm:$0xf]
  %v4716 = vld [vmem:[%s3 + $0x4d0] sm:$0xf]
  %v4717 = vld [vmem:[%s3 + $0x4d4] sm:$0xf]
  %v4718 = vld [vmem:[%s3 + $0x4d8] sm:$0xf]
  %v4719 = vld [vmem:[%s3 + $0x4dc] sm:$0xf]
  %v4720 = vld [vmem:[%s3 + $0x4e0] sm:$0xf]
  %v4721 = vld [vmem:[%s3 + $0x4e4] sm:$0xf]
  %v4722 = vld [vmem:[%s3 + $0x4e8] sm:$0xf]
  %v4723 = vld [vmem:[%s3 + $0x4ec] sm:$0xf]
  %v4724 = vld [vmem:[%s3 + $0x4f0] sm:$0xf]
  %v4725 = vld [vmem:[%s3 + $0x4f4] sm:$0xf]
  %v4726 = vld [vmem:[%s3 + $0x4f8] sm:$0xf]
  %v4727 = vld [vmem:[%s3 + $0x4fc] sm:$0xf]
  %v4792 = vunpack.c.l.b16 %v4664
  %v4793 = vunpack.c.l.b16 %v4665
  %v4794 = vunpack.c.l.b16 %v4666
  %v4795 = vunpack.c.l.b16 %v4667
  %v4796 = vunpack.c.l.b16 %v4668
  %v4797 = vunpack.c.l.b16 %v4669
  %v4798 = vunpack.c.l.b16 %v4670
  %v4799 = vunpack.c.l.b16 %v4671
  %v4800 = vunpack.c.l.b16 %v4672
  %v4801 = vunpack.c.l.b16 %v4673
  %v4802 = vunpack.c.l.b16 %v4674
  %v4803 = vunpack.c.l.b16 %v4675
  %v4804 = vunpack.c.l.b16 %v4676
  %v4805 = vunpack.c.l.b16 %v4677
  %v4806 = vunpack.c.l.b16 %v4678
  %v4807 = vunpack.c.l.b16 %v4679
  %v4808 = vunpack.c.l.b16 %v4680
  %v4809 = vunpack.c.l.b16 %v4681
  %v4810 = vunpack.c.l.b16 %v4682
  %v4811 = vunpack.c.l.b16 %v4683
  %v4812 = vunpack.c.l.b16 %v4684
  %v4813 = vunpack.c.l.b16 %v4685
  %v4814 = vunpack.c.l.b16 %v4686
  %v4815 = vunpack.c.l.b16 %v4687
  %v4816 = vunpack.c.l.b16 %v4688
  %v4817 = vunpack.c.l.b16 %v4689
  %v4818 = vunpack.c.l.b16 %v4690
  %v4819 = vunpack.c.l.b16 %v4691
  %v4820 = vunpack.c.l.b16 %v4692
  %v4821 = vunpack.c.l.b16 %v4693
  %v4822 = vunpack.c.l.b16 %v4694
  %v4823 = vunpack.c.l.b16 %v4695
  %v4824 = vunpack.c.l.b16 %v4696
  %v4825 = vunpack.c.l.b16 %v4697
  %v4826 = vunpack.c.l.b16 %v4698
  %v4827 = vunpack.c.l.b16 %v4699
  %v4828 = vunpack.c.l.b16 %v4700
  %v4829 = vunpack.c.l.b16 %v4701
  %v4830 = vunpack.c.l.b16 %v4702
  %v4831 = vunpack.c.l.b16 %v4703
  %v4832 = vunpack.c.l.b16 %v4704
  %v4833 = vunpack.c.l.b16 %v4705
  %v4834 = vunpack.c.l.b16 %v4706
  %v4835 = vunpack.c.l.b16 %v4707
  %v4836 = vunpack.c.l.b16 %v4708
  %v4837 = vunpack.c.l.b16 %v4709
  %v4838 = vunpack.c.l.b16 %v4710
  %v4839 = vunpack.c.l.b16 %v4711
  %v4840 = vunpack.c.l.b16 %v4712
  %v4841 = vunpack.c.l.b16 %v4713
  %v4842 = vunpack.c.l.b16 %v4714
  %v4843 = vunpack.c.l.b16 %v4715
  %v4844 = vunpack.c.l.b16 %v4716
  %v4845 = vunpack.c.l.b16 %v4717
  %v4846 = vunpack.c.l.b16 %v4718
  %v4847 = vunpack.c.l.b16 %v4719
  %v4848 = vunpack.c.l.b16 %v4720
  %v4849 = vunpack.c.l.b16 %v4721
  %v4850 = vunpack.c.l.b16 %v4722
  %v4851 = vunpack.c.l.b16 %v4723
  %v4852 = vunpack.c.l.b16 %v4724
  %v4853 = vunpack.c.l.b16 %v4725
  %v4854 = vunpack.c.l.b16 %v4726
  %v4855 = vunpack.c.l.b16 %v4727
  %v4856 = vpack.c.b16 %v4793, %v4792
  %v4857 = vpack.c.b16 %v4795, %v4794
  %v4858 = vpack.c.b16 %v4797, %v4796
  %v4859 = vpack.c.b16 %v4799, %v4798
  %v4860 = vpack.c.b16 %v4801, %v4800
  %v4861 = vpack.c.b16 %v4803, %v4802
  %v4862 = vpack.c.b16 %v4805, %v4804
  %v4863 = vpack.c.b16 %v4807, %v4806
  %v4864 = vpack.c.b16 %v4809, %v4808
  %v4865 = vpack.c.b16 %v4811, %v4810
  %v4866 = vpack.c.b16 %v4813, %v4812
  %v4867 = vpack.c.b16 %v4815, %v4814
  %v4868 = vpack.c.b16 %v4817, %v4816
  %v4869 = vpack.c.b16 %v4819, %v4818
  %v4870 = vpack.c.b16 %v4821, %v4820
  %v4871 = vpack.c.b16 %v4823, %v4822
  %v4872 = vpack.c.b16 %v4825, %v4824
  %v4873 = vpack.c.b16 %v4827, %v4826
  %v4874 = vpack.c.b16 %v4829, %v4828
  %v4875 = vpack.c.b16 %v4831, %v4830
  %v4876 = vpack.c.b16 %v4833, %v4832
  %v4877 = vpack.c.b16 %v4835, %v4834
  %v4878 = vpack.c.b16 %v4837, %v4836
  %v4879 = vpack.c.b16 %v4839, %v4838
  %v4880 = vpack.c.b16 %v4841, %v4840
  %v4881 = vpack.c.b16 %v4843, %v4842
  %v4882 = vpack.c.b16 %v4845, %v4844
  %v4883 = vpack.c.b16 %v4847, %v4846
  %v4884 = vpack.c.b16 %v4849, %v4848
  %v4885 = vpack.c.b16 %v4851, %v4850
  %v4886 = vpack.c.b16 %v4853, %v4852
  %v4887 = vpack.c.b16 %v4855, %v4854
  %4920 = vmatprep.subr.bf16.mxu0 0
  %4921 = vmatpush1.bf16.msra.mxu0 %v4856
  %4922 = vmatprep.subr.bf16.mxu0 0
  %4923 = vmatpush1.bf16.msra.mxu0 %v4857
  %4924 = vmatprep.subr.bf16.mxu0 0
  %4925 = vmatpush1.bf16.msra.mxu0 %v4858
  %4926 = vmatprep.subr.bf16.mxu0 0
  %4927 = vmatpush1.bf16.msra.mxu0 %v4859
  %4928 = vmatprep.subr.bf16.mxu0 0
  %4929 = vmatpush1.bf16.msra.mxu0 %v4860
  %4930 = vmatprep.subr.bf16.mxu0 0
  %4931 = vmatpush1.bf16.msra.mxu0 %v4861
  %4932 = vmatprep.subr.bf16.mxu0 0
  %4933 = vmatpush1.bf16.msra.mxu0 %v4862
  %4934 = vmatprep.subr.bf16.mxu0 0
  %4935 = vmatpush1.bf16.msra.mxu0 %v4863
  %4936 = vmatprep.subr.bf16.mxu0 0
  %4937 = vmatpush1.bf16.msra.mxu0 %v4864
  %4938 = vmatprep.subr.bf16.mxu0 0
  %4939 = vmatpush1.bf16.msra.mxu0 %v4865
  %4940 = vmatprep.subr.bf16.mxu0 0
  %4941 = vmatpush1.bf16.msra.mxu0 %v4866
  %4942 = vmatprep.subr.bf16.mxu0 0
  %4943 = vmatpush1.bf16.msra.mxu0 %v4867
  %4944 = vmatprep.subr.bf16.mxu0 0
  %4945 = vmatpush1.bf16.msra.mxu0 %v4868
  %4946 = vmatprep.subr.bf16.mxu0 0
  %4947 = vmatpush1.bf16.msra.mxu0 %v4869
  %4948 = vmatprep.subr.bf16.mxu0 0
  %4949 = vmatpush1.bf16.msra.mxu0 %v4870
  %4950 = vmatprep.subr.bf16.mxu0 0
  %4951 = vmatpush1.bf16.msra.mxu0 %v4871
  %4952 = vmatprep.mubr.bf16.mxu0 %v3271
  %4953 = vmatmul.mubr.bf16.gmra.mrb[0].mxu0 %v3270
  %v4954 = vpop.f32.mrb[0].mxu0
  %v4955 = vadd.f32 0.0, %v4954
  %v4956 = vpop.f32.mrb[0].mxu0
  %v4957 = vpop.f32.mrb[0].mxu0
  %v4958 = vpop.f32.mrb[0].mxu0
  %4959 = vdwg.mxu0
  %4960 = vmatprep.subr.bf16.mxu0 0
  %4961 = vmatpush1.bf16.msra.mxu0 %v4872
  %4962 = vmatprep.subr.bf16.mxu0 0
  %4963 = vmatpush1.bf16.msra.mxu0 %v4873
  %4964 = vmatprep.subr.bf16.mxu0 0
  %4965 = vmatpush1.bf16.msra.mxu0 %v4874
  %4966 = vmatprep.subr.bf16.mxu0 0
  %4967 = vmatpush1.bf16.msra.mxu0 %v4875
  %4968 = vmatprep.subr.bf16.mxu0 0
  %4969 = vmatpush1.bf16.msra.mxu0 %v4876
  %4970 = vmatprep.subr.bf16.mxu0 0
  %4971 = vmatpush1.bf16.msra.mxu0 %v4877
  %4972 = vmatprep.subr.bf16.mxu0 0
  %4973 = vmatpush1.bf16.msra.mxu0 %v4878
  %4974 = vmatprep.subr.bf16.mxu0 0
  %4975 = vmatpush1.bf16.msra.mxu0 %v4879
  %4976 = vmatprep.subr.bf16.mxu0 0
  %4977 = vmatpush1.bf16.msra.mxu0 %v4880
  %4978 = vmatprep.subr.bf16.mxu0 0
  %4979 = vmatpush1.bf16.msra.mxu0 %v4881
  %4980 = vmatprep.subr.bf16.mxu0 0
  %4981 = vmatpush1.bf16.msra.mxu0 %v4882
  %4982 = vmatprep.subr.bf16.mxu0 0
  %4983 = vmatpush1.bf16.msra.mxu0 %v4883
  %4984 = vmatprep.subr.bf16.mxu0 0
  %4985 = vmatpush1.bf16.msra.mxu0 %v4884
  %4986 = vmatprep.subr.bf16.mxu0 0
  %4987 = vmatpush1.bf16.msra.mxu0 %v4885
  %4988 = vmatprep.subr.bf16.mxu0 0
  %4989 = vmatpush1.bf16.msra.mxu0 %v4886
  %4990 = vmatprep.subr.bf16.mxu0 0
  %4991 = vmatpush1.bf16.msra.mxu0 %v4887
  %4992 = vmatprep.mubr.bf16.mxu0 %v3273
  %4993 = vmatmul.mubr.bf16.gmra.mrb[0].mxu0 %v3272
  %v4994 = vpop.f32.mrb[0].mxu0
  %v4995 = vadd.f32 %v4955, %v4994
  %v4996 = vpop.f32.mrb[0].mxu0
  %v4997 = vpop.f32.mrb[0].mxu0
  %v4998 = vpop.f32.mrb[0].mxu0
  %4999 = vdwg.mxu0
  %v5000 = vadd.f32 %v4663, %v4995
  %v5001 = vld [vmem:[%s3 + $0x500] sm:$0xf]
  %v5002 = vld [vmem:[%s3 + $0x504] sm:$0xf]
  %v5003 = vld [vmem:[%s3 + $0x508] sm:$0xf]
  %v5004 = vld [vmem:[%s3 + $0x50c] sm:$0xf]
  %v5005 = vld [vmem:[%s3 + $0x510] sm:$0xf]
  %v5006 = vld [vmem:[%s3 + $0x514] sm:$0xf]
  %v5007 = vld [vmem:[%s3 + $0x518] sm:$0xf]
  %v5008 = vld [vmem:[%s3 + $0x51c] sm:$0xf]
  %v5009 = vld [vmem:[%s3 + $0x520] sm:$0xf]
  %v5010 = vld [vmem:[%s3 + $0x524] sm:$0xf]
  %v5011 = vld [vmem:[%s3 + $0x528] sm:$0xf]
  %v5012 = vld [vmem:[%s3 + $0x52c] sm:$0xf]
  %v5013 = vld [vmem:[%s3 + $0x530] sm:$0xf]
  %v5014 = vld [vmem:[%s3 + $0x534] sm:$0xf]
  %v5015 = vld [vmem:[%s3 + $0x538] sm:$0xf]
  %v5016 = vld [vmem:[%s3 + $0x53c] sm:$0xf]
  %v5017 = vld [vmem:[%s3 + $0x540] sm:$0xf]
  %v5018 = vld [vmem:[%s3 + $0x544] sm:$0xf]
  %v5019 = vld [vmem:[%s3 + $0x548] sm:$0xf]
  %v5020 = vld [vmem:[%s3 + $0x54c] sm:$0xf]
  %v5021 = vld [vmem:[%s3 + $0x550] sm:$0xf]
  %v5022 = vld [vmem:[%s3 + $0x554] sm:$0xf]
  %v5023 = vld [vmem:[%s3 + $0x558] sm:$0xf]
  %v5024 = vld [vmem:[%s3 + $0x55c] sm:$0xf]
  %v5025 = vld [vmem:[%s3 + $0x560] sm:$0xf]
  %v5026 = vld [vmem:[%s3 + $0x564] sm:$0xf]
  %v5027 = vld [vmem:[%s3 + $0x568] sm:$0xf]
  %v5028 = vld [vmem:[%s3 + $0x56c] sm:$0xf]
  %v5029 = vld [vmem:[%s3 + $0x570] sm:$0xf]
  %v5030 = vld [vmem:[%s3 + $0x574] sm:$0xf]
  %v5031 = vld [vmem:[%s3 + $0x578] sm:$0xf]
  %v5032 = vld [vmem:[%s3 + $0x57c] sm:$0xf]
  %v5033 = vld [vmem:[%s3 + $0x580] sm:$0xf]
  %v5034 = vld [vmem:[%s3 + $0x584] sm:$0xf]
  %v5035 = vld [vmem:[%s3 + $0x588] sm:$0xf]
  %v5036 = vld [vmem:[%s3 + $0x58c] sm:$0xf]
  %v5037 = vld [vmem:[%s3 + $0x590] sm:$0xf]
  %v5038 = vld [vmem:[%s3 + $0x594] sm:$0xf]
  %v5039 = vld [vmem:[%s3 + $0x598] sm:$0xf]
  %v5040 = vld [vmem:[%s3 + $0x59c] sm:$0xf]
  %v5041 = vld [vmem:[%s3 + $0x5a0] sm:$0xf]
  %v5042 = vld [vmem:[%s3 + $0x5a4] sm:$0xf]
  %v5043 = vld [vmem:[%s3 + $0x5a8] sm:$0xf]
  %v5044 = vld [vmem:[%s3 + $0x5ac] sm:$0xf]
  %v5045 = vld [vmem:[%s3 + $0x5b0] sm:$0xf]
  %v5046 = vld [vmem:[%s3 + $0x5b4] sm:$0xf]
  %v5047 = vld [vmem:[%s3 + $0x5b8] sm:$0xf]
  %v5048 = vld [vmem:[%s3 + $0x5bc] sm:$0xf]
  %v5049 = vld [vmem:[%s3 + $0x5c0] sm:$0xf]
  %v5050 = vld [vmem:[%s3 + $0x5c4] sm:$0xf]
  %v5051 = vld [vmem:[%s3 + $0x5c8] sm:$0xf]
  %v5052 = vld [vmem:[%s3 + $0x5cc] sm:$0xf]
  %v5053 = vld [vmem:[%s3 + $0x5d0] sm:$0xf]
  %v5054 = vld [vmem:[%s3 + $0x5d4] sm:$0xf]
  %v5055 = vld [vmem:[%s3 + $0x5d8] sm:$0xf]
  %v5056 = vld [vmem:[%s3 + $0x5dc] sm:$0xf]
  %v5057 = vld [vmem:[%s3 + $0x5e0] sm:$0xf]
  %v5058 = vld [vmem:[%s3 + $0x5e4] sm:$0xf]
  %v5059 = vld [vmem:[%s3 + $0x5e8] sm:$0xf]
  %v5060 = vld [vmem:[%s3 + $0x5ec] sm:$0xf]
  %v5061 = vld [vmem:[%s3 + $0x5f0] sm:$0xf]
  %v5062 = vld [vmem:[%s3 + $0x5f4] sm:$0xf]
  %v5063 = vld [vmem:[%s3 + $0x5f8] sm:$0xf]
  %v5064 = vld [vmem:[%s3 + $0x5fc] sm:$0xf]
  %v5069 = vrot.slane %v3270, 4
  %v5070 = vrot.slane %v3271, 4
  %v5071 = vrot.slane %v3272, 4
  %v5072 = vrot.slane %v3273, 4
  %v5141 = vunpack.c.l.b16 %v5001
  %v5142 = vunpack.c.l.b16 %v5002
  %v5143 = vunpack.c.l.b16 %v5003
  %v5144 = vunpack.c.l.b16 %v5004
  %v5145 = vunpack.c.l.b16 %v5005
  %v5146 = vunpack.c.l.b16 %v5006
  %v5147 = vunpack.c.l.b16 %v5007
  %v5148 = vunpack.c.l.b16 %v5008
  %v5149 = vunpack.c.l.b16 %v5009
  %v5150 = vunpack.c.l.b16 %v5010
  %v5151 = vunpack.c.l.b16 %v5011
  %v5152 = vunpack.c.l.b16 %v5012
  %v5153 = vunpack.c.l.b16 %v5013
  %v5154 = vunpack.c.l.b16 %v5014
  %v5155 = vunpack.c.l.b16 %v5015
  %v5156 = vunpack.c.l.b16 %v5016
  %v5157 = vunpack.c.l.b16 %v5017
  %v5158 = vunpack.c.l.b16 %v5018
  %v5159 = vunpack.c.l.b16 %v5019
  %v5160 = vunpack.c.l.b16 %v5020
  %v5161 = vunpack.c.l.b16 %v5021
  %v5162 = vunpack.c.l.b16 %v5022
  %v5163 = vunpack.c.l.b16 %v5023
  %v5164 = vunpack.c.l.b16 %v5024
  %v5165 = vunpack.c.l.b16 %v5025
  %v5166 = vunpack.c.l.b16 %v5026
  %v5167 = vunpack.c.l.b16 %v5027
  %v5168 = vunpack.c.l.b16 %v5028
  %v5169 = vunpack.c.l.b16 %v5029
  %v5170 = vunpack.c.l.b16 %v5030
  %v5171 = vunpack.c.l.b16 %v5031
  %v5172 = vunpack.c.l.b16 %v5032
  %v5173 = vunpack.c.l.b16 %v5033
  %v5174 = vunpack.c.l.b16 %v5034
  %v5175 = vunpack.c.l.b16 %v5035
  %v5176 = vunpack.c.l.b16 %v5036
  %v5177 = vunpack.c.l.b16 %v5037
  %v5178 = vunpack.c.l.b16 %v5038
  %v5179 = vunpack.c.l.b16 %v5039
  %v5180 = vunpack.c.l.b16 %v5040
  %v5181 = vunpack.c.l.b16 %v5041
  %v5182 = vunpack.c.l.b16 %v5042
  %v5183 = vunpack.c.l.b16 %v5043
  %v5184 = vunpack.c.l.b16 %v5044
  %v5185 = vunpack.c.l.b16 %v5045
  %v5186 = vunpack.c.l.b16 %v5046
  %v5187 = vunpack.c.l.b16 %v5047
  %v5188 = vunpack.c.l.b16 %v5048
  %v5189 = vunpack.c.l.b16 %v5049
  %v5190 = vunpack.c.l.b16 %v5050
  %v5191 = vunpack.c.l.b16 %v5051
  %v5192 = vunpack.c.l.b16 %v5052
  %v5193 = vunpack.c.l.b16 %v5053
  %v5194 = vunpack.c.l.b16 %v5054
  %v5195 = vunpack.c.l.b16 %v5055
  %v5196 = vunpack.c.l.b16 %v5056
  %v5197 = vunpack.c.l.b16 %v5057
  %v5198 = vunpack.c.l.b16 %v5058
  %v5199 = vunpack.c.l.b16 %v5059
  %v5200 = vunpack.c.l.b16 %v5060
  %v5201 = vunpack.c.l.b16 %v5061
  %v5202 = vunpack.c.l.b16 %v5062
  %v5203 = vunpack.c.l.b16 %v5063
  %v5204 = vunpack.c.l.b16 %v5064
  %v5205 = vpack.c.b16 %v5142, %v5141
  %v5206 = vpack.c.b16 %v5144, %v5143
  %v5207 = vpack.c.b16 %v5146, %v5145
  %v5208 = vpack.c.b16 %v5148, %v5147
  %v5209 = vpack.c.b16 %v5150, %v5149
  %v5210 = vpack.c.b16 %v5152, %v5151
  %v5211 = vpack.c.b16 %v5154, %v5153
  %v5212 = vpack.c.b16 %v5156, %v5155
  %v5213 = vpack.c.b16 %v5158, %v5157
  %v5214 = vpack.c.b16 %v5160, %v5159
  %v5215 = vpack.c.b16 %v5162, %v5161
  %v5216 = vpack.c.b16 %v5164, %v5163
  %v5217 = vpack.c.b16 %v5166, %v5165
  %v5218 = vpack.c.b16 %v5168, %v5167
  %v5219 = vpack.c.b16 %v5170, %v5169
  %v5220 = vpack.c.b16 %v5172, %v5171
  %v5221 = vpack.c.b16 %v5174, %v5173
  %v5222 = vpack.c.b16 %v5176, %v5175
  %v5223 = vpack.c.b16 %v5178, %v5177
  %v5224 = vpack.c.b16 %v5180, %v5179
  %v5225 = vpack.c.b16 %v5182, %v5181
  %v5226 = vpack.c.b16 %v5184, %v5183
  %v5227 = vpack.c.b16 %v5186, %v5185
  %v5228 = vpack.c.b16 %v5188, %v5187
  %v5229 = vpack.c.b16 %v5190, %v5189
  %v5230 = vpack.c.b16 %v5192, %v5191
  %v5231 = vpack.c.b16 %v5194, %v5193
  %v5232 = vpack.c.b16 %v5196, %v5195
  %v5233 = vpack.c.b16 %v5198, %v5197
  %v5234 = vpack.c.b16 %v5200, %v5199
  %v5235 = vpack.c.b16 %v5202, %v5201
  %v5236 = vpack.c.b16 %v5204, %v5203
  %5269 = vmatprep.subr.bf16.mxu0 0
  %5270 = vmatpush1.bf16.msra.mxu0 %v5205
  %5271 = vmatprep.subr.bf16.mxu0 0
  %5272 = vmatpush1.bf16.msra.mxu0 %v5206
  %5273 = vmatprep.subr.bf16.mxu0 0
  %5274 = vmatpush1.bf16.msra.mxu0 %v5207
  %5275 = vmatprep.subr.bf16.mxu0 0
  %5276 = vmatpush1.bf16.msra.mxu0 %v5208
  %5277 = vmatprep.subr.bf16.mxu0 0
  %5278 = vmatpush1.bf16.msra.mxu0 %v5209
  %5279 = vmatprep.subr.bf16.mxu0 0
  %5280 = vmatpush1.bf16.msra.mxu0 %v5210
  %5281 = vmatprep.subr.bf16.mxu0 0
  %5282 = vmatpush1.bf16.msra.mxu0 %v5211
  %5283 = vmatprep.subr.bf16.mxu0 0
  %5284 = vmatpush1.bf16.msra.mxu0 %v5212
  %5285 = vmatprep.subr.bf16.mxu0 0
  %5286 = vmatpush1.bf16.msra.mxu0 %v5213
  %5287 = vmatprep.subr.bf16.mxu0 0
  %5288 = vmatpush1.bf16.msra.mxu0 %v5214
  %5289 = vmatprep.subr.bf16.mxu0 0
  %5290 = vmatpush1.bf16.msra.mxu0 %v5215
  %5291 = vmatprep.subr.bf16.mxu0 0
  %5292 = vmatpush1.bf16.msra.mxu0 %v5216
  %5293 = vmatprep.subr.bf16.mxu0 0
  %5294 = vmatpush1.bf16.msra.mxu0 %v5217
  %5295 = vmatprep.subr.bf16.mxu0 0
  %5296 = vmatpush1.bf16.msra.mxu0 %v5218
  %5297 = vmatprep.subr.bf16.mxu0 0
  %5298 = vmatpush1.bf16.msra.mxu0 %v5219
  %5299 = vmatprep.subr.bf16.mxu0 0
  %5300 = vmatpush1.bf16.msra.mxu0 %v5220
  %5301 = vmatprep.mubr.bf16.mxu0 %v5070
  %5302 = vmatmul.mubr.bf16.gmra.mrb[0].mxu0 %v5069
  %v5303 = vpop.f32.mrb[0].mxu0
  %v5304 = vadd.f32 0.0, %v5303
  %v5305 = vpop.f32.mrb[0].mxu0
  %v5306 = vpop.f32.mrb[0].mxu0
  %v5307 = vpop.f32.mrb[0].mxu0
  %5308 = vdwg.mxu0
  %5309 = vmatprep.subr.bf16.mxu0 0
  %5310 = vmatpush1.bf16.msra.mxu0 %v5221
  %5311 = vmatprep.subr.bf16.mxu0 0
  %5312 = vmatpush1.bf16.msra.mxu0 %v5222
  %5313 = vmatprep.subr.bf16.mxu0 0
  %5314 = vmatpush1.bf16.msra.mxu0 %v5223
  %5315 = vmatprep.subr.bf16.mxu0 0
  %5316 = vmatpush1.bf16.msra.mxu0 %v5224
  %5317 = vmatprep.subr.bf16.mxu0 0
  %5318 = vmatpush1.bf16.msra.mxu0 %v5225
  %5319 = vmatprep.subr.bf16.mxu0 0
  %5320 = vmatpush1.bf16.msra.mxu0 %v5226
  %5321 = vmatprep.subr.bf16.mxu0 0
  %5322 = vmatpush1.bf16.msra.mxu0 %v5227
  %5323 = vmatprep.subr.bf16.mxu0 0
  %5324 = vmatpush1.bf16.msra.mxu0 %v5228
  %5325 = vmatprep.subr.bf16.mxu0 0
  %5326 = vmatpush1.bf16.msra.mxu0 %v5229
  %5327 = vmatprep.subr.bf16.mxu0 0
  %5328 = vmatpush1.bf16.msra.mxu0 %v5230
  %5329 = vmatprep.subr.bf16.mxu0 0
  %5330 = vmatpush1.bf16.msra.mxu0 %v5231
  %5331 = vmatprep.subr.bf16.mxu0 0
  %5332 = vmatpush1.bf16.msra.mxu0 %v5232
  %5333 = vmatprep.subr.bf16.mxu0 0
  %5334 = vmatpush1.bf16.msra.mxu0 %v5233
  %5335 = vmatprep.subr.bf16.mxu0 0
  %5336 = vmatpush1.bf16.msra.mxu0 %v5234
  %5337 = vmatprep.subr.bf16.mxu0 0
  %5338 = vmatpush1.bf16.msra.mxu0 %v5235
  %5339 = vmatprep.subr.bf16.mxu0 0
  %5340 = vmatpush1.bf16.msra.mxu0 %v5236
  %5341 = vmatprep.mubr.bf16.mxu0 %v5072
  %5342 = vmatmul.mubr.bf16.gmra.mrb[0].mxu0 %v5071
  %v5343 = vpop.f32.mrb[0].mxu0
  %v5344 = vadd.f32 %v5304, %v5343
  %v5345 = vpop.f32.mrb[0].mxu0
  %v5346 = vpop.f32.mrb[0].mxu0
  %v5347 = vpop.f32.mrb[0].mxu0
  %5348 = vdwg.mxu0
  %v5349 = vadd.f32 %v5000, %v5344
  %v5350 = vld [vmem:[%s3 + $0x600] sm:$0xf]
  %v5351 = vld [vmem:[%s3 + $0x604] sm:$0xf]
  %v5352 = vld [vmem:[%s3 + $0x608] sm:$0xf]
  %v5353 = vld [vmem:[%s3 + $0x60c] sm:$0xf]
  %v5354 = vld [vmem:[%s3 + $0x610] sm:$0xf]
  %v5355 = vld [vmem:[%s3 + $0x614] sm:$0xf]
  %v5356 = vld [vmem:[%s3 + $0x618] sm:$0xf]
  %v5357 = vld [vmem:[%s3 + $0x61c] sm:$0xf]
  %v5358 = vld [vmem:[%s3 + $0x620] sm:$0xf]
  %v5359 = vld [vmem:[%s3 + $0x624] sm:$0xf]
  %v5360 = vld [vmem:[%s3 + $0x628] sm:$0xf]
  %v5361 = vld [vmem:[%s3 + $0x62c] sm:$0xf]
  %v5362 = vld [vmem:[%s3 + $0x630] sm:$0xf]
  %v5363 = vld [vmem:[%s3 + $0x634] sm:$0xf]
  %v5364 = vld [vmem:[%s3 + $0x638] sm:$0xf]
  %v5365 = vld [vmem:[%s3 + $0x63c] sm:$0xf]
  %v5366 = vld [vmem:[%s3 + $0x640] sm:$0xf]
  %v5367 = vld [vmem:[%s3 + $0x644] sm:$0xf]
  %v5368 = vld [vmem:[%s3 + $0x648] sm:$0xf]
  %v5369 = vld [vmem:[%s3 + $0x64c] sm:$0xf]
  %v5370 = vld [vmem:[%s3 + $0x650] sm:$0xf]
  %v5371 = vld [vmem:[%s3 + $0x654] sm:$0xf]
  %v5372 = vld [vmem:[%s3 + $0x658] sm:$0xf]
  %v5373 = vld [vmem:[%s3 + $0x65c] sm:$0xf]
  %v5374 = vld [vmem:[%s3 + $0x660] sm:$0xf]
  %v5375 = vld [vmem:[%s3 + $0x664] sm:$0xf]
  %v5376 = vld [vmem:[%s3 + $0x668] sm:$0xf]
  %v5377 = vld [vmem:[%s3 + $0x66c] sm:$0xf]
  %v5378 = vld [vmem:[%s3 + $0x670] sm:$0xf]
  %v5379 = vld [vmem:[%s3 + $0x674] sm:$0xf]
  %v5380 = vld [vmem:[%s3 + $0x678] sm:$0xf]
  %v5381 = vld [vmem:[%s3 + $0x67c] sm:$0xf]
  %v5382 = vld [vmem:[%s3 + $0x680] sm:$0xf]
  %v5383 = vld [vmem:[%s3 + $0x684] sm:$0xf]
  %v5384 = vld [vmem:[%s3 + $0x688] sm:$0xf]
  %v5385 = vld [vmem:[%s3 + $0x68c] sm:$0xf]
  %v5386 = vld [vmem:[%s3 + $0x690] sm:$0xf]
  %v5387 = vld [vmem:[%s3 + $0x694] sm:$0xf]
  %v5388 = vld [vmem:[%s3 + $0x698] sm:$0xf]
  %v5389 = vld [vmem:[%s3 + $0x69c] sm:$0xf]
  %v5390 = vld [vmem:[%s3 + $0x6a0] sm:$0xf]
  %v5391 = vld [vmem:[%s3 + $0x6a4] sm:$0xf]
  %v5392 = vld [vmem:[%s3 + $0x6a8] sm:$0xf]
  %v5393 = vld [vmem:[%s3 + $0x6ac] sm:$0xf]
  %v5394 = vld [vmem:[%s3 + $0x6b0] sm:$0xf]
  %v5395 = vld [vmem:[%s3 + $0x6b4] sm:$0xf]
  %v5396 = vld [vmem:[%s3 + $0x6b8] sm:$0xf]
  %v5397 = vld [vmem:[%s3 + $0x6bc] sm:$0xf]
  %v5398 = vld [vmem:[%s3 + $0x6c0] sm:$0xf]
  %v5399 = vld [vmem:[%s3 + $0x6c4] sm:$0xf]
  %v5400 = vld [vmem:[%s3 + $0x6c8] sm:$0xf]
  %v5401 = vld [vmem:[%s3 + $0x6cc] sm:$0xf]
  %v5402 = vld [vmem:[%s3 + $0x6d0] sm:$0xf]
  %v5403 = vld [vmem:[%s3 + $0x6d4] sm:$0xf]
  %v5404 = vld [vmem:[%s3 + $0x6d8] sm:$0xf]
  %v5405 = vld [vmem:[%s3 + $0x6dc] sm:$0xf]
  %v5406 = vld [vmem:[%s3 + $0x6e0] sm:$0xf]
  %v5407 = vld [vmem:[%s3 + $0x6e4] sm:$0xf]
  %v5408 = vld [vmem:[%s3 + $0x6e8] sm:$0xf]
  %v5409 = vld [vmem:[%s3 + $0x6ec] sm:$0xf]
  %v5410 = vld [vmem:[%s3 + $0x6f0] sm:$0xf]
  %v5411 = vld [vmem:[%s3 + $0x6f4] sm:$0xf]
  %v5412 = vld [vmem:[%s3 + $0x6f8] sm:$0xf]
  %v5413 = vld [vmem:[%s3 + $0x6fc] sm:$0xf]
  %v5478 = vunpack.c.l.b16 %v5350
  %v5479 = vunpack.c.l.b16 %v5351
  %v5480 = vunpack.c.l.b16 %v5352
  %v5481 = vunpack.c.l.b16 %v5353
  %v5482 = vunpack.c.l.b16 %v5354
  %v5483 = vunpack.c.l.b16 %v5355
  %v5484 = vunpack.c.l.b16 %v5356
  %v5485 = vunpack.c.l.b16 %v5357
  %v5486 = vunpack.c.l.b16 %v5358
  %v5487 = vunpack.c.l.b16 %v5359
  %v5488 = vunpack.c.l.b16 %v5360
  %v5489 = vunpack.c.l.b16 %v5361
  %v5490 = vunpack.c.l.b16 %v5362
  %v5491 = vunpack.c.l.b16 %v5363
  %v5492 = vunpack.c.l.b16 %v5364
  %v5493 = vunpack.c.l.b16 %v5365
  %v5494 = vunpack.c.l.b16 %v5366
  %v5495 = vunpack.c.l.b16 %v5367
  %v5496 = vunpack.c.l.b16 %v5368
  %v5497 = vunpack.c.l.b16 %v5369
  %v5498 = vunpack.c.l.b16 %v5370
  %v5499 = vunpack.c.l.b16 %v5371
  %v5500 = vunpack.c.l.b16 %v5372
  %v5501 = vunpack.c.l.b16 %v5373
  %v5502 = vunpack.c.l.b16 %v5374
  %v5503 = vunpack.c.l.b16 %v5375
  %v5504 = vunpack.c.l.b16 %v5376
  %v5505 = vunpack.c.l.b16 %v5377
  %v5506 = vunpack.c.l.b16 %v5378
  %v5507 = vunpack.c.l.b16 %v5379
  %v5508 = vunpack.c.l.b16 %v5380
  %v5509 = vunpack.c.l.b16 %v5381
  %v5510 = vunpack.c.l.b16 %v5382
  %v5511 = vunpack.c.l.b16 %v5383
  %v5512 = vunpack.c.l.b16 %v5384
  %v5513 = vunpack.c.l.b16 %v5385
  %v5514 = vunpack.c.l.b16 %v5386
  %v5515 = vunpack.c.l.b16 %v5387
  %v5516 = vunpack.c.l.b16 %v5388
  %v5517 = vunpack.c.l.b16 %v5389
  %v5518 = vunpack.c.l.b16 %v5390
  %v5519 = vunpack.c.l.b16 %v5391
  %v5520 = vunpack.c.l.b16 %v5392
  %v5521 = vunpack.c.l.b16 %v5393
  %v5522 = vunpack.c.l.b16 %v5394
  %v5523 = vunpack.c.l.b16 %v5395
  %v5524 = vunpack.c.l.b16 %v5396
  %v5525 = vunpack.c.l.b16 %v5397
  %v5526 = vunpack.c.l.b16 %v5398
  %v5527 = vunpack.c.l.b16 %v5399
  %v5528 = vunpack.c.l.b16 %v5400
  %v5529 = vunpack.c.l.b16 %v5401
  %v5530 = vunpack.c.l.b16 %v5402
  %v5531 = vunpack.c.l.b16 %v5403
  %v5532 = vunpack.c.l.b16 %v5404
  %v5533 = vunpack.c.l.b16 %v5405
  %v5534 = vunpack.c.l.b16 %v5406
  %v5535 = vunpack.c.l.b16 %v5407
  %v5536 = vunpack.c.l.b16 %v5408
  %v5537 = vunpack.c.l.b16 %v5409
  %v5538 = vunpack.c.l.b16 %v5410
  %v5539 = vunpack.c.l.b16 %v5411
  %v5540 = vunpack.c.l.b16 %v5412
  %v5541 = vunpack.c.l.b16 %v5413
  %v5542 = vpack.c.b16 %v5479, %v5478
  %v5543 = vpack.c.b16 %v5481, %v5480
  %v5544 = vpack.c.b16 %v5483, %v5482
  %v5545 = vpack.c.b16 %v5485, %v5484
  %v5546 = vpack.c.b16 %v5487, %v5486
  %v5547 = vpack.c.b16 %v5489, %v5488
  %v5548 = vpack.c.b16 %v5491, %v5490
  %v5549 = vpack.c.b16 %v5493, %v5492
  %v5550 = vpack.c.b16 %v5495, %v5494
  %v5551 = vpack.c.b16 %v5497, %v5496
  %v5552 = vpack.c.b16 %v5499, %v5498
  %v5553 = vpack.c.b16 %v5501, %v5500
  %v5554 = vpack.c.b16 %v5503, %v5502
  %v5555 = vpack.c.b16 %v5505, %v5504
  %v5556 = vpack.c.b16 %v5507, %v5506
  %v5557 = vpack.c.b16 %v5509, %v5508
  %v5558 = vpack.c.b16 %v5511, %v5510
  %v5559 = vpack.c.b16 %v5513, %v5512
  %v5560 = vpack.c.b16 %v5515, %v5514
  %v5561 = vpack.c.b16 %v5517, %v5516
  %v5562 = vpack.c.b16 %v5519, %v5518
  %v5563 = vpack.c.b16 %v5521, %v5520
  %v5564 = vpack.c.b16 %v5523, %v5522
  %v5565 = vpack.c.b16 %v5525, %v5524
  %v5566 = vpack.c.b16 %v5527, %v5526
  %v5567 = vpack.c.b16 %v5529, %v5528
  %v5568 = vpack.c.b16 %v5531, %v5530
  %v5569 = vpack.c.b16 %v5533, %v5532
  %v5570 = vpack.c.b16 %v5535, %v5534
  %v5571 = vpack.c.b16 %v5537, %v5536
  %v5572 = vpack.c.b16 %v5539, %v5538
  %v5573 = vpack.c.b16 %v5541, %v5540
  %5606 = vmatprep.subr.bf16.mxu0 0
  %5607 = vmatpush1.bf16.msra.mxu0 %v5542
  %5608 = vmatprep.subr.bf16.mxu0 0
  %5609 = vmatpush1.bf16.msra.mxu0 %v5543
  %5610 = vmatprep.subr.bf16.mxu0 0
  %5611 = vmatpush1.bf16.msra.mxu0 %v5544
  %5612 = vmatprep.subr.bf16.mxu0 0
  %5613 = vmatpush1.bf16.msra.mxu0 %v5545
  %5614 = vmatprep.subr.bf16.mxu0 0
  %5615 = vmatpush1.bf16.msra.mxu0 %v5546
  %5616 = vmatprep.subr.bf16.mxu0 0
  %5617 = vmatpush1.bf16.msra.mxu0 %v5547
  %5618 = vmatprep.subr.bf16.mxu0 0
  %5619 = vmatpush1.bf16.msra.mxu0 %v5548
  %5620 = vmatprep.subr.bf16.mxu0 0
  %5621 = vmatpush1.bf16.msra.mxu0 %v5549
  %5622 = vmatprep.subr.bf16.mxu0 0
  %5623 = vmatpush1.bf16.msra.mxu0 %v5550
  %5624 = vmatprep.subr.bf16.mxu0 0
  %5625 = vmatpush1.bf16.msra.mxu0 %v5551
  %5626 = vmatprep.subr.bf16.mxu0 0
  %5627 = vmatpush1.bf16.msra.mxu0 %v5552
  %5628 = vmatprep.subr.bf16.mxu0 0
  %5629 = vmatpush1.bf16.msra.mxu0 %v5553
  %5630 = vmatprep.subr.bf16.mxu0 0
  %5631 = vmatpush1.bf16.msra.mxu0 %v5554
  %5632 = vmatprep.subr.bf16.mxu0 0
  %5633 = vmatpush1.bf16.msra.mxu0 %v5555
  %5634 = vmatprep.subr.bf16.mxu0 0
  %5635 = vmatpush1.bf16.msra.mxu0 %v5556
  %5636 = vmatprep.subr.bf16.mxu0 0
  %5637 = vmatpush1.bf16.msra.mxu0 %v5557
  %5638 = vmatprep.mubr.bf16.mxu0 %v3275
  %5639 = vmatmul.mubr.bf16.gmra.mrb[0].mxu0 %v3274
  %v5640 = vpop.f32.mrb[0].mxu0
  %v5641 = vadd.f32 0.0, %v5640
  %v5642 = vpop.f32.mrb[0].mxu0
  %v5643 = vpop.f32.mrb[0].mxu0
  %v5644 = vpop.f32.mrb[0].mxu0
  %5645 = vdwg.mxu0
  %5646 = vmatprep.subr.bf16.mxu0 0
  %5647 = vmatpush1.bf16.msra.mxu0 %v5558
  %5648 = vmatprep.subr.bf16.mxu0 0
  %5649 = vmatpush1.bf16.msra.mxu0 %v5559
  %5650 = vmatprep.subr.bf16.mxu0 0
  %5651 = vmatpush1.bf16.msra.mxu0 %v5560
  %5652 = vmatprep.subr.bf16.mxu0 0
  %5653 = vmatpush1.bf16.msra.mxu0 %v5561
  %5654 = vmatprep.subr.bf16.mxu0 0
  %5655 = vmatpush1.bf16.msra.mxu0 %v5562
  %5656 = vmatprep.subr.bf16.mxu0 0
  %5657 = vmatpush1.bf16.msra.mxu0 %v5563
  %5658 = vmatprep.subr.bf16.mxu0 0
  %5659 = vmatpush1.bf16.msra.mxu0 %v5564
  %5660 = vmatprep.subr.bf16.mxu0 0
  %5661 = vmatpush1.bf16.msra.mxu0 %v5565
  %5662 = vmatprep.subr.bf16.mxu0 0
  %5663 = vmatpush1.bf16.msra.mxu0 %v5566
  %5664 = vmatprep.subr.bf16.mxu0 0
  %5665 = vmatpush1.bf16.msra.mxu0 %v5567
  %5666 = vmatprep.subr.bf16.mxu0 0
  %5667 = vmatpush1.bf16.msra.mxu0 %v5568
  %5668 = vmatprep.subr.bf16.mxu0 0
  %5669 = vmatpush1.bf16.msra.mxu0 %v5569
  %5670 = vmatprep.subr.bf16.mxu0 0
  %5671 = vmatpush1.bf16.msra.mxu0 %v5570
  %5672 = vmatprep.subr.bf16.mxu0 0
  %5673 = vmatpush1.bf16.msra.mxu0 %v5571
  %5674 = vmatprep.subr.bf16.mxu0 0
  %5675 = vmatpush1.bf16.msra.mxu0 %v5572
  %5676 = vmatprep.subr.bf16.mxu0 0
  %5677 = vmatpush1.bf16.msra.mxu0 %v5573
  %5678 = vmatprep.mubr.bf16.mxu0 %v3277
  %5679 = vmatmul.mubr.bf16.gmra.mrb[0].mxu0 %v3276
  %v5680 = vpop.f32.mrb[0].mxu0
  %v5681 = vadd.f32 %v5641, %v5680
  %v5682 = vpop.f32.mrb[0].mxu0
  %v5683 = vpop.f32.mrb[0].mxu0
  %v5684 = vpop.f32.mrb[0].mxu0
  %5685 = vdwg.mxu0
  %v5686 = vadd.f32 %v5349, %v5681
  %v5687 = vld [vmem:[%s3 + $0x700] sm:$0xf]
  %v5688 = vld [vmem:[%s3 + $0x704] sm:$0xf]
  %v5689 = vld [vmem:[%s3 + $0x708] sm:$0xf]
  %v5690 = vld [vmem:[%s3 + $0x70c] sm:$0xf]
  %v5691 = vld [vmem:[%s3 + $0x710] sm:$0xf]
  %v5692 = vld [vmem:[%s3 + $0x714] sm:$0xf]
  %v5693 = vld [vmem:[%s3 + $0x718] sm:$0xf]
  %v5694 = vld [vmem:[%s3 + $0x71c] sm:$0xf]
  %v5695 = vld [vmem:[%s3 + $0x720] sm:$0xf]
  %v5696 = vld [vmem:[%s3 + $0x724] sm:$0xf]
  %v5697 = vld [vmem:[%s3 + $0x728] sm:$0xf]
  %v5698 = vld [vmem:[%s3 + $0x72c] sm:$0xf]
  %v5699 = vld [vmem:[%s3 + $0x730] sm:$0xf]
  %v5700 = vld [vmem:[%s3 + $0x734] sm:$0xf]
  %v5701 = vld [vmem:[%s3 + $0x738] sm:$0xf]
  %v5702 = vld [vmem:[%s3 + $0x73c] sm:$0xf]
  %v5703 = vld [vmem:[%s3 + $0x740] sm:$0xf]
  %v5704 = vld [vmem:[%s3 + $0x744] sm:$0xf]
  %v5705 = vld [vmem:[%s3 + $0x748] sm:$0xf]
  %v5706 = vld [vmem:[%s3 + $0x74c] sm:$0xf]
  %v5707 = vld [vmem:[%s3 + $0x750] sm:$0xf]
  %v5708 = vld [vmem:[%s3 + $0x754] sm:$0xf]
  %v5709 = vld [vmem:[%s3 + $0x758] sm:$0xf]
  %v5710 = vld [vmem:[%s3 + $0x75c] sm:$0xf]
  %v5711 = vld [vmem:[%s3 + $0x760] sm:$0xf]
  %v5712 = vld [vmem:[%s3 + $0x764] sm:$0xf]
  %v5713 = vld [vmem:[%s3 + $0x768] sm:$0xf]
  %v5714 = vld [vmem:[%s3 + $0x76c] sm:$0xf]
  %v5715 = vld [vmem:[%s3 + $0x770] sm:$0xf]
  %v5716 = vld [vmem:[%s3 + $0x774] sm:$0xf]
  %v5717 = vld [vmem:[%s3 + $0x778] sm:$0xf]
  %v5718 = vld [vmem:[%s3 + $0x77c] sm:$0xf]
  %v5719 = vld [vmem:[%s3 + $0x780] sm:$0xf]
  %v5720 = vld [vmem:[%s3 + $0x784] sm:$0xf]
  %v5721 = vld [vmem:[%s3 + $0x788] sm:$0xf]
  %v5722 = vld [vmem:[%s3 + $0x78c] sm:$0xf]
  %v5723 = vld [vmem:[%s3 + $0x790] sm:$0xf]
  %v5724 = vld [vmem:[%s3 + $0x794] sm:$0xf]
  %v5725 = vld [vmem:[%s3 + $0x798] sm:$0xf]
  %v5726 = vld [vmem:[%s3 + $0x79c] sm:$0xf]
  %v5727 = vld [vmem:[%s3 + $0x7a0] sm:$0xf]
  %v5728 = vld [vmem:[%s3 + $0x7a4] sm:$0xf]
  %v5729 = vld [vmem:[%s3 + $0x7a8] sm:$0xf]
  %v5730 = vld [vmem:[%s3 + $0x7ac] sm:$0xf]
  %v5731 = vld [vmem:[%s3 + $0x7b0] sm:$0xf]
  %v5732 = vld [vmem:[%s3 + $0x7b4] sm:$0xf]
  %v5733 = vld [vmem:[%s3 + $0x7b8] sm:$0xf]
  %v5734 = vld [vmem:[%s3 + $0x7bc] sm:$0xf]
  %v5735 = vld [vmem:[%s3 + $0x7c0] sm:$0xf]
  %v5736 = vld [vmem:[%s3 + $0x7c4] sm:$0xf]
  %v5737 = vld [vmem:[%s3 + $0x7c8] sm:$0xf]
  %v5738 = vld [vmem:[%s3 + $0x7cc] sm:$0xf]
  %v5739 = vld [vmem:[%s3 + $0x7d0] sm:$0xf]
  %v5740 = vld [vmem:[%s3 + $0x7d4] sm:$0xf]
  %v5741 = vld [vmem:[%s3 + $0x7d8] sm:$0xf]
  %v5742 = vld [vmem:[%s3 + $0x7dc] sm:$0xf]
  %v5743 = vld [vmem:[%s3 + $0x7e0] sm:$0xf]
  %v5744 = vld [vmem:[%s3 + $0x7e4] sm:$0xf]
  %v5745 = vld [vmem:[%s3 + $0x7e8] sm:$0xf]
  %v5746 = vld [vmem:[%s3 + $0x7ec] sm:$0xf]
  %v5747 = vld [vmem:[%s3 + $0x7f0] sm:$0xf]
  %v5748 = vld [vmem:[%s3 + $0x7f4] sm:$0xf]
  %v5749 = vld [vmem:[%s3 + $0x7f8] sm:$0xf]
  %v5750 = vld [vmem:[%s3 + $0x7fc] sm:$0xf]
  %v5755 = vrot.slane %v3274, 4
  %v5756 = vrot.slane %v3275, 4
  %v5757 = vrot.slane %v3276, 4
  %v5758 = vrot.slane %v3277, 4
  %v5827 = vunpack.c.l.b16 %v5687
  %v5828 = vunpack.c.l.b16 %v5688
  %v5829 = vunpack.c.l.b16 %v5689
  %v5830 = vunpack.c.l.b16 %v5690
  %v5831 = vunpack.c.l.b16 %v5691
  %v5832 = vunpack.c.l.b16 %v5692
  %v5833 = vunpack.c.l.b16 %v5693
  %v5834 = vunpack.c.l.b16 %v5694
  %v5835 = vunpack.c.l.b16 %v5695
  %v5836 = vunpack.c.l.b16 %v5696
  %v5837 = vunpack.c.l.b16 %v5697
  %v5838 = vunpack.c.l.b16 %v5698
  %v5839 = vunpack.c.l.b16 %v5699
  %v5840 = vunpack.c.l.b16 %v5700
  %v5841 = vunpack.c.l.b16 %v5701
  %v5842 = vunpack.c.l.b16 %v5702
  %v5843 = vunpack.c.l.b16 %v5703
  %v5844 = vunpack.c.l.b16 %v5704
  %v5845 = vunpack.c.l.b16 %v5705
  %v5846 = vunpack.c.l.b16 %v5706
  %v5847 = vunpack.c.l.b16 %v5707
  %v5848 = vunpack.c.l.b16 %v5708
  %v5849 = vunpack.c.l.b16 %v5709
  %v5850 = vunpack.c.l.b16 %v5710
  %v5851 = vunpack.c.l.b16 %v5711
  %v5852 = vunpack.c.l.b16 %v5712
  %v5853 = vunpack.c.l.b16 %v5713
  %v5854 = vunpack.c.l.b16 %v5714
  %v5855 = vunpack.c.l.b16 %v5715
  %v5856 = vunpack.c.l.b16 %v5716
  %v5857 = vunpack.c.l.b16 %v5717
  %v5858 = vunpack.c.l.b16 %v5718
  %v5859 = vunpack.c.l.b16 %v5719
  %v5860 = vunpack.c.l.b16 %v5720
  %v5861 = vunpack.c.l.b16 %v5721
  %v5862 = vunpack.c.l.b16 %v5722
  %v5863 = vunpack.c.l.b16 %v5723
  %v5864 = vunpack.c.l.b16 %v5724
  %v5865 = vunpack.c.l.b16 %v5725
  %v5866 = vunpack.c.l.b16 %v5726
  %v5867 = vunpack.c.l.b16 %v5727
  %v5868 = vunpack.c.l.b16 %v5728
  %v5869 = vunpack.c.l.b16 %v5729
  %v5870 = vunpack.c.l.b16 %v5730
  %v5871 = vunpack.c.l.b16 %v5731
  %v5872 = vunpack.c.l.b16 %v5732
  %v5873 = vunpack.c.l.b16 %v5733
  %v5874 = vunpack.c.l.b16 %v5734
  %v5875 = vunpack.c.l.b16 %v5735
  %v5876 = vunpack.c.l.b16 %v5736
  %v5877 = vunpack.c.l.b16 %v5737
  %v5878 = vunpack.c.l.b16 %v5738
  %v5879 = vunpack.c.l.b16 %v5739
  %v5880 = vunpack.c.l.b16 %v5740
  %v5881 = vunpack.c.l.b16 %v5741
  %v5882 = vunpack.c.l.b16 %v5742
  %v5883 = vunpack.c.l.b16 %v5743
  %v5884 = vunpack.c.l.b16 %v5744
  %v5885 = vunpack.c.l.b16 %v5745
  %v5886 = vunpack.c.l.b16 %v5746
  %v5887 = vunpack.c.l.b16 %v5747
  %v5888 = vunpack.c.l.b16 %v5748
  %v5889 = vunpack.c.l.b16 %v5749
  %v5890 = vunpack.c.l.b16 %v5750
  %v5891 = vpack.c.b16 %v5828, %v5827
  %v5892 = vpack.c.b16 %v5830, %v5829
  %v5893 = vpack.c.b16 %v5832, %v5831
  %v5894 = vpack.c.b16 %v5834, %v5833
  %v5895 = vpack.c.b16 %v5836, %v5835
  %v5896 = vpack.c.b16 %v5838, %v5837
  %v5897 = vpack.c.b16 %v5840, %v5839
  %v5898 = vpack.c.b16 %v5842, %v5841
  %v5899 = vpack.c.b16 %v5844, %v5843
  %v5900 = vpack.c.b16 %v5846, %v5845
  %v5901 = vpack.c.b16 %v5848, %v5847
  %v5902 = vpack.c.b16 %v5850, %v5849
  %v5903 = vpack.c.b16 %v5852, %v5851
  %v5904 = vpack.c.b16 %v5854, %v5853
  %v5905 = vpack.c.b16 %v5856, %v5855
  %v5906 = vpack.c.b16 %v5858, %v5857
  %v5907 = vpack.c.b16 %v5860, %v5859
  %v5908 = vpack.c.b16 %v5862, %v5861
  %v5909 = vpack.c.b16 %v5864, %v5863
  %v5910 = vpack.c.b16 %v5866, %v5865
  %v5911 = vpack.c.b16 %v5868, %v5867
  %v5912 = vpack.c.b16 %v5870, %v5869
  %v5913 = vpack.c.b16 %v5872, %v5871
  %v5914 = vpack.c.b16 %v5874, %v5873
  %v5915 = vpack.c.b16 %v5876, %v5875
  %v5916 = vpack.c.b16 %v5878, %v5877
  %v5917 = vpack.c.b16 %v5880, %v5879
  %v5918 = vpack.c.b16 %v5882, %v5881
  %v5919 = vpack.c.b16 %v5884, %v5883
  %v5920 = vpack.c.b16 %v5886, %v5885
  %v5921 = vpack.c.b16 %v5888, %v5887
  %v5922 = vpack.c.b16 %v5890, %v5889
  %5955 = vmatprep.subr.bf16.mxu0 0
  %5956 = vmatpush1.bf16.msra.mxu0 %v5891
  %5957 = vmatprep.subr.bf16.mxu0 0
  %5958 = vmatpush1.bf16.msra.mxu0 %v5892
  %5959 = vmatprep.subr.bf16.mxu0 0
  %5960 = vmatpush1.bf16.msra.mxu0 %v5893
  %5961 = vmatprep.subr.bf16.mxu0 0
  %5962 = vmatpush1.bf16.msra.mxu0 %v5894
  %5963 = vmatprep.subr.bf16.mxu0 0
  %5964 = vmatpush1.bf16.msra.mxu0 %v5895
  %5965 = vmatprep.subr.bf16.mxu0 0
  %5966 = vmatpush1.bf16.msra.mxu0 %v5896
  %5967 = vmatprep.subr.bf16.mxu0 0
  %5968 = vmatpush1.bf16.msra.mxu0 %v5897
  %5969 = vmatprep.subr.bf16.mxu0 0
  %5970 = vmatpush1.bf16.msra.mxu0 %v5898
  %5971 = vmatprep.subr.bf16.mxu0 0
  %5972 = vmatpush1.bf16.msra.mxu0 %v5899
  %5973 = vmatprep.subr.bf16.mxu0 0
  %5974 = vmatpush1.bf16.msra.mxu0 %v5900
  %5975 = vmatprep.subr.bf16.mxu0 0
  %5976 = vmatpush1.bf16.msra.mxu0 %v5901
  %5977 = vmatprep.subr.bf16.mxu0 0
  %5978 = vmatpush1.bf16.msra.mxu0 %v5902
  %5979 = vmatprep.subr.bf16.mxu0 0
  %5980 = vmatpush1.bf16.msra.mxu0 %v5903
  %5981 = vmatprep.subr.bf16.mxu0 0
  %5982 = vmatpush1.bf16.msra.mxu0 %v5904
  %5983 = vmatprep.subr.bf16.mxu0 0
  %5984 = vmatpush1.bf16.msra.mxu0 %v5905
  %5985 = vmatprep.subr.bf16.mxu0 0
  %5986 = vmatpush1.bf16.msra.mxu0 %v5906
  %5987 = vmatprep.mubr.bf16.mxu0 %v5756
  %5988 = vmatmul.mubr.bf16.gmra.mrb[0].mxu0 %v5755
  %v5989 = vpop.f32.mrb[0].mxu0
  %v5990 = vadd.f32 0.0, %v5989
  %v5991 = vpop.f32.mrb[0].mxu0
  %v5992 = vpop.f32.mrb[0].mxu0
  %v5993 = vpop.f32.mrb[0].mxu0
  %5994 = vdwg.mxu0
  %5995 = vmatprep.subr.bf16.mxu0 0
  %5996 = vmatpush1.bf16.msra.mxu0 %v5907
  %5997 = vmatprep.subr.bf16.mxu0 0
  %5998 = vmatpush1.bf16.msra.mxu0 %v5908
  %5999 = vmatprep.subr.bf16.mxu0 0
  %6000 = vmatpush1.bf16.msra.mxu0 %v5909
  %6001 = vmatprep.subr.bf16.mxu0 0
  %6002 = vmatpush1.bf16.msra.mxu0 %v5910
  %6003 = vmatprep.subr.bf16.mxu0 0
  %6004 = vmatpush1.bf16.msra.mxu0 %v5911
  %6005 = vmatprep.subr.bf16.mxu0 0
  %6006 = vmatpush1.bf16.msra.mxu0 %v5912
  %6007 = vmatprep.subr.bf16.mxu0 0
  %6008 = vmatpush1.bf16.msra.mxu0 %v5913
  %6009 = vmatprep.subr.bf16.mxu0 0
  %6010 = vmatpush1.bf16.msra.mxu0 %v5914
  %6011 = vmatprep.subr.bf16.mxu0 0
  %6012 = vmatpush1.bf16.msra.mxu0 %v5915
  %6013 = vmatprep.subr.bf16.mxu0 0
  %6014 = vmatpush1.bf16.msra.mxu0 %v5916
  %6015 = vmatprep.subr.bf16.mxu0 0
  %6016 = vmatpush1.bf16.msra.mxu0 %v5917
  %6017 = vmatprep.subr.bf16.mxu0 0
  %6018 = vmatpush1.bf16.msra.mxu0 %v5918
  %6019 = vmatprep.subr.bf16.mxu0 0
  %6020 = vmatpush1.bf16.msra.mxu0 %v5919
  %6021 = vmatprep.subr.bf16.mxu0 0
  %6022 = vmatpush1.bf16.msra.mxu0 %v5920
  %6023 = vmatprep.subr.bf16.mxu0 0
  %6024 = vmatpush1.bf16.msra.mxu0 %v5921
  %6025 = vmatprep.subr.bf16.mxu0 0
  %6026 = vmatpush1.bf16.msra.mxu0 %v5922
  %6027 = vmatprep.mubr.bf16.mxu0 %v5758
  %6028 = vmatmul.mubr.bf16.gmra.mrb[0].mxu0 %v5757
  %v6029 = vpop.f32.mrb[0].mxu0
  %v6030 = vadd.f32 %v5990, %v6029
  %v6031 = vpop.f32.mrb[0].mxu0
  %v6032 = vpop.f32.mrb[0].mxu0
  %v6033 = vpop.f32.mrb[0].mxu0
  %6034 = vdwg.mxu0
  %v6035 = vadd.f32 %v5686, %v6030
  %v6036 = vld [vmem:[%s3 + $0x800] sm:$0xf]
  %v6037 = vld [vmem:[%s3 + $0x804] sm:$0xf]
  %v6038 = vld [vmem:[%s3 + $0x808] sm:$0xf]
  %v6039 = vld [vmem:[%s3 + $0x80c] sm:$0xf]
  %v6040 = vld [vmem:[%s3 + $0x810] sm:$0xf]
  %v6041 = vld [vmem:[%s3 + $0x814] sm:$0xf]
  %v6042 = vld [vmem:[%s3 + $0x818] sm:$0xf]
  %v6043 = vld [vmem:[%s3 + $0x81c] sm:$0xf]
  %v6044 = vld [vmem:[%s3 + $0x820] sm:$0xf]
  %v6045 = vld [vmem:[%s3 + $0x824] sm:$0xf]
  %v6046 = vld [vmem:[%s3 + $0x828] sm:$0xf]
  %v6047 = vld [vmem:[%s3 + $0x82c] sm:$0xf]
  %v6048 = vld [vmem:[%s3 + $0x830] sm:$0xf]
  %v6049 = vld [vmem:[%s3 + $0x834] sm:$0xf]
  %v6050 = vld [vmem:[%s3 + $0x838] sm:$0xf]
  %v6051 = vld [vmem:[%s3 + $0x83c] sm:$0xf]
  %v6052 = vld [vmem:[%s3 + $0x840] sm:$0xf]
  %v6053 = vld [vmem:[%s3 + $0x844] sm:$0xf]
  %v6054 = vld [vmem:[%s3 + $0x848] sm:$0xf]
  %v6055 = vld [vmem:[%s3 + $0x84c] sm:$0xf]
  %v6056 = vld [vmem:[%s3 + $0x850] sm:$0xf]
  %v6057 = vld [vmem:[%s3 + $0x854] sm:$0xf]
  %v6058 = vld [vmem:[%s3 + $0x858] sm:$0xf]
  %v6059 = vld [vmem:[%s3 + $0x85c] sm:$0xf]
  %v6060 = vld [vmem:[%s3 + $0x860] sm:$0xf]
  %v6061 = vld [vmem:[%s3 + $0x864] sm:$0xf]
  %v6062 = vld [vmem:[%s3 + $0x868] sm:$0xf]
  %v6063 = vld [vmem:[%s3 + $0x86c] sm:$0xf]
  %v6064 = vld [vmem:[%s3 + $0x870] sm:$0xf]
  %v6065 = vld [vmem:[%s3 + $0x874] sm:$0xf]
  %v6066 = vld [vmem:[%s3 + $0x878] sm:$0xf]
  %v6067 = vld [vmem:[%s3 + $0x87c] sm:$0xf]
  %v6068 = vld [vmem:[%s3 + $0x880] sm:$0xf]
  %v6069 = vld [vmem:[%s3 + $0x884] sm:$0xf]
  %v6070 = vld [vmem:[%s3 + $0x888] sm:$0xf]
  %v6071 = vld [vmem:[%s3 + $0x88c] sm:$0xf]
  %v6072 = vld [vmem:[%s3 + $0x890] sm:$0xf]
  %v6073 = vld [vmem:[%s3 + $0x894] sm:$0xf]
  %v6074 = vld [vmem:[%s3 + $0x898] sm:$0xf]
  %v6075 = vld [vmem:[%s3 + $0x89c] sm:$0xf]
  %v6076 = vld [vmem:[%s3 + $0x8a0] sm:$0xf]
  %v6077 = vld [vmem:[%s3 + $0x8a4] sm:$0xf]
  %v6078 = vld [vmem:[%s3 + $0x8a8] sm:$0xf]
  %v6079 = vld [vmem:[%s3 + $0x8ac] sm:$0xf]
  %v6080 = vld [vmem:[%s3 + $0x8b0] sm:$0xf]
  %v6081 = vld [vmem:[%s3 + $0x8b4] sm:$0xf]
  %v6082 = vld [vmem:[%s3 + $0x8b8] sm:$0xf]
  %v6083 = vld [vmem:[%s3 + $0x8bc] sm:$0xf]
  %v6084 = vld [vmem:[%s3 + $0x8c0] sm:$0xf]
  %v6085 = vld [vmem:[%s3 + $0x8c4] sm:$0xf]
  %v6086 = vld [vmem:[%s3 + $0x8c8] sm:$0xf]
  %v6087 = vld [vmem:[%s3 + $0x8cc] sm:$0xf]
  %v6088 = vld [vmem:[%s3 + $0x8d0] sm:$0xf]
  %v6089 = vld [vmem:[%s3 + $0x8d4] sm:$0xf]
  %v6090 = vld [vmem:[%s3 + $0x8d8] sm:$0xf]
  %v6091 = vld [vmem:[%s3 + $0x8dc] sm:$0xf]
  %v6092 = vld [vmem:[%s3 + $0x8e0] sm:$0xf]
  %v6093 = vld [vmem:[%s3 + $0x8e4] sm:$0xf]
  %v6094 = vld [vmem:[%s3 + $0x8e8] sm:$0xf]
  %v6095 = vld [vmem:[%s3 + $0x8ec] sm:$0xf]
  %v6096 = vld [vmem:[%s3 + $0x8f0] sm:$0xf]
  %v6097 = vld [vmem:[%s3 + $0x8f4] sm:$0xf]
  %v6098 = vld [vmem:[%s3 + $0x8f8] sm:$0xf]
  %v6099 = vld [vmem:[%s3 + $0x8fc] sm:$0xf]
  %v6164 = vunpack.c.l.b16 %v6036
  %v6165 = vunpack.c.l.b16 %v6037
  %v6166 = vunpack.c.l.b16 %v6038
  %v6167 = vunpack.c.l.b16 %v6039
  %v6168 = vunpack.c.l.b16 %v6040
  %v6169 = vunpack.c.l.b16 %v6041
  %v6170 = vunpack.c.l.b16 %v6042
  %v6171 = vunpack.c.l.b16 %v6043
  %v6172 = vunpack.c.l.b16 %v6044
  %v6173 = vunpack.c.l.b16 %v6045
  %v6174 = vunpack.c.l.b16 %v6046
  %v6175 = vunpack.c.l.b16 %v6047
  %v6176 = vunpack.c.l.b16 %v6048
  %v6177 = vunpack.c.l.b16 %v6049
  %v6178 = vunpack.c.l.b16 %v6050
  %v6179 = vunpack.c.l.b16 %v6051
  %v6180 = vunpack.c.l.b16 %v6052
  %v6181 = vunpack.c.l.b16 %v6053
  %v6182 = vunpack.c.l.b16 %v6054
  %v6183 = vunpack.c.l.b16 %v6055
  %v6184 = vunpack.c.l.b16 %v6056
  %v6185 = vunpack.c.l.b16 %v6057
  %v6186 = vunpack.c.l.b16 %v6058
  %v6187 = vunpack.c.l.b16 %v6059
  %v6188 = vunpack.c.l.b16 %v6060
  %v6189 = vunpack.c.l.b16 %v6061
  %v6190 = vunpack.c.l.b16 %v6062
  %v6191 = vunpack.c.l.b16 %v6063
  %v6192 = vunpack.c.l.b16 %v6064
  %v6193 = vunpack.c.l.b16 %v6065
  %v6194 = vunpack.c.l.b16 %v6066
  %v6195 = vunpack.c.l.b16 %v6067
  %v6196 = vunpack.c.l.b16 %v6068
  %v6197 = vunpack.c.l.b16 %v6069
  %v6198 = vunpack.c.l.b16 %v6070
  %v6199 = vunpack.c.l.b16 %v6071
  %v6200 = vunpack.c.l.b16 %v6072
  %v6201 = vunpack.c.l.b16 %v6073
  %v6202 = vunpack.c.l.b16 %v6074
  %v6203 = vunpack.c.l.b16 %v6075
  %v6204 = vunpack.c.l.b16 %v6076
  %v6205 = vunpack.c.l.b16 %v6077
  %v6206 = vunpack.c.l.b16 %v6078
  %v6207 = vunpack.c.l.b16 %v6079
  %v6208 = vunpack.c.l.b16 %v6080
  %v6209 = vunpack.c.l.b16 %v6081
  %v6210 = vunpack.c.l.b16 %v6082
  %v6211 = vunpack.c.l.b16 %v6083
  %v6212 = vunpack.c.l.b16 %v6084
  %v6213 = vunpack.c.l.b16 %v6085
  %v6214 = vunpack.c.l.b16 %v6086
  %v6215 = vunpack.c.l.b16 %v6087
  %v6216 = vunpack.c.l.b16 %v6088
  %v6217 = vunpack.c.l.b16 %v6089
  %v6218 = vunpack.c.l.b16 %v6090
  %v6219 = vunpack.c.l.b16 %v6091
  %v6220 = vunpack.c.l.b16 %v6092
  %v6221 = vunpack.c.l.b16 %v6093
  %v6222 = vunpack.c.l.b16 %v6094
  %v6223 = vunpack.c.l.b16 %v6095
  %v6224 = vunpack.c.l.b16 %v6096
  %v6225 = vunpack.c.l.b16 %v6097
  %v6226 = vunpack.c.l.b16 %v6098
  %v6227 = vunpack.c.l.b16 %v6099
  %v6228 = vpack.c.b16 %v6165, %v6164
  %v6229 = vpack.c.b16 %v6167, %v6166
  %v6230 = vpack.c.b16 %v6169, %v6168
  %v6231 = vpack.c.b16 %v6171, %v6170
  %v6232 = vpack.c.b16 %v6173, %v6172
  %v6233 = vpack.c.b16 %v6175, %v6174
  %v6234 = vpack.c.b16 %v6177, %v6176
  %v6235 = vpack.c.b16 %v6179, %v6178
  %v6236 = vpack.c.b16 %v6181, %v6180
  %v6237 = vpack.c.b16 %v6183, %v6182
  %v6238 = vpack.c.b16 %v6185, %v6184
  %v6239 = vpack.c.b16 %v6187, %v6186
  %v6240 = vpack.c.b16 %v6189, %v6188
  %v6241 = vpack.c.b16 %v6191, %v6190
  %v6242 = vpack.c.b16 %v6193, %v6192
  %v6243 = vpack.c.b16 %v6195, %v6194
  %v6244 = vpack.c.b16 %v6197, %v6196
  %v6245 = vpack.c.b16 %v6199, %v6198
  %v6246 = vpack.c.b16 %v6201, %v6200
  %v6247 = vpack.c.b16 %v6203, %v6202
  %v6248 = vpack.c.b16 %v6205, %v6204
  %v6249 = vpack.c.b16 %v6207, %v6206
  %v6250 = vpack.c.b16 %v6209, %v6208
  %v6251 = vpack.c.b16 %v6211, %v6210
  %v6252 = vpack.c.b16 %v6213, %v6212
  %v6253 = vpack.c.b16 %v6215, %v6214
  %v6254 = vpack.c.b16 %v6217, %v6216
  %v6255 = vpack.c.b16 %v6219, %v6218
  %v6256 = vpack.c.b16 %v6221, %v6220
  %v6257 = vpack.c.b16 %v6223, %v6222
  %v6258 = vpack.c.b16 %v6225, %v6224
  %v6259 = vpack.c.b16 %v6227, %v6226
  %6292 = vmatprep.subr.bf16.mxu0 0
  %6293 = vmatpush1.bf16.msra.mxu0 %v6228
  %6294 = vmatprep.subr.bf16.mxu0 0
  %6295 = vmatpush1.bf16.msra.mxu0 %v6229
  %6296 = vmatprep.subr.bf16.mxu0 0
  %6297 = vmatpush1.bf16.msra.mxu0 %v6230
  %6298 = vmatprep.subr.bf16.mxu0 0
  %6299 = vmatpush1.bf16.msra.mxu0 %v6231
  %6300 = vmatprep.subr.bf16.mxu0 0
  %6301 = vmatpush1.bf16.msra.mxu0 %v6232
  %6302 = vmatprep.subr.bf16.mxu0 0
  %6303 = vmatpush1.bf16.msra.mxu0 %v6233
  %6304 = vmatprep.subr.bf16.mxu0 0
  %6305 = vmatpush1.bf16.msra.mxu0 %v6234
  %6306 = vmatprep.subr.bf16.mxu0 0
  %6307 = vmatpush1.bf16.msra.mxu0 %v6235
  %6308 = vmatprep.subr.bf16.mxu0 0
  %6309 = vmatpush1.bf16.msra.mxu0 %v6236
  %6310 = vmatprep.subr.bf16.mxu0 0
  %6311 = vmatpush1.bf16.msra.mxu0 %v6237
  %6312 = vmatprep.subr.bf16.mxu0 0
  %6313 = vmatpush1.bf16.msra.mxu0 %v6238
  %6314 = vmatprep.subr.bf16.mxu0 0
  %6315 = vmatpush1.bf16.msra.mxu0 %v6239
  %6316 = vmatprep.subr.bf16.mxu0 0
  %6317 = vmatpush1.bf16.msra.mxu0 %v6240
  %6318 = vmatprep.subr.bf16.mxu0 0
  %6319 = vmatpush1.bf16.msra.mxu0 %v6241
  %6320 = vmatprep.subr.bf16.mxu0 0
  %6321 = vmatpush1.bf16.msra.mxu0 %v6242
  %6322 = vmatprep.subr.bf16.mxu0 0
  %6323 = vmatpush1.bf16.msra.mxu0 %v6243
  %6324 = vmatprep.mubr.bf16.mxu0 %v3279
  %6325 = vmatmul.mubr.bf16.gmra.mrb[0].mxu0 %v3278
  %v6326 = vpop.f32.mrb[0].mxu0
  %v6327 = vadd.f32 0.0, %v6326
  %v6328 = vpop.f32.mrb[0].mxu0
  %v6329 = vpop.f32.mrb[0].mxu0
  %v6330 = vpop.f32.mrb[0].mxu0
  %6331 = vdwg.mxu0
  %6332 = vmatprep.subr.bf16.mxu0 0
  %6333 = vmatpush1.bf16.msra.mxu0 %v6244
  %6334 = vmatprep.subr.bf16.mxu0 0
  %6335 = vmatpush1.bf16.msra.mxu0 %v6245
  %6336 = vmatprep.subr.bf16.mxu0 0
  %6337 = vmatpush1.bf16.msra.mxu0 %v6246
  %6338 = vmatprep.subr.bf16.mxu0 0
  %6339 = vmatpush1.bf16.msra.mxu0 %v6247
  %6340 = vmatprep.subr.bf16.mxu0 0
  %6341 = vmatpush1.bf16.msra.mxu0 %v6248
  %6342 = vmatprep.subr.bf16.mxu0 0
  %6343 = vmatpush1.bf16.msra.mxu0 %v6249
  %6344 = vmatprep.subr.bf16.mxu0 0
  %6345 = vmatpush1.bf16.msra.mxu0 %v6250
  %6346 = vmatprep.subr.bf16.mxu0 0
  %6347 = vmatpush1.bf16.msra.mxu0 %v6251
  %6348 = vmatprep.subr.bf16.mxu0 0
  %6349 = vmatpush1.bf16.msra.mxu0 %v6252
  %6350 = vmatprep.subr.bf16.mxu0 0
  %6351 = vmatpush1.bf16.msra.mxu0 %v6253
  %6352 = vmatprep.subr.bf16.mxu0 0
  %6353 = vmatpush1.bf16.msra.mxu0 %v6254
  %6354 = vmatprep.subr.bf16.mxu0 0
  %6355 = vmatpush1.bf16.msra.mxu0 %v6255
  %6356 = vmatprep.subr.bf16.mxu0 0
  %6357 = vmatpush1.bf16.msra.mxu0 %v6256
  %6358 = vmatprep.subr.bf16.mxu0 0
  %6359 = vmatpush1.bf16.msra.mxu0 %v6257
  %6360 = vmatprep.subr.bf16.mxu0 0
  %6361 = vmatpush1.bf16.msra.mxu0 %v6258
  %6362 = vmatprep.subr.bf16.mxu0 0
  %6363 = vmatpush1.bf16.msra.mxu0 %v6259
  %6364 = vmatprep.mubr.bf16.mxu0 %v3281
  %6365 = vmatmul.mubr.bf16.gmra.mrb[0].mxu0 %v3280
  %v6366 = vpop.f32.mrb[0].mxu0
  %v6367 = vadd.f32 %v6327, %v6366
  %v6368 = vpop.f32.mrb[0].mxu0
  %v6369 = vpop.f32.mrb[0].mxu0
  %v6370 = vpop.f32.mrb[0].mxu0
  %6371 = vdwg.mxu0
  %v6372 = vadd.f32 %v6035, %v6367
  %v6373 = vld [vmem:[%s3 + $0x900] sm:$0xf]
  %v6374 = vld [vmem:[%s3 + $0x904] sm:$0xf]
  %v6375 = vld [vmem:[%s3 + $0x908] sm:$0xf]
  %v6376 = vld [vmem:[%s3 + $0x90c] sm:$0xf]
  %v6377 = vld [vmem:[%s3 + $0x910] sm:$0xf]
  %v6378 = vld [vmem:[%s3 + $0x914] sm:$0xf]
  %v6379 = vld [vmem:[%s3 + $0x918] sm:$0xf]
  %v6380 = vld [vmem:[%s3 + $0x91c] sm:$0xf]
  %v6381 = vld [vmem:[%s3 + $0x920] sm:$0xf]
  %v6382 = vld [vmem:[%s3 + $0x924] sm:$0xf]
  %v6383 = vld [vmem:[%s3 + $0x928] sm:$0xf]
  %v6384 = vld [vmem:[%s3 + $0x92c] sm:$0xf]
  %v6385 = vld [vmem:[%s3 + $0x930] sm:$0xf]
  %v6386 = vld [vmem:[%s3 + $0x934] sm:$0xf]
  %v6387 = vld [vmem:[%s3 + $0x938] sm:$0xf]
  %v6388 = vld [vmem:[%s3 + $0x93c] sm:$0xf]
  %v6389 = vld [vmem:[%s3 + $0x940] sm:$0xf]
  %v6390 = vld [vmem:[%s3 + $0x944] sm:$0xf]
  %v6391 = vld [vmem:[%s3 + $0x948] sm:$0xf]
  %v6392 = vld [vmem:[%s3 + $0x94c] sm:$0xf]
  %v6393 = vld [vmem:[%s3 + $0x950] sm:$0xf]
  %v6394 = vld [vmem:[%s3 + $0x954] sm:$0xf]
  %v6395 = vld [vmem:[%s3 + $0x958] sm:$0xf]
  %v6396 = vld [vmem:[%s3 + $0x95c] sm:$0xf]
  %v6397 = vld [vmem:[%s3 + $0x960] sm:$0xf]
  %v6398 = vld [vmem:[%s3 + $0x964] sm:$0xf]
  %v6399 = vld [vmem:[%s3 + $0x968] sm:$0xf]
  %v6400 = vld [vmem:[%s3 + $0x96c] sm:$0xf]
  %v6401 = vld [vmem:[%s3 + $0x970] sm:$0xf]
  %v6402 = vld [vmem:[%s3 + $0x974] sm:$0xf]
  %v6403 = vld [vmem:[%s3 + $0x978] sm:$0xf]
  %v6404 = vld [vmem:[%s3 + $0x97c] sm:$0xf]
  %v6405 = vld [vmem:[%s3 + $0x980] sm:$0xf]
  %v6406 = vld [vmem:[%s3 + $0x984] sm:$0xf]
  %v6407 = vld [vmem:[%s3 + $0x988] sm:$0xf]
  %v6408 = vld [vmem:[%s3 + $0x98c] sm:$0xf]
  %v6409 = vld [vmem:[%s3 + $0x990] sm:$0xf]
  %v6410 = vld [vmem:[%s3 + $0x994] sm:$0xf]
  %v6411 = vld [vmem:[%s3 + $0x998] sm:$0xf]
  %v6412 = vld [vmem:[%s3 + $0x99c] sm:$0xf]
  %v6413 = vld [vmem:[%s3 + $0x9a0] sm:$0xf]
  %v6414 = vld [vmem:[%s3 + $0x9a4] sm:$0xf]
  %v6415 = vld [vmem:[%s3 + $0x9a8] sm:$0xf]
  %v6416 = vld [vmem:[%s3 + $0x9ac] sm:$0xf]
  %v6417 = vld [vmem:[%s3 + $0x9b0] sm:$0xf]
  %v6418 = vld [vmem:[%s3 + $0x9b4] sm:$0xf]
  %v6419 = vld [vmem:[%s3 + $0x9b8] sm:$0xf]
  %v6420 = vld [vmem:[%s3 + $0x9bc] sm:$0xf]
  %v6421 = vld [vmem:[%s3 + $0x9c0] sm:$0xf]
  %v6422 = vld [vmem:[%s3 + $0x9c4] sm:$0xf]
  %v6423 = vld [vmem:[%s3 + $0x9c8] sm:$0xf]
  %v6424 = vld [vmem:[%s3 + $0x9cc] sm:$0xf]
  %v6425 = vld [vmem:[%s3 + $0x9d0] sm:$0xf]
  %v6426 = vld [vmem:[%s3 + $0x9d4] sm:$0xf]
  %v6427 = vld [vmem:[%s3 + $0x9d8] sm:$0xf]
  %v6428 = vld [vmem:[%s3 + $0x9dc] sm:$0xf]
  %v6429 = vld [vmem:[%s3 + $0x9e0] sm:$0xf]
  %v6430 = vld [vmem:[%s3 + $0x9e4] sm:$0xf]
  %v6431 = vld [vmem:[%s3 + $0x9e8] sm:$0xf]
  %v6432 = vld [vmem:[%s3 + $0x9ec] sm:$0xf]
  %v6433 = vld [vmem:[%s3 + $0x9f0] sm:$0xf]
  %v6434 = vld [vmem:[%s3 + $0x9f4] sm:$0xf]
  %v6435 = vld [vmem:[%s3 + $0x9f8] sm:$0xf]
  %v6436 = vld [vmem:[%s3 + $0x9fc] sm:$0xf]
  %v6441 = vrot.slane %v3278, 4
  %v6442 = vrot.slane %v3279, 4
  %v6443 = vrot.slane %v3280, 4
  %v6444 = vrot.slane %v3281, 4
  %v6513 = vunpack.c.l.b16 %v6373
  %v6514 = vunpack.c.l.b16 %v6374
  %v6515 = vunpack.c.l.b16 %v6375
  %v6516 = vunpack.c.l.b16 %v6376
  %v6517 = vunpack.c.l.b16 %v6377
  %v6518 = vunpack.c.l.b16 %v6378
  %v6519 = vunpack.c.l.b16 %v6379
  %v6520 = vunpack.c.l.b16 %v6380
  %v6521 = vunpack.c.l.b16 %v6381
  %v6522 = vunpack.c.l.b16 %v6382
  %v6523 = vunpack.c.l.b16 %v6383
  %v6524 = vunpack.c.l.b16 %v6384
  %v6525 = vunpack.c.l.b16 %v6385
  %v6526 = vunpack.c.l.b16 %v6386
  %v6527 = vunpack.c.l.b16 %v6387
  %v6528 = vunpack.c.l.b16 %v6388
  %v6529 = vunpack.c.l.b16 %v6389
  %v6530 = vunpack.c.l.b16 %v6390
  %v6531 = vunpack.c.l.b16 %v6391
  %v6532 = vunpack.c.l.b16 %v6392
  %v6533 = vunpack.c.l.b16 %v6393
  %v6534 = vunpack.c.l.b16 %v6394
  %v6535 = vunpack.c.l.b16 %v6395
  %v6536 = vunpack.c.l.b16 %v6396
  %v6537 = vunpack.c.l.b16 %v6397
  %v6538 = vunpack.c.l.b16 %v6398
  %v6539 = vunpack.c.l.b16 %v6399
  %v6540 = vunpack.c.l.b16 %v6400
  %v6541 = vunpack.c.l.b16 %v6401
  %v6542 = vunpack.c.l.b16 %v6402
  %v6543 = vunpack.c.l.b16 %v6403
  %v6544 = vunpack.c.l.b16 %v6404
  %v6545 = vunpack.c.l.b16 %v6405
  %v6546 = vunpack.c.l.b16 %v6406
  %v6547 = vunpack.c.l.b16 %v6407
  %v6548 = vunpack.c.l.b16 %v6408
  %v6549 = vunpack.c.l.b16 %v6409
  %v6550 = vunpack.c.l.b16 %v6410
  %v6551 = vunpack.c.l.b16 %v6411
  %v6552 = vunpack.c.l.b16 %v6412
  %v6553 = vunpack.c.l.b16 %v6413
  %v6554 = vunpack.c.l.b16 %v6414
  %v6555 = vunpack.c.l.b16 %v6415
  %v6556 = vunpack.c.l.b16 %v6416
  %v6557 = vunpack.c.l.b16 %v6417
  %v6558 = vunpack.c.l.b16 %v6418
  %v6559 = vunpack.c.l.b16 %v6419
  %v6560 = vunpack.c.l.b16 %v6420
  %v6561 = vunpack.c.l.b16 %v6421
  %v6562 = vunpack.c.l.b16 %v6422
  %v6563 = vunpack.c.l.b16 %v6423
  %v6564 = vunpack.c.l.b16 %v6424
  %v6565 = vunpack.c.l.b16 %v6425
  %v6566 = vunpack.c.l.b16 %v6426
  %v6567 = vunpack.c.l.b16 %v6427
  %v6568 = vunpack.c.l.b16 %v6428
  %v6569 = vunpack.c.l.b16 %v6429
  %v6570 = vunpack.c.l.b16 %v6430
  %v6571 = vunpack.c.l.b16 %v6431
  %v6572 = vunpack.c.l.b16 %v6432
  %v6573 = vunpack.c.l.b16 %v6433
  %v6574 = vunpack.c.l.b16 %v6434
  %v6575 = vunpack.c.l.b16 %v6435
  %v6576 = vunpack.c.l.b16 %v6436
  %v6577 = vpack.c.b16 %v6514, %v6513
  %v6578 = vpack.c.b16 %v6516, %v6515
  %v6579 = vpack.c.b16 %v6518, %v6517
  %v6580 = vpack.c.b16 %v6520, %v6519
  %v6581 = vpack.c.b16 %v6522, %v6521
  %v6582 = vpack.c.b16 %v6524, %v6523
  %v6583 = vpack.c.b16 %v6526, %v6525
  %v6584 = vpack.c.b16 %v6528, %v6527
  %v6585 = vpack.c.b16 %v6530, %v6529
  %v6586 = vpack.c.b16 %v6532, %v6531
  %v6587 = vpack.c.b16 %v6534, %v6533
  %v6588 = vpack.c.b16 %v6536, %v6535
  %v6589 = vpack.c.b16 %v6538, %v6537
  %v6590 = vpack.c.b16 %v6540, %v6539
  %v6591 = vpack.c.b16 %v6542, %v6541
  %v6592 = vpack.c.b16 %v6544, %v6543
  %v6593 = vpack.c.b16 %v6546, %v6545
  %v6594 = vpack.c.b16 %v6548, %v6547
  %v6595 = vpack.c.b16 %v6550, %v6549
  %v6596 = vpack.c.b16 %v6552, %v6551
  %v6597 = vpack.c.b16 %v6554, %v6553
  %v6598 = vpack.c.b16 %v6556, %v6555
  %v6599 = vpack.c.b16 %v6558, %v6557
  %v6600 = vpack.c.b16 %v6560, %v6559
  %v6601 = vpack.c.b16 %v6562, %v6561
  %v6602 = vpack.c.b16 %v6564, %v6563
  %v6603 = vpack.c.b16 %v6566, %v6565
  %v6604 = vpack.c.b16 %v6568, %v6567
  %v6605 = vpack.c.b16 %v6570, %v6569
  %v6606 = vpack.c.b16 %v6572, %v6571
  %v6607 = vpack.c.b16 %v6574, %v6573
  %v6608 = vpack.c.b16 %v6576, %v6575
  %6641 = vmatprep.subr.bf16.mxu0 0
  %6642 = vmatpush1.bf16.msra.mxu0 %v6577
  %6643 = vmatprep.subr.bf16.mxu0 0
  %6644 = vmatpush1.bf16.msra.mxu0 %v6578
  %6645 = vmatprep.subr.bf16.mxu0 0
  %6646 = vmatpush1.bf16.msra.mxu0 %v6579
  %6647 = vmatprep.subr.bf16.mxu0 0
  %6648 = vmatpush1.bf16.msra.mxu0 %v6580
  %6649 = vmatprep.subr.bf16.mxu0 0
  %6650 = vmatpush1.bf16.msra.mxu0 %v6581
  %6651 = vmatprep.subr.bf16.mxu0 0
  %6652 = vmatpush1.bf16.msra.mxu0 %v6582
  %6653 = vmatprep.subr.bf16.mxu0 0
  %6654 = vmatpush1.bf16.msra.mxu0 %v6583
  %6655 = vmatprep.subr.bf16.mxu0 0
  %6656 = vmatpush1.bf16.msra.mxu0 %v6584
  %6657 = vmatprep.subr.bf16.mxu0 0
  %6658 = vmatpush1.bf16.msra.mxu0 %v6585
  %6659 = vmatprep.subr.bf16.mxu0 0
  %6660 = vmatpush1.bf16.msra.mxu0 %v6586
  %6661 = vmatprep.subr.bf16.mxu0 0
  %6662 = vmatpush1.bf16.msra.mxu0 %v6587
  %6663 = vmatprep.subr.bf16.mxu0 0
  %6664 = vmatpush1.bf16.msra.mxu0 %v6588
  %6665 = vmatprep.subr.bf16.mxu0 0
  %6666 = vmatpush1.bf16.msra.mxu0 %v6589
  %6667 = vmatprep.subr.bf16.mxu0 0
  %6668 = vmatpush1.bf16.msra.mxu0 %v6590
  %6669 = vmatprep.subr.bf16.mxu0 0
  %6670 = vmatpush1.bf16.msra.mxu0 %v6591
  %6671 = vmatprep.subr.bf16.mxu0 0
  %6672 = vmatpush1.bf16.msra.mxu0 %v6592
  %6673 = vmatprep.mubr.bf16.mxu0 %v6442
  %6674 = vmatmul.mubr.bf16.gmra.mrb[0].mxu0 %v6441
  %v6675 = vpop.f32.mrb[0].mxu0
  %v6676 = vadd.f32 0.0, %v6675
  %v6677 = vpop.f32.mrb[0].mxu0
  %v6678 = vpop.f32.mrb[0].mxu0
  %v6679 = vpop.f32.mrb[0].mxu0
  %6680 = vdwg.mxu0
  %6681 = vmatprep.subr.bf16.mxu0 0
  %6682 = vmatpush1.bf16.msra.mxu0 %v6593
  %6683 = vmatprep.subr.bf16.mxu0 0
  %6684 = vmatpush1.bf16.msra.mxu0 %v6594
  %6685 = vmatprep.subr.bf16.mxu0 0
  %6686 = vmatpush1.bf16.msra.mxu0 %v6595
  %6687 = vmatprep.subr.bf16.mxu0 0
  %6688 = vmatpush1.bf16.msra.mxu0 %v6596
  %6689 = vmatprep.subr.bf16.mxu0 0
  %6690 = vmatpush1.bf16.msra.mxu0 %v6597
  %6691 = vmatprep.subr.bf16.mxu0 0
  %6692 = vmatpush1.bf16.msra.mxu0 %v6598
  %6693 = vmatprep.subr.bf16.mxu0 0
  %6694 = vmatpush1.bf16.msra.mxu0 %v6599
  %6695 = vmatprep.subr.bf16.mxu0 0
  %6696 = vmatpush1.bf16.msra.mxu0 %v6600
  %6697 = vmatprep.subr.bf16.mxu0 0
  %6698 = vmatpush1.bf16.msra.mxu0 %v6601
  %6699 = vmatprep.subr.bf16.mxu0 0
  %6700 = vmatpush1.bf16.msra.mxu0 %v6602
  %6701 = vmatprep.subr.bf16.mxu0 0
  %6702 = vmatpush1.bf16.msra.mxu0 %v6603
  %6703 = vmatprep.subr.bf16.mxu0 0
  %6704 = vmatpush1.bf16.msra.mxu0 %v6604
  %6705 = vmatprep.subr.bf16.mxu0 0
  %6706 = vmatpush1.bf16.msra.mxu0 %v6605
  %6707 = vmatprep.subr.bf16.mxu0 0
  %6708 = vmatpush1.bf16.msra.mxu0 %v6606
  %6709 = vmatprep.subr.bf16.mxu0 0
  %6710 = vmatpush1.bf16.msra.mxu0 %v6607
  %6711 = vmatprep.subr.bf16.mxu0 0
  %6712 = vmatpush1.bf16.msra.mxu0 %v6608
  %6713 = vmatprep.mubr.bf16.mxu0 %v6444
  %6714 = vmatmul.mubr.bf16.gmra.mrb[0].mxu0 %v6443
  %v6715 = vpop.f32.mrb[0].mxu0
  %v6716 = vadd.f32 %v6676, %v6715
  %v6717 = vpop.f32.mrb[0].mxu0
  %v6718 = vpop.f32.mrb[0].mxu0
  %v6719 = vpop.f32.mrb[0].mxu0
  %6720 = vdwg.mxu0
  %v6721 = vadd.f32 %v6372, %v6716
  %v6722 = vld [vmem:[%s3 + $0xa00] sm:$0xf]
  %v6723 = vld [vmem:[%s3 + $0xa04] sm:$0xf]
  %v6724 = vld [vmem:[%s3 + $0xa08] sm:$0xf]
  %v6725 = vld [vmem:[%s3 + $0xa0c] sm:$0xf]
  %v6726 = vld [vmem:[%s3 + $0xa10] sm:$0xf]
  %v6727 = vld [vmem:[%s3 + $0xa14] sm:$0xf]
  %v6728 = vld [vmem:[%s3 + $0xa18] sm:$0xf]
  %v6729 = vld [vmem:[%s3 + $0xa1c] sm:$0xf]
  %v6730 = vld [vmem:[%s3 + $0xa20] sm:$0xf]
  %v6731 = vld [vmem:[%s3 + $0xa24] sm:$0xf]
  %v6732 = vld [vmem:[%s3 + $0xa28] sm:$0xf]
  %v6733 = vld [vmem:[%s3 + $0xa2c] sm:$0xf]
  %v6734 = vld [vmem:[%s3 + $0xa30] sm:$0xf]
  %v6735 = vld [vmem:[%s3 + $0xa34] sm:$0xf]
  %v6736 = vld [vmem:[%s3 + $0xa38] sm:$0xf]
  %v6737 = vld [vmem:[%s3 + $0xa3c] sm:$0xf]
  %v6738 = vld [vmem:[%s3 + $0xa40] sm:$0xf]
  %v6739 = vld [vmem:[%s3 + $0xa44] sm:$0xf]
  %v6740 = vld [vmem:[%s3 + $0xa48] sm:$0xf]
  %v6741 = vld [vmem:[%s3 + $0xa4c] sm:$0xf]
  %v6742 = vld [vmem:[%s3 + $0xa50] sm:$0xf]
  %v6743 = vld [vmem:[%s3 + $0xa54] sm:$0xf]
  %v6744 = vld [vmem:[%s3 + $0xa58] sm:$0xf]
  %v6745 = vld [vmem:[%s3 + $0xa5c] sm:$0xf]
  %v6746 = vld [vmem:[%s3 + $0xa60] sm:$0xf]
  %v6747 = vld [vmem:[%s3 + $0xa64] sm:$0xf]
  %v6748 = vld [vmem:[%s3 + $0xa68] sm:$0xf]
  %v6749 = vld [vmem:[%s3 + $0xa6c] sm:$0xf]
  %v6750 = vld [vmem:[%s3 + $0xa70] sm:$0xf]
  %v6751 = vld [vmem:[%s3 + $0xa74] sm:$0xf]
  %v6752 = vld [vmem:[%s3 + $0xa78] sm:$0xf]
  %v6753 = vld [vmem:[%s3 + $0xa7c] sm:$0xf]
  %v6754 = vld [vmem:[%s3 + $0xa80] sm:$0xf]
  %v6755 = vld [vmem:[%s3 + $0xa84] sm:$0xf]
  %v6756 = vld [vmem:[%s3 + $0xa88] sm:$0xf]
  %v6757 = vld [vmem:[%s3 + $0xa8c] sm:$0xf]
  %v6758 = vld [vmem:[%s3 + $0xa90] sm:$0xf]
  %v6759 = vld [vmem:[%s3 + $0xa94] sm:$0xf]
  %v6760 = vld [vmem:[%s3 + $0xa98] sm:$0xf]
  %v6761 = vld [vmem:[%s3 + $0xa9c] sm:$0xf]
  %v6762 = vld [vmem:[%s3 + $0xaa0] sm:$0xf]
  %v6763 = vld [vmem:[%s3 + $0xaa4] sm:$0xf]
  %v6764 = vld [vmem:[%s3 + $0xaa8] sm:$0xf]
  %v6765 = vld [vmem:[%s3 + $0xaac] sm:$0xf]
  %v6766 = vld [vmem:[%s3 + $0xab0] sm:$0xf]
  %v6767 = vld [vmem:[%s3 + $0xab4] sm:$0xf]
  %v6768 = vld [vmem:[%s3 + $0xab8] sm:$0xf]
  %v6769 = vld [vmem:[%s3 + $0xabc] sm:$0xf]
  %v6770 = vld [vmem:[%s3 + $0xac0] sm:$0xf]
  %v6771 = vld [vmem:[%s3 + $0xac4] sm:$0xf]
  %v6772 = vld [vmem:[%s3 + $0xac8] sm:$0xf]
  %v6773 = vld [vmem:[%s3 + $0xacc] sm:$0xf]
  %v6774 = vld [vmem:[%s3 + $0xad0] sm:$0xf]
  %v6775 = vld [vmem:[%s3 + $0xad4] sm:$0xf]
  %v6776 = vld [vmem:[%s3 + $0xad8] sm:$0xf]
  %v6777 = vld [vmem:[%s3 + $0xadc] sm:$0xf]
  %v6778 = vld [vmem:[%s3 + $0xae0] sm:$0xf]
  %v6779 = vld [vmem:[%s3 + $0xae4] sm:$0xf]
  %v6780 = vld [vmem:[%s3 + $0xae8] sm:$0xf]
  %v6781 = vld [vmem:[%s3 + $0xaec] sm:$0xf]
  %v6782 = vld [vmem:[%s3 + $0xaf0] sm:$0xf]
  %v6783 = vld [vmem:[%s3 + $0xaf4] sm:$0xf]
  %v6784 = vld [vmem:[%s3 + $0xaf8] sm:$0xf]
  %v6785 = vld [vmem:[%s3 + $0xafc] sm:$0xf]
  %v6850 = vunpack.c.l.b16 %v6722
  %v6851 = vunpack.c.l.b16 %v6723
  %v6852 = vunpack.c.l.b16 %v6724
  %v6853 = vunpack.c.l.b16 %v6725
  %v6854 = vunpack.c.l.b16 %v6726
  %v6855 = vunpack.c.l.b16 %v6727
  %v6856 = vunpack.c.l.b16 %v6728
  %v6857 = vunpack.c.l.b16 %v6729
  %v6858 = vunpack.c.l.b16 %v6730
  %v6859 = vunpack.c.l.b16 %v6731
  %v6860 = vunpack.c.l.b16 %v6732
  %v6861 = vunpack.c.l.b16 %v6733
  %v6862 = vunpack.c.l.b16 %v6734
  %v6863 = vunpack.c.l.b16 %v6735
  %v6864 = vunpack.c.l.b16 %v6736
  %v6865 = vunpack.c.l.b16 %v6737
  %v6866 = vunpack.c.l.b16 %v6738
  %v6867 = vunpack.c.l.b16 %v6739
  %v6868 = vunpack.c.l.b16 %v6740
  %v6869 = vunpack.c.l.b16 %v6741
  %v6870 = vunpack.c.l.b16 %v6742
  %v6871 = vunpack.c.l.b16 %v6743
  %v6872 = vunpack.c.l.b16 %v6744
  %v6873 = vunpack.c.l.b16 %v6745
  %v6874 = vunpack.c.l.b16 %v6746
  %v6875 = vunpack.c.l.b16 %v6747
  %v6876 = vunpack.c.l.b16 %v6748
  %v6877 = vunpack.c.l.b16 %v6749
  %v6878 = vunpack.c.l.b16 %v6750
  %v6879 = vunpack.c.l.b16 %v6751
  %v6880 = vunpack.c.l.b16 %v6752
  %v6881 = vunpack.c.l.b16 %v6753
  %v6882 = vunpack.c.l.b16 %v6754
  %v6883 = vunpack.c.l.b16 %v6755
  %v6884 = vunpack.c.l.b16 %v6756
  %v6885 = vunpack.c.l.b16 %v6757
  %v6886 = vunpack.c.l.b16 %v6758
  %v6887 = vunpack.c.l.b16 %v6759
  %v6888 = vunpack.c.l.b16 %v6760
  %v6889 = vunpack.c.l.b16 %v6761
  %v6890 = vunpack.c.l.b16 %v6762
  %v6891 = vunpack.c.l.b16 %v6763
  %v6892 = vunpack.c.l.b16 %v6764
  %v6893 = vunpack.c.l.b16 %v6765
  %v6894 = vunpack.c.l.b16 %v6766
  %v6895 = vunpack.c.l.b16 %v6767
  %v6896 = vunpack.c.l.b16 %v6768
  %v6897 = vunpack.c.l.b16 %v6769
  %v6898 = vunpack.c.l.b16 %v6770
  %v6899 = vunpack.c.l.b16 %v6771
  %v6900 = vunpack.c.l.b16 %v6772
  %v6901 = vunpack.c.l.b16 %v6773
  %v6902 = vunpack.c.l.b16 %v6774
  %v6903 = vunpack.c.l.b16 %v6775
  %v6904 = vunpack.c.l.b16 %v6776
  %v6905 = vunpack.c.l.b16 %v6777
  %v6906 = vunpack.c.l.b16 %v6778
  %v6907 = vunpack.c.l.b16 %v6779
  %v6908 = vunpack.c.l.b16 %v6780
  %v6909 = vunpack.c.l.b16 %v6781
  %v6910 = vunpack.c.l.b16 %v6782
  %v6911 = vunpack.c.l.b16 %v6783
  %v6912 = vunpack.c.l.b16 %v6784
  %v6913 = vunpack.c.l.b16 %v6785
  %v6914 = vpack.c.b16 %v6851, %v6850
  %v6915 = vpack.c.b16 %v6853, %v6852
  %v6916 = vpack.c.b16 %v6855, %v6854
  %v6917 = vpack.c.b16 %v6857, %v6856
  %v6918 = vpack.c.b16 %v6859, %v6858
  %v6919 = vpack.c.b16 %v6861, %v6860
  %v6920 = vpack.c.b16 %v6863, %v6862
  %v6921 = vpack.c.b16 %v6865, %v6864
  %v6922 = vpack.c.b16 %v6867, %v6866
  %v6923 = vpack.c.b16 %v6869, %v6868
  %v6924 = vpack.c.b16 %v6871, %v6870
  %v6925 = vpack.c.b16 %v6873, %v6872
  %v6926 = vpack.c.b16 %v6875, %v6874
  %v6927 = vpack.c.b16 %v6877, %v6876
  %v6928 = vpack.c.b16 %v6879, %v6878
  %v6929 = vpack.c.b16 %v6881, %v6880
  %v6930 = vpack.c.b16 %v6883, %v6882
  %v6931 = vpack.c.b16 %v6885, %v6884
  %v6932 = vpack.c.b16 %v6887, %v6886
  %v6933 = vpack.c.b16 %v6889, %v6888
  %v6934 = vpack.c.b16 %v6891, %v6890
  %v6935 = vpack.c.b16 %v6893, %v6892
  %v6936 = vpack.c.b16 %v6895, %v6894
  %v6937 = vpack.c.b16 %v6897, %v6896
  %v6938 = vpack.c.b16 %v6899, %v6898
  %v6939 = vpack.c.b16 %v6901, %v6900
  %v6940 = vpack.c.b16 %v6903, %v6902
  %v6941 = vpack.c.b16 %v6905, %v6904
  %v6942 = vpack.c.b16 %v6907, %v6906
  %v6943 = vpack.c.b16 %v6909, %v6908
  %v6944 = vpack.c.b16 %v6911, %v6910
  %v6945 = vpack.c.b16 %v6913, %v6912
  %6978 = vmatprep.subr.bf16.mxu0 0
  %6979 = vmatpush1.bf16.msra.mxu0 %v6914
  %6980 = vmatprep.subr.bf16.mxu0 0
  %6981 = vmatpush1.bf16.msra.mxu0 %v6915
  %6982 = vmatprep.subr.bf16.mxu0 0
  %6983 = vmatpush1.bf16.msra.mxu0 %v6916
  %6984 = vmatprep.subr.bf16.mxu0 0
  %6985 = vmatpush1.bf16.msra.mxu0 %v6917
  %6986 = vmatprep.subr.bf16.mxu0 0
  %6987 = vmatpush1.bf16.msra.mxu0 %v6918
  %6988 = vmatprep.subr.bf16.mxu0 0
  %6989 = vmatpush1.bf16.msra.mxu0 %v6919
  %6990 = vmatprep.subr.bf16.mxu0 0
  %6991 = vmatpush1.bf16.msra.mxu0 %v6920
  %6992 = vmatprep.subr.bf16.mxu0 0
  %6993 = vmatpush1.bf16.msra.mxu0 %v6921
  %6994 = vmatprep.subr.bf16.mxu0 0
  %6995 = vmatpush1.bf16.msra.mxu0 %v6922
  %6996 = vmatprep.subr.bf16.mxu0 0
  %6997 = vmatpush1.bf16.msra.mxu0 %v6923
  %6998 = vmatprep.subr.bf16.mxu0 0
  %6999 = vmatpush1.bf16.msra.mxu0 %v6924
  %7000 = vmatprep.subr.bf16.mxu0 0
  %7001 = vmatpush1.bf16.msra.mxu0 %v6925
  %7002 = vmatprep.subr.bf16.mxu0 0
  %7003 = vmatpush1.bf16.msra.mxu0 %v6926
  %7004 = vmatprep.subr.bf16.mxu0 0
  %7005 = vmatpush1.bf16.msra.mxu0 %v6927
  %7006 = vmatprep.subr.bf16.mxu0 0
  %7007 = vmatpush1.bf16.msra.mxu0 %v6928
  %7008 = vmatprep.subr.bf16.mxu0 0
  %7009 = vmatpush1.bf16.msra.mxu0 %v6929
  %7010 = vmatprep.mubr.bf16.mxu0 %v3283
  %7011 = vmatmul.mubr.bf16.gmra.mrb[0].mxu0 %v3282
  %v7012 = vpop.f32.mrb[0].mxu0
  %v7013 = vadd.f32 0.0, %v7012
  %v7014 = vpop.f32.mrb[0].mxu0
  %v7015 = vpop.f32.mrb[0].mxu0
  %v7016 = vpop.f32.mrb[0].mxu0
  %7017 = vdwg.mxu0
  %7018 = vmatprep.subr.bf16.mxu0 0
  %7019 = vmatpush1.bf16.msra.mxu0 %v6930
  %7020 = vmatprep.subr.bf16.mxu0 0
  %7021 = vmatpush1.bf16.msra.mxu0 %v6931
  %7022 = vmatprep.subr.bf16.mxu0 0
  %7023 = vmatpush1.bf16.msra.mxu0 %v6932
  %7024 = vmatprep.subr.bf16.mxu0 0
  %7025 = vmatpush1.bf16.msra.mxu0 %v6933
  %7026 = vmatprep.subr.bf16.mxu0 0
  %7027 = vmatpush1.bf16.msra.mxu0 %v6934
  %7028 = vmatprep.subr.bf16.mxu0 0
  %7029 = vmatpush1.bf16.msra.mxu0 %v6935
  %7030 = vmatprep.subr.bf16.mxu0 0
  %7031 = vmatpush1.bf16.msra.mxu0 %v6936
  %7032 = vmatprep.subr.bf16.mxu0 0
  %7033 = vmatpush1.bf16.msra.mxu0 %v6937
  %7034 = vmatprep.subr.bf16.mxu0 0
  %7035 = vmatpush1.bf16.msra.mxu0 %v6938
  %7036 = vmatprep.subr.bf16.mxu0 0
  %7037 = vmatpush1.bf16.msra.mxu0 %v6939
  %7038 = vmatprep.subr.bf16.mxu0 0
  %7039 = vmatpush1.bf16.msra.mxu0 %v6940
  %7040 = vmatprep.subr.bf16.mxu0 0
  %7041 = vmatpush1.bf16.msra.mxu0 %v6941
  %7042 = vmatprep.subr.bf16.mxu0 0
  %7043 = vmatpush1.bf16.msra.mxu0 %v6942
  %7044 = vmatprep.subr.bf16.mxu0 0
  %7045 = vmatpush1.bf16.msra.mxu0 %v6943
  %7046 = vmatprep.subr.bf16.mxu0 0
  %7047 = vmatpush1.bf16.msra.mxu0 %v6944
  %7048 = vmatprep.subr.bf16.mxu0 0
  %7049 = vmatpush1.bf16.msra.mxu0 %v6945
  %7050 = vmatprep.mubr.bf16.mxu0 %v3285
  %7051 = vmatmul.mubr.bf16.gmra.mrb[0].mxu0 %v3284
  %v7052 = vpop.f32.mrb[0].mxu0
  %v7053 = vadd.f32 %v7013, %v7052
  %v7054 = vpop.f32.mrb[0].mxu0
  %v7055 = vpop.f32.mrb[0].mxu0
  %v7056 = vpop.f32.mrb[0].mxu0
  %7057 = vdwg.mxu0
  %v7058 = vadd.f32 %v6721, %v7053
  %v7059 = vld [vmem:[%s3 + $0xb00] sm:$0xf]
  %v7060 = vld [vmem:[%s3 + $0xb04] sm:$0xf]
  %v7061 = vld [vmem:[%s3 + $0xb08] sm:$0xf]
  %v7062 = vld [vmem:[%s3 + $0xb0c] sm:$0xf]
  %v7063 = vld [vmem:[%s3 + $0xb10] sm:$0xf]
  %v7064 = vld [vmem:[%s3 + $0xb14] sm:$0xf]
  %v7065 = vld [vmem:[%s3 + $0xb18] sm:$0xf]
  %v7066 = vld [vmem:[%s3 + $0xb1c] sm:$0xf]
  %v7067 = vld [vmem:[%s3 + $0xb20] sm:$0xf]
  %v7068 = vld [vmem:[%s3 + $0xb24] sm:$0xf]
  %v7069 = vld [vmem:[%s3 + $0xb28] sm:$0xf]
  %v7070 = vld [vmem:[%s3 + $0xb2c] sm:$0xf]
  %v7071 = vld [vmem:[%s3 + $0xb30] sm:$0xf]
  %v7072 = vld [vmem:[%s3 + $0xb34] sm:$0xf]
  %v7073 = vld [vmem:[%s3 + $0xb38] sm:$0xf]
  %v7074 = vld [vmem:[%s3 + $0xb3c] sm:$0xf]
  %v7075 = vld [vmem:[%s3 + $0xb40] sm:$0xf]
  %v7076 = vld [vmem:[%s3 + $0xb44] sm:$0xf]
  %v7077 = vld [vmem:[%s3 + $0xb48] sm:$0xf]
  %v7078 = vld [vmem:[%s3 + $0xb4c] sm:$0xf]
  %v7079 = vld [vmem:[%s3 + $0xb50] sm:$0xf]
  %v7080 = vld [vmem:[%s3 + $0xb54] sm:$0xf]
  %v7081 = vld [vmem:[%s3 + $0xb58] sm:$0xf]
  %v7082 = vld [vmem:[%s3 + $0xb5c] sm:$0xf]
  %v7083 = vld [vmem:[%s3 + $0xb60] sm:$0xf]
  %v7084 = vld [vmem:[%s3 + $0xb64] sm:$0xf]
  %v7085 = vld [vmem:[%s3 + $0xb68] sm:$0xf]
  %v7086 = vld [vmem:[%s3 + $0xb6c] sm:$0xf]
  %v7087 = vld [vmem:[%s3 + $0xb70] sm:$0xf]
  %v7088 = vld [vmem:[%s3 + $0xb74] sm:$0xf]
  %v7089 = vld [vmem:[%s3 + $0xb78] sm:$0xf]
  %v7090 = vld [vmem:[%s3 + $0xb7c] sm:$0xf]
  %v7091 = vld [vmem:[%s3 + $0xb80] sm:$0xf]
  %v7092 = vld [vmem:[%s3 + $0xb84] sm:$0xf]
  %v7093 = vld [vmem:[%s3 + $0xb88] sm:$0xf]
  %v7094 = vld [vmem:[%s3 + $0xb8c] sm:$0xf]
  %v7095 = vld [vmem:[%s3 + $0xb90] sm:$0xf]
  %v7096 = vld [vmem:[%s3 + $0xb94] sm:$0xf]
  %v7097 = vld [vmem:[%s3 + $0xb98] sm:$0xf]
  %v7098 = vld [vmem:[%s3 + $0xb9c] sm:$0xf]
  %v7099 = vld [vmem:[%s3 + $0xba0] sm:$0xf]
  %v7100 = vld [vmem:[%s3 + $0xba4] sm:$0xf]
  %v7101 = vld [vmem:[%s3 + $0xba8] sm:$0xf]
  %v7102 = vld [vmem:[%s3 + $0xbac] sm:$0xf]
  %v7103 = vld [vmem:[%s3 + $0xbb0] sm:$0xf]
  %v7104 = vld [vmem:[%s3 + $0xbb4] sm:$0xf]
  %v7105 = vld [vmem:[%s3 + $0xbb8] sm:$0xf]
  %v7106 = vld [vmem:[%s3 + $0xbbc] sm:$0xf]
  %v7107 = vld [vmem:[%s3 + $0xbc0] sm:$0xf]
  %v7108 = vld [vmem:[%s3 + $0xbc4] sm:$0xf]
  %v7109 = vld [vmem:[%s3 + $0xbc8] sm:$0xf]
  %v7110 = vld [vmem:[%s3 + $0xbcc] sm:$0xf]
  %v7111 = vld [vmem:[%s3 + $0xbd0] sm:$0xf]
  %v7112 = vld [vmem:[%s3 + $0xbd4] sm:$0xf]
  %v7113 = vld [vmem:[%s3 + $0xbd8] sm:$0xf]
  %v7114 = vld [vmem:[%s3 + $0xbdc] sm:$0xf]
  %v7115 = vld [vmem:[%s3 + $0xbe0] sm:$0xf]
  %v7116 = vld [vmem:[%s3 + $0xbe4] sm:$0xf]
  %v7117 = vld [vmem:[%s3 + $0xbe8] sm:$0xf]
  %v7118 = vld [vmem:[%s3 + $0xbec] sm:$0xf]
  %v7119 = vld [vmem:[%s3 + $0xbf0] sm:$0xf]
  %v7120 = vld [vmem:[%s3 + $0xbf4] sm:$0xf]
  %v7121 = vld [vmem:[%s3 + $0xbf8] sm:$0xf]
  %v7122 = vld [vmem:[%s3 + $0xbfc] sm:$0xf]
  %v7127 = vrot.slane %v3282, 4
  %v7128 = vrot.slane %v3283, 4
  %v7129 = vrot.slane %v3284, 4
  %v7130 = vrot.slane %v3285, 4
  %v7199 = vunpack.c.l.b16 %v7059
  %v7200 = vunpack.c.l.b16 %v7060
  %v7201 = vunpack.c.l.b16 %v7061
  %v7202 = vunpack.c.l.b16 %v7062
  %v7203 = vunpack.c.l.b16 %v7063
  %v7204 = vunpack.c.l.b16 %v7064
  %v7205 = vunpack.c.l.b16 %v7065
  %v7206 = vunpack.c.l.b16 %v7066
  %v7207 = vunpack.c.l.b16 %v7067
  %v7208 = vunpack.c.l.b16 %v7068
  %v7209 = vunpack.c.l.b16 %v7069
  %v7210 = vunpack.c.l.b16 %v7070
  %v7211 = vunpack.c.l.b16 %v7071
  %v7212 = vunpack.c.l.b16 %v7072
  %v7213 = vunpack.c.l.b16 %v7073
  %v7214 = vunpack.c.l.b16 %v7074
  %v7215 = vunpack.c.l.b16 %v7075
  %v7216 = vunpack.c.l.b16 %v7076
  %v7217 = vunpack.c.l.b16 %v7077
  %v7218 = vunpack.c.l.b16 %v7078
  %v7219 = vunpack.c.l.b16 %v7079
  %v7220 = vunpack.c.l.b16 %v7080
  %v7221 = vunpack.c.l.b16 %v7081
  %v7222 = vunpack.c.l.b16 %v7082
  %v7223 = vunpack.c.l.b16 %v7083
  %v7224 = vunpack.c.l.b16 %v7084
  %v7225 = vunpack.c.l.b16 %v7085
  %v7226 = vunpack.c.l.b16 %v7086
  %v7227 = vunpack.c.l.b16 %v7087
  %v7228 = vunpack.c.l.b16 %v7088
  %v7229 = vunpack.c.l.b16 %v7089
  %v7230 = vunpack.c.l.b16 %v7090
  %v7231 = vunpack.c.l.b16 %v7091
  %v7232 = vunpack.c.l.b16 %v7092
  %v7233 = vunpack.c.l.b16 %v7093
  %v7234 = vunpack.c.l.b16 %v7094
  %v7235 = vunpack.c.l.b16 %v7095
  %v7236 = vunpack.c.l.b16 %v7096
  %v7237 = vunpack.c.l.b16 %v7097
  %v7238 = vunpack.c.l.b16 %v7098
  %v7239 = vunpack.c.l.b16 %v7099
  %v7240 = vunpack.c.l.b16 %v7100
  %v7241 = vunpack.c.l.b16 %v7101
  %v7242 = vunpack.c.l.b16 %v7102
  %v7243 = vunpack.c.l.b16 %v7103
  %v7244 = vunpack.c.l.b16 %v7104
  %v7245 = vunpack.c.l.b16 %v7105
  %v7246 = vunpack.c.l.b16 %v7106
  %v7247 = vunpack.c.l.b16 %v7107
  %v7248 = vunpack.c.l.b16 %v7108
  %v7249 = vunpack.c.l.b16 %v7109
  %v7250 = vunpack.c.l.b16 %v7110
  %v7251 = vunpack.c.l.b16 %v7111
  %v7252 = vunpack.c.l.b16 %v7112
  %v7253 = vunpack.c.l.b16 %v7113
  %v7254 = vunpack.c.l.b16 %v7114
  %v7255 = vunpack.c.l.b16 %v7115
  %v7256 = vunpack.c.l.b16 %v7116
  %v7257 = vunpack.c.l.b16 %v7117
  %v7258 = vunpack.c.l.b16 %v7118
  %v7259 = vunpack.c.l.b16 %v7119
  %v7260 = vunpack.c.l.b16 %v7120
  %v7261 = vunpack.c.l.b16 %v7121
  %v7262 = vunpack.c.l.b16 %v7122
  %v7263 = vpack.c.b16 %v7200, %v7199
  %v7264 = vpack.c.b16 %v7202, %v7201
  %v7265 = vpack.c.b16 %v7204, %v7203
  %v7266 = vpack.c.b16 %v7206, %v7205
  %v7267 = vpack.c.b16 %v7208, %v7207
  %v7268 = vpack.c.b16 %v7210, %v7209
  %v7269 = vpack.c.b16 %v7212, %v7211
  %v7270 = vpack.c.b16 %v7214, %v7213
  %v7271 = vpack.c.b16 %v7216, %v7215
  %v7272 = vpack.c.b16 %v7218, %v7217
  %v7273 = vpack.c.b16 %v7220, %v7219
  %v7274 = vpack.c.b16 %v7222, %v7221
  %v7275 = vpack.c.b16 %v7224, %v7223
  %v7276 = vpack.c.b16 %v7226, %v7225
  %v7277 = vpack.c.b16 %v7228, %v7227
  %v7278 = vpack.c.b16 %v7230, %v7229
  %v7279 = vpack.c.b16 %v7232, %v7231
  %v7280 = vpack.c.b16 %v7234, %v7233
  %v7281 = vpack.c.b16 %v7236, %v7235
  %v7282 = vpack.c.b16 %v7238, %v7237
  %v7283 = vpack.c.b16 %v7240, %v7239
  %v7284 = vpack.c.b16 %v7242, %v7241
  %v7285 = vpack.c.b16 %v7244, %v7243
  %v7286 = vpack.c.b16 %v7246, %v7245
  %v7287 = vpack.c.b16 %v7248, %v7247
  %v7288 = vpack.c.b16 %v7250, %v7249
  %v7289 = vpack.c.b16 %v7252, %v7251
  %v7290 = vpack.c.b16 %v7254, %v7253
  %v7291 = vpack.c.b16 %v7256, %v7255
  %v7292 = vpack.c.b16 %v7258, %v7257
  %v7293 = vpack.c.b16 %v7260, %v7259
  %v7294 = vpack.c.b16 %v7262, %v7261
  %7327 = vmatprep.subr.bf16.mxu0 0
  %7328 = vmatpush1.bf16.msra.mxu0 %v7263
  %7329 = vmatprep.subr.bf16.mxu0 0
  %7330 = vmatpush1.bf16.msra.mxu0 %v7264
  %7331 = vmatprep.subr.bf16.mxu0 0
  %7332 = vmatpush1.bf16.msra.mxu0 %v7265
  %7333 = vmatprep.subr.bf16.mxu0 0
  %7334 = vmatpush1.bf16.msra.mxu0 %v7266
  %7335 = vmatprep.subr.bf16.mxu0 0
  %7336 = vmatpush1.bf16.msra.mxu0 %v7267
  %7337 = vmatprep.subr.bf16.mxu0 0
  %7338 = vmatpush1.bf16.msra.mxu0 %v7268
  %7339 = vmatprep.subr.bf16.mxu0 0
  %7340 = vmatpush1.bf16.msra.mxu0 %v7269
  %7341 = vmatprep.subr.bf16.mxu0 0
  %7342 = vmatpush1.bf16.msra.mxu0 %v7270
  %7343 = vmatprep.subr.bf16.mxu0 0
  %7344 = vmatpush1.bf16.msra.mxu0 %v7271
  %7345 = vmatprep.subr.bf16.mxu0 0
  %7346 = vmatpush1.bf16.msra.mxu0 %v7272
  %7347 = vmatprep.subr.bf16.mxu0 0
  %7348 = vmatpush1.bf16.msra.mxu0 %v7273
  %7349 = vmatprep.subr.bf16.mxu0 0
  %7350 = vmatpush1.bf16.msra.mxu0 %v7274
  %7351 = vmatprep.subr.bf16.mxu0 0
  %7352 = vmatpush1.bf16.msra.mxu0 %v7275
  %7353 = vmatprep.subr.bf16.mxu0 0
  %7354 = vmatpush1.bf16.msra.mxu0 %v7276
  %7355 = vmatprep.subr.bf16.mxu0 0
  %7356 = vmatpush1.bf16.msra.mxu0 %v7277
  %7357 = vmatprep.subr.bf16.mxu0 0
  %7358 = vmatpush1.bf16.msra.mxu0 %v7278
  %7359 = vmatprep.mubr.bf16.mxu0 %v7128
  %7360 = vmatmul.mubr.bf16.gmra.mrb[0].mxu0 %v7127
  %v7361 = vpop.f32.mrb[0].mxu0
  %v7362 = vadd.f32 0.0, %v7361
  %v7363 = vpop.f32.mrb[0].mxu0
  %v7364 = vpop.f32.mrb[0].mxu0
  %v7365 = vpop.f32.mrb[0].mxu0
  %7366 = vdwg.mxu0
  %7367 = vmatprep.subr.bf16.mxu0 0
  %7368 = vmatpush1.bf16.msra.mxu0 %v7279
  %7369 = vmatprep.subr.bf16.mxu0 0
  %7370 = vmatpush1.bf16.msra.mxu0 %v7280
  %7371 = vmatprep.subr.bf16.mxu0 0
  %7372 = vmatpush1.bf16.msra.mxu0 %v7281
  %7373 = vmatprep.subr.bf16.mxu0 0
  %7374 = vmatpush1.bf16.msra.mxu0 %v7282
  %7375 = vmatprep.subr.bf16.mxu0 0
  %7376 = vmatpush1.bf16.msra.mxu0 %v7283
  %7377 = vmatprep.subr.bf16.mxu0 0
  %7378 = vmatpush1.bf16.msra.mxu0 %v7284
  %7379 = vmatprep.subr.bf16.mxu0 0
  %7380 = vmatpush1.bf16.msra.mxu0 %v7285
  %7381 = vmatprep.subr.bf16.mxu0 0
  %7382 = vmatpush1.bf16.msra.mxu0 %v7286
  %7383 = vmatprep.subr.bf16.mxu0 0
  %7384 = vmatpush1.bf16.msra.mxu0 %v7287
  %7385 = vmatprep.subr.bf16.mxu0 0
  %7386 = vmatpush1.bf16.msra.mxu0 %v7288
  %7387 = vmatprep.subr.bf16.mxu0 0
  %7388 = vmatpush1.bf16.msra.mxu0 %v7289
  %7389 = vmatprep.subr.bf16.mxu0 0
  %7390 = vmatpush1.bf16.msra.mxu0 %v7290
  %7391 = vmatprep.subr.bf16.mxu0 0
  %7392 = vmatpush1.bf16.msra.mxu0 %v7291
  %7393 = vmatprep.subr.bf16.mxu0 0
  %7394 = vmatpush1.bf16.msra.mxu0 %v7292
  %7395 = vmatprep.subr.bf16.mxu0 0
  %7396 = vmatpush1.bf16.msra.mxu0 %v7293
  %7397 = vmatprep.subr.bf16.mxu0 0
  %7398 = vmatpush1.bf16.msra.mxu0 %v7294
  %7399 = vmatprep.mubr.bf16.mxu0 %v7130
  %7400 = vmatmul.mubr.bf16.gmra.mrb[0].mxu0 %v7129
  %v7401 = vpop.f32.mrb[0].mxu0
  %v7402 = vadd.f32 %v7362, %v7401
  %v7403 = vpop.f32.mrb[0].mxu0
  %v7404 = vpop.f32.mrb[0].mxu0
  %v7405 = vpop.f32.mrb[0].mxu0
  %7406 = vdwg.mxu0
  %v7407 = vadd.f32 %v7058, %v7402
  %v7408 = vld [vmem:[%s3 + $0xc00] sm:$0xf]
  %v7409 = vld [vmem:[%s3 + $0xc04] sm:$0xf]
  %v7410 = vld [vmem:[%s3 + $0xc08] sm:$0xf]
  %v7411 = vld [vmem:[%s3 + $0xc0c] sm:$0xf]
  %v7412 = vld [vmem:[%s3 + $0xc10] sm:$0xf]
  %v7413 = vld [vmem:[%s3 + $0xc14] sm:$0xf]
  %v7414 = vld [vmem:[%s3 + $0xc18] sm:$0xf]
  %v7415 = vld [vmem:[%s3 + $0xc1c] sm:$0xf]
  %v7416 = vld [vmem:[%s3 + $0xc20] sm:$0xf]
  %v7417 = vld [vmem:[%s3 + $0xc24] sm:$0xf]
  %v7418 = vld [vmem:[%s3 + $0xc28] sm:$0xf]
  %v7419 = vld [vmem:[%s3 + $0xc2c] sm:$0xf]
  %v7420 = vld [vmem:[%s3 + $0xc30] sm:$0xf]
  %v7421 = vld [vmem:[%s3 + $0xc34] sm:$0xf]
  %v7422 = vld [vmem:[%s3 + $0xc38] sm:$0xf]
  %v7423 = vld [vmem:[%s3 + $0xc3c] sm:$0xf]
  %v7424 = vld [vmem:[%s3 + $0xc40] sm:$0xf]
  %v7425 = vld [vmem:[%s3 + $0xc44] sm:$0xf]
  %v7426 = vld [vmem:[%s3 + $0xc48] sm:$0xf]
  %v7427 = vld [vmem:[%s3 + $0xc4c] sm:$0xf]
  %v7428 = vld [vmem:[%s3 + $0xc50] sm:$0xf]
  %v7429 = vld [vmem:[%s3 + $0xc54] sm:$0xf]
  %v7430 = vld [vmem:[%s3 + $0xc58] sm:$0xf]
  %v7431 = vld [vmem:[%s3 + $0xc5c] sm:$0xf]
  %v7432 = vld [vmem:[%s3 + $0xc60] sm:$0xf]
  %v7433 = vld [vmem:[%s3 + $0xc64] sm:$0xf]
  %v7434 = vld [vmem:[%s3 + $0xc68] sm:$0xf]
  %v7435 = vld [vmem:[%s3 + $0xc6c] sm:$0xf]
  %v7436 = vld [vmem:[%s3 + $0xc70] sm:$0xf]
  %v7437 = vld [vmem:[%s3 + $0xc74] sm:$0xf]
  %v7438 = vld [vmem:[%s3 + $0xc78] sm:$0xf]
  %v7439 = vld [vmem:[%s3 + $0xc7c] sm:$0xf]
  %v7440 = vld [vmem:[%s3 + $0xc80] sm:$0xf]
  %v7441 = vld [vmem:[%s3 + $0xc84] sm:$0xf]
  %v7442 = vld [vmem:[%s3 + $0xc88] sm:$0xf]
  %v7443 = vld [vmem:[%s3 + $0xc8c] sm:$0xf]
  %v7444 = vld [vmem:[%s3 + $0xc90] sm:$0xf]
  %v7445 = vld [vmem:[%s3 + $0xc94] sm:$0xf]
  %v7446 = vld [vmem:[%s3 + $0xc98] sm:$0xf]
  %v7447 = vld [vmem:[%s3 + $0xc9c] sm:$0xf]
  %v7448 = vld [vmem:[%s3 + $0xca0] sm:$0xf]
  %v7449 = vld [vmem:[%s3 + $0xca4] sm:$0xf]
  %v7450 = vld [vmem:[%s3 + $0xca8] sm:$0xf]
  %v7451 = vld [vmem:[%s3 + $0xcac] sm:$0xf]
  %v7452 = vld [vmem:[%s3 + $0xcb0] sm:$0xf]
  %v7453 = vld [vmem:[%s3 + $0xcb4] sm:$0xf]
  %v7454 = vld [vmem:[%s3 + $0xcb8] sm:$0xf]
  %v7455 = vld [vmem:[%s3 + $0xcbc] sm:$0xf]
  %v7456 = vld [vmem:[%s3 + $0xcc0] sm:$0xf]
  %v7457 = vld [vmem:[%s3 + $0xcc4] sm:$0xf]
  %v7458 = vld [vmem:[%s3 + $0xcc8] sm:$0xf]
  %v7459 = vld [vmem:[%s3 + $0xccc] sm:$0xf]
  %v7460 = vld [vmem:[%s3 + $0xcd0] sm:$0xf]
  %v7461 = vld [vmem:[%s3 + $0xcd4] sm:$0xf]
  %v7462 = vld [vmem:[%s3 + $0xcd8] sm:$0xf]
  %v7463 = vld [vmem:[%s3 + $0xcdc] sm:$0xf]
  %v7464 = vld [vmem:[%s3 + $0xce0] sm:$0xf]
  %v7465 = vld [vmem:[%s3 + $0xce4] sm:$0xf]
  %v7466 = vld [vmem:[%s3 + $0xce8] sm:$0xf]
  %v7467 = vld [vmem:[%s3 + $0xcec] sm:$0xf]
  %v7468 = vld [vmem:[%s3 + $0xcf0] sm:$0xf]
  %v7469 = vld [vmem:[%s3 + $0xcf4] sm:$0xf]
  %v7470 = vld [vmem:[%s3 + $0xcf8] sm:$0xf]
  %v7471 = vld [vmem:[%s3 + $0xcfc] sm:$0xf]
  %v7536 = vunpack.c.l.b16 %v7408
  %v7537 = vunpack.c.l.b16 %v7409
  %v7538 = vunpack.c.l.b16 %v7410
  %v7539 = vunpack.c.l.b16 %v7411
  %v7540 = vunpack.c.l.b16 %v7412
  %v7541 = vunpack.c.l.b16 %v7413
  %v7542 = vunpack.c.l.b16 %v7414
  %v7543 = vunpack.c.l.b16 %v7415
  %v7544 = vunpack.c.l.b16 %v7416
  %v7545 = vunpack.c.l.b16 %v7417
  %v7546 = vunpack.c.l.b16 %v7418
  %v7547 = vunpack.c.l.b16 %v7419
  %v7548 = vunpack.c.l.b16 %v7420
  %v7549 = vunpack.c.l.b16 %v7421
  %v7550 = vunpack.c.l.b16 %v7422
  %v7551 = vunpack.c.l.b16 %v7423
  %v7552 = vunpack.c.l.b16 %v7424
  %v7553 = vunpack.c.l.b16 %v7425
  %v7554 = vunpack.c.l.b16 %v7426
  %v7555 = vunpack.c.l.b16 %v7427
  %v7556 = vunpack.c.l.b16 %v7428
  %v7557 = vunpack.c.l.b16 %v7429
  %v7558 = vunpack.c.l.b16 %v7430
  %v7559 = vunpack.c.l.b16 %v7431
  %v7560 = vunpack.c.l.b16 %v7432
  %v7561 = vunpack.c.l.b16 %v7433
  %v7562 = vunpack.c.l.b16 %v7434
  %v7563 = vunpack.c.l.b16 %v7435
  %v7564 = vunpack.c.l.b16 %v7436
  %v7565 = vunpack.c.l.b16 %v7437
  %v7566 = vunpack.c.l.b16 %v7438
  %v7567 = vunpack.c.l.b16 %v7439
  %v7568 = vunpack.c.l.b16 %v7440
  %v7569 = vunpack.c.l.b16 %v7441
  %v7570 = vunpack.c.l.b16 %v7442
  %v7571 = vunpack.c.l.b16 %v7443
  %v7572 = vunpack.c.l.b16 %v7444
  %v7573 = vunpack.c.l.b16 %v7445
  %v7574 = vunpack.c.l.b16 %v7446
  %v7575 = vunpack.c.l.b16 %v7447
  %v7576 = vunpack.c.l.b16 %v7448
  %v7577 = vunpack.c.l.b16 %v7449
  %v7578 = vunpack.c.l.b16 %v7450
  %v7579 = vunpack.c.l.b16 %v7451
  %v7580 = vunpack.c.l.b16 %v7452
  %v7581 = vunpack.c.l.b16 %v7453
  %v7582 = vunpack.c.l.b16 %v7454
  %v7583 = vunpack.c.l.b16 %v7455
  %v7584 = vunpack.c.l.b16 %v7456
  %v7585 = vunpack.c.l.b16 %v7457
  %v7586 = vunpack.c.l.b16 %v7458
  %v7587 = vunpack.c.l.b16 %v7459
  %v7588 = vunpack.c.l.b16 %v7460
  %v7589 = vunpack.c.l.b16 %v7461
  %v7590 = vunpack.c.l.b16 %v7462
  %v7591 = vunpack.c.l.b16 %v7463
  %v7592 = vunpack.c.l.b16 %v7464
  %v7593 = vunpack.c.l.b16 %v7465
  %v7594 = vunpack.c.l.b16 %v7466
  %v7595 = vunpack.c.l.b16 %v7467
  %v7596 = vunpack.c.l.b16 %v7468
  %v7597 = vunpack.c.l.b16 %v7469
  %v7598 = vunpack.c.l.b16 %v7470
  %v7599 = vunpack.c.l.b16 %v7471
  %v7600 = vpack.c.b16 %v7537, %v7536
  %v7601 = vpack.c.b16 %v7539, %v7538
  %v7602 = vpack.c.b16 %v7541, %v7540
  %v7603 = vpack.c.b16 %v7543, %v7542
  %v7604 = vpack.c.b16 %v7545, %v7544
  %v7605 = vpack.c.b16 %v7547, %v7546
  %v7606 = vpack.c.b16 %v7549, %v7548
  %v7607 = vpack.c.b16 %v7551, %v7550
  %v7608 = vpack.c.b16 %v7553, %v7552
  %v7609 = vpack.c.b16 %v7555, %v7554
  %v7610 = vpack.c.b16 %v7557, %v7556
  %v7611 = vpack.c.b16 %v7559, %v7558
  %v7612 = vpack.c.b16 %v7561, %v7560
  %v7613 = vpack.c.b16 %v7563, %v7562
  %v7614 = vpack.c.b16 %v7565, %v7564
  %v7615 = vpack.c.b16 %v7567, %v7566
  %v7616 = vpack.c.b16 %v7569, %v7568
  %v7617 = vpack.c.b16 %v7571, %v7570
  %v7618 = vpack.c.b16 %v7573, %v7572
  %v7619 = vpack.c.b16 %v7575, %v7574
  %v7620 = vpack.c.b16 %v7577, %v7576
  %v7621 = vpack.c.b16 %v7579, %v7578
  %v7622 = vpack.c.b16 %v7581, %v7580
  %v7623 = vpack.c.b16 %v7583, %v7582
  %v7624 = vpack.c.b16 %v7585, %v7584
  %v7625 = vpack.c.b16 %v7587, %v7586
  %v7626 = vpack.c.b16 %v7589, %v7588
  %v7627 = vpack.c.b16 %v7591, %v7590
  %v7628 = vpack.c.b16 %v7593, %v7592
  %v7629 = vpack.c.b16 %v7595, %v7594
  %v7630 = vpack.c.b16 %v7597, %v7596
  %v7631 = vpack.c.b16 %v7599, %v7598
  %7664 = vmatprep.subr.bf16.mxu0 0
  %7665 = vmatpush1.bf16.msra.mxu0 %v7600
  %7666 = vmatprep.subr.bf16.mxu0 0
  %7667 = vmatpush1.bf16.msra.mxu0 %v7601
  %7668 = vmatprep.subr.bf16.mxu0 0
  %7669 = vmatpush1.bf16.msra.mxu0 %v7602
  %7670 = vmatprep.subr.bf16.mxu0 0
  %7671 = vmatpush1.bf16.msra.mxu0 %v7603
  %7672 = vmatprep.subr.bf16.mxu0 0
  %7673 = vmatpush1.bf16.msra.mxu0 %v7604
  %7674 = vmatprep.subr.bf16.mxu0 0
  %7675 = vmatpush1.bf16.msra.mxu0 %v7605
  %7676 = vmatprep.subr.bf16.mxu0 0
  %7677 = vmatpush1.bf16.msra.mxu0 %v7606
  %7678 = vmatprep.subr.bf16.mxu0 0
  %7679 = vmatpush1.bf16.msra.mxu0 %v7607
  %7680 = vmatprep.subr.bf16.mxu0 0
  %7681 = vmatpush1.bf16.msra.mxu0 %v7608
  %7682 = vmatprep.subr.bf16.mxu0 0
  %7683 = vmatpush1.bf16.msra.mxu0 %v7609
  %7684 = vmatprep.subr.bf16.mxu0 0
  %7685 = vmatpush1.bf16.msra.mxu0 %v7610
  %7686 = vmatprep.subr.bf16.mxu0 0
  %7687 = vmatpush1.bf16.msra.mxu0 %v7611
  %7688 = vmatprep.subr.bf16.mxu0 0
  %7689 = vmatpush1.bf16.msra.mxu0 %v7612
  %7690 = vmatprep.subr.bf16.mxu0 0
  %7691 = vmatpush1.bf16.msra.mxu0 %v7613
  %7692 = vmatprep.subr.bf16.mxu0 0
  %7693 = vmatpush1.bf16.msra.mxu0 %v7614
  %7694 = vmatprep.subr.bf16.mxu0 0
  %7695 = vmatpush1.bf16.msra.mxu0 %v7615
  %7696 = vmatprep.mubr.bf16.mxu0 %v3287
  %7697 = vmatmul.mubr.bf16.gmra.mrb[0].mxu0 %v3286
  %v7698 = vpop.f32.mrb[0].mxu0
  %v7699 = vadd.f32 0.0, %v7698
  %v7700 = vpop.f32.mrb[0].mxu0
  %v7701 = vpop.f32.mrb[0].mxu0
  %v7702 = vpop.f32.mrb[0].mxu0
  %7703 = vdwg.mxu0
  %7704 = vmatprep.subr.bf16.mxu0 0
  %7705 = vmatpush1.bf16.msra.mxu0 %v7616
  %7706 = vmatprep.subr.bf16.mxu0 0
  %7707 = vmatpush1.bf16.msra.mxu0 %v7617
  %7708 = vmatprep.subr.bf16.mxu0 0
  %7709 = vmatpush1.bf16.msra.mxu0 %v7618
  %7710 = vmatprep.subr.bf16.mxu0 0
  %7711 = vmatpush1.bf16.msra.mxu0 %v7619
  %7712 = vmatprep.subr.bf16.mxu0 0
  %7713 = vmatpush1.bf16.msra.mxu0 %v7620
  %7714 = vmatprep.subr.bf16.mxu0 0
  %7715 = vmatpush1.bf16.msra.mxu0 %v7621
  %7716 = vmatprep.subr.bf16.mxu0 0
  %7717 = vmatpush1.bf16.msra.mxu0 %v7622
  %7718 = vmatprep.subr.bf16.mxu0 0
  %7719 = vmatpush1.bf16.msra.mxu0 %v7623
  %7720 = vmatprep.subr.bf16.mxu0 0
  %7721 = vmatpush1.bf16.msra.mxu0 %v7624
  %7722 = vmatprep.subr.bf16.mxu0 0
  %7723 = vmatpush1.bf16.msra.mxu0 %v7625
  %7724 = vmatprep.subr.bf16.mxu0 0
  %7725 = vmatpush1.bf16.msra.mxu0 %v7626
  %7726 = vmatprep.subr.bf16.mxu0 0
  %7727 = vmatpush1.bf16.msra.mxu0 %v7627
  %7728 = vmatprep.subr.bf16.mxu0 0
  %7729 = vmatpush1.bf16.msra.mxu0 %v7628
  %7730 = vmatprep.subr.bf16.mxu0 0
  %7731 = vmatpush1.bf16.msra.mxu0 %v7629
  %7732 = vmatprep.subr.bf16.mxu0 0
  %7733 = vmatpush1.bf16.msra.mxu0 %v7630
  %7734 = vmatprep.subr.bf16.mxu0 0
  %7735 = vmatpush1.bf16.msra.mxu0 %v7631
  %7736 = vmatprep.mubr.bf16.mxu0 %v3289
  %7737 = vmatmul.mubr.bf16.gmra.mrb[0].mxu0 %v3288
  %v7738 = vpop.f32.mrb[0].mxu0
  %v7739 = vadd.f32 %v7699, %v7738
  %v7740 = vpop.f32.mrb[0].mxu0
  %v7741 = vpop.f32.mrb[0].mxu0
  %v7742 = vpop.f32.mrb[0].mxu0
  %7743 = vdwg.mxu0
  %v7744 = vadd.f32 %v7407, %v7739
  %v7745 = vld [vmem:[%s3 + $0xd00] sm:$0xf]
  %v7746 = vld [vmem:[%s3 + $0xd04] sm:$0xf]
  %v7747 = vld [vmem:[%s3 + $0xd08] sm:$0xf]
  %v7748 = vld [vmem:[%s3 + $0xd0c] sm:$0xf]
  %v7749 = vld [vmem:[%s3 + $0xd10] sm:$0xf]
  %v7750 = vld [vmem:[%s3 + $0xd14] sm:$0xf]
  %v7751 = vld [vmem:[%s3 + $0xd18] sm:$0xf]
  %v7752 = vld [vmem:[%s3 + $0xd1c] sm:$0xf]
  %v7753 = vld [vmem:[%s3 + $0xd20] sm:$0xf]
  %v7754 = vld [vmem:[%s3 + $0xd24] sm:$0xf]
  %v7755 = vld [vmem:[%s3 + $0xd28] sm:$0xf]
  %v7756 = vld [vmem:[%s3 + $0xd2c] sm:$0xf]
  %v7757 = vld [vmem:[%s3 + $0xd30] sm:$0xf]
  %v7758 = vld [vmem:[%s3 + $0xd34] sm:$0xf]
  %v7759 = vld [vmem:[%s3 + $0xd38] sm:$0xf]
  %v7760 = vld [vmem:[%s3 + $0xd3c] sm:$0xf]
  %v7761 = vld [vmem:[%s3 + $0xd40] sm:$0xf]
  %v7762 = vld [vmem:[%s3 + $0xd44] sm:$0xf]
  %v7763 = vld [vmem:[%s3 + $0xd48] sm:$0xf]
  %v7764 = vld [vmem:[%s3 + $0xd4c] sm:$0xf]
  %v7765 = vld [vmem:[%s3 + $0xd50] sm:$0xf]
  %v7766 = vld [vmem:[%s3 + $0xd54] sm:$0xf]
  %v7767 = vld [vmem:[%s3 + $0xd58] sm:$0xf]
  %v7768 = vld [vmem:[%s3 + $0xd5c] sm:$0xf]
  %v7769 = vld [vmem:[%s3 + $0xd60] sm:$0xf]
  %v7770 = vld [vmem:[%s3 + $0xd64] sm:$0xf]
  %v7771 = vld [vmem:[%s3 + $0xd68] sm:$0xf]
  %v7772 = vld [vmem:[%s3 + $0xd6c] sm:$0xf]
  %v7773 = vld [vmem:[%s3 + $0xd70] sm:$0xf]
  %v7774 = vld [vmem:[%s3 + $0xd74] sm:$0xf]
  %v7775 = vld [vmem:[%s3 + $0xd78] sm:$0xf]
  %v7776 = vld [vmem:[%s3 + $0xd7c] sm:$0xf]
  %v7777 = vld [vmem:[%s3 + $0xd80] sm:$0xf]
  %v7778 = vld [vmem:[%s3 + $0xd84] sm:$0xf]
  %v7779 = vld [vmem:[%s3 + $0xd88] sm:$0xf]
  %v7780 = vld [vmem:[%s3 + $0xd8c] sm:$0xf]
  %v7781 = vld [vmem:[%s3 + $0xd90] sm:$0xf]
  %v7782 = vld [vmem:[%s3 + $0xd94] sm:$0xf]
  %v7783 = vld [vmem:[%s3 + $0xd98] sm:$0xf]
  %v7784 = vld [vmem:[%s3 + $0xd9c] sm:$0xf]
  %v7785 = vld [vmem:[%s3 + $0xda0] sm:$0xf]
  %v7786 = vld [vmem:[%s3 + $0xda4] sm:$0xf]
  %v7787 = vld [vmem:[%s3 + $0xda8] sm:$0xf]
  %v7788 = vld [vmem:[%s3 + $0xdac] sm:$0xf]
  %v7789 = vld [vmem:[%s3 + $0xdb0] sm:$0xf]
  %v7790 = vld [vmem:[%s3 + $0xdb4] sm:$0xf]
  %v7791 = vld [vmem:[%s3 + $0xdb8] sm:$0xf]
  %v7792 = vld [vmem:[%s3 + $0xdbc] sm:$0xf]
  %v7793 = vld [vmem:[%s3 + $0xdc0] sm:$0xf]
  %v7794 = vld [vmem:[%s3 + $0xdc4] sm:$0xf]
  %v7795 = vld [vmem:[%s3 + $0xdc8] sm:$0xf]
  %v7796 = vld [vmem:[%s3 + $0xdcc] sm:$0xf]
  %v7797 = vld [vmem:[%s3 + $0xdd0] sm:$0xf]
  %v7798 = vld [vmem:[%s3 + $0xdd4] sm:$0xf]
  %v7799 = vld [vmem:[%s3 + $0xdd8] sm:$0xf]
  %v7800 = vld [vmem:[%s3 + $0xddc] sm:$0xf]
  %v7801 = vld [vmem:[%s3 + $0xde0] sm:$0xf]
  %v7802 = vld [vmem:[%s3 + $0xde4] sm:$0xf]
  %v7803 = vld [vmem:[%s3 + $0xde8] sm:$0xf]
  %v7804 = vld [vmem:[%s3 + $0xdec] sm:$0xf]
  %v7805 = vld [vmem:[%s3 + $0xdf0] sm:$0xf]
  %v7806 = vld [vmem:[%s3 + $0xdf4] sm:$0xf]
  %v7807 = vld [vmem:[%s3 + $0xdf8] sm:$0xf]
  %v7808 = vld [vmem:[%s3 + $0xdfc] sm:$0xf]
  %v7813 = vrot.slane %v3286, 4
  %v7814 = vrot.slane %v3287, 4
  %v7815 = vrot.slane %v3288, 4
  %v7816 = vrot.slane %v3289, 4
  %v7885 = vunpack.c.l.b16 %v7745
  %v7886 = vunpack.c.l.b16 %v7746
  %v7887 = vunpack.c.l.b16 %v7747
  %v7888 = vunpack.c.l.b16 %v7748
  %v7889 = vunpack.c.l.b16 %v7749
  %v7890 = vunpack.c.l.b16 %v7750
  %v7891 = vunpack.c.l.b16 %v7751
  %v7892 = vunpack.c.l.b16 %v7752
  %v7893 = vunpack.c.l.b16 %v7753
  %v7894 = vunpack.c.l.b16 %v7754
  %v7895 = vunpack.c.l.b16 %v7755
  %v7896 = vunpack.c.l.b16 %v7756
  %v7897 = vunpack.c.l.b16 %v7757
  %v7898 = vunpack.c.l.b16 %v7758
  %v7899 = vunpack.c.l.b16 %v7759
  %v7900 = vunpack.c.l.b16 %v7760
  %v7901 = vunpack.c.l.b16 %v7761
  %v7902 = vunpack.c.l.b16 %v7762
  %v7903 = vunpack.c.l.b16 %v7763
  %v7904 = vunpack.c.l.b16 %v7764
  %v7905 = vunpack.c.l.b16 %v7765
  %v7906 = vunpack.c.l.b16 %v7766
  %v7907 = vunpack.c.l.b16 %v7767
  %v7908 = vunpack.c.l.b16 %v7768
  %v7909 = vunpack.c.l.b16 %v7769
  %v7910 = vunpack.c.l.b16 %v7770
  %v7911 = vunpack.c.l.b16 %v7771
  %v7912 = vunpack.c.l.b16 %v7772
  %v7913 = vunpack.c.l.b16 %v7773
  %v7914 = vunpack.c.l.b16 %v7774
  %v7915 = vunpack.c.l.b16 %v7775
  %v7916 = vunpack.c.l.b16 %v7776
  %v7917 = vunpack.c.l.b16 %v7777
  %v7918 = vunpack.c.l.b16 %v7778
  %v7919 = vunpack.c.l.b16 %v7779
  %v7920 = vunpack.c.l.b16 %v7780
  %v7921 = vunpack.c.l.b16 %v7781
  %v7922 = vunpack.c.l.b16 %v7782
  %v7923 = vunpack.c.l.b16 %v7783
  %v7924 = vunpack.c.l.b16 %v7784
  %v7925 = vunpack.c.l.b16 %v7785
  %v7926 = vunpack.c.l.b16 %v7786
  %v7927 = vunpack.c.l.b16 %v7787
  %v7928 = vunpack.c.l.b16 %v7788
  %v7929 = vunpack.c.l.b16 %v7789
  %v7930 = vunpack.c.l.b16 %v7790
  %v7931 = vunpack.c.l.b16 %v7791
  %v7932 = vunpack.c.l.b16 %v7792
  %v7933 = vunpack.c.l.b16 %v7793
  %v7934 = vunpack.c.l.b16 %v7794
  %v7935 = vunpack.c.l.b16 %v7795
  %v7936 = vunpack.c.l.b16 %v7796
  %v7937 = vunpack.c.l.b16 %v7797
  %v7938 = vunpack.c.l.b16 %v7798
  %v7939 = vunpack.c.l.b16 %v7799
  %v7940 = vunpack.c.l.b16 %v7800
  %v7941 = vunpack.c.l.b16 %v7801
  %v7942 = vunpack.c.l.b16 %v7802
  %v7943 = vunpack.c.l.b16 %v7803
  %v7944 = vunpack.c.l.b16 %v7804
  %v7945 = vunpack.c.l.b16 %v7805
  %v7946 = vunpack.c.l.b16 %v7806
  %v7947 = vunpack.c.l.b16 %v7807
  %v7948 = vunpack.c.l.b16 %v7808
  %v7949 = vpack.c.b16 %v7886, %v7885
  %v7950 = vpack.c.b16 %v7888, %v7887
  %v7951 = vpack.c.b16 %v7890, %v7889
  %v7952 = vpack.c.b16 %v7892, %v7891
  %v7953 = vpack.c.b16 %v7894, %v7893
  %v7954 = vpack.c.b16 %v7896, %v7895
  %v7955 = vpack.c.b16 %v7898, %v7897
  %v7956 = vpack.c.b16 %v7900, %v7899
  %v7957 = vpack.c.b16 %v7902, %v7901
  %v7958 = vpack.c.b16 %v7904, %v7903
  %v7959 = vpack.c.b16 %v7906, %v7905
  %v7960 = vpack.c.b16 %v7908, %v7907
  %v7961 = vpack.c.b16 %v7910, %v7909
  %v7962 = vpack.c.b16 %v7912, %v7911
  %v7963 = vpack.c.b16 %v7914, %v7913
  %v7964 = vpack.c.b16 %v7916, %v7915
  %v7965 = vpack.c.b16 %v7918, %v7917
  %v7966 = vpack.c.b16 %v7920, %v7919
  %v7967 = vpack.c.b16 %v7922, %v7921
  %v7968 = vpack.c.b16 %v7924, %v7923
  %v7969 = vpack.c.b16 %v7926, %v7925
  %v7970 = vpack.c.b16 %v7928, %v7927
  %v7971 = vpack.c.b16 %v7930, %v7929
  %v7972 = vpack.c.b16 %v7932, %v7931
  %v7973 = vpack.c.b16 %v7934, %v7933
  %v7974 = vpack.c.b16 %v7936, %v7935
  %v7975 = vpack.c.b16 %v7938, %v7937
  %v7976 = vpack.c.b16 %v7940, %v7939
  %v7977 = vpack.c.b16 %v7942, %v7941
  %v7978 = vpack.c.b16 %v7944, %v7943
  %v7979 = vpack.c.b16 %v7946, %v7945
  %v7980 = vpack.c.b16 %v7948, %v7947
  %8013 = vmatprep.subr.bf16.mxu0 0
  %8014 = vmatpush1.bf16.msra.mxu0 %v7949
  %8015 = vmatprep.subr.bf16.mxu0 0
  %8016 = vmatpush1.bf16.msra.mxu0 %v7950
  %8017 = vmatprep.subr.bf16.mxu0 0
  %8018 = vmatpush1.bf16.msra.mxu0 %v7951
  %8019 = vmatprep.subr.bf16.mxu0 0
  %8020 = vmatpush1.bf16.msra.mxu0 %v7952
  %8021 = vmatprep.subr.bf16.mxu0 0
  %8022 = vmatpush1.bf16.msra.mxu0 %v7953
  %8023 = vmatprep.subr.bf16.mxu0 0
  %8024 = vmatpush1.bf16.msra.mxu0 %v7954
  %8025 = vmatprep.subr.bf16.mxu0 0
  %8026 = vmatpush1.bf16.msra.mxu0 %v7955
  %8027 = vmatprep.subr.bf16.mxu0 0
  %8028 = vmatpush1.bf16.msra.mxu0 %v7956
  %8029 = vmatprep.subr.bf16.mxu0 0
  %8030 = vmatpush1.bf16.msra.mxu0 %v7957
  %8031 = vmatprep.subr.bf16.mxu0 0
  %8032 = vmatpush1.bf16.msra.mxu0 %v7958
  %8033 = vmatprep.subr.bf16.mxu0 0
  %8034 = vmatpush1.bf16.msra.mxu0 %v7959
  %8035 = vmatprep.subr.bf16.mxu0 0
  %8036 = vmatpush1.bf16.msra.mxu0 %v7960
  %8037 = vmatprep.subr.bf16.mxu0 0
  %8038 = vmatpush1.bf16.msra.mxu0 %v7961
  %8039 = vmatprep.subr.bf16.mxu0 0
  %8040 = vmatpush1.bf16.msra.mxu0 %v7962
  %8041 = vmatprep.subr.bf16.mxu0 0
  %8042 = vmatpush1.bf16.msra.mxu0 %v7963
  %8043 = vmatprep.subr.bf16.mxu0 0
  %8044 = vmatpush1.bf16.msra.mxu0 %v7964
  %8045 = vmatprep.mubr.bf16.mxu0 %v7814
  %8046 = vmatmul.mubr.bf16.gmra.mrb[0].mxu0 %v7813
  %v8047 = vpop.f32.mrb[0].mxu0
  %v8048 = vadd.f32 0.0, %v8047
  %v8049 = vpop.f32.mrb[0].mxu0
  %v8050 = vpop.f32.mrb[0].mxu0
  %v8051 = vpop.f32.mrb[0].mxu0
  %8052 = vdwg.mxu0
  %8053 = vmatprep.subr.bf16.mxu0 0
  %8054 = vmatpush1.bf16.msra.mxu0 %v7965
  %8055 = vmatprep.subr.bf16.mxu0 0
  %8056 = vmatpush1.bf16.msra.mxu0 %v7966
  %8057 = vmatprep.subr.bf16.mxu0 0
  %8058 = vmatpush1.bf16.msra.mxu0 %v7967
  %8059 = vmatprep.subr.bf16.mxu0 0
  %8060 = vmatpush1.bf16.msra.mxu0 %v7968
  %8061 = vmatprep.subr.bf16.mxu0 0
  %8062 = vmatpush1.bf16.msra.mxu0 %v7969
  %8063 = vmatprep.subr.bf16.mxu0 0
  %8064 = vmatpush1.bf16.msra.mxu0 %v7970
  %8065 = vmatprep.subr.bf16.mxu0 0
  %8066 = vmatpush1.bf16.msra.mxu0 %v7971
  %8067 = vmatprep.subr.bf16.mxu0 0
  %8068 = vmatpush1.bf16.msra.mxu0 %v7972
  %8069 = vmatprep.subr.bf16.mxu0 0
  %8070 = vmatpush1.bf16.msra.mxu0 %v7973
  %8071 = vmatprep.subr.bf16.mxu0 0
  %8072 = vmatpush1.bf16.msra.mxu0 %v7974
  %8073 = vmatprep.subr.bf16.mxu0 0
  %8074 = vmatpush1.bf16.msra.mxu0 %v7975
  %8075 = vmatprep.subr.bf16.mxu0 0
  %8076 = vmatpush1.bf16.msra.mxu0 %v7976
  %8077 = vmatprep.subr.bf16.mxu0 0
  %8078 = vmatpush1.bf16.msra.mxu0 %v7977
  %8079 = vmatprep.subr.bf16.mxu0 0
  %8080 = vmatpush1.bf16.msra.mxu0 %v7978
  %8081 = vmatprep.subr.bf16.mxu0 0
  %8082 = vmatpush1.bf16.msra.mxu0 %v7979
  %8083 = vmatprep.subr.bf16.mxu0 0
  %8084 = vmatpush1.bf16.msra.mxu0 %v7980
  %8085 = vmatprep.mubr.bf16.mxu0 %v7816
  %8086 = vmatmul.mubr.bf16.gmra.mrb[0].mxu0 %v7815
  %v8087 = vpop.f32.mrb[0].mxu0
  %v8088 = vadd.f32 %v8048, %v8087
  %v8089 = vpop.f32.mrb[0].mxu0
  %v8090 = vpop.f32.mrb[0].mxu0
  %v8091 = vpop.f32.mrb[0].mxu0
  %8092 = vdwg.mxu0
  %v8093 = vadd.f32 %v7744, %v8088
  %v8094 = vld [vmem:[%s3 + $0xe00] sm:$0xf]
  %v8095 = vld [vmem:[%s3 + $0xe04] sm:$0xf]
  %v8096 = vld [vmem:[%s3 + $0xe08] sm:$0xf]
  %v8097 = vld [vmem:[%s3 + $0xe0c] sm:$0xf]
  %v8098 = vld [vmem:[%s3 + $0xe10] sm:$0xf]
  %v8099 = vld [vmem:[%s3 + $0xe14] sm:$0xf]
  %v8100 = vld [vmem:[%s3 + $0xe18] sm:$0xf]
  %v8101 = vld [vmem:[%s3 + $0xe1c] sm:$0xf]
  %v8102 = vld [vmem:[%s3 + $0xe20] sm:$0xf]
  %v8103 = vld [vmem:[%s3 + $0xe24] sm:$0xf]
  %v8104 = vld [vmem:[%s3 + $0xe28] sm:$0xf]
  %v8105 = vld [vmem:[%s3 + $0xe2c] sm:$0xf]
  %v8106 = vld [vmem:[%s3 + $0xe30] sm:$0xf]
  %v8107 = vld [vmem:[%s3 + $0xe34] sm:$0xf]
  %v8108 = vld [vmem:[%s3 + $0xe38] sm:$0xf]
  %v8109 = vld [vmem:[%s3 + $0xe3c] sm:$0xf]
  %v8110 = vld [vmem:[%s3 + $0xe40] sm:$0xf]
  %v8111 = vld [vmem:[%s3 + $0xe44] sm:$0xf]
  %v8112 = vld [vmem:[%s3 + $0xe48] sm:$0xf]
  %v8113 = vld [vmem:[%s3 + $0xe4c] sm:$0xf]
  %v8114 = vld [vmem:[%s3 + $0xe50] sm:$0xf]
  %v8115 = vld [vmem:[%s3 + $0xe54] sm:$0xf]
  %v8116 = vld [vmem:[%s3 + $0xe58] sm:$0xf]
  %v8117 = vld [vmem:[%s3 + $0xe5c] sm:$0xf]
  %v8118 = vld [vmem:[%s3 + $0xe60] sm:$0xf]
  %v8119 = vld [vmem:[%s3 + $0xe64] sm:$0xf]
  %v8120 = vld [vmem:[%s3 + $0xe68] sm:$0xf]
  %v8121 = vld [vmem:[%s3 + $0xe6c] sm:$0xf]
  %v8122 = vld [vmem:[%s3 + $0xe70] sm:$0xf]
  %v8123 = vld [vmem:[%s3 + $0xe74] sm:$0xf]
  %v8124 = vld [vmem:[%s3 + $0xe78] sm:$0xf]
  %v8125 = vld [vmem:[%s3 + $0xe7c] sm:$0xf]
  %v8126 = vld [vmem:[%s3 + $0xe80] sm:$0xf]
  %v8127 = vld [vmem:[%s3 + $0xe84] sm:$0xf]
  %v8128 = vld [vmem:[%s3 + $0xe88] sm:$0xf]
  %v8129 = vld [vmem:[%s3 + $0xe8c] sm:$0xf]
  %v8130 = vld [vmem:[%s3 + $0xe90] sm:$0xf]
  %v8131 = vld [vmem:[%s3 + $0xe94] sm:$0xf]
  %v8132 = vld [vmem:[%s3 + $0xe98] sm:$0xf]
  %v8133 = vld [vmem:[%s3 + $0xe9c] sm:$0xf]
  %v8134 = vld [vmem:[%s3 + $0xea0] sm:$0xf]
  %v8135 = vld [vmem:[%s3 + $0xea4] sm:$0xf]
  %v8136 = vld [vmem:[%s3 + $0xea8] sm:$0xf]
  %v8137 = vld [vmem:[%s3 + $0xeac] sm:$0xf]
  %v8138 = vld [vmem:[%s3 + $0xeb0] sm:$0xf]
  %v8139 = vld [vmem:[%s3 + $0xeb4] sm:$0xf]
  %v8140 = vld [vmem:[%s3 + $0xeb8] sm:$0xf]
  %v8141 = vld [vmem:[%s3 + $0xebc] sm:$0xf]
  %v8142 = vld [vmem:[%s3 + $0xec0] sm:$0xf]
  %v8143 = vld [vmem:[%s3 + $0xec4] sm:$0xf]
  %v8144 = vld [vmem:[%s3 + $0xec8] sm:$0xf]
  %v8145 = vld [vmem:[%s3 + $0xecc] sm:$0xf]
  %v8146 = vld [vmem:[%s3 + $0xed0] sm:$0xf]
  %v8147 = vld [vmem:[%s3 + $0xed4] sm:$0xf]
  %v8148 = vld [vmem:[%s3 + $0xed8] sm:$0xf]
  %v8149 = vld [vmem:[%s3 + $0xedc] sm:$0xf]
  %v8150 = vld [vmem:[%s3 + $0xee0] sm:$0xf]
  %v8151 = vld [vmem:[%s3 + $0xee4] sm:$0xf]
  %v8152 = vld [vmem:[%s3 + $0xee8] sm:$0xf]
  %v8153 = vld [vmem:[%s3 + $0xeec] sm:$0xf]
  %v8154 = vld [vmem:[%s3 + $0xef0] sm:$0xf]
  %v8155 = vld [vmem:[%s3 + $0xef4] sm:$0xf]
  %v8156 = vld [vmem:[%s3 + $0xef8] sm:$0xf]
  %v8157 = vld [vmem:[%s3 + $0xefc] sm:$0xf]
  %v8222 = vunpack.c.l.b16 %v8094
  %v8223 = vunpack.c.l.b16 %v8095
  %v8224 = vunpack.c.l.b16 %v8096
  %v8225 = vunpack.c.l.b16 %v8097
  %v8226 = vunpack.c.l.b16 %v8098
  %v8227 = vunpack.c.l.b16 %v8099
  %v8228 = vunpack.c.l.b16 %v8100
  %v8229 = vunpack.c.l.b16 %v8101
  %v8230 = vunpack.c.l.b16 %v8102
  %v8231 = vunpack.c.l.b16 %v8103
  %v8232 = vunpack.c.l.b16 %v8104
  %v8233 = vunpack.c.l.b16 %v8105
  %v8234 = vunpack.c.l.b16 %v8106
  %v8235 = vunpack.c.l.b16 %v8107
  %v8236 = vunpack.c.l.b16 %v8108
  %v8237 = vunpack.c.l.b16 %v8109
  %v8238 = vunpack.c.l.b16 %v8110
  %v8239 = vunpack.c.l.b16 %v8111
  %v8240 = vunpack.c.l.b16 %v8112
  %v8241 = vunpack.c.l.b16 %v8113
  %v8242 = vunpack.c.l.b16 %v8114
  %v8243 = vunpack.c.l.b16 %v8115
  %v8244 = vunpack.c.l.b16 %v8116
  %v8245 = vunpack.c.l.b16 %v8117
  %v8246 = vunpack.c.l.b16 %v8118
  %v8247 = vunpack.c.l.b16 %v8119
  %v8248 = vunpack.c.l.b16 %v8120
  %v8249 = vunpack.c.l.b16 %v8121
  %v8250 = vunpack.c.l.b16 %v8122
  %v8251 = vunpack.c.l.b16 %v8123
  %v8252 = vunpack.c.l.b16 %v8124
  %v8253 = vunpack.c.l.b16 %v8125
  %v8254 = vunpack.c.l.b16 %v8126
  %v8255 = vunpack.c.l.b16 %v8127
  %v8256 = vunpack.c.l.b16 %v8128
  %v8257 = vunpack.c.l.b16 %v8129
  %v8258 = vunpack.c.l.b16 %v8130
  %v8259 = vunpack.c.l.b16 %v8131
  %v8260 = vunpack.c.l.b16 %v8132
  %v8261 = vunpack.c.l.b16 %v8133
  %v8262 = vunpack.c.l.b16 %v8134
  %v8263 = vunpack.c.l.b16 %v8135
  %v8264 = vunpack.c.l.b16 %v8136
  %v8265 = vunpack.c.l.b16 %v8137
  %v8266 = vunpack.c.l.b16 %v8138
  %v8267 = vunpack.c.l.b16 %v8139
  %v8268 = vunpack.c.l.b16 %v8140
  %v8269 = vunpack.c.l.b16 %v8141
  %v8270 = vunpack.c.l.b16 %v8142
  %v8271 = vunpack.c.l.b16 %v8143
  %v8272 = vunpack.c.l.b16 %v8144
  %v8273 = vunpack.c.l.b16 %v8145
  %v8274 = vunpack.c.l.b16 %v8146
  %v8275 = vunpack.c.l.b16 %v8147
  %v8276 = vunpack.c.l.b16 %v8148
  %v8277 = vunpack.c.l.b16 %v8149
  %v8278 = vunpack.c.l.b16 %v8150
  %v8279 = vunpack.c.l.b16 %v8151
  %v8280 = vunpack.c.l.b16 %v8152
  %v8281 = vunpack.c.l.b16 %v8153
  %v8282 = vunpack.c.l.b16 %v8154
  %v8283 = vunpack.c.l.b16 %v8155
  %v8284 = vunpack.c.l.b16 %v8156
  %v8285 = vunpack.c.l.b16 %v8157
  %v8286 = vpack.c.b16 %v8223, %v8222
  %v8287 = vpack.c.b16 %v8225, %v8224
  %v8288 = vpack.c.b16 %v8227, %v8226
  %v8289 = vpack.c.b16 %v8229, %v8228
  %v8290 = vpack.c.b16 %v8231, %v8230
  %v8291 = vpack.c.b16 %v8233, %v8232
  %v8292 = vpack.c.b16 %v8235, %v8234
  %v8293 = vpack.c.b16 %v8237, %v8236
  %v8294 = vpack.c.b16 %v8239, %v8238
  %v8295 = vpack.c.b16 %v8241, %v8240
  %v8296 = vpack.c.b16 %v8243, %v8242
  %v8297 = vpack.c.b16 %v8245, %v8244
  %v8298 = vpack.c.b16 %v8247, %v8246
  %v8299 = vpack.c.b16 %v8249, %v8248
  %v8300 = vpack.c.b16 %v8251, %v8250
  %v8301 = vpack.c.b16 %v8253, %v8252
  %v8302 = vpack.c.b16 %v8255, %v8254
  %v8303 = vpack.c.b16 %v8257, %v8256
  %v8304 = vpack.c.b16 %v8259, %v8258
  %v8305 = vpack.c.b16 %v8261, %v8260
  %v8306 = vpack.c.b16 %v8263, %v8262
  %v8307 = vpack.c.b16 %v8265, %v8264
  %v8308 = vpack.c.b16 %v8267, %v8266
  %v8309 = vpack.c.b16 %v8269, %v8268
  %v8310 = vpack.c.b16 %v8271, %v8270
  %v8311 = vpack.c.b16 %v8273, %v8272
  %v8312 = vpack.c.b16 %v8275, %v8274
  %v8313 = vpack.c.b16 %v8277, %v8276
  %v8314 = vpack.c.b16 %v8279, %v8278
  %v8315 = vpack.c.b16 %v8281, %v8280
  %v8316 = vpack.c.b16 %v8283, %v8282
  %v8317 = vpack.c.b16 %v8285, %v8284
  %8350 = vmatprep.subr.bf16.mxu0 0
  %8351 = vmatpush1.bf16.msra.mxu0 %v8286
  %8352 = vmatprep.subr.bf16.mxu0 0
  %8353 = vmatpush1.bf16.msra.mxu0 %v8287
  %8354 = vmatprep.subr.bf16.mxu0 0
  %8355 = vmatpush1.bf16.msra.mxu0 %v8288
  %8356 = vmatprep.subr.bf16.mxu0 0
  %8357 = vmatpush1.bf16.msra.mxu0 %v8289
  %8358 = vmatprep.subr.bf16.mxu0 0
  %8359 = vmatpush1.bf16.msra.mxu0 %v8290
  %8360 = vmatprep.subr.bf16.mxu0 0
  %8361 = vmatpush1.bf16.msra.mxu0 %v8291
  %8362 = vmatprep.subr.bf16.mxu0 0
  %8363 = vmatpush1.bf16.msra.mxu0 %v8292
  %8364 = vmatprep.subr.bf16.mxu0 0
  %8365 = vmatpush1.bf16.msra.mxu0 %v8293
  %8366 = vmatprep.subr.bf16.mxu0 0
  %8367 = vmatpush1.bf16.msra.mxu0 %v8294
  %8368 = vmatprep.subr.bf16.mxu0 0
  %8369 = vmatpush1.bf16.msra.mxu0 %v8295
  %8370 = vmatprep.subr.bf16.mxu0 0
  %8371 = vmatpush1.bf16.msra.mxu0 %v8296
  %8372 = vmatprep.subr.bf16.mxu0 0
  %8373 = vmatpush1.bf16.msra.mxu0 %v8297
  %8374 = vmatprep.subr.bf16.mxu0 0
  %8375 = vmatpush1.bf16.msra.mxu0 %v8298
  %8376 = vmatprep.subr.bf16.mxu0 0
  %8377 = vmatpush1.bf16.msra.mxu0 %v8299
  %8378 = vmatprep.subr.bf16.mxu0 0
  %8379 = vmatpush1.bf16.msra.mxu0 %v8300
  %8380 = vmatprep.subr.bf16.mxu0 0
  %8381 = vmatpush1.bf16.msra.mxu0 %v8301
  %8382 = vmatprep.mubr.bf16.mxu0 %v3291
  %8383 = vmatmul.mubr.bf16.gmra.mrb[0].mxu0 %v3290
  %v8384 = vpop.f32.mrb[0].mxu0
  %v8385 = vadd.f32 0.0, %v8384
  %v8386 = vpop.f32.mrb[0].mxu0
  %v8387 = vpop.f32.mrb[0].mxu0
  %v8388 = vpop.f32.mrb[0].mxu0
  %8389 = vdwg.mxu0
  %8390 = vmatprep.subr.bf16.mxu0 0
  %8391 = vmatpush1.bf16.msra.mxu0 %v8302
  %8392 = vmatprep.subr.bf16.mxu0 0
  %8393 = vmatpush1.bf16.msra.mxu0 %v8303
  %8394 = vmatprep.subr.bf16.mxu0 0
  %8395 = vmatpush1.bf16.msra.mxu0 %v8304
  %8396 = vmatprep.subr.bf16.mxu0 0
  %8397 = vmatpush1.bf16.msra.mxu0 %v8305
  %8398 = vmatprep.subr.bf16.mxu0 0
  %8399 = vmatpush1.bf16.msra.mxu0 %v8306
  %8400 = vmatprep.subr.bf16.mxu0 0
  %8401 = vmatpush1.bf16.msra.mxu0 %v8307
  %8402 = vmatprep.subr.bf16.mxu0 0
  %8403 = vmatpush1.bf16.msra.mxu0 %v8308
  %8404 = vmatprep.subr.bf16.mxu0 0
  %8405 = vmatpush1.bf16.msra.mxu0 %v8309
  %8406 = vmatprep.subr.bf16.mxu0 0
  %8407 = vmatpush1.bf16.msra.mxu0 %v8310
  %8408 = vmatprep.subr.bf16.mxu0 0
  %8409 = vmatpush1.bf16.msra.mxu0 %v8311
  %8410 = vmatprep.subr.bf16.mxu0 0
  %8411 = vmatpush1.bf16.msra.mxu0 %v8312
  %8412 = vmatprep.subr.bf16.mxu0 0
  %8413 = vmatpush1.bf16.msra.mxu0 %v8313
  %8414 = vmatprep.subr.bf16.mxu0 0
  %8415 = vmatpush1.bf16.msra.mxu0 %v8314
  %8416 = vmatprep.subr.bf16.mxu0 0
  %8417 = vmatpush1.bf16.msra.mxu0 %v8315
  %8418 = vmatprep.subr.bf16.mxu0 0
  %8419 = vmatpush1.bf16.msra.mxu0 %v8316
  %8420 = vmatprep.subr.bf16.mxu0 0
  %8421 = vmatpush1.bf16.msra.mxu0 %v8317
  %8422 = vmatprep.mubr.bf16.mxu0 %v3293
  %8423 = vmatmul.mubr.bf16.gmra.mrb[0].mxu0 %v3292
  %v8424 = vpop.f32.mrb[0].mxu0
  %v8425 = vadd.f32 %v8385, %v8424
  %v8426 = vpop.f32.mrb[0].mxu0
  %v8427 = vpop.f32.mrb[0].mxu0
  %v8428 = vpop.f32.mrb[0].mxu0
  %8429 = vdwg.mxu0
  %v8430 = vadd.f32 %v8093, %v8425
  %v8431 = vld [vmem:[%s3 + $0xf00] sm:$0xf]
  %v8432 = vld [vmem:[%s3 + $0xf04] sm:$0xf]
  %v8433 = vld [vmem:[%s3 + $0xf08] sm:$0xf]
  %v8434 = vld [vmem:[%s3 + $0xf0c] sm:$0xf]
  %v8435 = vld [vmem:[%s3 + $0xf10] sm:$0xf]
  %v8436 = vld [vmem:[%s3 + $0xf14] sm:$0xf]
  %v8437 = vld [vmem:[%s3 + $0xf18] sm:$0xf]
  %v8438 = vld [vmem:[%s3 + $0xf1c] sm:$0xf]
  %v8439 = vld [vmem:[%s3 + $0xf20] sm:$0xf]
  %v8440 = vld [vmem:[%s3 + $0xf24] sm:$0xf]
  %v8441 = vld [vmem:[%s3 + $0xf28] sm:$0xf]
  %v8442 = vld [vmem:[%s3 + $0xf2c] sm:$0xf]
  %v8443 = vld [vmem:[%s3 + $0xf30] sm:$0xf]
  %v8444 = vld [vmem:[%s3 + $0xf34] sm:$0xf]
  %v8445 = vld [vmem:[%s3 + $0xf38] sm:$0xf]
  %v8446 = vld [vmem:[%s3 + $0xf3c] sm:$0xf]
  %v8447 = vld [vmem:[%s3 + $0xf40] sm:$0xf]
  %v8448 = vld [vmem:[%s3 + $0xf44] sm:$0xf]
  %v8449 = vld [vmem:[%s3 + $0xf48] sm:$0xf]
  %v8450 = vld [vmem:[%s3 + $0xf4c] sm:$0xf]
  %v8451 = vld [vmem:[%s3 + $0xf50] sm:$0xf]
  %v8452 = vld [vmem:[%s3 + $0xf54] sm:$0xf]
  %v8453 = vld [vmem:[%s3 + $0xf58] sm:$0xf]
  %v8454 = vld [vmem:[%s3 + $0xf5c] sm:$0xf]
  %v8455 = vld [vmem:[%s3 + $0xf60] sm:$0xf]
  %v8456 = vld [vmem:[%s3 + $0xf64] sm:$0xf]
  %v8457 = vld [vmem:[%s3 + $0xf68] sm:$0xf]
  %v8458 = vld [vmem:[%s3 + $0xf6c] sm:$0xf]
  %v8459 = vld [vmem:[%s3 + $0xf70] sm:$0xf]
  %v8460 = vld [vmem:[%s3 + $0xf74] sm:$0xf]
  %v8461 = vld [vmem:[%s3 + $0xf78] sm:$0xf]
  %v8462 = vld [vmem:[%s3 + $0xf7c] sm:$0xf]
  %v8463 = vld [vmem:[%s3 + $0xf80] sm:$0xf]
  %v8464 = vld [vmem:[%s3 + $0xf84] sm:$0xf]
  %v8465 = vld [vmem:[%s3 + $0xf88] sm:$0xf]
  %v8466 = vld [vmem:[%s3 + $0xf8c] sm:$0xf]
  %v8467 = vld [vmem:[%s3 + $0xf90] sm:$0xf]
  %v8468 = vld [vmem:[%s3 + $0xf94] sm:$0xf]
  %v8469 = vld [vmem:[%s3 + $0xf98] sm:$0xf]
  %v8470 = vld [vmem:[%s3 + $0xf9c] sm:$0xf]
  %v8471 = vld [vmem:[%s3 + $0xfa0] sm:$0xf]
  %v8472 = vld [vmem:[%s3 + $0xfa4] sm:$0xf]
  %v8473 = vld [vmem:[%s3 + $0xfa8] sm:$0xf]
  %v8474 = vld [vmem:[%s3 + $0xfac] sm:$0xf]
  %v8475 = vld [vmem:[%s3 + $0xfb0] sm:$0xf]
  %v8476 = vld [vmem:[%s3 + $0xfb4] sm:$0xf]
  %v8477 = vld [vmem:[%s3 + $0xfb8] sm:$0xf]
  %v8478 = vld [vmem:[%s3 + $0xfbc] sm:$0xf]
  %v8479 = vld [vmem:[%s3 + $0xfc0] sm:$0xf]
  %v8480 = vld [vmem:[%s3 + $0xfc4] sm:$0xf]
  %v8481 = vld [vmem:[%s3 + $0xfc8] sm:$0xf]
  %v8482 = vld [vmem:[%s3 + $0xfcc] sm:$0xf]
  %v8483 = vld [vmem:[%s3 + $0xfd0] sm:$0xf]
  %v8484 = vld [vmem:[%s3 + $0xfd4] sm:$0xf]
  %v8485 = vld [vmem:[%s3 + $0xfd8] sm:$0xf]
  %v8486 = vld [vmem:[%s3 + $0xfdc] sm:$0xf]
  %v8487 = vld [vmem:[%s3 + $0xfe0] sm:$0xf]
  %v8488 = vld [vmem:[%s3 + $0xfe4] sm:$0xf]
  %v8489 = vld [vmem:[%s3 + $0xfe8] sm:$0xf]
  %v8490 = vld [vmem:[%s3 + $0xfec] sm:$0xf]
  %v8491 = vld [vmem:[%s3 + $0xff0] sm:$0xf]
  %v8492 = vld [vmem:[%s3 + $0xff4] sm:$0xf]
  %v8493 = vld [vmem:[%s3 + $0xff8] sm:$0xf]
  %v8494 = vld [vmem:[%s3 + $0xffc] sm:$0xf]
  %v8499 = vrot.slane %v3290, 4
  %v8500 = vrot.slane %v3291, 4
  %v8501 = vrot.slane %v3292, 4
  %v8502 = vrot.slane %v3293, 4
  %v8571 = vunpack.c.l.b16 %v8431
  %v8572 = vunpack.c.l.b16 %v8432
  %v8573 = vunpack.c.l.b16 %v8433
  %v8574 = vunpack.c.l.b16 %v8434
  %v8575 = vunpack.c.l.b16 %v8435
  %v8576 = vunpack.c.l.b16 %v8436
  %v8577 = vunpack.c.l.b16 %v8437
  %v8578 = vunpack.c.l.b16 %v8438
  %v8579 = vunpack.c.l.b16 %v8439
  %v8580 = vunpack.c.l.b16 %v8440
  %v8581 = vunpack.c.l.b16 %v8441
  %v8582 = vunpack.c.l.b16 %v8442
  %v8583 = vunpack.c.l.b16 %v8443
  %v8584 = vunpack.c.l.b16 %v8444
  %v8585 = vunpack.c.l.b16 %v8445
  %v8586 = vunpack.c.l.b16 %v8446
  %v8587 = vunpack.c.l.b16 %v8447
  %v8588 = vunpack.c.l.b16 %v8448
  %v8589 = vunpack.c.l.b16 %v8449
  %v8590 = vunpack.c.l.b16 %v8450
  %v8591 = vunpack.c.l.b16 %v8451
  %v8592 = vunpack.c.l.b16 %v8452
  %v8593 = vunpack.c.l.b16 %v8453
  %v8594 = vunpack.c.l.b16 %v8454
  %v8595 = vunpack.c.l.b16 %v8455
  %v8596 = vunpack.c.l.b16 %v8456
  %v8597 = vunpack.c.l.b16 %v8457
  %v8598 = vunpack.c.l.b16 %v8458
  %v8599 = vunpack.c.l.b16 %v8459
  %v8600 = vunpack.c.l.b16 %v8460
  %v8601 = vunpack.c.l.b16 %v8461
  %v8602 = vunpack.c.l.b16 %v8462
  %v8603 = vunpack.c.l.b16 %v8463
  %v8604 = vunpack.c.l.b16 %v8464
  %v8605 = vunpack.c.l.b16 %v8465
  %v8606 = vunpack.c.l.b16 %v8466
  %v8607 = vunpack.c.l.b16 %v8467
  %v8608 = vunpack.c.l.b16 %v8468
  %v8609 = vunpack.c.l.b16 %v8469
  %v8610 = vunpack.c.l.b16 %v8470
  %v8611 = vunpack.c.l.b16 %v8471
  %v8612 = vunpack.c.l.b16 %v8472
  %v8613 = vunpack.c.l.b16 %v8473
  %v8614 = vunpack.c.l.b16 %v8474
  %v8615 = vunpack.c.l.b16 %v8475
  %v8616 = vunpack.c.l.b16 %v8476
  %v8617 = vunpack.c.l.b16 %v8477
  %v8618 = vunpack.c.l.b16 %v8478
  %v8619 = vunpack.c.l.b16 %v8479
  %v8620 = vunpack.c.l.b16 %v8480
  %v8621 = vunpack.c.l.b16 %v8481
  %v8622 = vunpack.c.l.b16 %v8482
  %v8623 = vunpack.c.l.b16 %v8483
  %v8624 = vunpack.c.l.b16 %v8484
  %v8625 = vunpack.c.l.b16 %v8485
  %v8626 = vunpack.c.l.b16 %v8486
  %v8627 = vunpack.c.l.b16 %v8487
  %v8628 = vunpack.c.l.b16 %v8488
  %v8629 = vunpack.c.l.b16 %v8489
  %v8630 = vunpack.c.l.b16 %v8490
  %v8631 = vunpack.c.l.b16 %v8491
  %v8632 = vunpack.c.l.b16 %v8492
  %v8633 = vunpack.c.l.b16 %v8493
  %v8634 = vunpack.c.l.b16 %v8494
  %v8635 = vpack.c.b16 %v8572, %v8571
  %v8636 = vpack.c.b16 %v8574, %v8573
  %v8637 = vpack.c.b16 %v8576, %v8575
  %v8638 = vpack.c.b16 %v8578, %v8577
  %v8639 = vpack.c.b16 %v8580, %v8579
  %v8640 = vpack.c.b16 %v8582, %v8581
  %v8641 = vpack.c.b16 %v8584, %v8583
  %v8642 = vpack.c.b16 %v8586, %v8585
  %v8643 = vpack.c.b16 %v8588, %v8587
  %v8644 = vpack.c.b16 %v8590, %v8589
  %v8645 = vpack.c.b16 %v8592, %v8591
  %v8646 = vpack.c.b16 %v8594, %v8593
  %v8647 = vpack.c.b16 %v8596, %v8595
  %v8648 = vpack.c.b16 %v8598, %v8597
  %v8649 = vpack.c.b16 %v8600, %v8599
  %v8650 = vpack.c.b16 %v8602, %v8601
  %v8651 = vpack.c.b16 %v8604, %v8603
  %v8652 = vpack.c.b16 %v8606, %v8605
  %v8653 = vpack.c.b16 %v8608, %v8607
  %v8654 = vpack.c.b16 %v8610, %v8609
  %v8655 = vpack.c.b16 %v8612, %v8611
  %v8656 = vpack.c.b16 %v8614, %v8613
  %v8657 = vpack.c.b16 %v8616, %v8615
  %v8658 = vpack.c.b16 %v8618, %v8617
  %v8659 = vpack.c.b16 %v8620, %v8619
  %v8660 = vpack.c.b16 %v8622, %v8621
  %v8661 = vpack.c.b16 %v8624, %v8623
  %v8662 = vpack.c.b16 %v8626, %v8625
  %v8663 = vpack.c.b16 %v8628, %v8627
  %v8664 = vpack.c.b16 %v8630, %v8629
  %v8665 = vpack.c.b16 %v8632, %v8631
  %v8666 = vpack.c.b16 %v8634, %v8633
  %8699 = vmatprep.subr.bf16.mxu0 0
  %8700 = vmatpush1.bf16.msra.mxu0 %v8635
  %8701 = vmatprep.subr.bf16.mxu0 0
  %8702 = vmatpush1.bf16.msra.mxu0 %v8636
  %8703 = vmatprep.subr.bf16.mxu0 0
  %8704 = vmatpush1.bf16.msra.mxu0 %v8637
  %8705 = vmatprep.subr.bf16.mxu0 0
  %8706 = vmatpush1.bf16.msra.mxu0 %v8638
  %8707 = vmatprep.subr.bf16.mxu0 0
  %8708 = vmatpush1.bf16.msra.mxu0 %v8639
  %8709 = vmatprep.subr.bf16.mxu0 0
  %8710 = vmatpush1.bf16.msra.mxu0 %v8640
  %8711 = vmatprep.subr.bf16.mxu0 0
  %8712 = vmatpush1.bf16.msra.mxu0 %v8641
  %8713 = vmatprep.subr.bf16.mxu0 0
  %8714 = vmatpush1.bf16.msra.mxu0 %v8642
  %8715 = vmatprep.subr.bf16.mxu0 0
  %8716 = vmatpush1.bf16.msra.mxu0 %v8643
  %8717 = vmatprep.subr.bf16.mxu0 0
  %8718 = vmatpush1.bf16.msra.mxu0 %v8644
  %8719 = vmatprep.subr.bf16.mxu0 0
  %8720 = vmatpush1.bf16.msra.mxu0 %v8645
  %8721 = vmatprep.subr.bf16.mxu0 0
  %8722 = vmatpush1.bf16.msra.mxu0 %v8646
  %8723 = vmatprep.subr.bf16.mxu0 0
  %8724 = vmatpush1.bf16.msra.mxu0 %v8647
  %8725 = vmatprep.subr.bf16.mxu0 0
  %8726 = vmatpush1.bf16.msra.mxu0 %v8648
  %8727 = vmatprep.subr.bf16.mxu0 0
  %8728 = vmatpush1.bf16.msra.mxu0 %v8649
  %8729 = vmatprep.subr.bf16.mxu0 0
  %8730 = vmatpush1.bf16.msra.mxu0 %v8650
  %8731 = vmatprep.mubr.bf16.mxu0 %v8500
  %8732 = vmatmul.mubr.bf16.gmra.mrb[0].mxu0 %v8499
  %v8733 = vpop.f32.mrb[0].mxu0
  %v8734 = vadd.f32 0.0, %v8733
  %v8735 = vpop.f32.mrb[0].mxu0
  %v8736 = vpop.f32.mrb[0].mxu0
  %v8737 = vpop.f32.mrb[0].mxu0
  %8738 = vdwg.mxu0
  %8739 = vmatprep.subr.bf16.mxu0 0
  %8740 = vmatpush1.bf16.msra.mxu0 %v8651
  %8741 = vmatprep.subr.bf16.mxu0 0
  %8742 = vmatpush1.bf16.msra.mxu0 %v8652
  %8743 = vmatprep.subr.bf16.mxu0 0
  %8744 = vmatpush1.bf16.msra.mxu0 %v8653
  %8745 = vmatprep.subr.bf16.mxu0 0
  %8746 = vmatpush1.bf16.msra.mxu0 %v8654
  %8747 = vmatprep.subr.bf16.mxu0 0
  %8748 = vmatpush1.bf16.msra.mxu0 %v8655
  %8749 = vmatprep.subr.bf16.mxu0 0
  %8750 = vmatpush1.bf16.msra.mxu0 %v8656
  %8751 = vmatprep.subr.bf16.mxu0 0
  %8752 = vmatpush1.bf16.msra.mxu0 %v8657
  %8753 = vmatprep.subr.bf16.mxu0 0
  %8754 = vmatpush1.bf16.msra.mxu0 %v8658
  %8755 = vmatprep.subr.bf16.mxu0 0
  %8756 = vmatpush1.bf16.msra.mxu0 %v8659
  %8757 = vmatprep.subr.bf16.mxu0 0
  %8758 = vmatpush1.bf16.msra.mxu0 %v8660
  %8759 = vmatprep.subr.bf16.mxu0 0
  %8760 = vmatpush1.bf16.msra.mxu0 %v8661
  %8761 = vmatprep.subr.bf16.mxu0 0
  %8762 = vmatpush1.bf16.msra.mxu0 %v8662
  %8763 = vmatprep.subr.bf16.mxu0 0
  %8764 = vmatpush1.bf16.msra.mxu0 %v8663
  %8765 = vmatprep.subr.bf16.mxu0 0
  %8766 = vmatpush1.bf16.msra.mxu0 %v8664
  %8767 = vmatprep.subr.bf16.mxu0 0
  %8768 = vmatpush1.bf16.msra.mxu0 %v8665
  %8769 = vmatprep.subr.bf16.mxu0 0
  %8770 = vmatpush1.bf16.msra.mxu0 %v8666
  %8771 = vmatprep.mubr.bf16.mxu0 %v8502
  %8772 = vmatmul.mubr.bf16.gmra.mrb[0].mxu0 %v8501
  %v8773 = vpop.f32.mrb[0].mxu0
  %v8774 = vadd.f32 %v8734, %v8773
  %v8775 = vpop.f32.mrb[0].mxu0
  %v8776 = vpop.f32.mrb[0].mxu0
  %v8777 = vpop.f32.mrb[0].mxu0
  %8778 = vdwg.mxu0
  %v8779 = vadd.f32 %v8430, %v8774
  %v8780 = vld [vmem:[%s4] sm:$0x1]
  %v8782 = vlaneseq
  %v8783 = vshrl.u32 %v8782, 7
  %v8784 = vsub.s32 0, %v8783
  %v8785 = vrot.slane %v8780, %v8784
  %v8787 = vadd.f32 %v8779, %v8785
  %v8788 = vld [vmem:[%s5] sm:$0xff]
  %v8789 = vld [vmem:[%s5 + $0x8] sm:$0xff]
  %v8790 = vld [vmem:[%s5 + $0x10] sm:$0xff]
  %v8791 = vld [vmem:[%s5 + $0x18] sm:$0xff]
  %v8792 = vld [vmem:[%s5 + $0x20] sm:$0xff]
  %v8793 = vld [vmem:[%s5 + $0x28] sm:$0xff]
  %v8794 = vld [vmem:[%s5 + $0x30] sm:$0xff]
  %v8795 = vld [vmem:[%s5 + $0x38] sm:$0xff]
  %v8796 = vld [vmem:[%s5 + $0x40] sm:$0xff]
  %v8797 = vld [vmem:[%s5 + $0x48] sm:$0xff]
  %v8798 = vld [vmem:[%s5 + $0x50] sm:$0xff]
  %v8799 = vld [vmem:[%s5 + $0x58] sm:$0xff]
  %v8800 = vld [vmem:[%s5 + $0x60] sm:$0xff]
  %v8801 = vld [vmem:[%s5 + $0x68] sm:$0xff]
  %v8802 = vld [vmem:[%s5 + $0x70] sm:$0xff]
  %v8803 = vld [vmem:[%s5 + $0x78] sm:$0xff]
  %v8804 = vld [vmem:[%s6] sm:$0x1]
  %v8806 = vlaneseq
  %v8807 = vshrl.u32 %v8806, 7
  %v8808 = vsub.s32 0, %v8807
  %v8809 = vrot.slane %v8804, %v8808
  %8811 = vmatprep.subr.mxu0 0.0
  %8812 = vmatpush1.msra.mxu0 %v8788
  %8813 = vmatprep.subr.mxu0 0.0
  %8814 = vmatpush1.msra.mxu0 %v8789
  %8815 = vmatprep.subr.mxu0 0.0
  %8816 = vmatpush1.msra.mxu0 %v8790
  %8817 = vmatprep.subr.mxu0 0.0
  %8818 = vmatpush1.msra.mxu0 %v8791
  %8819 = vmatprep.subr.mxu0 0.0
  %8820 = vmatpush1.msra.mxu0 %v8792
  %8821 = vmatprep.subr.mxu0 0.0
  %8822 = vmatpush1.msra.mxu0 %v8793
  %8823 = vmatprep.subr.mxu0 0.0
  %8824 = vmatpush1.msra.mxu0 %v8794
  %8825 = vmatprep.subr.mxu0 0.0
  %8826 = vmatpush1.msra.mxu0 %v8795
  %8827 = vmatprep.subr.mxu0 0.0
  %8828 = vmatpush1.msra.mxu0 %v8796
  %8829 = vmatprep.subr.mxu0 0.0
  %8830 = vmatpush1.msra.mxu0 %v8797
  %8831 = vmatprep.subr.mxu0 0.0
  %8832 = vmatpush1.msra.mxu0 %v8798
  %8833 = vmatprep.subr.mxu0 0.0
  %8834 = vmatpush1.msra.mxu0 %v8799
  %8835 = vmatprep.subr.mxu0 0.0
  %8836 = vmatpush1.msra.mxu0 %v8800
  %8837 = vmatprep.subr.mxu0 0.0
  %8838 = vmatpush1.msra.mxu0 %v8801
  %8839 = vmatprep.subr.mxu0 0.0
  %8840 = vmatpush1.msra.mxu0 %v8802
  %8841 = vmatprep.subr.mxu0 0.0
  %8842 = vmatpush1.msra.mxu0 %v8803
  %8843 = vmatprep.subr.mxu0 0.0
  %8844 = vmatpush1.msra.mxu0 0.0
  %8845 = vmatprep.subr.mxu0 0.0
  %8846 = vmatpush1.msra.mxu0 0.0
  %8847 = vmatprep.subr.mxu0 0.0
  %8848 = vmatpush1.msra.mxu0 0.0
  %8849 = vmatprep.subr.mxu0 0.0
  %8850 = vmatpush1.msra.mxu0 0.0
  %8851 = vmatprep.subr.mxu0 0.0
  %8852 = vmatpush1.msra.mxu0 0.0
  %8853 = vmatprep.subr.mxu0 0.0
  %8854 = vmatpush1.msra.mxu0 0.0
  %8855 = vmatprep.subr.mxu0 0.0
  %8856 = vmatpush1.msra.mxu0 0.0
  %8857 = vmatprep.subr.mxu0 0.0
  %8858 = vmatpush1.msra.mxu0 0.0
  %8859 = vmatprep.subr.mxu0 0.0
  %8860 = vmatpush1.msra.mxu0 0.0
  %8861 = vmatprep.subr.mxu0 0.0
  %8862 = vmatpush1.msra.mxu0 0.0
  %8863 = vmatprep.subr.mxu0 0.0
  %8864 = vmatpush1.msra.mxu0 0.0
  %8865 = vmatprep.subr.mxu0 0.0
  %8866 = vmatpush1.msra.mxu0 0.0
  %8867 = vmatprep.subr.mxu0 0.0
  %8868 = vmatpush1.msra.mxu0 0.0
  %8869 = vmatprep.subr.mxu0 0.0
  %8870 = vmatpush1.msra.mxu0 0.0
  %8871 = vmatprep.subr.mxu0 0.0
  %8872 = vmatpush1.msra.mxu0 0.0
  %8873 = vmatprep.subr.mxu0 0.0
  %8874 = vmatpush1.msra.mxu0 0.0
  %8875 = vmatprep.mubr.f32.mxu0 0.0
  %8876 = vmatmul.mubr.f32.gmra.mrb[0].mxu0 %v8787
  %v8877 = vpop.f32.mrb[0].mxu0
  %v8878 = vadd.f32 %v8809, %v8877
  %v8879 = vpop.f32.mrb[0].mxu0
  %8880 = vdwg.mxu0
  %vm8881 = vcmask 80896
  %8882 = vst.msk [vmem:[%s7] sm:$0xff] %vm8881, %v8878
  // Predicated region
  $region30: #{cifar_smnet_forward.1} parent=0 // pred_check
    _
  $region31: #{cifar_smnet_forward.1} parent=0 // pred_check_branch
    %8884 = sbr.rel (0) target = $region33
  $region32: #{cifar_smnet_forward.1} parent=0 // pred_region
    _
  $region33: #{cifar_smnet_forward.1} parent=0 // pred_fallthru
    _
  // Predicated region
  $region34: #{cifar_smnet_forward.1} parent=0 // pred_check
    _
  $region35: #{cifar_smnet_forward.1} parent=0 // pred_check_branch
    %8886 = sbr.rel (0) target = $region37
  $region36: #{cifar_smnet_forward.1} parent=0 // pred_region
    _
  $region37: #{cifar_smnet_forward.1} parent=0 // pred_fallthru
    _

</llo_original>
